<compile_context>
chip_gen: v7x
topology: tpu7x:2x2x1
jax: 0.10.0
libtpu: 0.0.40
codegen_flags: <defaults>
</compile_context>

<pallas_src>
import functools
import math

import jax
import jax.numpy as jnp
from jax import lax
from jax.experimental import pallas as pl
from jax.experimental.pallas import tpu as pltpu

_HALO = 128      # zero halo (columns) around flattened activations, lane aligned


# ------------------------------- small helpers ------------------------------ #

def _round_up(v, m):
    return (v + m - 1) // m * m


def _is_pow2(v):
    return v > 0 and (v & (v - 1)) == 0


def _pick_tm(mpad):
    # lane-dense tiles (multiple of 128); >=2 grid steps when M allows (v7x).
    return 256 if (mpad % 256 == 0 and mpad >= 512) else 128


class FlatAct:
    """Channel-first activation stored as [C, Mpad] bf16.

    Column m = n*(H*W) + h*W + w holds pixel (n, h, w) for m < M = N*H*W;
    columns M..Mpad-1 are zero (lane padding to a multiple of 128)."""

    def __init__(self, data, n, h, w):
        self.data = data
        self.n, self.h, self.w = n, h, w
        self.m = n * h * w
        self.mpad = data.shape[1]

    def spatial(self):
        c = self.data.shape[0]
        return self.data[:, :self.m].reshape(c, self.n, self.h, self.w)


# ------------------------------ in-kernel im2col ---------------------------- #

def _patches_from_ref(src_ref, g0, tm, h, w):
    """Build a [9*C, tm] bf16 im2col tile for output columns [g0, g0+tm).

    src_ref: halo-padded flat activation [C, _HALO + Mpad + _HALO] (bf16).
    Requires power-of-two H, W (column decode uses bit masks only).
    Returns (patches, col) with col the (1, tm) int32 global column index.
    """
    hw = h * w
    col = lax.broadcasted_iota(jnp.int32, (1, tm), 1) + g0
    wc = col & (w - 1)          # w coordinate
    rc = col & (hw - 1)         # h*W + w within one image
    pieces = []
    for dh in (-1, 0, 1):
        for dw in (-1, 0, 1):
            start = _HALO + g0 + dh * w + dw
            piece = src_ref[:, pl.ds(start, tm)]
            conds = []
            if dw == -1:
                conds.append(wc >= 1)
            elif dw == 1:
                conds.append(wc <= w - 2)
            if dh == -1:
                conds.append(rc >= w)
            elif dh == 1:
                conds.append(rc < (h - 1) * w)
            if conds:
                mask = conds[0]
                for cnd in conds[1:]:
                    mask = jnp.logical_and(mask, cnd)
                piece = jnp.where(mask, piece, jnp.zeros_like(piece))
            pieces.append(piece)
    return jnp.concatenate(pieces, axis=0), col


# --------------------------------- kernels ---------------------------------- #

def _shift_conv_kernel(x_ref, w_ref, b_ref, o_ref, *, h, w, m, tm, relu,
                       single_step):
    g0 = 0 if single_step else pl.program_id(0) * tm
    patches, col = _patches_from_ref(x_ref, g0, tm, h, w)
    acc = jnp.dot(w_ref[...], patches, preferred_element_type=jnp.float32)
    acc = acc + b_ref[...]
    if relu:
        acc = jnp.maximum(acc, 0.0)
    if m is not None:                               # zero the M-padding columns
        acc = jnp.where(col < m, acc, jnp.zeros_like(acc))
    o_ref[...] = acc.astype(o_ref.dtype)


def _shift_conv_res_kernel(x_ref, w_ref, b_ref, r_ref, o_ref, *, h, w, m, tm,
                           relu, single_step, res_offset):
    g0 = 0 if single_step else pl.program_id(0) * tm
    patches, col = _patches_from_ref(x_ref, g0, tm, h, w)
    acc = jnp.dot(w_ref[...], patches, preferred_element_type=jnp.float32)
    acc = acc + b_ref[...]
    res = r_ref[...].astype(jnp.float32)
    c_out, c_res = acc.shape[0], res.shape[0]
    if res_offset > 0 or c_out > res_offset + c_res:
        # option-'A' shortcut: add un-padded residual into the middle rows.
        res = jnp.concatenate(
            [jnp.zeros((res_offset, tm), jnp.float32), res,
             jnp.zeros((c_out - res_offset - c_res, tm), jnp.float32)], axis=0)
    acc = acc + res
    if relu:
        acc = jnp.maximum(acc, 0.0)
    if m is not None:
        acc = jnp.where(col < m, acc, jnp.zeros_like(acc))
    o_ref[...] = acc.astype(o_ref.dtype)


def _fused_block_kernel(x_ref, w1_ref, b1_ref, w2_ref, b2_ref, o_ref, mid_ref,
                        *, h, w, m, mpad, tm):
    """Identity basic block: conv1 -> VMEM scratch -> conv2 + shortcut + ReLU."""
    mid_ref[...] = jnp.zeros_like(mid_ref)          # halos + M-padding = 0
    mask_cols = (mpad != m)
    for i in range(mpad // tm):                     # small static unroll
        g0 = i * tm
        patches, col = _patches_from_ref(x_ref, g0, tm, h, w)
        acc = jnp.dot(w1_ref[...], patches, preferred_element_type=jnp.float32)
        acc = jnp.maximum(acc + b1_ref[...], 0.0)
        if mask_cols:
            acc = jnp.where(col < m, acc, jnp.zeros_like(acc))
        mid_ref[:, pl.ds(_HALO + g0, tm)] = acc.astype(mid_ref.dtype)
    for i in range(mpad // tm):
        g0 = i * tm
        patches, col = _patches_from_ref(mid_ref, g0, tm, h, w)
        acc = jnp.dot(w2_ref[...], patches, preferred_element_type=jnp.float32)
        acc = acc + b2_ref[...]
        acc = acc + x_ref[:, pl.ds(_HALO + g0, tm)].astype(jnp.float32)  # identity
        acc = jnp.maximum(acc, 0.0)
        if mask_cols:
            acc = jnp.where(col < m, acc, jnp.zeros_like(acc))
        o_ref[:, pl.ds(g0, tm)] = acc.astype(o_ref.dtype)


def _gemm_conv_kernel(w_ref, p_ref, b_ref, o_ref, *, relu, m, tm):
    acc = jnp.dot(w_ref[...], p_ref[...], preferred_element_type=jnp.float32)
    acc = acc + b_ref[...]
    if relu:
        acc = jnp.maximum(acc, 0.0)
    if m is not None:
        col = lax.broadcasted_iota(jnp.int32, (1, tm), 1) + pl.program_id(0) * tm
        acc = jnp.where(col < m, acc, jnp.zeros_like(acc))
    o_ref[...] = acc.astype(o_ref.dtype)


def _gap_fc_kernel(x_ref, pool_ref, w_ref, b_ref, o_ref):
    # GAP as an MXU matmul against a pooling matrix (no cross-lane reduce),
    # then the FC layer, in one kernel.
    pooled = jnp.dot(x_ref[...], pool_ref[...], preferred_element_type=jnp.float32)
    o_ref[...] = jnp.dot(w_ref[...], pooled,
                         preferred_element_type=jnp.float32) + b_ref[...]


# --------------------------------- wrappers --------------------------------- #

def conv3x3_shift(act, wk, bias, *, relu=True, residual=None, res_offset=0):
    """Stride-1 3x3 conv with in-kernel im2col, folded BN, optional residual."""
    c_in = act.data.shape[0]
    c_out = wk.shape[0]
    assert wk.shape[1] == 9 * c_in
    assert _is_pow2(act.h) and _is_pow2(act.w) and act.w + 1 <= _HALO
    xpad = jnp.pad(act.data, ((0, 0), (_HALO, _HALO)))
    l = xpad.shape[1]
    tm = _pick_tm(act.mpad)
    steps = act.mpad // tm
    m_valid = act.m if act.mpad != act.m else None
    common = dict(h=act.h, w=act.w, m=m_valid, tm=tm, relu=relu,
                  single_step=(steps == 1))
    in_specs = [pl.BlockSpec((c_in, l), lambda i: (0, 0)),        # resident
                pl.BlockSpec((c_out, 9 * c_in), lambda i: (0, 0)),
                pl.BlockSpec((c_out, 1), lambda i: (0, 0))]
    args = [xpad, wk, bias]
    if residual is not None:
        c_res = residual.shape[0]
        in_specs.append(pl.BlockSpec((c_res, tm), lambda i: (0, i)))
        args.append(residual)
        kernel = functools.partial(_shift_conv_res_kernel,
                                   res_offset=res_offset, **common)
    else:
        kernel = functools.partial(_shift_conv_kernel, **common)
    out = pl.pallas_call(
        kernel,
        out_shape=jax.ShapeDtypeStruct((c_out, act.mpad), jnp.bfloat16),
        grid=(steps,),
        in_specs=in_specs,
        out_specs=pl.BlockSpec((c_out, tm), lambda i: (0, i)),
        compiler_params=pltpu.CompilerParams(dimension_semantics=("parallel",)),
        cost_estimate=pl.CostEstimate(
            flops=2 * act.mpad * 9 * c_in * c_out, transcendentals=0,
            bytes_accessed=(xpad.size + wk.size + c_out * act.mpad
                            + (residual.size if residual is not None else 0)) * 2),
    )(*args)
    return FlatAct(out, act.n, act.h, act.w)


def fused_basic_block(act, p):
    """Identity residual block (conv1+conv2+shortcut+ReLUs) in one pallas_call."""
    c = act.data.shape[0]
    assert c == p["planes"] and p["w1"].shape[1] == 9 * c
    assert _is_pow2(act.h) and _is_pow2(act.w) and act.w + 1 <= _HALO
    xpad = jnp.pad(act.data, ((0, 0), (_HALO, _HALO)))
    l = xpad.shape[1]
    tm = _pick_tm(act.mpad)
    kernel = functools.partial(_fused_block_kernel, h=act.h, w=act.w,
                               m=act.m, mpad=act.mpad, tm=tm)
    out = pl.pallas_call(
        kernel,
        out_shape=jax.ShapeDtypeStruct((c, act.mpad), jnp.bfloat16),
        grid=(1,),
        in_specs=[pl.BlockSpec((c, l), lambda i: (0, 0)),
                  pl.BlockSpec(p["w1"].shape, lambda i: (0, 0)),
                  pl.BlockSpec((c, 1), lambda i: (0, 0)),
                  pl.BlockSpec(p["w2"].shape, lambda i: (0, 0)),
                  pl.BlockSpec((c, 1), lambda i: (0, 0))],
        out_specs=pl.BlockSpec((c, act.mpad), lambda i: (0, 0)),
        scratch_shapes=[pltpu.VMEM((c, l), jnp.bfloat16)],
        compiler_params=pltpu.CompilerParams(dimension_semantics=("arbitrary",)),
        cost_estimate=pl.CostEstimate(
            flops=2 * 2 * act.mpad * 9 * c * c, transcendentals=0,
            bytes_accessed=(xpad.size + 2 * p["w1"].size + c * act.mpad) * 2),
    )(xpad, p["w1"], p["b1"], p["w2"], p["b2"])
    return FlatAct(out, act.n, act.h, act.w)


def _im2col_tapmajor(x_cnhw, stride, ho, wo):
    """[C, N, H, W] -> [9*C, M] bf16 patches, K ordered (tap, ci)."""
    c, n = x_cnhw.shape[0], x_cnhw.shape[1]
    xp = jnp.pad(x_cnhw, ((0, 0), (0, 0), (1, 1), (1, 1))).astype(jnp.bfloat16)
    cols = []
    for kh in range(3):
        for kw in range(3):
            cols.append(xp[:, :, kh:kh + stride * (ho - 1) + 1:stride,
                              kw:kw + stride * (wo - 1) + 1:stride])
    patches = jnp.stack(cols, axis=0)                    # [9, C, N, Ho, Wo]
    return patches.reshape(9 * c, n * ho * wo)


def conv3x3_gemm(x_cnhw, wk, bias, *, stride=1, relu=True):
    """Fallback path (stem conv / stride-2 convs): XLA im2col + tiled GEMM."""
    c_in, n, h, w = x_cnhw.shape
    c_out, k_pad = wk.shape
    ho = (h + 2 - 3) // stride + 1
    wo = (w + 2 - 3) // stride + 1
    m = n * ho * wo
    mpad = _round_up(m, 128)
    patches = _im2col_tapmajor(x_cnhw, stride, ho, wo)
    if patches.shape[0] != k_pad:
        patches = jnp.pad(patches, ((0, k_pad - patches.shape[0]), (0, 0)))
    if mpad != m:
        patches = jnp.pad(patches, ((0, 0), (0, mpad - m)))
    tm = _pick_tm(mpad)
    m_valid = m if mpad != m else None
    kernel = functools.partial(_gemm_conv_kernel, relu=relu, m=m_valid, tm=tm)
    out = pl.pallas_call(
        kernel,
        out_shape=jax.ShapeDtypeStruct((c_out, mpad), jnp.bfloat16),
        grid=(mpad // tm,),
        in_specs=[pl.BlockSpec((c_out, k_pad), lambda i: (0, 0)),
                  pl.BlockSpec((k_pad, tm), lambda i: (0, i)),
                  pl.BlockSpec((c_out, 1), lambda i: (0, 0))],
        out_specs=pl.BlockSpec((c_out, tm), lambda i: (0, i)),
        compiler_params=pltpu.CompilerParams(dimension_semantics=("parallel",)),
        cost_estimate=pl.CostEstimate(
            flops=2 * mpad * k_pad * c_out, transcendentals=0,
            bytes_accessed=(c_out * k_pad + k_pad * mpad + c_out * mpad) * 2),
    )(wk, patches, bias)
    return FlatAct(out, n, ho, wo)


def gap_fc(act, fc_w, fc_b_col):
    """Fused global-average-pool + fully-connected layer."""
    c = act.data.shape[0]
    nc = fc_w.shape[0]
    hw = act.h * act.w
    col = jnp.arange(act.mpad, dtype=jnp.int32)
    sel = (col[:, None] < act.m) & ((col[:, None] // hw)
                                    == jnp.arange(act.n, dtype=jnp.int32)[None, :])
    pool = jnp.where(sel, 1.0 / hw, 0.0).astype(jnp.bfloat16)     # [Mpad, N]
    logits_t = pl.pallas_call(
        _gap_fc_kernel,
        out_shape=jax.ShapeDtypeStruct((nc, act.n), jnp.float32),
        grid=(1,),
        in_specs=[pl.BlockSpec((c, act.mpad), lambda i: (0, 0)),
                  pl.BlockSpec((act.mpad, act.n), lambda i: (0, 0)),
                  pl.BlockSpec((nc, c), lambda i: (0, 0)),
                  pl.BlockSpec((nc, 1), lambda i: (0, 0))],
        out_specs=pl.BlockSpec((nc, act.n), lambda i: (0, 0)),
        compiler_params=pltpu.CompilerParams(dimension_semantics=("arbitrary",)),
    )(act.data, pool, fc_w, fc_b_col)
    return logits_t.T                                            # [N, classes]


# --------------------------------- network ---------------------------------- #

def basic_block(act, p):
    identity = (p["stride"] == 1 and p["in_planes"] == p["planes"])
    pow2 = _is_pow2(act.h) and _is_pow2(act.w)
    if identity and pow2 and act.mpad // _pick_tm(act.mpad) <= 8:
        return fused_basic_block(act, p)
    # general path: conv1 (possibly stride 2 via im2col GEMM) then conv2+res.
    if p["stride"] == 1 and pow2:
        mid = conv3x3_shift(act, p["w1"], p["b1"], relu=True)
    else:
        mid = conv3x3_gemm(act.spatial(), p["w1"], p["b1"],
                           stride=p["stride"], relu=True)
    if p["stride"] != 1 or p["in_planes"] != p["planes"]:
        sc = act.spatial()[:, :, ::2, ::2]            # option-'A' shortcut
        sc = sc.reshape(sc.shape[0], mid.m)
        if mid.mpad != mid.m:
            sc = jnp.pad(sc, ((0, 0), (0, mid.mpad - mid.m)))
        res_offset = p["planes"] // 4
    else:
        sc = act.data
        res_offset = 0
    return conv3x3_shift(mid, p["w2"], p["b2"], relu=True,
                         residual=sc, res_offset=res_offset)


def resnet20_forward(plan, images_nchw):
    n, _, h, w = images_nchw.shape
    if not (_is_pow2(h) and _is_pow2(w)):
        raise NotImplementedError("shift-conv path needs power-of-two H, W")
    x_cnhw = jnp.transpose(images_nchw, (1, 0, 2, 3)).astype(jnp.float32)
    act = conv3x3_gemm(x_cnhw, plan["w1"], plan["b1"], stride=1, relu=True)
    for li in (1, 2, 3):
        for blk in plan[f"layer{li}"]:
            act = basic_block(act, blk)
    return gap_fc(act, plan["fc_w"], plan["fc_b"])    # [N, num_classes]


# ------------------------------ parameter prep ------------------------------ #

def _fold_conv_tapmajor(w, gamma, beta, mean, var, eps=1e-5):
    """conv [Cout,Cin,3,3] + eval-mode BN -> bf16 [Cout, Kpad] (tap-major K),
    f32 bias [Cout, 1].  bias = beta - scale*running_mean (general fold)."""
    c_out, c_in = w.shape[0], w.shape[1]
    scale = gamma / jnp.sqrt(var + eps)
    bias = beta - scale * mean
    wk = jnp.transpose(w, (0, 2, 3, 1)).reshape(c_out, 9 * c_in)
    wk = wk * scale.reshape(c_out, 1)
    k_pad = _round_up(9 * c_in, 16)                   # bf16 sublane packing
    if k_pad != 9 * c_in:
        wk = jnp.pad(wk, ((0, 0), (0, k_pad - 9 * c_in)))
    return wk.astype(jnp.bfloat16), bias.reshape(c_out, 1).astype(jnp.float32)


def prepare_params(params):
    plan = {}
    plan["w1"], plan["b1"] = _fold_conv_tapmajor(params["conv1"], *params["bn1"])
    for li in (1, 2, 3):
        blocks = []
        for p in params[f"layer{li}"]:
            w1, b1 = _fold_conv_tapmajor(p["conv1"], *p["bn1"])
            w2, b2 = _fold_conv_tapmajor(p["conv2"], *p["bn2"])
            blocks.append({"w1": w1, "b1": b1, "w2": w2, "b2": b2,
                           "stride": p["stride"], "in_planes": p["in_planes"],
                           "planes": p["planes"]})
        plan[f"layer{li}"] = blocks
    plan["fc_w"] = params["fc_w"].astype(jnp.float32)
    plan["fc_b"] = params["fc_b"].reshape(-1, 1).astype(jnp.float32)
    return plan


def init_params(key, num_classes=100):
    keys = iter(jax.random.split(key, 64))

    def conv(cout, cin):
        fan_in = cin * 9
        return jax.random.normal(next(keys), (cout, cin, 3, 3),
                                 jnp.float32) / math.sqrt(fan_in)

    def bn(c):
        kg, kb, km, kv = jax.random.split(next(keys), 4)
        gamma = 1.0 + 0.05 * jax.random.normal(kg, (c,), jnp.float32)
        beta = 0.05 * jax.random.normal(kb, (c,), jnp.float32)
        running_mean = 0.05 * jax.random.normal(km, (c,), jnp.float32)
        running_var = 1.0 + 0.1 * jax.random.uniform(kv, (c,), jnp.float32)
        return gamma, beta, running_mean, running_var

    params = {"conv1": conv(16, 3), "bn1": bn(16)}
    in_planes = 16
    for li, planes in enumerate((16, 32, 64), start=1):
        blocks = []
        for bi in range(3):
            stride = 2 if (li > 1 and bi == 0) else 1
            blocks.append({"conv1": conv(planes, in_planes), "bn1": bn(planes),
                           "conv2": conv(planes, planes), "bn2": bn(planes),
                           "stride": stride, "in_planes": in_planes,
                           "planes": planes})
            in_planes = planes
        params[f"layer{li}"] = blocks
    params["fc_w"] = jax.random.normal(next(keys), (num_classes, 64),
                                       jnp.float32) / math.sqrt(64)
    params["fc_b"] = 0.01 * jax.random.normal(next(keys), (num_classes,),
                                              jnp.float32)
    return params


# ----------------------------------- main ------------------------------------ #

if __name__ == "__main__":
    key = jax.random.PRNGKey(0)
    pkey, xkey = jax.random.split(key)
    params = init_params(pkey, num_classes=100)
    plan = prepare_params(params)          # fold BN, tap-major bf16 weights

    # Small CIFAR-like input: batch=2, channels=3, spatial=16x16 (NCHW).
    x = jax.random.normal(xkey, (2, 3, 16, 16), jnp.float32)

    fwd = jax.jit(lambda a: resnet20_forward(plan, a))
    logits = jax.block_until_ready(fwd(x))
    assert logits.shape == (2, 100) and logits.dtype == jnp.float32
    assert bool(jnp.all(jnp.isfinite(logits)))
    print("KERNEL_OK")
</pallas_src>

<mosaic_0001>
module attributes {stable_mosaic.version = 11 : i64} {
  func.func @_gemm_conv_kernel(%arg0: i32, %arg1: memref<16x32xbf16, #tpu.memory_space<vmem>>, %arg2: memref<32x256xbf16, #tpu.memory_space<vmem>>, %arg3: memref<16x1xf32, #tpu.memory_space<vmem>>, %arg4: memref<16x256xbf16, #tpu.memory_space<vmem>>) attributes {dimension_semantics = [#tpu.dimension_semantics<parallel>], iteration_bounds = array<i64: 2>, scalar_prefetch = 0 : i64, scratch_operands = 0 : i64, tpu.core_type = #tpu.core_type<tc>, window_params = [{pipeline_mode = #tpu.pipeline_mode<synchronous>, transform_indices = @transform_0, window_bounds = array<i64: 16, 32>}, {transform_indices = @transform_1, window_bounds = array<i64: 32, 256>}, {pipeline_mode = #tpu.pipeline_mode<synchronous>, transform_indices = @transform_2, window_bounds = array<i64: 16, 1>}, {transform_indices = @transform_3, window_bounds = array<i64: 16, 256>}]} {
    %c0 = arith.constant 0 : index
    %c0_0 = arith.constant 0 : index
    %0 = vector.load %arg1[%c0, %c0_0] : memref<16x32xbf16, #tpu.memory_space<vmem>>, vector<16x32xbf16>
    %c0_1 = arith.constant 0 : index
    %c0_2 = arith.constant 0 : index
    %1 = vector.load %arg2[%c0_1, %c0_2] : memref<32x256xbf16, #tpu.memory_space<vmem>>, vector<32x256xbf16>
    %cst = arith.constant dense<0.000000e+00> : vector<16x256xf32>
    %2 = tpu.matmul %0, %1, %cst {dimension_numbers = #tpu.dot_dimension_numbers<[1], [0], [0], [1], [0, 0, 1, 1], [], []>} : vector<16x32xbf16>, vector<32x256xbf16>, vector<16x256xf32> -> vector<16x256xf32>
    %c0_3 = arith.constant 0 : index
    %c0_4 = arith.constant 0 : index
    %3 = vector.load %arg3[%c0_3, %c0_4] : memref<16x1xf32, #tpu.memory_space<vmem>>, vector<16x1xf32>
    %4 = vector.broadcast %3 : vector<16x1xf32> to vector<16x256xf32>
    %5 = arith.addf %2, %4 : vector<16x256xf32>
    %cst_5 = arith.constant 0.000000e+00 : f32
    %6 = vector.broadcast %cst_5 : f32 to vector<16x256xf32>
    %7 = arith.maximumf %5, %6 : vector<16x256xf32>
    %8 = arith.truncf %7 : vector<16x256xf32> to vector<16x256xbf16>
    %c0_6 = arith.constant 0 : index
    %c0_7 = arith.constant 0 : index
    %9 = vector.load %arg4[%c0_6, %c0_7] : memref<16x256xbf16, #tpu.memory_space<vmem>>, vector<16x256xbf16>
    tpu.vector_store %arg4[%c0_6, %c0_7], %8 {strides = array<i32>} : memref<16x256xbf16, #tpu.memory_space<vmem>>, vector<16x256xbf16>,
    return
  }
  func.func @transform_0(%arg0: i32) -> (i32, i32) {
    %c0_i32 = arith.constant 0 : i32
    %c0_i32_0 = arith.constant 0 : i32
    %c0_i32_1 = arith.constant 0 : i32
    return %c0_i32, %c0_i32_0 : i32, i32
  }
  func.func @transform_1(%arg0: i32) -> (i32, i32) {
    %c0_i32 = arith.constant 0 : i32
    %c0_i32_0 = arith.constant 0 : i32
    return %c0_i32, %arg0 : i32, i32
  }
  func.func @transform_2(%arg0: i32) -> (i32, i32) {
    %c0_i32 = arith.constant 0 : i32
    %c0_i32_0 = arith.constant 0 : i32
    %c0_i32_1 = arith.constant 0 : i32
    return %c0_i32, %c0_i32_0 : i32, i32
  }
  func.func @transform_3(%arg0: i32) -> (i32, i32) {
    %c0_i32 = arith.constant 0 : i32
    %c0_i32_0 = arith.constant 0 : i32
    return %c0_i32, %arg0 : i32, i32
  }
}

module attributes {stable_mosaic.version = 11 : i64} {
  func.func @_fused_block_kernel(%arg0: i32, %arg1: memref<16x768xbf16, #tpu.memory_space<vmem>>, %arg2: memref<16x144xbf16, #tpu.memory_space<vmem>>, %arg3: memref<16x1xf32, #tpu.memory_space<vmem>>, %arg4: memref<16x144xbf16, #tpu.memory_space<vmem>>, %arg5: memref<16x1xf32, #tpu.memory_space<vmem>>, %arg6: memref<16x512xbf16, #tpu.memory_space<vmem>>, %arg7: memref<16x768xbf16, #tpu.memory_space<vmem>>) attributes {dimension_semantics = [#tpu.dimension_semantics<arbitrary>], iteration_bounds = array<i64: 1>, scalar_prefetch = 0 : i64, scratch_operands = 1 : i64, tpu.core_type = #tpu.core_type<tc>, window_params = [{pipeline_mode = #tpu.pipeline_mode<synchronous>, transform_indices = @transform_0, window_bounds = array<i64: 16, 768>}, {pipeline_mode = #tpu.pipeline_mode<synchronous>, transform_indices = @transform_1, window_bounds = array<i64: 16, 144>}, {pipeline_mode = #tpu.pipeline_mode<synchronous>, transform_indices = @transform_2, window_bounds = array<i64: 16, 1>}, {pipeline_mode = #tpu.pipeline_mode<synchronous>, transform_indices = @transform_3, window_bounds = array<i64: 16, 144>}, {pipeline_mode = #tpu.pipeline_mode<synchronous>, transform_indices = @transform_4, window_bounds = array<i64: 16, 1>}, {pipeline_mode = #tpu.pipeline_mode<synchronous>, transform_indices = @transform_5, window_bounds = array<i64: 16, 512>}]} {
    %cst = arith.constant 0.000000e+00 : bf16
    %0 = vector.broadcast %cst : bf16 to vector<16x768xbf16>
    %c0 = arith.constant 0 : index
    %c0_0 = arith.constant 0 : index
    %1 = vector.load %arg7[%c0, %c0_0] : memref<16x768xbf16, #tpu.memory_space<vmem>>, vector<16x768xbf16>
    tpu.vector_store %arg7[%c0, %c0_0], %0 {strides = array<i32>} : memref<16x768xbf16, #tpu.memory_space<vmem>>, vector<16x768xbf16>,
    %2 = tpu.iota {dimensions = array<i32: 1>} : vector<1x256xi32>
    %c0_i32 = arith.constant 0 : i32
    %3 = vector.broadcast %c0_i32 : i32 to vector<1x256xi32>
    %4 = arith.addi %2, %3 : vector<1x256xi32>
    %c15_i32 = arith.constant 15 : i32
    %5 = vector.broadcast %c15_i32 : i32 to vector<1x256xi32>
    %6 = arith.andi %4, %5 : vector<1x256xi32>
    %c255_i32 = arith.constant 255 : i32
    %7 = vector.broadcast %c255_i32 : i32 to vector<1x256xi32>
    %8 = arith.andi %4, %7 : vector<1x256xi32>
    %c0_1 = arith.constant 0 : index
    %c111 = arith.constant 111 : index
    %9 = vector.load %arg1[%c0_1, %c111] : memref<16x768xbf16, #tpu.memory_space<vmem>>, vector<16x256xbf16>
    %c1_i32 = arith.constant 1 : i32
    %10 = vector.broadcast %c1_i32 : i32 to vector<1x256xi32>
    %11 = arith.cmpi sge, %6, %10 : vector<1x256xi32>
    %c16_i32 = arith.constant 16 : i32
    %12 = vector.broadcast %c16_i32 : i32 to vector<1x256xi32>
    %13 = arith.cmpi sge, %8, %12 : vector<1x256xi32>
    %14 = arith.andi %11, %13 : vector<1x256xi1>
    %cst_2 = arith.constant 0.000000e+00 : bf16
    %15 = vector.broadcast %cst_2 : bf16 to vector<16x256xbf16>
    %16 = vector.shape_cast %14 : vector<1x256xi1> to vector<1x256xi1>
    %17 = vector.broadcast %16 : vector<1x256xi1> to vector<16x256xi1>
    %18 = arith.select %17, %9, %15 : vector<16x256xi1>, vector<16x256xbf16>
    %c0_3 = arith.constant 0 : index
    %c112 = arith.constant 112 : index
    %19 = vector.load %arg1[%c0_3, %c112] : memref<16x768xbf16, #tpu.memory_space<vmem>>, vector<16x256xbf16>
    %c16_i32_4 = arith.constant 16 : i32
    %20 = vector.broadcast %c16_i32_4 : i32 to vector<1x256xi32>
    %21 = arith.cmpi sge, %8, %20 : vector<1x256xi32>
    %cst_5 = arith.constant 0.000000e+00 : bf16
    %22 = vector.broadcast %cst_5 : bf16 to vector<16x256xbf16>
    %23 = vector.shape_cast %21 : vector<1x256xi1> to vector<1x256xi1>
    %24 = vector.broadcast %23 : vector<1x256xi1> to vector<16x256xi1>
    %25 = arith.select %24, %19, %22 : vector<16x256xi1>, vector<16x256xbf16>
    %c0_6 = arith.constant 0 : index
    %c113 = arith.constant 113 : index
    %26 = vector.load %arg1[%c0_6, %c113] : memref<16x768xbf16, #tpu.memory_space<vmem>>, vector<16x256xbf16>
    %c14_i32 = arith.constant 14 : i32
    %27 = vector.broadcast %c14_i32 : i32 to vector<1x256xi32>
    %28 = arith.cmpi sle, %6, %27 : vector<1x256xi32>
    %c16_i32_7 = arith.constant 16 : i32
    %29 = vector.broadcast %c16_i32_7 : i32 to vector<1x256xi32>
    %30 = arith.cmpi sge, %8, %29 : vector<1x256xi32>
    %31 = arith.andi %28, %30 : vector<1x256xi1>
    %cst_8 = arith.constant 0.000000e+00 : bf16
    %32 = vector.broadcast %cst_8 : bf16 to vector<16x256xbf16>
    %33 = vector.shape_cast %31 : vector<1x256xi1> to vector<1x256xi1>
    %34 = vector.broadcast %33 : vector<1x256xi1> to vector<16x256xi1>
    %35 = arith.select %34, %26, %32 : vector<16x256xi1>, vector<16x256xbf16>
    %c0_9 = arith.constant 0 : index
    %c127 = arith.constant 127 : index
    %36 = vector.load %arg1[%c0_9, %c127] : memref<16x768xbf16, #tpu.memory_space<vmem>>, vector<16x256xbf16>
    %c1_i32_10 = arith.constant 1 : i32
    %37 = vector.broadcast %c1_i32_10 : i32 to vector<1x256xi32>
    %38 = arith.cmpi sge, %6, %37 : vector<1x256xi32>
    %cst_11 = arith.constant 0.000000e+00 : bf16
    %39 = vector.broadcast %cst_11 : bf16 to vector<16x256xbf16>
    %40 = vector.shape_cast %38 : vector<1x256xi1> to vector<1x256xi1>
    %41 = vector.broadcast %40 : vector<1x256xi1> to vector<16x256xi1>
    %42 = arith.select %41, %36, %39 : vector<16x256xi1>, vector<16x256xbf16>
    %c0_12 = arith.constant 0 : index
    %c128 = arith.constant 128 : index
    %43 = vector.load %arg1[%c0_12, %c128] : memref<16x768xbf16, #tpu.memory_space<vmem>>, vector<16x256xbf16>
    %c0_13 = arith.constant 0 : index
    %c129 = arith.constant 129 : index
    %44 = vector.load %arg1[%c0_13, %c129] : memref<16x768xbf16, #tpu.memory_space<vmem>>, vector<16x256xbf16>
    %c14_i32_14 = arith.constant 14 : i32
    %45 = vector.broadcast %c14_i32_14 : i32 to vector<1x256xi32>
    %46 = arith.cmpi sle, %6, %45 : vector<1x256xi32>
    %cst_15 = arith.constant 0.000000e+00 : bf16
    %47 = vector.broadcast %cst_15 : bf16 to vector<16x256xbf16>
    %48 = vector.shape_cast %46 : vector<1x256xi1> to vector<1x256xi1>
    %49 = vector.broadcast %48 : vector<1x256xi1> to vector<16x256xi1>
    %50 = arith.select %49, %44, %47 : vector<16x256xi1>, vector<16x256xbf16>
    %c0_16 = arith.constant 0 : index
    %c143 = arith.constant 143 : index
    %51 = vector.load %arg1[%c0_16, %c143] : memref<16x768xbf16, #tpu.memory_space<vmem>>, vector<16x256xbf16>
    %c1_i32_17 = arith.constant 1 : i32
    %52 = vector.broadcast %c1_i32_17 : i32 to vector<1x256xi32>
    %53 = arith.cmpi sge, %6, %52 : vector<1x256xi32>
    %c240_i32 = arith.constant 240 : i32
    %54 = vector.broadcast %c240_i32 : i32 to vector<1x256xi32>
    %55 = arith.cmpi slt, %8, %54 : vector<1x256xi32>
    %56 = arith.andi %53, %55 : vector<1x256xi1>
    %cst_18 = arith.constant 0.000000e+00 : bf16
    %57 = vector.broadcast %cst_18 : bf16 to vector<16x256xbf16>
    %58 = vector.shape_cast %56 : vector<1x256xi1> to vector<1x256xi1>
    %59 = vector.broadcast %58 : vector<1x256xi1> to vector<16x256xi1>
    %60 = arith.select %59, %51, %57 : vector<16x256xi1>, vector<16x256xbf16>
    %c0_19 = arith.constant 0 : index
    %c144 = arith.constant 144 : index
    %61 = vector.load %arg1[%c0_19, %c144] : memref<16x768xbf16, #tpu.memory_space<vmem>>, vector<16x256xbf16>
    %c240_i32_20 = arith.constant 240 : i32
    %62 = vector.broadcast %c240_i32_20 : i32 to vector<1x256xi32>
    %63 = arith.cmpi slt, %8, %62 : vector<1x256xi32>
    %cst_21 = arith.constant 0.000000e+00 : bf16
    %64 = vector.broadcast %cst_21 : bf16 to vector<16x256xbf16>
    %65 = vector.shape_cast %63 : vector<1x256xi1> to vector<1x256xi1>
    %66 = vector.broadcast %65 : vector<1x256xi1> to vector<16x256xi1>
    %67 = arith.select %66, %61, %64 : vector<16x256xi1>, vector<16x256xbf16>
    %c0_22 = arith.constant 0 : index
    %c145 = arith.constant 145 : index
    %68 = vector.load %arg1[%c0_22, %c145] : memref<16x768xbf16, #tpu.memory_space<vmem>>, vector<16x256xbf16>
    %c14_i32_23 = arith.constant 14 : i32
    %69 = vector.broadcast %c14_i32_23 : i32 to vector<1x256xi32>
    %70 = arith.cmpi sle, %6, %69 : vector<1x256xi32>
    %c240_i32_24 = arith.constant 240 : i32
    %71 = vector.broadcast %c240_i32_24 : i32 to vector<1x256xi32>
    %72 = arith.cmpi slt, %8, %71 : vector<1x256xi32>
    %73 = arith.andi %70, %72 : vector<1x256xi1>
    %cst_25 = arith.constant 0.000000e+00 : bf16
    %74 = vector.broadcast %cst_25 : bf16 to vector<16x256xbf16>
    %75 = vector.shape_cast %73 : vector<1x256xi1> to vector<1x256xi1>
    %76 = vector.broadcast %75 : vector<1x256xi1> to vector<16x256xi1>
    %77 = arith.select %76, %68, %74 : vector<16x256xi1>, vector<16x256xbf16>
    %78 = tpu.concatenate %18, %25, %35, %42, %43, %50, %60, %67, %77 in 0 : vector<16x256xbf16>, vector<16x256xbf16>, vector<16x256xbf16>, vector<16x256xbf16>, vector<16x256xbf16>, vector<16x256xbf16>, vector<16x256xbf16>, vector<16x256xbf16>, vector<16x256xbf16> -> vector<144x256xbf16>
    %c0_26 = arith.constant 0 : index
    %c0_27 = arith.constant 0 : index
    %79 = vector.load %arg2[%c0_26, %c0_27] : memref<16x144xbf16, #tpu.memory_space<vmem>>, vector<16x144xbf16>
    %cst_28 = arith.constant dense<0.000000e+00> : vector<16x256xf32>
    %80 = tpu.matmul %79, %78, %cst_28 {dimension_numbers = #tpu.dot_dimension_numbers<[1], [0], [0], [1], [0, 0, 1, 1], [], []>} : vector<16x144xbf16>, vector<144x256xbf16>, vector<16x256xf32> -> vector<16x256xf32>
    %c0_29 = arith.constant 0 : index
    %c0_30 = arith.constant 0 : index
    %81 = vector.load %arg3[%c0_29, %c0_30] : memref<16x1xf32, #tpu.memory_space<vmem>>, vector<16x1xf32>
    %82 = vector.broadcast %81 : vector<16x1xf32> to vector<16x256xf32>
    %83 = arith.addf %80, %82 : vector<16x256xf32>
    %cst_31 = arith.constant 0.000000e+00 : f32
    %84 = vector.broadcast %cst_31 : f32 to vector<16x256xf32>
    %85 = arith.maximumf %83, %84 : vector<16x256xf32>
    %86 = arith.truncf %85 : vector<16x256xf32> to vector<16x256xbf16>
    %c0_32 = arith.constant 0 : index
    %c128_33 = arith.constant 128 : index
    %87 = vector.load %arg7[%c0_32, %c128_33] : memref<16x768xbf16, #tpu.memory_space<vmem>>, vector<16x256xbf16>
    tpu.vector_store %arg7[%c0_32, %c128_33], %86 {strides = array<i32>} : memref<16x768xbf16, #tpu.memory_space<vmem>>, vector<16x256xbf16>,
    %88 = tpu.iota {dimensions = array<i32: 1>} : vector<1x256xi32>
    %c256_i32 = arith.constant 256 : i32
    %89 = vector.broadcast %c256_i32 : i32 to vector<1x256xi32>
    %90 = arith.addi %88, %89 : vector<1x256xi32>
    %c15_i32_34 = arith.constant 15 : i32
    %91 = vector.broadcast %c15_i32_34 : i32 to vector<1x256xi32>
    %92 = arith.andi %90, %91 : vector<1x256xi32>
    %c255_i32_35 = arith.constant 255 : i32
    %93 = vector.broadcast %c255_i32_35 : i32 to vector<1x256xi32>
    %94 = arith.andi %90, %93 : vector<1x256xi32>
    %c0_36 = arith.constant 0 : index
    %c367 = arith.constant 367 : index
    %95 = vector.load %arg1[%c0_36, %c367] : memref<16x768xbf16, #tpu.memory_space<vmem>>, vector<16x256xbf16>
    %c1_i32_37 = arith.constant 1 : i32
    %96 = vector.broadcast %c1_i32_37 : i32 to vector<1x256xi32>
    %97 = arith.cmpi sge, %92, %96 : vector<1x256xi32>
    %c16_i32_38 = arith.constant 16 : i32
    %98 = vector.broadcast %c16_i32_38 : i32 to vector<1x256xi32>
    %99 = arith.cmpi sge, %94, %98 : vector<1x256xi32>
    %100 = arith.andi %97, %99 : vector<1x256xi1>
    %cst_39 = arith.constant 0.000000e+00 : bf16
    %101 = vector.broadcast %cst_39 : bf16 to vector<16x256xbf16>
    %102 = vector.shape_cast %100 : vector<1x256xi1> to vector<1x256xi1>
    %103 = vector.broadcast %102 : vector<1x256xi1> to vector<16x256xi1>
    %104 = arith.select %103, %95, %101 : vector<16x256xi1>, vector<16x256xbf16>
    %c0_40 = arith.constant 0 : index
    %c368 = arith.constant 368 : index
    %105 = vector.load %arg1[%c0_40, %c368] : memref<16x768xbf16, #tpu.memory_space<vmem>>, vector<16x256xbf16>
    %c16_i32_41 = arith.constant 16 : i32
    %106 = vector.broadcast %c16_i32_41 : i32 to vector<1x256xi32>
    %107 = arith.cmpi sge, %94, %106 : vector<1x256xi32>
    %cst_42 = arith.constant 0.000000e+00 : bf16
    %108 = vector.broadcast %cst_42 : bf16 to vector<16x256xbf16>
    %109 = vector.shape_cast %107 : vector<1x256xi1> to vector<1x256xi1>
    %110 = vector.broadcast %109 : vector<1x256xi1> to vector<16x256xi1>
    %111 = arith.select %110, %105, %108 : vector<16x256xi1>, vector<16x256xbf16>
    %c0_43 = arith.constant 0 : index
    %c369 = arith.constant 369 : index
    %112 = vector.load %arg1[%c0_43, %c369] : memref<16x768xbf16, #tpu.memory_space<vmem>>, vector<16x256xbf16>
    %c14_i32_44 = arith.constant 14 : i32
    %113 = vector.broadcast %c14_i32_44 : i32 to vector<1x256xi32>
    %114 = arith.cmpi sle, %92, %113 : vector<1x256xi32>
    %c16_i32_45 = arith.constant 16 : i32
    %115 = vector.broadcast %c16_i32_45 : i32 to vector<1x256xi32>
    %116 = arith.cmpi sge, %94, %115 : vector<1x256xi32>
    %117 = arith.andi %114, %116 : vector<1x256xi1>
    %cst_46 = arith.constant 0.000000e+00 : bf16
    %118 = vector.broadcast %cst_46 : bf16 to vector<16x256xbf16>
    %119 = vector.shape_cast %117 : vector<1x256xi1> to vector<1x256xi1>
    %120 = vector.broadcast %119 : vector<1x256xi1> to vector<16x256xi1>
    %121 = arith.select %120, %112, %118 : vector<16x256xi1>, vector<16x256xbf16>
    %c0_47 = arith.constant 0 : index
    %c383 = arith.constant 383 : index
    %122 = vector.load %arg1[%c0_47, %c383] : memref<16x768xbf16, #tpu.memory_space<vmem>>, vector<16x256xbf16>
    %c1_i32_48 = arith.constant 1 : i32
    %123 = vector.broadcast %c1_i32_48 : i32 to vector<1x256xi32>
    %124 = arith.cmpi sge, %92, %123 : vector<1x256xi32>
    %cst_49 = arith.constant 0.000000e+00 : bf16
    %125 = vector.broadcast %cst_49 : bf16 to vector<16x256xbf16>
    %126 = vector.shape_cast %124 : vector<1x256xi1> to vector<1x256xi1>
    %127 = vector.broadcast %126 : vector<1x256xi1> to vector<16x256xi1>
    %128 = arith.select %127, %122, %125 : vector<16x256xi1>, vector<16x256xbf16>
    %c0_50 = arith.constant 0 : index
    %c384 = arith.constant 384 : index
    %129 = vector.load %arg1[%c0_50, %c384] : memref<16x768xbf16, #tpu.memory_space<vmem>>, vector<16x256xbf16>
    %c0_51 = arith.constant 0 : index
    %c385 = arith.constant 385 : index
    %130 = vector.load %arg1[%c0_51, %c385] : memref<16x768xbf16, #tpu.memory_space<vmem>>, vector<16x256xbf16>
    %c14_i32_52 = arith.constant 14 : i32
    %131 = vector.broadcast %c14_i32_52 : i32 to vector<1x256xi32>
    %132 = arith.cmpi sle, %92, %131 : vector<1x256xi32>
    %cst_53 = arith.constant 0.000000e+00 : bf16
    %133 = vector.broadcast %cst_53 : bf16 to vector<16x256xbf16>
    %134 = vector.shape_cast %132 : vector<1x256xi1> to vector<1x256xi1>
    %135 = vector.broadcast %134 : vector<1x256xi1> to vector<16x256xi1>
    %136 = arith.select %135, %130, %133 : vector<16x256xi1>, vector<16x256xbf16>
    %c0_54 = arith.constant 0 : index
    %c399 = arith.constant 399 : index
    %137 = vector.load %arg1[%c0_54, %c399] : memref<16x768xbf16, #tpu.memory_space<vmem>>, vector<16x256xbf16>
    %c1_i32_55 = arith.constant 1 : i32
    %138 = vector.broadcast %c1_i32_55 : i32 to vector<1x256xi32>
    %139 = arith.cmpi sge, %92, %138 : vector<1x256xi32>
    %c240_i32_56 = arith.constant 240 : i32
    %140 = vector.broadcast %c240_i32_56 : i32 to vector<1x256xi32>
    %141 = arith.cmpi slt, %94, %140 : vector<1x256xi32>
    %142 = arith.andi %139, %141 : vector<1x256xi1>
    %cst_57 = arith.constant 0.000000e+00 : bf16
    %143 = vector.broadcast %cst_57 : bf16 to vector<16x256xbf16>
    %144 = vector.shape_cast %142 : vector<1x256xi1> to vector<1x256xi1>
    %145 = vector.broadcast %144 : vector<1x256xi1> to vector<16x256xi1>
    %146 = arith.select %145, %137, %143 : vector<16x256xi1>, vector<16x256xbf16>
    %c0_58 = arith.constant 0 : index
    %c400 = arith.constant 400 : index
    %147 = vector.load %arg1[%c0_58, %c400] : memref<16x768xbf16, #tpu.memory_space<vmem>>, vector<16x256xbf16>
    %c240_i32_59 = arith.constant 240 : i32
    %148 = vector.broadcast %c240_i32_59 : i32 to vector<1x256xi32>
    %149 = arith.cmpi slt, %94, %148 : vector<1x256xi32>
    %cst_60 = arith.constant 0.000000e+00 : bf16
    %150 = vector.broadcast %cst_60 : bf16 to vector<16x256xbf16>
    %151 = vector.shape_cast %149 : vector<1x256xi1> to vector<1x256xi1>
    %152 = vector.broadcast %151 : vector<1x256xi1> to vector<16x256xi1>
    %153 = arith.select %152, %147, %150 : vector<16x256xi1>, vector<16x256xbf16>
    %c0_61 = arith.constant 0 : index
    %c401 = arith.constant 401 : index
    %154 = vector.load %arg1[%c0_61, %c401] : memref<16x768xbf16, #tpu.memory_space<vmem>>, vector<16x256xbf16>
    %c14_i32_62 = arith.constant 14 : i32
    %155 = vector.broadcast %c14_i32_62 : i32 to vector<1x256xi32>
    %156 = arith.cmpi sle, %92, %155 : vector<1x256xi32>
    %c240_i32_63 = arith.constant 240 : i32
    %157 = vector.broadcast %c240_i32_63 : i32 to vector<1x256xi32>
    %158 = arith.cmpi slt, %94, %157 : vector<1x256xi32>
    %159 = arith.andi %156, %158 : vector<1x256xi1>
    %cst_64 = arith.constant 0.000000e+00 : bf16
    %160 = vector.broadcast %cst_64 : bf16 to vector<16x256xbf16>
    %161 = vector.shape_cast %159 : vector<1x256xi1> to vector<1x256xi1>
    %162 = vector.broadcast %161 : vector<1x256xi1> to vector<16x256xi1>
    %163 = arith.select %162, %154, %160 : vector<16x256xi1>, vector<16x256xbf16>
    %164 = tpu.concatenate %104, %111, %121, %128, %129, %136, %146, %153, %163 in 0 : vector<16x256xbf16>, vector<16x256xbf16>, vector<16x256xbf16>, vector<16x256xbf16>, vector<16x256xbf16>, vector<16x256xbf16>, vector<16x256xbf16>, vector<16x256xbf16>, vector<16x256xbf16> -> vector<144x256xbf16>
    %c0_65 = arith.constant 0 : index
    %c0_66 = arith.constant 0 : index
    %165 = vector.load %arg2[%c0_65, %c0_66] : memref<16x144xbf16, #tpu.memory_space<vmem>>, vector<16x144xbf16>
    %cst_67 = arith.constant dense<0.000000e+00> : vector<16x256xf32>
    %166 = tpu.matmul %165, %164, %cst_67 {dimension_numbers = #tpu.dot_dimension_numbers<[1], [0], [0], [1], [0, 0, 1, 1], [], []>} : vector<16x144xbf16>, vector<144x256xbf16>, vector<16x256xf32> -> vector<16x256xf32>
    %c0_68 = arith.constant 0 : index
    %c0_69 = arith.constant 0 : index
    %167 = vector.load %arg3[%c0_68, %c0_69] : memref<16x1xf32, #tpu.memory_space<vmem>>, vector<16x1xf32>
    %168 = vector.broadcast %167 : vector<16x1xf32> to vector<16x256xf32>
    %169 = arith.addf %166, %168 : vector<16x256xf32>
    %cst_70 = arith.constant 0.000000e+00 : f32
    %170 = vector.broadcast %cst_70 : f32 to vector<16x256xf32>
    %171 = arith.maximumf %169, %170 : vector<16x256xf32>
    %172 = arith.truncf %171 : vector<16x256xf32> to vector<16x256xbf16>
    %c0_71 = arith.constant 0 : index
    %c384_72 = arith.constant 384 : index
    %173 = vector.load %arg7[%c0_71, %c384_72] : memref<16x768xbf16, #tpu.memory_space<vmem>>, vector<16x256xbf16>
    tpu.vector_store %arg7[%c0_71, %c384_72], %172 {strides = array<i32>} : memref<16x768xbf16, #tpu.memory_space<vmem>>, vector<16x256xbf16>,
    %174 = tpu.iota {dimensions = array<i32: 1>} : vector<1x256xi32>
    %c0_i32_73 = arith.constant 0 : i32
    %175 = vector.broadcast %c0_i32_73 : i32 to vector<1x256xi32>
    %176 = arith.addi %174, %175 : vector<1x256xi32>
    %c15_i32_74 = arith.constant 15 : i32
    %177 = vector.broadcast %c15_i32_74 : i32 to vector<1x256xi32>
    %178 = arith.andi %176, %177 : vector<1x256xi32>
    %c255_i32_75 = arith.constant 255 : i32
    %179 = vector.broadcast %c255_i32_75 : i32 to vector<1x256xi32>
    %180 = arith.andi %176, %179 : vector<1x256xi32>
    %c0_76 = arith.constant 0 : index
    %c111_77 = arith.constant 111 : index
    %181 = vector.load %arg7[%c0_76, %c111_77] : memref<16x768xbf16, #tpu.memory_space<vmem>>, vector<16x256xbf16>
    %c1_i32_78 = arith.constant 1 : i32
    %182 = vector.broadcast %c1_i32_78 : i32 to vector<1x256xi32>
    %183 = arith.cmpi sge, %178, %182 : vector<1x256xi32>
    %c16_i32_79 = arith.constant 16 : i32
    %184 = vector.broadcast %c16_i32_79 : i32 to vector<1x256xi32>
    %185 = arith.cmpi sge, %180, %184 : vector<1x256xi32>
    %186 = arith.andi %183, %185 : vector<1x256xi1>
    %cst_80 = arith.constant 0.000000e+00 : bf16
    %187 = vector.broadcast %cst_80 : bf16 to vector<16x256xbf16>
    %188 = vector.shape_cast %186 : vector<1x256xi1> to vector<1x256xi1>
    %189 = vector.broadcast %188 : vector<1x256xi1> to vector<16x256xi1>
    %190 = arith.select %189, %181, %187 : vector<16x256xi1>, vector<16x256xbf16>
    %c0_81 = arith.constant 0 : index
    %c112_82 = arith.constant 112 : index
    %191 = vector.load %arg7[%c0_81, %c112_82] : memref<16x768xbf16, #tpu.memory_space<vmem>>, vector<16x256xbf16>
    %c16_i32_83 = arith.constant 16 : i32
    %192 = vector.broadcast %c16_i32_83 : i32 to vector<1x256xi32>
    %193 = arith.cmpi sge, %180, %192 : vector<1x256xi32>
    %cst_84 = arith.constant 0.000000e+00 : bf16
    %194 = vector.broadcast %cst_84 : bf16 to vector<16x256xbf16>
    %195 = vector.shape_cast %193 : vector<1x256xi1> to vector<1x256xi1>
    %196 = vector.broadcast %195 : vector<1x256xi1> to vector<16x256xi1>
    %197 = arith.select %196, %191, %194 : vector<16x256xi1>, vector<16x256xbf16>
    %c0_85 = arith.constant 0 : index
    %c113_86 = arith.constant 113 : index
    %198 = vector.load %arg7[%c0_85, %c113_86] : memref<16x768xbf16, #tpu.memory_space<vmem>>, vector<16x256xbf16>
    %c14_i32_87 = arith.constant 14 : i32
    %199 = vector.broadcast %c14_i32_87 : i32 to vector<1x256xi32>
    %200 = arith.cmpi sle, %178, %199 : vector<1x256xi32>
    %c16_i32_88 = arith.constant 16 : i32
    %201 = vector.broadcast %c16_i32_88 : i32 to vector<1x256xi32>
    %202 = arith.cmpi sge, %180, %201 : vector<1x256xi32>
    %203 = arith.andi %200, %202 : vector<1x256xi1>
    %cst_89 = arith.constant 0.000000e+00 : bf16
    %204 = vector.broadcast %cst_89 : bf16 to vector<16x256xbf16>
    %205 = vector.shape_cast %203 : vector<1x256xi1> to vector<1x256xi1>
    %206 = vector.broadcast %205 : vector<1x256xi1> to vector<16x256xi1>
    %207 = arith.select %206, %198, %204 : vector<16x256xi1>, vector<16x256xbf16>
    %c0_90 = arith.constant 0 : index
    %c127_91 = arith.constant 127 : index
    %208 = vector.load %arg7[%c0_90, %c127_91] : memref<16x768xbf16, #tpu.memory_space<vmem>>, vector<16x256xbf16>
    %c1_i32_92 = arith.constant 1 : i32
    %209 = vector.broadcast %c1_i32_92 : i32 to vector<1x256xi32>
    %210 = arith.cmpi sge, %178, %209 : vector<1x256xi32>
    %cst_93 = arith.constant 0.000000e+00 : bf16
    %211 = vector.broadcast %cst_93 : bf16 to vector<16x256xbf16>
    %212 = vector.shape_cast %210 : vector<1x256xi1> to vector<1x256xi1>
    %213 = vector.broadcast %212 : vector<1x256xi1> to vector<16x256xi1>
    %214 = arith.select %213, %208, %211 : vector<16x256xi1>, vector<16x256xbf16>
    %c0_94 = arith.constant 0 : index
    %c128_95 = arith.constant 128 : index
    %215 = vector.load %arg7[%c0_94, %c128_95] : memref<16x768xbf16, #tpu.memory_space<vmem>>, vector<16x256xbf16>
    %c0_96 = arith.constant 0 : index
    %c129_97 = arith.constant 129 : index
    %216 = vector.load %arg7[%c0_96, %c129_97] : memref<16x768xbf16, #tpu.memory_space<vmem>>, vector<16x256xbf16>
    %c14_i32_98 = arith.constant 14 : i32
    %217 = vector.broadcast %c14_i32_98 : i32 to vector<1x256xi32>
    %218 = arith.cmpi sle, %178, %217 : vector<1x256xi32>
    %cst_99 = arith.constant 0.000000e+00 : bf16
    %219 = vector.broadcast %cst_99 : bf16 to vector<16x256xbf16>
    %220 = vector.shape_cast %218 : vector<1x256xi1> to vector<1x256xi1>
    %221 = vector.broadcast %220 : vector<1x256xi1> to vector<16x256xi1>
    %222 = arith.select %221, %216, %219 : vector<16x256xi1>, vector<16x256xbf16>
    %c0_100 = arith.constant 0 : index
    %c143_101 = arith.constant 143 : index
    %223 = vector.load %arg7[%c0_100, %c143_101] : memref<16x768xbf16, #tpu.memory_space<vmem>>, vector<16x256xbf16>
    %c1_i32_102 = arith.constant 1 : i32
    %224 = vector.broadcast %c1_i32_102 : i32 to vector<1x256xi32>
    %225 = arith.cmpi sge, %178, %224 : vector<1x256xi32>
    %c240_i32_103 = arith.constant 240 : i32
    %226 = vector.broadcast %c240_i32_103 : i32 to vector<1x256xi32>
    %227 = arith.cmpi slt, %180, %226 : vector<1x256xi32>
    %228 = arith.andi %225, %227 : vector<1x256xi1>
    %cst_104 = arith.constant 0.000000e+00 : bf16
    %229 = vector.broadcast %cst_104 : bf16 to vector<16x256xbf16>
    %230 = vector.shape_cast %228 : vector<1x256xi1> to vector<1x256xi1>
    %231 = vector.broadcast %230 : vector<1x256xi1> to vector<16x256xi1>
    %232 = arith.select %231, %223, %229 : vector<16x256xi1>, vector<16x256xbf16>
    %c0_105 = arith.constant 0 : index
    %c144_106 = arith.constant 144 : index
    %233 = vector.load %arg7[%c0_105, %c144_106] : memref<16x768xbf16, #tpu.memory_space<vmem>>, vector<16x256xbf16>
    %c240_i32_107 = arith.constant 240 : i32
    %234 = vector.broadcast %c240_i32_107 : i32 to vector<1x256xi32>
    %235 = arith.cmpi slt, %180, %234 : vector<1x256xi32>
    %cst_108 = arith.constant 0.000000e+00 : bf16
    %236 = vector.broadcast %cst_108 : bf16 to vector<16x256xbf16>
    %237 = vector.shape_cast %235 : vector<1x256xi1> to vector<1x256xi1>
    %238 = vector.broadcast %237 : vector<1x256xi1> to vector<16x256xi1>
    %239 = arith.select %238, %233, %236 : vector<16x256xi1>, vector<16x256xbf16>
    %c0_109 = arith.constant 0 : index
    %c145_110 = arith.constant 145 : index
    %240 = vector.load %arg7[%c0_109, %c145_110] : memref<16x768xbf16, #tpu.memory_space<vmem>>, vector<16x256xbf16>
    %c14_i32_111 = arith.constant 14 : i32
    %241 = vector.broadcast %c14_i32_111 : i32 to vector<1x256xi32>
    %242 = arith.cmpi sle, %178, %241 : vector<1x256xi32>
    %c240_i32_112 = arith.constant 240 : i32
    %243 = vector.broadcast %c240_i32_112 : i32 to vector<1x256xi32>
    %244 = arith.cmpi slt, %180, %243 : vector<1x256xi32>
    %245 = arith.andi %242, %244 : vector<1x256xi1>
    %cst_113 = arith.constant 0.000000e+00 : bf16
    %246 = vector.broadcast %cst_113 : bf16 to vector<16x256xbf16>
    %247 = vector.shape_cast %245 : vector<1x256xi1> to vector<1x256xi1>
    %248 = vector.broadcast %247 : vector<1x256xi1> to vector<16x256xi1>
    %249 = arith.select %248, %240, %246 : vector<16x256xi1>, vector<16x256xbf16>
    %250 = tpu.concatenate %190, %197, %207, %214, %215, %222, %232, %239, %249 in 0 : vector<16x256xbf16>, vector<16x256xbf16>, vector<16x256xbf16>, vector<16x256xbf16>, vector<16x256xbf16>, vector<16x256xbf16>, vector<16x256xbf16>, vector<16x256xbf16>, vector<16x256xbf16> -> vector<144x256xbf16>
    %c0_114 = arith.constant 0 : index
    %c0_115 = arith.constant 0 : index
    %251 = vector.load %arg4[%c0_114, %c0_115] : memref<16x144xbf16, #tpu.memory_space<vmem>>, vector<16x144xbf16>
    %cst_116 = arith.constant dense<0.000000e+00> : vector<16x256xf32>
    %252 = tpu.matmul %251, %250, %cst_116 {dimension_numbers = #tpu.dot_dimension_numbers<[1], [0], [0], [1], [0, 0, 1, 1], [], []>} : vector<16x144xbf16>, vector<144x256xbf16>, vector<16x256xf32> -> vector<16x256xf32>
    %c0_117 = arith.constant 0 : index
    %c0_118 = arith.constant 0 : index
    %253 = vector.load %arg5[%c0_117, %c0_118] : memref<16x1xf32, #tpu.memory_space<vmem>>, vector<16x1xf32>
    %254 = vector.broadcast %253 : vector<16x1xf32> to vector<16x256xf32>
    %255 = arith.addf %252, %254 : vector<16x256xf32>
    %c0_119 = arith.constant 0 : index
    %c128_120 = arith.constant 128 : index
    %256 = vector.load %arg1[%c0_119, %c128_120] : memref<16x768xbf16, #tpu.memory_space<vmem>>, vector<16x256xbf16>
    %257 = arith.extf %256 : vector<16x256xbf16> to vector<16x256xf32>
    %258 = arith.addf %255, %257 : vector<16x256xf32>
    %cst_121 = arith.constant 0.000000e+00 : f32
    %259 = vector.broadcast %cst_121 : f32 to vector<16x256xf32>
    %260 = arith.maximumf %258, %259 : vector<16x256xf32>
    %261 = arith.truncf %260 : vector<16x256xf32> to vector<16x256xbf16>
    %c0_122 = arith.constant 0 : index
    %c0_123 = arith.constant 0 : index
    %262 = vector.load %arg6[%c0_122, %c0_123] : memref<16x512xbf16, #tpu.memory_space<vmem>>, vector<16x256xbf16>
    tpu.vector_store %arg6[%c0_122, %c0_123], %261 {strides = array<i32>} : memref<16x512xbf16, #tpu.memory_space<vmem>>, vector<16x256xbf16>,
    %263 = tpu.iota {dimensions = array<i32: 1>} : vector<1x256xi32>
    %c256_i32_124 = arith.constant 256 : i32
    %264 = vector.broadcast %c256_i32_124 : i32 to vector<1x256xi32>
    %265 = arith.addi %263, %264 : vector<1x256xi32>
    %c15_i32_125 = arith.constant 15 : i32
    %266 = vector.broadcast %c15_i32_125 : i32 to vector<1x256xi32>
    %267 = arith.andi %265, %266 : vector<1x256xi32>
    %c255_i32_126 = arith.constant 255 : i32
    %268 = vector.broadcast %c255_i32_126 : i32 to vector<1x256xi32>
    %269 = arith.andi %265, %268 : vector<1x256xi32>
    %c0_127 = arith.constant 0 : index
    %c367_128 = arith.constant 367 : index
    %270 = vector.load %arg7[%c0_127, %c367_128] : memref<16x768xbf16, #tpu.memory_space<vmem>>, vector<16x256xbf16>
    %c1_i32_129 = arith.constant 1 : i32
    %271 = vector.broadcast %c1_i32_129 : i32 to vector<1x256xi32>
    %272 = arith.cmpi sge, %267, %271 : vector<1x256xi32>
    %c16_i32_130 = arith.constant 16 : i32
    %273 = vector.broadcast %c16_i32_130 : i32 to vector<1x256xi32>
    %274 = arith.cmpi sge, %269, %273 : vector<1x256xi32>
    %275 = arith.andi %272, %274 : vector<1x256xi1>
    %cst_131 = arith.constant 0.000000e+00 : bf16
    %276 = vector.broadcast %cst_131 : bf16 to vector<16x256xbf16>
    %277 = vector.shape_cast %275 : vector<1x256xi1> to vector<1x256xi1>
    %278 = vector.broadcast %277 : vector<1x256xi1> to vector<16x256xi1>
    %279 = arith.select %278, %270, %276 : vector<16x256xi1>, vector<16x256xbf16>
    %c0_132 = arith.constant 0 : index
    %c368_133 = arith.constant 368 : index
    %280 = vector.load %arg7[%c0_132, %c368_133] : memref<16x768xbf16, #tpu.memory_space<vmem>>, vector<16x256xbf16>
    %c16_i32_134 = arith.constant 16 : i32
    %281 = vector.broadcast %c16_i32_134 : i32 to vector<1x256xi32>
    %282 = arith.cmpi sge, %269, %281 : vector<1x256xi32>
    %cst_135 = arith.constant 0.000000e+00 : bf16
    %283 = vector.broadcast %cst_135 : bf16 to vector<16x256xbf16>
    %284 = vector.shape_cast %282 : vector<1x256xi1> to vector<1x256xi1>
    %285 = vector.broadcast %284 : vector<1x256xi1> to vector<16x256xi1>
    %286 = arith.select %285, %280, %283 : vector<16x256xi1>, vector<16x256xbf16>
    %c0_136 = arith.constant 0 : index
    %c369_137 = arith.constant 369 : index
    %287 = vector.load %arg7[%c0_136, %c369_137] : memref<16x768xbf16, #tpu.memory_space<vmem>>, vector<16x256xbf16>
    %c14_i32_138 = arith.constant 14 : i32
    %288 = vector.broadcast %c14_i32_138 : i32 to vector<1x256xi32>
    %289 = arith.cmpi sle, %267, %288 : vector<1x256xi32>
    %c16_i32_139 = arith.constant 16 : i32
    %290 = vector.broadcast %c16_i32_139 : i32 to vector<1x256xi32>
    %291 = arith.cmpi sge, %269, %290 : vector<1x256xi32>
    %292 = arith.andi %289, %291 : vector<1x256xi1>
    %cst_140 = arith.constant 0.000000e+00 : bf16
    %293 = vector.broadcast %cst_140 : bf16 to vector<16x256xbf16>
    %294 = vector.shape_cast %292 : vector<1x256xi1> to vector<1x256xi1>
    %295 = vector.broadcast %294 : vector<1x256xi1> to vector<16x256xi1>
    %296 = arith.select %295, %287, %293 : vector<16x256xi1>, vector<16x256xbf16>
    %c0_141 = arith.constant 0 : index
    %c383_142 = arith.constant 383 : index
    %297 = vector.load %arg7[%c0_141, %c383_142] : memref<16x768xbf16, #tpu.memory_space<vmem>>, vector<16x256xbf16>
    %c1_i32_143 = arith.constant 1 : i32
    %298 = vector.broadcast %c1_i32_143 : i32 to vector<1x256xi32>
    %299 = arith.cmpi sge, %267, %298 : vector<1x256xi32>
    %cst_144 = arith.constant 0.000000e+00 : bf16
    %300 = vector.broadcast %cst_144 : bf16 to vector<16x256xbf16>
    %301 = vector.shape_cast %299 : vector<1x256xi1> to vector<1x256xi1>
    %302 = vector.broadcast %301 : vector<1x256xi1> to vector<16x256xi1>
    %303 = arith.select %302, %297, %300 : vector<16x256xi1>, vector<16x256xbf16>
    %c0_145 = arith.constant 0 : index
    %c384_146 = arith.constant 384 : index
    %304 = vector.load %arg7[%c0_145, %c384_146] : memref<16x768xbf16, #tpu.memory_space<vmem>>, vector<16x256xbf16>
    %c0_147 = arith.constant 0 : index
    %c385_148 = arith.constant 385 : index
    %305 = vector.load %arg7[%c0_147, %c385_148] : memref<16x768xbf16, #tpu.memory_space<vmem>>, vector<16x256xbf16>
    %c14_i32_149 = arith.constant 14 : i32
    %306 = vector.broadcast %c14_i32_149 : i32 to vector<1x256xi32>
    %307 = arith.cmpi sle, %267, %306 : vector<1x256xi32>
    %cst_150 = arith.constant 0.000000e+00 : bf16
    %308 = vector.broadcast %cst_150 : bf16 to vector<16x256xbf16>
    %309 = vector.shape_cast %307 : vector<1x256xi1> to vector<1x256xi1>
    %310 = vector.broadcast %309 : vector<1x256xi1> to vector<16x256xi1>
    %311 = arith.select %310, %305, %308 : vector<16x256xi1>, vector<16x256xbf16>
    %c0_151 = arith.constant 0 : index
    %c399_152 = arith.constant 399 : index
    %312 = vector.load %arg7[%c0_151, %c399_152] : memref<16x768xbf16, #tpu.memory_space<vmem>>, vector<16x256xbf16>
    %c1_i32_153 = arith.constant 1 : i32
    %313 = vector.broadcast %c1_i32_153 : i32 to vector<1x256xi32>
    %314 = arith.cmpi sge, %267, %313 : vector<1x256xi32>
    %c240_i32_154 = arith.constant 240 : i32
    %315 = vector.broadcast %c240_i32_154 : i32 to vector<1x256xi32>
    %316 = arith.cmpi slt, %269, %315 : vector<1x256xi32>
    %317 = arith.andi %314, %316 : vector<1x256xi1>
    %cst_155 = arith.constant 0.000000e+00 : bf16
    %318 = vector.broadcast %cst_155 : bf16 to vector<16x256xbf16>
    %319 = vector.shape_cast %317 : vector<1x256xi1> to vector<1x256xi1>
    %320 = vector.broadcast %319 : vector<1x256xi1> to vector<16x256xi1>
    %321 = arith.select %320, %312, %318 : vector<16x256xi1>, vector<16x256xbf16>
    %c0_156 = arith.constant 0 : index
    %c400_157 = arith.constant 400 : index
    %322 = vector.load %arg7[%c0_156, %c400_157] : memref<16x768xbf16, #tpu.memory_space<vmem>>, vector<16x256xbf16>
    %c240_i32_158 = arith.constant 240 : i32
    %323 = vector.broadcast %c240_i32_158 : i32 to vector<1x256xi32>
    %324 = arith.cmpi slt, %269, %323 : vector<1x256xi32>
    %cst_159 = arith.constant 0.000000e+00 : bf16
    %325 = vector.broadcast %cst_159 : bf16 to vector<16x256xbf16>
    %326 = vector.shape_cast %324 : vector<1x256xi1> to vector<1x256xi1>
    %327 = vector.broadcast %326 : vector<1x256xi1> to vector<16x256xi1>
    %328 = arith.select %327, %322, %325 : vector<16x256xi1>, vector<16x256xbf16>
    %c0_160 = arith.constant 0 : index
    %c401_161 = arith.constant 401 : index
    %329 = vector.load %arg7[%c0_160, %c401_161] : memref<16x768xbf16, #tpu.memory_space<vmem>>, vector<16x256xbf16>
    %c14_i32_162 = arith.constant 14 : i32
    %330 = vector.broadcast %c14_i32_162 : i32 to vector<1x256xi32>
    %331 = arith.cmpi sle, %267, %330 : vector<1x256xi32>
    %c240_i32_163 = arith.constant 240 : i32
    %332 = vector.broadcast %c240_i32_163 : i32 to vector<1x256xi32>
    %333 = arith.cmpi slt, %269, %332 : vector<1x256xi32>
    %334 = arith.andi %331, %333 : vector<1x256xi1>
    %cst_164 = arith.constant 0.000000e+00 : bf16
    %335 = vector.broadcast %cst_164 : bf16 to vector<16x256xbf16>
    %336 = vector.shape_cast %334 : vector<1x256xi1> to vector<1x256xi1>
    %337 = vector.broadcast %336 : vector<1x256xi1> to vector<16x256xi1>
    %338 = arith.select %337, %329, %335 : vector<16x256xi1>, vector<16x256xbf16>
    %339 = tpu.concatenate %279, %286, %296, %303, %304, %311, %321, %328, %338 in 0 : vector<16x256xbf16>, vector<16x256xbf16>, vector<16x256xbf16>, vector<16x256xbf16>, vector<16x256xbf16>, vector<16x256xbf16>, vector<16x256xbf16>, vector<16x256xbf16>, vector<16x256xbf16> -> vector<144x256xbf16>
    %c0_165 = arith.constant 0 : index
    %c0_166 = arith.constant 0 : index
    %340 = vector.load %arg4[%c0_165, %c0_166] : memref<16x144xbf16, #tpu.memory_space<vmem>>, vector<16x144xbf16>
    %cst_167 = arith.constant dense<0.000000e+00> : vector<16x256xf32>
    %341 = tpu.matmul %340, %339, %cst_167 {dimension_numbers = #tpu.dot_dimension_numbers<[1], [0], [0], [1], [0, 0, 1, 1], [], []>} : vector<16x144xbf16>, vector<144x256xbf16>, vector<16x256xf32> -> vector<16x256xf32>
    %c0_168 = arith.constant 0 : index
    %c0_169 = arith.constant 0 : index
    %342 = vector.load %arg5[%c0_168, %c0_169] : memref<16x1xf32, #tpu.memory_space<vmem>>, vector<16x1xf32>
    %343 = vector.broadcast %342 : vector<16x1xf32> to vector<16x256xf32>
    %344 = arith.addf %341, %343 : vector<16x256xf32>
    %c0_170 = arith.constant 0 : index
    %c384_171 = arith.constant 384 : index
    %345 = vector.load %arg1[%c0_170, %c384_171] : memref<16x768xbf16, #tpu.memory_space<vmem>>, vector<16x256xbf16>
    %346 = arith.extf %345 : vector<16x256xbf16> to vector<16x256xf32>
    %347 = arith.addf %344, %346 : vector<16x256xf32>
    %cst_172 = arith.constant 0.000000e+00 : f32
    %348 = vector.broadcast %cst_172 : f32 to vector<16x256xf32>
    %349 = arith.maximumf %347, %348 : vector<16x256xf32>
    %350 = arith.truncf %349 : vector<16x256xf32> to vector<16x256xbf16>
    %c0_173 = arith.constant 0 : index
    %c256 = arith.constant 256 : index
    %351 = vector.load %arg6[%c0_173, %c256] : memref<16x512xbf16, #tpu.memory_space<vmem>>, vector<16x256xbf16>
    tpu.vector_store %arg6[%c0_173, %c256], %350 {strides = array<i32>} : memref<16x512xbf16, #tpu.memory_space<vmem>>, vector<16x256xbf16>,
    return
  }
  func.func @transform_0(%arg0: i32) -> (i32, i32) {
    %c0_i32 = arith.constant 0 : i32
    %c0_i32_0 = arith.constant 0 : i32
    %c0_i32_1 = arith.constant 0 : i32
    return %c0_i32, %c0_i32_0 : i32, i32
  }
  func.func @transform_1(%arg0: i32) -> (i32, i32) {
    %c0_i32 = arith.constant 0 : i32
    %c0_i32_0 = arith.constant 0 : i32
    %c0_i32_1 = arith.constant 0 : i32
    return %c0_i32, %c0_i32_0 : i32, i32
  }
  func.func @transform_2(%arg0: i32) -> (i32, i32) {
    %c0_i32 = arith.constant 0 : i32
    %c0_i32_0 = arith.constant 0 : i32
    %c0_i32_1 = arith.constant 0 : i32
    return %c0_i32, %c0_i32_0 : i32, i32
  }
  func.func @transform_3(%arg0: i32) -> (i32, i32) {
    %c0_i32 = arith.constant 0 : i32
    %c0_i32_0 = arith.constant 0 : i32
    %c0_i32_1 = arith.constant 0 : i32
    return %c0_i32, %c0_i32_0 : i32, i32
  }
  func.func @transform_4(%arg0: i32) -> (i32, i32) {
    %c0_i32 = arith.constant 0 : i32
    %c0_i32_0 = arith.constant 0 : i32
    %c0_i32_1 = arith.constant 0 : i32
    return %c0_i32, %c0_i32_0 : i32, i32
  }
  func.func @transform_5(%arg0: i32) -> (i32, i32) {
    %c0_i32 = arith.constant 0 : i32
    %c0_i32_0 = arith.constant 0 : i32
    %c0_i32_1 = arith.constant 0 : i32
    return %c0_i32, %c0_i32_0 : i32, i32
  }
}

module attributes {stable_mosaic.version = 11 : i64} {
  func.func @_gemm_conv_kernel(%arg0: i32, %arg1: memref<32x144xbf16, #tpu.memory_space<vmem>>, %arg2: memref<144x128xbf16, #tpu.memory_space<vmem>>, %arg3: memref<32x1xf32, #tpu.memory_space<vmem>>, %arg4: memref<32x128xbf16, #tpu.memory_space<vmem>>) attributes {dimension_semantics = [#tpu.dimension_semantics<parallel>], iteration_bounds = array<i64: 1>, scalar_prefetch = 0 : i64, scratch_operands = 0 : i64, tpu.core_type = #tpu.core_type<tc>, window_params = [{pipeline_mode = #tpu.pipeline_mode<synchronous>, transform_indices = @transform_0, window_bounds = array<i64: 32, 144>}, {transform_indices = @transform_1, window_bounds = array<i64: 144, 128>}, {pipeline_mode = #tpu.pipeline_mode<synchronous>, transform_indices = @transform_2, window_bounds = array<i64: 32, 1>}, {transform_indices = @transform_3, window_bounds = array<i64: 32, 128>}]} {
    %c0 = arith.constant 0 : index
    %c0_0 = arith.constant 0 : index
    %0 = vector.load %arg1[%c0, %c0_0] : memref<32x144xbf16, #tpu.memory_space<vmem>>, vector<32x144xbf16>
    %c0_1 = arith.constant 0 : index
    %c0_2 = arith.constant 0 : index
    %1 = vector.load %arg2[%c0_1, %c0_2] : memref<144x128xbf16, #tpu.memory_space<vmem>>, vector<144x128xbf16>
    %cst = arith.constant dense<0.000000e+00> : vector<32x128xf32>
    %2 = tpu.matmul %0, %1, %cst {dimension_numbers = #tpu.dot_dimension_numbers<[1], [0], [0], [1], [0, 0, 1, 1], [], []>} : vector<32x144xbf16>, vector<144x128xbf16>, vector<32x128xf32> -> vector<32x128xf32>
    %c0_3 = arith.constant 0 : index
    %c0_4 = arith.constant 0 : index
    %3 = vector.load %arg3[%c0_3, %c0_4] : memref<32x1xf32, #tpu.memory_space<vmem>>, vector<32x1xf32>
    %4 = vector.broadcast %3 : vector<32x1xf32> to vector<32x128xf32>
    %5 = arith.addf %2, %4 : vector<32x128xf32>
    %cst_5 = arith.constant 0.000000e+00 : f32
    %6 = vector.broadcast %cst_5 : f32 to vector<32x128xf32>
    %7 = arith.maximumf %5, %6 : vector<32x128xf32>
    %8 = arith.truncf %7 : vector<32x128xf32> to vector<32x128xbf16>
    %c0_6 = arith.constant 0 : index
    %c0_7 = arith.constant 0 : index
    %9 = vector.load %arg4[%c0_6, %c0_7] : memref<32x128xbf16, #tpu.memory_space<vmem>>, vector<32x128xbf16>
    tpu.vector_store %arg4[%c0_6, %c0_7], %8 {strides = array<i32>} : memref<32x128xbf16, #tpu.memory_space<vmem>>, vector<32x128xbf16>,
    return
  }
  func.func @transform_0(%arg0: i32) -> (i32, i32) {
    %c0_i32 = arith.constant 0 : i32
    %c0_i32_0 = arith.constant 0 : i32
    %c0_i32_1 = arith.constant 0 : i32
    return %c0_i32, %c0_i32_0 : i32, i32
  }
  func.func @transform_1(%arg0: i32) -> (i32, i32) {
    %c0_i32 = arith.constant 0 : i32
    %c0_i32_0 = arith.constant 0 : i32
    return %c0_i32, %arg0 : i32, i32
  }
  func.func @transform_2(%arg0: i32) -> (i32, i32) {
    %c0_i32 = arith.constant 0 : i32
    %c0_i32_0 = arith.constant 0 : i32
    %c0_i32_1 = arith.constant 0 : i32
    return %c0_i32, %c0_i32_0 : i32, i32
  }
  func.func @transform_3(%arg0: i32) -> (i32, i32) {
    %c0_i32 = arith.constant 0 : i32
    %c0_i32_0 = arith.constant 0 : i32
    return %c0_i32, %arg0 : i32, i32
  }
}

module attributes {stable_mosaic.version = 11 : i64} {
  func.func @_shift_conv_res_kernel(%arg0: i32, %arg1: memref<32x384xbf16, #tpu.memory_space<vmem>>, %arg2: memref<32x288xbf16, #tpu.memory_space<vmem>>, %arg3: memref<32x1xf32, #tpu.memory_space<vmem>>, %arg4: memref<16x128xbf16, #tpu.memory_space<vmem>>, %arg5: memref<32x128xbf16, #tpu.memory_space<vmem>>) attributes {dimension_semantics = [#tpu.dimension_semantics<parallel>], iteration_bounds = array<i64: 1>, scalar_prefetch = 0 : i64, scratch_operands = 0 : i64, tpu.core_type = #tpu.core_type<tc>, window_params = [{pipeline_mode = #tpu.pipeline_mode<synchronous>, transform_indices = @transform_0, window_bounds = array<i64: 32, 384>}, {pipeline_mode = #tpu.pipeline_mode<synchronous>, transform_indices = @transform_1, window_bounds = array<i64: 32, 288>}, {pipeline_mode = #tpu.pipeline_mode<synchronous>, transform_indices = @transform_2, window_bounds = array<i64: 32, 1>}, {transform_indices = @transform_3, window_bounds = array<i64: 16, 128>}, {transform_indices = @transform_4, window_bounds = array<i64: 32, 128>}]} {
    %0 = tpu.iota {dimensions = array<i32: 1>} : vector<1x128xi32>
    %c0_i32 = arith.constant 0 : i32
    %1 = vector.broadcast %c0_i32 : i32 to vector<1x128xi32>
    %2 = arith.addi %0, %1 : vector<1x128xi32>
    %c7_i32 = arith.constant 7 : i32
    %3 = vector.broadcast %c7_i32 : i32 to vector<1x128xi32>
    %4 = arith.andi %2, %3 : vector<1x128xi32>
    %c63_i32 = arith.constant 63 : i32
    %5 = vector.broadcast %c63_i32 : i32 to vector<1x128xi32>
    %6 = arith.andi %2, %5 : vector<1x128xi32>
    %c0 = arith.constant 0 : index
    %c119 = arith.constant 119 : index
    %7 = vector.load %arg1[%c0, %c119] : memref<32x384xbf16, #tpu.memory_space<vmem>>, vector<32x128xbf16>
    %c1_i32 = arith.constant 1 : i32
    %8 = vector.broadcast %c1_i32 : i32 to vector<1x128xi32>
    %9 = arith.cmpi sge, %4, %8 : vector<1x128xi32>
    %c8_i32 = arith.constant 8 : i32
    %10 = vector.broadcast %c8_i32 : i32 to vector<1x128xi32>
    %11 = arith.cmpi sge, %6, %10 : vector<1x128xi32>
    %12 = arith.andi %9, %11 : vector<1x128xi1>
    %cst = arith.constant 0.000000e+00 : bf16
    %13 = vector.broadcast %cst : bf16 to vector<32x128xbf16>
    %14 = vector.shape_cast %12 : vector<1x128xi1> to vector<1x128xi1>
    %15 = vector.broadcast %14 : vector<1x128xi1> to vector<32x128xi1>
    %16 = arith.select %15, %7, %13 : vector<32x128xi1>, vector<32x128xbf16>
    %c0_0 = arith.constant 0 : index
    %c120 = arith.constant 120 : index
    %17 = vector.load %arg1[%c0_0, %c120] : memref<32x384xbf16, #tpu.memory_space<vmem>>, vector<32x128xbf16>
    %c8_i32_1 = arith.constant 8 : i32
    %18 = vector.broadcast %c8_i32_1 : i32 to vector<1x128xi32>
    %19 = arith.cmpi sge, %6, %18 : vector<1x128xi32>
    %cst_2 = arith.constant 0.000000e+00 : bf16
    %20 = vector.broadcast %cst_2 : bf16 to vector<32x128xbf16>
    %21 = vector.shape_cast %19 : vector<1x128xi1> to vector<1x128xi1>
    %22 = vector.broadcast %21 : vector<1x128xi1> to vector<32x128xi1>
    %23 = arith.select %22, %17, %20 : vector<32x128xi1>, vector<32x128xbf16>
    %c0_3 = arith.constant 0 : index
    %c121 = arith.constant 121 : index
    %24 = vector.load %arg1[%c0_3, %c121] : memref<32x384xbf16, #tpu.memory_space<vmem>>, vector<32x128xbf16>
    %c6_i32 = arith.constant 6 : i32
    %25 = vector.broadcast %c6_i32 : i32 to vector<1x128xi32>
    %26 = arith.cmpi sle, %4, %25 : vector<1x128xi32>
    %c8_i32_4 = arith.constant 8 : i32
    %27 = vector.broadcast %c8_i32_4 : i32 to vector<1x128xi32>
    %28 = arith.cmpi sge, %6, %27 : vector<1x128xi32>
    %29 = arith.andi %26, %28 : vector<1x128xi1>
    %cst_5 = arith.constant 0.000000e+00 : bf16
    %30 = vector.broadcast %cst_5 : bf16 to vector<32x128xbf16>
    %31 = vector.shape_cast %29 : vector<1x128xi1> to vector<1x128xi1>
    %32 = vector.broadcast %31 : vector<1x128xi1> to vector<32x128xi1>
    %33 = arith.select %32, %24, %30 : vector<32x128xi1>, vector<32x128xbf16>
    %c0_6 = arith.constant 0 : index
    %c127 = arith.constant 127 : index
    %34 = vector.load %arg1[%c0_6, %c127] : memref<32x384xbf16, #tpu.memory_space<vmem>>, vector<32x128xbf16>
    %c1_i32_7 = arith.constant 1 : i32
    %35 = vector.broadcast %c1_i32_7 : i32 to vector<1x128xi32>
    %36 = arith.cmpi sge, %4, %35 : vector<1x128xi32>
    %cst_8 = arith.constant 0.000000e+00 : bf16
    %37 = vector.broadcast %cst_8 : bf16 to vector<32x128xbf16>
    %38 = vector.shape_cast %36 : vector<1x128xi1> to vector<1x128xi1>
    %39 = vector.broadcast %38 : vector<1x128xi1> to vector<32x128xi1>
    %40 = arith.select %39, %34, %37 : vector<32x128xi1>, vector<32x128xbf16>
    %c0_9 = arith.constant 0 : index
    %c128 = arith.constant 128 : index
    %41 = vector.load %arg1[%c0_9, %c128] : memref<32x384xbf16, #tpu.memory_space<vmem>>, vector<32x128xbf16>
    %c0_10 = arith.constant 0 : index
    %c129 = arith.constant 129 : index
    %42 = vector.load %arg1[%c0_10, %c129] : memref<32x384xbf16, #tpu.memory_space<vmem>>, vector<32x128xbf16>
    %c6_i32_11 = arith.constant 6 : i32
    %43 = vector.broadcast %c6_i32_11 : i32 to vector<1x128xi32>
    %44 = arith.cmpi sle, %4, %43 : vector<1x128xi32>
    %cst_12 = arith.constant 0.000000e+00 : bf16
    %45 = vector.broadcast %cst_12 : bf16 to vector<32x128xbf16>
    %46 = vector.shape_cast %44 : vector<1x128xi1> to vector<1x128xi1>
    %47 = vector.broadcast %46 : vector<1x128xi1> to vector<32x128xi1>
    %48 = arith.select %47, %42, %45 : vector<32x128xi1>, vector<32x128xbf16>
    %c0_13 = arith.constant 0 : index
    %c135 = arith.constant 135 : index
    %49 = vector.load %arg1[%c0_13, %c135] : memref<32x384xbf16, #tpu.memory_space<vmem>>, vector<32x128xbf16>
    %c1_i32_14 = arith.constant 1 : i32
    %50 = vector.broadcast %c1_i32_14 : i32 to vector<1x128xi32>
    %51 = arith.cmpi sge, %4, %50 : vector<1x128xi32>
    %c56_i32 = arith.constant 56 : i32
    %52 = vector.broadcast %c56_i32 : i32 to vector<1x128xi32>
    %53 = arith.cmpi slt, %6, %52 : vector<1x128xi32>
    %54 = arith.andi %51, %53 : vector<1x128xi1>
    %cst_15 = arith.constant 0.000000e+00 : bf16
    %55 = vector.broadcast %cst_15 : bf16 to vector<32x128xbf16>
    %56 = vector.shape_cast %54 : vector<1x128xi1> to vector<1x128xi1>
    %57 = vector.broadcast %56 : vector<1x128xi1> to vector<32x128xi1>
    %58 = arith.select %57, %49, %55 : vector<32x128xi1>, vector<32x128xbf16>
    %c0_16 = arith.constant 0 : index
    %c136 = arith.constant 136 : index
    %59 = vector.load %arg1[%c0_16, %c136] : memref<32x384xbf16, #tpu.memory_space<vmem>>, vector<32x128xbf16>
    %c56_i32_17 = arith.constant 56 : i32
    %60 = vector.broadcast %c56_i32_17 : i32 to vector<1x128xi32>
    %61 = arith.cmpi slt, %6, %60 : vector<1x128xi32>
    %cst_18 = arith.constant 0.000000e+00 : bf16
    %62 = vector.broadcast %cst_18 : bf16 to vector<32x128xbf16>
    %63 = vector.shape_cast %61 : vector<1x128xi1> to vector<1x128xi1>
    %64 = vector.broadcast %63 : vector<1x128xi1> to vector<32x128xi1>
    %65 = arith.select %64, %59, %62 : vector<32x128xi1>, vector<32x128xbf16>
    %c0_19 = arith.constant 0 : index
    %c137 = arith.constant 137 : index
    %66 = vector.load %arg1[%c0_19, %c137] : memref<32x384xbf16, #tpu.memory_space<vmem>>, vector<32x128xbf16>
    %c6_i32_20 = arith.constant 6 : i32
    %67 = vector.broadcast %c6_i32_20 : i32 to vector<1x128xi32>
    %68 = arith.cmpi sle, %4, %67 : vector<1x128xi32>
    %c56_i32_21 = arith.constant 56 : i32
    %69 = vector.broadcast %c56_i32_21 : i32 to vector<1x128xi32>
    %70 = arith.cmpi slt, %6, %69 : vector<1x128xi32>
    %71 = arith.andi %68, %70 : vector<1x128xi1>
    %cst_22 = arith.constant 0.000000e+00 : bf16
    %72 = vector.broadcast %cst_22 : bf16 to vector<32x128xbf16>
    %73 = vector.shape_cast %71 : vector<1x128xi1> to vector<1x128xi1>
    %74 = vector.broadcast %73 : vector<1x128xi1> to vector<32x128xi1>
    %75 = arith.select %74, %66, %72 : vector<32x128xi1>, vector<32x128xbf16>
    %76 = tpu.concatenate %16, %23, %33, %40, %41, %48, %58, %65, %75 in 0 : vector<32x128xbf16>, vector<32x128xbf16>, vector<32x128xbf16>, vector<32x128xbf16>, vector<32x128xbf16>, vector<32x128xbf16>, vector<32x128xbf16>, vector<32x128xbf16>, vector<32x128xbf16> -> vector<288x128xbf16>
    %c0_23 = arith.constant 0 : index
    %c0_24 = arith.constant 0 : index
    %77 = vector.load %arg2[%c0_23, %c0_24] : memref<32x288xbf16, #tpu.memory_space<vmem>>, vector<32x288xbf16>
    %cst_25 = arith.constant dense<0.000000e+00> : vector<32x128xf32>
    %78 = tpu.matmul %77, %76, %cst_25 {dimension_numbers = #tpu.dot_dimension_numbers<[1], [0], [0], [1], [0, 0, 1, 1], [], []>} : vector<32x288xbf16>, vector<288x128xbf16>, vector<32x128xf32> -> vector<32x128xf32>
    %c0_26 = arith.constant 0 : index
    %c0_27 = arith.constant 0 : index
    %79 = vector.load %arg3[%c0_26, %c0_27] : memref<32x1xf32, #tpu.memory_space<vmem>>, vector<32x1xf32>
    %80 = vector.broadcast %79 : vector<32x1xf32> to vector<32x128xf32>
    %81 = arith.addf %78, %80 : vector<32x128xf32>
    %c0_28 = arith.constant 0 : index
    %c0_29 = arith.constant 0 : index
    %82 = vector.load %arg4[%c0_28, %c0_29] : memref<16x128xbf16, #tpu.memory_space<vmem>>, vector<16x128xbf16>
    %83 = arith.extf %82 : vector<16x128xbf16> to vector<16x128xf32>
    %cst_30 = arith.constant 0.000000e+00 : f32
    %84 = vector.broadcast %cst_30 : f32 to vector<8x128xf32>
    %cst_31 = arith.constant 0.000000e+00 : f32
    %85 = vector.broadcast %cst_31 : f32 to vector<8x128xf32>
    %86 = tpu.concatenate %84, %83, %85 in 0 : vector<8x128xf32>, vector<16x128xf32>, vector<8x128xf32> -> vector<32x128xf32>
    %87 = arith.addf %81, %86 : vector<32x128xf32>
    %cst_32 = arith.constant 0.000000e+00 : f32
    %88 = vector.broadcast %cst_32 : f32 to vector<32x128xf32>
    %89 = arith.maximumf %87, %88 : vector<32x128xf32>
    %90 = arith.truncf %89 : vector<32x128xf32> to vector<32x128xbf16>
    %c0_33 = arith.constant 0 : index
    %c0_34 = arith.constant 0 : index
    %91 = vector.load %arg5[%c0_33, %c0_34] : memref<32x128xbf16, #tpu.memory_space<vmem>>, vector<32x128xbf16>
    tpu.vector_store %arg5[%c0_33, %c0_34], %90 {strides = array<i32>} : memref<32x128xbf16, #tpu.memory_space<vmem>>, vector<32x128xbf16>,
    return
  }
  func.func @transform_0(%arg0: i32) -> (i32, i32) {
    %c0_i32 = arith.constant 0 : i32
    %c0_i32_0 = arith.constant 0 : i32
    %c0_i32_1 = arith.constant 0 : i32
    return %c0_i32, %c0_i32_0 : i32, i32
  }
  func.func @transform_1(%arg0: i32) -> (i32, i32) {
    %c0_i32 = arith.constant 0 : i32
    %c0_i32_0 = arith.constant 0 : i32
    %c0_i32_1 = arith.constant 0 : i32
    return %c0_i32, %c0_i32_0 : i32, i32
  }
  func.func @transform_2(%arg0: i32) -> (i32, i32) {
    %c0_i32 = arith.constant 0 : i32
    %c0_i32_0 = arith.constant 0 : i32
    %c0_i32_1 = arith.constant 0 : i32
    return %c0_i32, %c0_i32_0 : i32, i32
  }
  func.func @transform_3(%arg0: i32) -> (i32, i32) {
    %c0_i32 = arith.constant 0 : i32
    %c0_i32_0 = arith.constant 0 : i32
    return %c0_i32, %arg0 : i32, i32
  }
  func.func @transform_4(%arg0: i32) -> (i32, i32) {
    %c0_i32 = arith.constant 0 : i32
    %c0_i32_0 = arith.constant 0 : i32
    return %c0_i32, %arg0 : i32, i32
  }
}

module attributes {stable_mosaic.version = 11 : i64} {
  func.func @_fused_block_kernel(%arg0: i32, %arg1: memref<32x384xbf16, #tpu.memory_space<vmem>>, %arg2: memref<32x288xbf16, #tpu.memory_space<vmem>>, %arg3: memref<32x1xf32, #tpu.memory_space<vmem>>, %arg4: memref<32x288xbf16, #tpu.memory_space<vmem>>, %arg5: memref<32x1xf32, #tpu.memory_space<vmem>>, %arg6: memref<32x128xbf16, #tpu.memory_space<vmem>>, %arg7: memref<32x384xbf16, #tpu.memory_space<vmem>>) attributes {dimension_semantics = [#tpu.dimension_semantics<arbitrary>], iteration_bounds = array<i64: 1>, scalar_prefetch = 0 : i64, scratch_operands = 1 : i64, tpu.core_type = #tpu.core_type<tc>, window_params = [{pipeline_mode = #tpu.pipeline_mode<synchronous>, transform_indices = @transform_0, window_bounds = array<i64: 32, 384>}, {pipeline_mode = #tpu.pipeline_mode<synchronous>, transform_indices = @transform_1, window_bounds = array<i64: 32, 288>}, {pipeline_mode = #tpu.pipeline_mode<synchronous>, transform_indices = @transform_2, window_bounds = array<i64: 32, 1>}, {pipeline_mode = #tpu.pipeline_mode<synchronous>, transform_indices = @transform_3, window_bounds = array<i64: 32, 288>}, {pipeline_mode = #tpu.pipeline_mode<synchronous>, transform_indices = @transform_4, window_bounds = array<i64: 32, 1>}, {pipeline_mode = #tpu.pipeline_mode<synchronous>, transform_indices = @transform_5, window_bounds = array<i64: 32, 128>}]} {
    %cst = arith.constant 0.000000e+00 : bf16
    %0 = vector.broadcast %cst : bf16 to vector<32x384xbf16>
    %c0 = arith.constant 0 : index
    %c0_0 = arith.constant 0 : index
    %1 = vector.load %arg7[%c0, %c0_0] : memref<32x384xbf16, #tpu.memory_space<vmem>>, vector<32x384xbf16>
    tpu.vector_store %arg7[%c0, %c0_0], %0 {strides = array<i32>} : memref<32x384xbf16, #tpu.memory_space<vmem>>, vector<32x384xbf16>,
    %2 = tpu.iota {dimensions = array<i32: 1>} : vector<1x128xi32>
    %c0_i32 = arith.constant 0 : i32
    %3 = vector.broadcast %c0_i32 : i32 to vector<1x128xi32>
    %4 = arith.addi %2, %3 : vector<1x128xi32>
    %c7_i32 = arith.constant 7 : i32
    %5 = vector.broadcast %c7_i32 : i32 to vector<1x128xi32>
    %6 = arith.andi %4, %5 : vector<1x128xi32>
    %c63_i32 = arith.constant 63 : i32
    %7 = vector.broadcast %c63_i32 : i32 to vector<1x128xi32>
    %8 = arith.andi %4, %7 : vector<1x128xi32>
    %c0_1 = arith.constant 0 : index
    %c119 = arith.constant 119 : index
    %9 = vector.load %arg1[%c0_1, %c119] : memref<32x384xbf16, #tpu.memory_space<vmem>>, vector<32x128xbf16>
    %c1_i32 = arith.constant 1 : i32
    %10 = vector.broadcast %c1_i32 : i32 to vector<1x128xi32>
    %11 = arith.cmpi sge, %6, %10 : vector<1x128xi32>
    %c8_i32 = arith.constant 8 : i32
    %12 = vector.broadcast %c8_i32 : i32 to vector<1x128xi32>
    %13 = arith.cmpi sge, %8, %12 : vector<1x128xi32>
    %14 = arith.andi %11, %13 : vector<1x128xi1>
    %cst_2 = arith.constant 0.000000e+00 : bf16
    %15 = vector.broadcast %cst_2 : bf16 to vector<32x128xbf16>
    %16 = vector.shape_cast %14 : vector<1x128xi1> to vector<1x128xi1>
    %17 = vector.broadcast %16 : vector<1x128xi1> to vector<32x128xi1>
    %18 = arith.select %17, %9, %15 : vector<32x128xi1>, vector<32x128xbf16>
    %c0_3 = arith.constant 0 : index
    %c120 = arith.constant 120 : index
    %19 = vector.load %arg1[%c0_3, %c120] : memref<32x384xbf16, #tpu.memory_space<vmem>>, vector<32x128xbf16>
    %c8_i32_4 = arith.constant 8 : i32
    %20 = vector.broadcast %c8_i32_4 : i32 to vector<1x128xi32>
    %21 = arith.cmpi sge, %8, %20 : vector<1x128xi32>
    %cst_5 = arith.constant 0.000000e+00 : bf16
    %22 = vector.broadcast %cst_5 : bf16 to vector<32x128xbf16>
    %23 = vector.shape_cast %21 : vector<1x128xi1> to vector<1x128xi1>
    %24 = vector.broadcast %23 : vector<1x128xi1> to vector<32x128xi1>
    %25 = arith.select %24, %19, %22 : vector<32x128xi1>, vector<32x128xbf16>
    %c0_6 = arith.constant 0 : index
    %c121 = arith.constant 121 : index
    %26 = vector.load %arg1[%c0_6, %c121] : memref<32x384xbf16, #tpu.memory_space<vmem>>, vector<32x128xbf16>
    %c6_i32 = arith.constant 6 : i32
    %27 = vector.broadcast %c6_i32 : i32 to vector<1x128xi32>
    %28 = arith.cmpi sle, %6, %27 : vector<1x128xi32>
    %c8_i32_7 = arith.constant 8 : i32
    %29 = vector.broadcast %c8_i32_7 : i32 to vector<1x128xi32>
    %30 = arith.cmpi sge, %8, %29 : vector<1x128xi32>
    %31 = arith.andi %28, %30 : vector<1x128xi1>
    %cst_8 = arith.constant 0.000000e+00 : bf16
    %32 = vector.broadcast %cst_8 : bf16 to vector<32x128xbf16>
    %33 = vector.shape_cast %31 : vector<1x128xi1> to vector<1x128xi1>
    %34 = vector.broadcast %33 : vector<1x128xi1> to vector<32x128xi1>
    %35 = arith.select %34, %26, %32 : vector<32x128xi1>, vector<32x128xbf16>
    %c0_9 = arith.constant 0 : index
    %c127 = arith.constant 127 : index
    %36 = vector.load %arg1[%c0_9, %c127] : memref<32x384xbf16, #tpu.memory_space<vmem>>, vector<32x128xbf16>
    %c1_i32_10 = arith.constant 1 : i32
    %37 = vector.broadcast %c1_i32_10 : i32 to vector<1x128xi32>
    %38 = arith.cmpi sge, %6, %37 : vector<1x128xi32>
    %cst_11 = arith.constant 0.000000e+00 : bf16
    %39 = vector.broadcast %cst_11 : bf16 to vector<32x128xbf16>
    %40 = vector.shape_cast %38 : vector<1x128xi1> to vector<1x128xi1>
    %41 = vector.broadcast %40 : vector<1x128xi1> to vector<32x128xi1>
    %42 = arith.select %41, %36, %39 : vector<32x128xi1>, vector<32x128xbf16>
    %c0_12 = arith.constant 0 : index
    %c128 = arith.constant 128 : index
    %43 = vector.load %arg1[%c0_12, %c128] : memref<32x384xbf16, #tpu.memory_space<vmem>>, vector<32x128xbf16>
    %c0_13 = arith.constant 0 : index
    %c129 = arith.constant 129 : index
    %44 = vector.load %arg1[%c0_13, %c129] : memref<32x384xbf16, #tpu.memory_space<vmem>>, vector<32x128xbf16>
    %c6_i32_14 = arith.constant 6 : i32
    %45 = vector.broadcast %c6_i32_14 : i32 to vector<1x128xi32>
    %46 = arith.cmpi sle, %6, %45 : vector<1x128xi32>
    %cst_15 = arith.constant 0.000000e+00 : bf16
    %47 = vector.broadcast %cst_15 : bf16 to vector<32x128xbf16>
    %48 = vector.shape_cast %46 : vector<1x128xi1> to vector<1x128xi1>
    %49 = vector.broadcast %48 : vector<1x128xi1> to vector<32x128xi1>
    %50 = arith.select %49, %44, %47 : vector<32x128xi1>, vector<32x128xbf16>
    %c0_16 = arith.constant 0 : index
    %c135 = arith.constant 135 : index
    %51 = vector.load %arg1[%c0_16, %c135] : memref<32x384xbf16, #tpu.memory_space<vmem>>, vector<32x128xbf16>
    %c1_i32_17 = arith.constant 1 : i32
    %52 = vector.broadcast %c1_i32_17 : i32 to vector<1x128xi32>
    %53 = arith.cmpi sge, %6, %52 : vector<1x128xi32>
    %c56_i32 = arith.constant 56 : i32
    %54 = vector.broadcast %c56_i32 : i32 to vector<1x128xi32>
    %55 = arith.cmpi slt, %8, %54 : vector<1x128xi32>
    %56 = arith.andi %53, %55 : vector<1x128xi1>
    %cst_18 = arith.constant 0.000000e+00 : bf16
    %57 = vector.broadcast %cst_18 : bf16 to vector<32x128xbf16>
    %58 = vector.shape_cast %56 : vector<1x128xi1> to vector<1x128xi1>
    %59 = vector.broadcast %58 : vector<1x128xi1> to vector<32x128xi1>
    %60 = arith.select %59, %51, %57 : vector<32x128xi1>, vector<32x128xbf16>
    %c0_19 = arith.constant 0 : index
    %c136 = arith.constant 136 : index
    %61 = vector.load %arg1[%c0_19, %c136] : memref<32x384xbf16, #tpu.memory_space<vmem>>, vector<32x128xbf16>
    %c56_i32_20 = arith.constant 56 : i32
    %62 = vector.broadcast %c56_i32_20 : i32 to vector<1x128xi32>
    %63 = arith.cmpi slt, %8, %62 : vector<1x128xi32>
    %cst_21 = arith.constant 0.000000e+00 : bf16
    %64 = vector.broadcast %cst_21 : bf16 to vector<32x128xbf16>
    %65 = vector.shape_cast %63 : vector<1x128xi1> to vector<1x128xi1>
    %66 = vector.broadcast %65 : vector<1x128xi1> to vector<32x128xi1>
    %67 = arith.select %66, %61, %64 : vector<32x128xi1>, vector<32x128xbf16>
    %c0_22 = arith.constant 0 : index
    %c137 = arith.constant 137 : index
    %68 = vector.load %arg1[%c0_22, %c137] : memref<32x384xbf16, #tpu.memory_space<vmem>>, vector<32x128xbf16>
    %c6_i32_23 = arith.constant 6 : i32
    %69 = vector.broadcast %c6_i32_23 : i32 to vector<1x128xi32>
    %70 = arith.cmpi sle, %6, %69 : vector<1x128xi32>
    %c56_i32_24 = arith.constant 56 : i32
    %71 = vector.broadcast %c56_i32_24 : i32 to vector<1x128xi32>
    %72 = arith.cmpi slt, %8, %71 : vector<1x128xi32>
    %73 = arith.andi %70, %72 : vector<1x128xi1>
    %cst_25 = arith.constant 0.000000e+00 : bf16
    %74 = vector.broadcast %cst_25 : bf16 to vector<32x128xbf16>
    %75 = vector.shape_cast %73 : vector<1x128xi1> to vector<1x128xi1>
    %76 = vector.broadcast %75 : vector<1x128xi1> to vector<32x128xi1>
    %77 = arith.select %76, %68, %74 : vector<32x128xi1>, vector<32x128xbf16>
    %78 = tpu.concatenate %18, %25, %35, %42, %43, %50, %60, %67, %77 in 0 : vector<32x128xbf16>, vector<32x128xbf16>, vector<32x128xbf16>, vector<32x128xbf16>, vector<32x128xbf16>, vector<32x128xbf16>, vector<32x128xbf16>, vector<32x128xbf16>, vector<32x128xbf16> -> vector<288x128xbf16>
    %c0_26 = arith.constant 0 : index
    %c0_27 = arith.constant 0 : index
    %79 = vector.load %arg2[%c0_26, %c0_27] : memref<32x288xbf16, #tpu.memory_space<vmem>>, vector<32x288xbf16>
    %cst_28 = arith.constant dense<0.000000e+00> : vector<32x128xf32>
    %80 = tpu.matmul %79, %78, %cst_28 {dimension_numbers = #tpu.dot_dimension_numbers<[1], [0], [0], [1], [0, 0, 1, 1], [], []>} : vector<32x288xbf16>, vector<288x128xbf16>, vector<32x128xf32> -> vector<32x128xf32>
    %c0_29 = arith.constant 0 : index
    %c0_30 = arith.constant 0 : index
    %81 = vector.load %arg3[%c0_29, %c0_30] : memref<32x1xf32, #tpu.memory_space<vmem>>, vector<32x1xf32>
    %82 = vector.broadcast %81 : vector<32x1xf32> to vector<32x128xf32>
    %83 = arith.addf %80, %82 : vector<32x128xf32>
    %cst_31 = arith.constant 0.000000e+00 : f32
    %84 = vector.broadcast %cst_31 : f32 to vector<32x128xf32>
    %85 = arith.maximumf %83, %84 : vector<32x128xf32>
    %86 = arith.truncf %85 : vector<32x128xf32> to vector<32x128xbf16>
    %c0_32 = arith.constant 0 : index
    %c128_33 = arith.constant 128 : index
    %87 = vector.load %arg7[%c0_32, %c128_33] : memref<32x384xbf16, #tpu.memory_space<vmem>>, vector<32x128xbf16>
    tpu.vector_store %arg7[%c0_32, %c128_33], %86 {strides = array<i32>} : memref<32x384xbf16, #tpu.memory_space<vmem>>, vector<32x128xbf16>,
    %88 = tpu.iota {dimensions = array<i32: 1>} : vector<1x128xi32>
    %c0_i32_34 = arith.constant 0 : i32
    %89 = vector.broadcast %c0_i32_34 : i32 to vector<1x128xi32>
    %90 = arith.addi %88, %89 : vector<1x128xi32>
    %c7_i32_35 = arith.constant 7 : i32
    %91 = vector.broadcast %c7_i32_35 : i32 to vector<1x128xi32>
    %92 = arith.andi %90, %91 : vector<1x128xi32>
    %c63_i32_36 = arith.constant 63 : i32
    %93 = vector.broadcast %c63_i32_36 : i32 to vector<1x128xi32>
    %94 = arith.andi %90, %93 : vector<1x128xi32>
    %c0_37 = arith.constant 0 : index
    %c119_38 = arith.constant 119 : index
    %95 = vector.load %arg7[%c0_37, %c119_38] : memref<32x384xbf16, #tpu.memory_space<vmem>>, vector<32x128xbf16>
    %c1_i32_39 = arith.constant 1 : i32
    %96 = vector.broadcast %c1_i32_39 : i32 to vector<1x128xi32>
    %97 = arith.cmpi sge, %92, %96 : vector<1x128xi32>
    %c8_i32_40 = arith.constant 8 : i32
    %98 = vector.broadcast %c8_i32_40 : i32 to vector<1x128xi32>
    %99 = arith.cmpi sge, %94, %98 : vector<1x128xi32>
    %100 = arith.andi %97, %99 : vector<1x128xi1>
    %cst_41 = arith.constant 0.000000e+00 : bf16
    %101 = vector.broadcast %cst_41 : bf16 to vector<32x128xbf16>
    %102 = vector.shape_cast %100 : vector<1x128xi1> to vector<1x128xi1>
    %103 = vector.broadcast %102 : vector<1x128xi1> to vector<32x128xi1>
    %104 = arith.select %103, %95, %101 : vector<32x128xi1>, vector<32x128xbf16>
    %c0_42 = arith.constant 0 : index
    %c120_43 = arith.constant 120 : index
    %105 = vector.load %arg7[%c0_42, %c120_43] : memref<32x384xbf16, #tpu.memory_space<vmem>>, vector<32x128xbf16>
    %c8_i32_44 = arith.constant 8 : i32
    %106 = vector.broadcast %c8_i32_44 : i32 to vector<1x128xi32>
    %107 = arith.cmpi sge, %94, %106 : vector<1x128xi32>
    %cst_45 = arith.constant 0.000000e+00 : bf16
    %108 = vector.broadcast %cst_45 : bf16 to vector<32x128xbf16>
    %109 = vector.shape_cast %107 : vector<1x128xi1> to vector<1x128xi1>
    %110 = vector.broadcast %109 : vector<1x128xi1> to vector<32x128xi1>
    %111 = arith.select %110, %105, %108 : vector<32x128xi1>, vector<32x128xbf16>
    %c0_46 = arith.constant 0 : index
    %c121_47 = arith.constant 121 : index
    %112 = vector.load %arg7[%c0_46, %c121_47] : memref<32x384xbf16, #tpu.memory_space<vmem>>, vector<32x128xbf16>
    %c6_i32_48 = arith.constant 6 : i32
    %113 = vector.broadcast %c6_i32_48 : i32 to vector<1x128xi32>
    %114 = arith.cmpi sle, %92, %113 : vector<1x128xi32>
    %c8_i32_49 = arith.constant 8 : i32
    %115 = vector.broadcast %c8_i32_49 : i32 to vector<1x128xi32>
    %116 = arith.cmpi sge, %94, %115 : vector<1x128xi32>
    %117 = arith.andi %114, %116 : vector<1x128xi1>
    %cst_50 = arith.constant 0.000000e+00 : bf16
    %118 = vector.broadcast %cst_50 : bf16 to vector<32x128xbf16>
    %119 = vector.shape_cast %117 : vector<1x128xi1> to vector<1x128xi1>
    %120 = vector.broadcast %119 : vector<1x128xi1> to vector<32x128xi1>
    %121 = arith.select %120, %112, %118 : vector<32x128xi1>, vector<32x128xbf16>
    %c0_51 = arith.constant 0 : index
    %c127_52 = arith.constant 127 : index
    %122 = vector.load %arg7[%c0_51, %c127_52] : memref<32x384xbf16, #tpu.memory_space<vmem>>, vector<32x128xbf16>
    %c1_i32_53 = arith.constant 1 : i32
    %123 = vector.broadcast %c1_i32_53 : i32 to vector<1x128xi32>
    %124 = arith.cmpi sge, %92, %123 : vector<1x128xi32>
    %cst_54 = arith.constant 0.000000e+00 : bf16
    %125 = vector.broadcast %cst_54 : bf16 to vector<32x128xbf16>
    %126 = vector.shape_cast %124 : vector<1x128xi1> to vector<1x128xi1>
    %127 = vector.broadcast %126 : vector<1x128xi1> to vector<32x128xi1>
    %128 = arith.select %127, %122, %125 : vector<32x128xi1>, vector<32x128xbf16>
    %c0_55 = arith.constant 0 : index
    %c128_56 = arith.constant 128 : index
    %129 = vector.load %arg7[%c0_55, %c128_56] : memref<32x384xbf16, #tpu.memory_space<vmem>>, vector<32x128xbf16>
    %c0_57 = arith.constant 0 : index
    %c129_58 = arith.constant 129 : index
    %130 = vector.load %arg7[%c0_57, %c129_58] : memref<32x384xbf16, #tpu.memory_space<vmem>>, vector<32x128xbf16>
    %c6_i32_59 = arith.constant 6 : i32
    %131 = vector.broadcast %c6_i32_59 : i32 to vector<1x128xi32>
    %132 = arith.cmpi sle, %92, %131 : vector<1x128xi32>
    %cst_60 = arith.constant 0.000000e+00 : bf16
    %133 = vector.broadcast %cst_60 : bf16 to vector<32x128xbf16>
    %134 = vector.shape_cast %132 : vector<1x128xi1> to vector<1x128xi1>
    %135 = vector.broadcast %134 : vector<1x128xi1> to vector<32x128xi1>
    %136 = arith.select %135, %130, %133 : vector<32x128xi1>, vector<32x128xbf16>
    %c0_61 = arith.constant 0 : index
    %c135_62 = arith.constant 135 : index
    %137 = vector.load %arg7[%c0_61, %c135_62] : memref<32x384xbf16, #tpu.memory_space<vmem>>, vector<32x128xbf16>
    %c1_i32_63 = arith.constant 1 : i32
    %138 = vector.broadcast %c1_i32_63 : i32 to vector<1x128xi32>
    %139 = arith.cmpi sge, %92, %138 : vector<1x128xi32>
    %c56_i32_64 = arith.constant 56 : i32
    %140 = vector.broadcast %c56_i32_64 : i32 to vector<1x128xi32>
    %141 = arith.cmpi slt, %94, %140 : vector<1x128xi32>
    %142 = arith.andi %139, %141 : vector<1x128xi1>
    %cst_65 = arith.constant 0.000000e+00 : bf16
    %143 = vector.broadcast %cst_65 : bf16 to vector<32x128xbf16>
    %144 = vector.shape_cast %142 : vector<1x128xi1> to vector<1x128xi1>
    %145 = vector.broadcast %144 : vector<1x128xi1> to vector<32x128xi1>
    %146 = arith.select %145, %137, %143 : vector<32x128xi1>, vector<32x128xbf16>
    %c0_66 = arith.constant 0 : index
    %c136_67 = arith.constant 136 : index
    %147 = vector.load %arg7[%c0_66, %c136_67] : memref<32x384xbf16, #tpu.memory_space<vmem>>, vector<32x128xbf16>
    %c56_i32_68 = arith.constant 56 : i32
    %148 = vector.broadcast %c56_i32_68 : i32 to vector<1x128xi32>
    %149 = arith.cmpi slt, %94, %148 : vector<1x128xi32>
    %cst_69 = arith.constant 0.000000e+00 : bf16
    %150 = vector.broadcast %cst_69 : bf16 to vector<32x128xbf16>
    %151 = vector.shape_cast %149 : vector<1x128xi1> to vector<1x128xi1>
    %152 = vector.broadcast %151 : vector<1x128xi1> to vector<32x128xi1>
    %153 = arith.select %152, %147, %150 : vector<32x128xi1>, vector<32x128xbf16>
    %c0_70 = arith.constant 0 : index
    %c137_71 = arith.constant 137 : index
    %154 = vector.load %arg7[%c0_70, %c137_71] : memref<32x384xbf16, #tpu.memory_space<vmem>>, vector<32x128xbf16>
    %c6_i32_72 = arith.constant 6 : i32
    %155 = vector.broadcast %c6_i32_72 : i32 to vector<1x128xi32>
    %156 = arith.cmpi sle, %92, %155 : vector<1x128xi32>
    %c56_i32_73 = arith.constant 56 : i32
    %157 = vector.broadcast %c56_i32_73 : i32 to vector<1x128xi32>
    %158 = arith.cmpi slt, %94, %157 : vector<1x128xi32>
    %159 = arith.andi %156, %158 : vector<1x128xi1>
    %cst_74 = arith.constant 0.000000e+00 : bf16
    %160 = vector.broadcast %cst_74 : bf16 to vector<32x128xbf16>
    %161 = vector.shape_cast %159 : vector<1x128xi1> to vector<1x128xi1>
    %162 = vector.broadcast %161 : vector<1x128xi1> to vector<32x128xi1>
    %163 = arith.select %162, %154, %160 : vector<32x128xi1>, vector<32x128xbf16>
    %164 = tpu.concatenate %104, %111, %121, %128, %129, %136, %146, %153, %163 in 0 : vector<32x128xbf16>, vector<32x128xbf16>, vector<32x128xbf16>, vector<32x128xbf16>, vector<32x128xbf16>, vector<32x128xbf16>, vector<32x128xbf16>, vector<32x128xbf16>, vector<32x128xbf16> -> vector<288x128xbf16>
    %c0_75 = arith.constant 0 : index
    %c0_76 = arith.constant 0 : index
    %165 = vector.load %arg4[%c0_75, %c0_76] : memref<32x288xbf16, #tpu.memory_space<vmem>>, vector<32x288xbf16>
    %cst_77 = arith.constant dense<0.000000e+00> : vector<32x128xf32>
    %166 = tpu.matmul %165, %164, %cst_77 {dimension_numbers = #tpu.dot_dimension_numbers<[1], [0], [0], [1], [0, 0, 1, 1], [], []>} : vector<32x288xbf16>, vector<288x128xbf16>, vector<32x128xf32> -> vector<32x128xf32>
    %c0_78 = arith.constant 0 : index
    %c0_79 = arith.constant 0 : index
    %167 = vector.load %arg5[%c0_78, %c0_79] : memref<32x1xf32, #tpu.memory_space<vmem>>, vector<32x1xf32>
    %168 = vector.broadcast %167 : vector<32x1xf32> to vector<32x128xf32>
    %169 = arith.addf %166, %168 : vector<32x128xf32>
    %c0_80 = arith.constant 0 : index
    %c128_81 = arith.constant 128 : index
    %170 = vector.load %arg1[%c0_80, %c128_81] : memref<32x384xbf16, #tpu.memory_space<vmem>>, vector<32x128xbf16>
    %171 = arith.extf %170 : vector<32x128xbf16> to vector<32x128xf32>
    %172 = arith.addf %169, %171 : vector<32x128xf32>
    %cst_82 = arith.constant 0.000000e+00 : f32
    %173 = vector.broadcast %cst_82 : f32 to vector<32x128xf32>
    %174 = arith.maximumf %172, %173 : vector<32x128xf32>
    %175 = arith.truncf %174 : vector<32x128xf32> to vector<32x128xbf16>
    %c0_83 = arith.constant 0 : index
    %c0_84 = arith.constant 0 : index
    %176 = vector.load %arg6[%c0_83, %c0_84] : memref<32x128xbf16, #tpu.memory_space<vmem>>, vector<32x128xbf16>
    tpu.vector_store %arg6[%c0_83, %c0_84], %175 {strides = array<i32>} : memref<32x128xbf16, #tpu.memory_space<vmem>>, vector<32x128xbf16>,
    return
  }
  func.func @transform_0(%arg0: i32) -> (i32, i32) {
    %c0_i32 = arith.constant 0 : i32
    %c0_i32_0 = arith.constant 0 : i32
    %c0_i32_1 = arith.constant 0 : i32
    return %c0_i32, %c0_i32_0 : i32, i32
  }
  func.func @transform_1(%arg0: i32) -> (i32, i32) {
    %c0_i32 = arith.constant 0 : i32
    %c0_i32_0 = arith.constant 0 : i32
    %c0_i32_1 = arith.constant 0 : i32
    return %c0_i32, %c0_i32_0 : i32, i32
  }
  func.func @transform_2(%arg0: i32) -> (i32, i32) {
    %c0_i32 = arith.constant 0 : i32
    %c0_i32_0 = arith.constant 0 : i32
    %c0_i32_1 = arith.constant 0 : i32
    return %c0_i32, %c0_i32_0 : i32, i32
  }
  func.func @transform_3(%arg0: i32) -> (i32, i32) {
    %c0_i32 = arith.constant 0 : i32
    %c0_i32_0 = arith.constant 0 : i32
    %c0_i32_1 = arith.constant 0 : i32
    return %c0_i32, %c0_i32_0 : i32, i32
  }
  func.func @transform_4(%arg0: i32) -> (i32, i32) {
    %c0_i32 = arith.constant 0 : i32
    %c0_i32_0 = arith.constant 0 : i32
    %c0_i32_1 = arith.constant 0 : i32
    return %c0_i32, %c0_i32_0 : i32, i32
  }
  func.func @transform_5(%arg0: i32) -> (i32, i32) {
    %c0_i32 = arith.constant 0 : i32
    %c0_i32_0 = arith.constant 0 : i32
    %c0_i32_1 = arith.constant 0 : i32
    return %c0_i32, %c0_i32_0 : i32, i32
  }
}

module attributes {stable_mosaic.version = 11 : i64} {
  func.func @_gemm_conv_kernel(%arg0: i32, %arg1: memref<64x288xbf16, #tpu.memory_space<vmem>>, %arg2: memref<288x128xbf16, #tpu.memory_space<vmem>>, %arg3: memref<64x1xf32, #tpu.memory_space<vmem>>, %arg4: memref<64x128xbf16, #tpu.memory_space<vmem>>) attributes {dimension_semantics = [#tpu.dimension_semantics<parallel>], iteration_bounds = array<i64: 1>, scalar_prefetch = 0 : i64, scratch_operands = 0 : i64, tpu.core_type = #tpu.core_type<tc>, window_params = [{pipeline_mode = #tpu.pipeline_mode<synchronous>, transform_indices = @transform_0, window_bounds = array<i64: 64, 288>}, {transform_indices = @transform_1, window_bounds = array<i64: 288, 128>}, {pipeline_mode = #tpu.pipeline_mode<synchronous>, transform_indices = @transform_2, window_bounds = array<i64: 64, 1>}, {transform_indices = @transform_3, window_bounds = array<i64: 64, 128>}]} {
    %c0 = arith.constant 0 : index
    %c0_0 = arith.constant 0 : index
    %0 = vector.load %arg1[%c0, %c0_0] : memref<64x288xbf16, #tpu.memory_space<vmem>>, vector<64x288xbf16>
    %c0_1 = arith.constant 0 : index
    %c0_2 = arith.constant 0 : index
    %1 = vector.load %arg2[%c0_1, %c0_2] : memref<288x128xbf16, #tpu.memory_space<vmem>>, vector<288x128xbf16>
    %cst = arith.constant dense<0.000000e+00> : vector<64x128xf32>
    %2 = tpu.matmul %0, %1, %cst {dimension_numbers = #tpu.dot_dimension_numbers<[1], [0], [0], [1], [0, 0, 1, 1], [], []>} : vector<64x288xbf16>, vector<288x128xbf16>, vector<64x128xf32> -> vector<64x128xf32>
    %c0_3 = arith.constant 0 : index
    %c0_4 = arith.constant 0 : index
    %3 = vector.load %arg3[%c0_3, %c0_4] : memref<64x1xf32, #tpu.memory_space<vmem>>, vector<64x1xf32>
    %4 = vector.broadcast %3 : vector<64x1xf32> to vector<64x128xf32>
    %5 = arith.addf %2, %4 : vector<64x128xf32>
    %cst_5 = arith.constant 0.000000e+00 : f32
    %6 = vector.broadcast %cst_5 : f32 to vector<64x128xf32>
    %7 = arith.maximumf %5, %6 : vector<64x128xf32>
    %8 = tpu.iota {dimensions = array<i32: 1>} : vector<1x128xi32>
    %c128_i32 = arith.constant 128 : i32
    %9 = arith.muli %arg0, %c128_i32 : i32
    %10 = vector.broadcast %9 : i32 to vector<1x128xi32>
    %11 = arith.addi %8, %10 : vector<1x128xi32>
    %c32_i32 = arith.constant 32 : i32
    %12 = vector.broadcast %c32_i32 : i32 to vector<1x128xi32>
    %13 = arith.cmpi slt, %11, %12 : vector<1x128xi32>
    %cst_6 = arith.constant 0.000000e+00 : f32
    %14 = vector.broadcast %cst_6 : f32 to vector<64x128xf32>
    %15 = vector.shape_cast %13 : vector<1x128xi1> to vector<1x128xi1>
    %16 = vector.broadcast %15 : vector<1x128xi1> to vector<64x128xi1>
    %17 = arith.select %16, %7, %14 : vector<64x128xi1>, vector<64x128xf32>
    %18 = arith.truncf %17 : vector<64x128xf32> to vector<64x128xbf16>
    %c0_7 = arith.constant 0 : index
    %c0_8 = arith.constant 0 : index
    %19 = vector.load %arg4[%c0_7, %c0_8] : memref<64x128xbf16, #tpu.memory_space<vmem>>, vector<64x128xbf16>
    tpu.vector_store %arg4[%c0_7, %c0_8], %18 {strides = array<i32>} : memref<64x128xbf16, #tpu.memory_space<vmem>>, vector<64x128xbf16>,
    return
  }
  func.func @transform_0(%arg0: i32) -> (i32, i32) {
    %c0_i32 = arith.constant 0 : i32
    %c0_i32_0 = arith.constant 0 : i32
    %c0_i32_1 = arith.constant 0 : i32
    return %c0_i32, %c0_i32_0 : i32, i32
  }
  func.func @transform_1(%arg0: i32) -> (i32, i32) {
    %c0_i32 = arith.constant 0 : i32
    %c0_i32_0 = arith.constant 0 : i32
    return %c0_i32, %arg0 : i32, i32
  }
  func.func @transform_2(%arg0: i32) -> (i32, i32) {
    %c0_i32 = arith.constant 0 : i32
    %c0_i32_0 = arith.constant 0 : i32
    %c0_i32_1 = arith.constant 0 : i32
    return %c0_i32, %c0_i32_0 : i32, i32
  }
  func.func @transform_3(%arg0: i32) -> (i32, i32) {
    %c0_i32 = arith.constant 0 : i32
    %c0_i32_0 = arith.constant 0 : i32
    return %c0_i32, %arg0 : i32, i32
  }
}

module attributes {stable_mosaic.version = 11 : i64} {
  func.func @_shift_conv_res_kernel(%arg0: i32, %arg1: memref<64x384xbf16, #tpu.memory_space<vmem>>, %arg2: memref<64x576xbf16, #tpu.memory_space<vmem>>, %arg3: memref<64x1xf32, #tpu.memory_space<vmem>>, %arg4: memref<32x128xbf16, #tpu.memory_space<vmem>>, %arg5: memref<64x128xbf16, #tpu.memory_space<vmem>>) attributes {dimension_semantics = [#tpu.dimension_semantics<parallel>], iteration_bounds = array<i64: 1>, scalar_prefetch = 0 : i64, scratch_operands = 0 : i64, tpu.core_type = #tpu.core_type<tc>, window_params = [{pipeline_mode = #tpu.pipeline_mode<synchronous>, transform_indices = @transform_0, window_bounds = array<i64: 64, 384>}, {pipeline_mode = #tpu.pipeline_mode<synchronous>, transform_indices = @transform_1, window_bounds = array<i64: 64, 576>}, {pipeline_mode = #tpu.pipeline_mode<synchronous>, transform_indices = @transform_2, window_bounds = array<i64: 64, 1>}, {transform_indices = @transform_3, window_bounds = array<i64: 32, 128>}, {transform_indices = @transform_4, window_bounds = array<i64: 64, 128>}]} {
    %0 = tpu.iota {dimensions = array<i32: 1>} : vector<1x128xi32>
    %c0_i32 = arith.constant 0 : i32
    %1 = vector.broadcast %c0_i32 : i32 to vector<1x128xi32>
    %2 = arith.addi %0, %1 : vector<1x128xi32>
    %c3_i32 = arith.constant 3 : i32
    %3 = vector.broadcast %c3_i32 : i32 to vector<1x128xi32>
    %4 = arith.andi %2, %3 : vector<1x128xi32>
    %c15_i32 = arith.constant 15 : i32
    %5 = vector.broadcast %c15_i32 : i32 to vector<1x128xi32>
    %6 = arith.andi %2, %5 : vector<1x128xi32>
    %c0 = arith.constant 0 : index
    %c123 = arith.constant 123 : index
    %7 = vector.load %arg1[%c0, %c123] : memref<64x384xbf16, #tpu.memory_space<vmem>>, vector<64x128xbf16>
    %c1_i32 = arith.constant 1 : i32
    %8 = vector.broadcast %c1_i32 : i32 to vector<1x128xi32>
    %9 = arith.cmpi sge, %4, %8 : vector<1x128xi32>
    %c4_i32 = arith.constant 4 : i32
    %10 = vector.broadcast %c4_i32 : i32 to vector<1x128xi32>
    %11 = arith.cmpi sge, %6, %10 : vector<1x128xi32>
    %12 = arith.andi %9, %11 : vector<1x128xi1>
    %cst = arith.constant 0.000000e+00 : bf16
    %13 = vector.broadcast %cst : bf16 to vector<64x128xbf16>
    %14 = vector.shape_cast %12 : vector<1x128xi1> to vector<1x128xi1>
    %15 = vector.broadcast %14 : vector<1x128xi1> to vector<64x128xi1>
    %16 = arith.select %15, %7, %13 : vector<64x128xi1>, vector<64x128xbf16>
    %c0_0 = arith.constant 0 : index
    %c124 = arith.constant 124 : index
    %17 = vector.load %arg1[%c0_0, %c124] : memref<64x384xbf16, #tpu.memory_space<vmem>>, vector<64x128xbf16>
    %c4_i32_1 = arith.constant 4 : i32
    %18 = vector.broadcast %c4_i32_1 : i32 to vector<1x128xi32>
    %19 = arith.cmpi sge, %6, %18 : vector<1x128xi32>
    %cst_2 = arith.constant 0.000000e+00 : bf16
    %20 = vector.broadcast %cst_2 : bf16 to vector<64x128xbf16>
    %21 = vector.shape_cast %19 : vector<1x128xi1> to vector<1x128xi1>
    %22 = vector.broadcast %21 : vector<1x128xi1> to vector<64x128xi1>
    %23 = arith.select %22, %17, %20 : vector<64x128xi1>, vector<64x128xbf16>
    %c0_3 = arith.constant 0 : index
    %c125 = arith.constant 125 : index
    %24 = vector.load %arg1[%c0_3, %c125] : memref<64x384xbf16, #tpu.memory_space<vmem>>, vector<64x128xbf16>
    %c2_i32 = arith.constant 2 : i32
    %25 = vector.broadcast %c2_i32 : i32 to vector<1x128xi32>
    %26 = arith.cmpi sle, %4, %25 : vector<1x128xi32>
    %c4_i32_4 = arith.constant 4 : i32
    %27 = vector.broadcast %c4_i32_4 : i32 to vector<1x128xi32>
    %28 = arith.cmpi sge, %6, %27 : vector<1x128xi32>
    %29 = arith.andi %26, %28 : vector<1x128xi1>
    %cst_5 = arith.constant 0.000000e+00 : bf16
    %30 = vector.broadcast %cst_5 : bf16 to vector<64x128xbf16>
    %31 = vector.shape_cast %29 : vector<1x128xi1> to vector<1x128xi1>
    %32 = vector.broadcast %31 : vector<1x128xi1> to vector<64x128xi1>
    %33 = arith.select %32, %24, %30 : vector<64x128xi1>, vector<64x128xbf16>
    %c0_6 = arith.constant 0 : index
    %c127 = arith.constant 127 : index
    %34 = vector.load %arg1[%c0_6, %c127] : memref<64x384xbf16, #tpu.memory_space<vmem>>, vector<64x128xbf16>
    %c1_i32_7 = arith.constant 1 : i32
    %35 = vector.broadcast %c1_i32_7 : i32 to vector<1x128xi32>
    %36 = arith.cmpi sge, %4, %35 : vector<1x128xi32>
    %cst_8 = arith.constant 0.000000e+00 : bf16
    %37 = vector.broadcast %cst_8 : bf16 to vector<64x128xbf16>
    %38 = vector.shape_cast %36 : vector<1x128xi1> to vector<1x128xi1>
    %39 = vector.broadcast %38 : vector<1x128xi1> to vector<64x128xi1>
    %40 = arith.select %39, %34, %37 : vector<64x128xi1>, vector<64x128xbf16>
    %c0_9 = arith.constant 0 : index
    %c128 = arith.constant 128 : index
    %41 = vector.load %arg1[%c0_9, %c128] : memref<64x384xbf16, #tpu.memory_space<vmem>>, vector<64x128xbf16>
    %c0_10 = arith.constant 0 : index
    %c129 = arith.constant 129 : index
    %42 = vector.load %arg1[%c0_10, %c129] : memref<64x384xbf16, #tpu.memory_space<vmem>>, vector<64x128xbf16>
    %c2_i32_11 = arith.constant 2 : i32
    %43 = vector.broadcast %c2_i32_11 : i32 to vector<1x128xi32>
    %44 = arith.cmpi sle, %4, %43 : vector<1x128xi32>
    %cst_12 = arith.constant 0.000000e+00 : bf16
    %45 = vector.broadcast %cst_12 : bf16 to vector<64x128xbf16>
    %46 = vector.shape_cast %44 : vector<1x128xi1> to vector<1x128xi1>
    %47 = vector.broadcast %46 : vector<1x128xi1> to vector<64x128xi1>
    %48 = arith.select %47, %42, %45 : vector<64x128xi1>, vector<64x128xbf16>
    %c0_13 = arith.constant 0 : index
    %c131 = arith.constant 131 : index
    %49 = vector.load %arg1[%c0_13, %c131] : memref<64x384xbf16, #tpu.memory_space<vmem>>, vector<64x128xbf16>
    %c1_i32_14 = arith.constant 1 : i32
    %50 = vector.broadcast %c1_i32_14 : i32 to vector<1x128xi32>
    %51 = arith.cmpi sge, %4, %50 : vector<1x128xi32>
    %c12_i32 = arith.constant 12 : i32
    %52 = vector.broadcast %c12_i32 : i32 to vector<1x128xi32>
    %53 = arith.cmpi slt, %6, %52 : vector<1x128xi32>
    %54 = arith.andi %51, %53 : vector<1x128xi1>
    %cst_15 = arith.constant 0.000000e+00 : bf16
    %55 = vector.broadcast %cst_15 : bf16 to vector<64x128xbf16>
    %56 = vector.shape_cast %54 : vector<1x128xi1> to vector<1x128xi1>
    %57 = vector.broadcast %56 : vector<1x128xi1> to vector<64x128xi1>
    %58 = arith.select %57, %49, %55 : vector<64x128xi1>, vector<64x128xbf16>
    %c0_16 = arith.constant 0 : index
    %c132 = arith.constant 132 : index
    %59 = vector.load %arg1[%c0_16, %c132] : memref<64x384xbf16, #tpu.memory_space<vmem>>, vector<64x128xbf16>
    %c12_i32_17 = arith.constant 12 : i32
    %60 = vector.broadcast %c12_i32_17 : i32 to vector<1x128xi32>
    %61 = arith.cmpi slt, %6, %60 : vector<1x128xi32>
    %cst_18 = arith.constant 0.000000e+00 : bf16
    %62 = vector.broadcast %cst_18 : bf16 to vector<64x128xbf16>
    %63 = vector.shape_cast %61 : vector<1x128xi1> to vector<1x128xi1>
    %64 = vector.broadcast %63 : vector<1x128xi1> to vector<64x128xi1>
    %65 = arith.select %64, %59, %62 : vector<64x128xi1>, vector<64x128xbf16>
    %c0_19 = arith.constant 0 : index
    %c133 = arith.constant 133 : index
    %66 = vector.load %arg1[%c0_19, %c133] : memref<64x384xbf16, #tpu.memory_space<vmem>>, vector<64x128xbf16>
    %c2_i32_20 = arith.constant 2 : i32
    %67 = vector.broadcast %c2_i32_20 : i32 to vector<1x128xi32>
    %68 = arith.cmpi sle, %4, %67 : vector<1x128xi32>
    %c12_i32_21 = arith.constant 12 : i32
    %69 = vector.broadcast %c12_i32_21 : i32 to vector<1x128xi32>
    %70 = arith.cmpi slt, %6, %69 : vector<1x128xi32>
    %71 = arith.andi %68, %70 : vector<1x128xi1>
    %cst_22 = arith.constant 0.000000e+00 : bf16
    %72 = vector.broadcast %cst_22 : bf16 to vector<64x128xbf16>
    %73 = vector.shape_cast %71 : vector<1x128xi1> to vector<1x128xi1>
    %74 = vector.broadcast %73 : vector<1x128xi1> to vector<64x128xi1>
    %75 = arith.select %74, %66, %72 : vector<64x128xi1>, vector<64x128xbf16>
    %76 = tpu.concatenate %16, %23, %33, %40, %41, %48, %58, %65, %75 in 0 : vector<64x128xbf16>, vector<64x128xbf16>, vector<64x128xbf16>, vector<64x128xbf16>, vector<64x128xbf16>, vector<64x128xbf16>, vector<64x128xbf16>, vector<64x128xbf16>, vector<64x128xbf16> -> vector<576x128xbf16>
    %c0_23 = arith.constant 0 : index
    %c0_24 = arith.constant 0 : index
    %77 = vector.load %arg2[%c0_23, %c0_24] : memref<64x576xbf16, #tpu.memory_space<vmem>>, vector<64x576xbf16>
    %cst_25 = arith.constant dense<0.000000e+00> : vector<64x128xf32>
    %78 = tpu.matmul %77, %76, %cst_25 {dimension_numbers = #tpu.dot_dimension_numbers<[1], [0], [0], [1], [0, 0, 1, 1], [], []>} : vector<64x576xbf16>, vector<576x128xbf16>, vector<64x128xf32> -> vector<64x128xf32>
    %c0_26 = arith.constant 0 : index
    %c0_27 = arith.constant 0 : index
    %79 = vector.load %arg3[%c0_26, %c0_27] : memref<64x1xf32, #tpu.memory_space<vmem>>, vector<64x1xf32>
    %80 = vector.broadcast %79 : vector<64x1xf32> to vector<64x128xf32>
    %81 = arith.addf %78, %80 : vector<64x128xf32>
    %c0_28 = arith.constant 0 : index
    %c0_29 = arith.constant 0 : index
    %82 = vector.load %arg4[%c0_28, %c0_29] : memref<32x128xbf16, #tpu.memory_space<vmem>>, vector<32x128xbf16>
    %83 = arith.extf %82 : vector<32x128xbf16> to vector<32x128xf32>
    %cst_30 = arith.constant 0.000000e+00 : f32
    %84 = vector.broadcast %cst_30 : f32 to vector<16x128xf32>
    %cst_31 = arith.constant 0.000000e+00 : f32
    %85 = vector.broadcast %cst_31 : f32 to vector<16x128xf32>
    %86 = tpu.concatenate %84, %83, %85 in 0 : vector<16x128xf32>, vector<32x128xf32>, vector<16x128xf32> -> vector<64x128xf32>
    %87 = arith.addf %81, %86 : vector<64x128xf32>
    %cst_32 = arith.constant 0.000000e+00 : f32
    %88 = vector.broadcast %cst_32 : f32 to vector<64x128xf32>
    %89 = arith.maximumf %87, %88 : vector<64x128xf32>
    %c32_i32 = arith.constant 32 : i32
    %90 = vector.broadcast %c32_i32 : i32 to vector<1x128xi32>
    %91 = arith.cmpi slt, %2, %90 : vector<1x128xi32>
    %cst_33 = arith.constant 0.000000e+00 : f32
    %92 = vector.broadcast %cst_33 : f32 to vector<64x128xf32>
    %93 = vector.shape_cast %91 : vector<1x128xi1> to vector<1x128xi1>
    %94 = vector.broadcast %93 : vector<1x128xi1> to vector<64x128xi1>
    %95 = arith.select %94, %89, %92 : vector<64x128xi1>, vector<64x128xf32>
    %96 = arith.truncf %95 : vector<64x128xf32> to vector<64x128xbf16>
    %c0_34 = arith.constant 0 : index
    %c0_35 = arith.constant 0 : index
    %97 = vector.load %arg5[%c0_34, %c0_35] : memref<64x128xbf16, #tpu.memory_space<vmem>>, vector<64x128xbf16>
    tpu.vector_store %arg5[%c0_34, %c0_35], %96 {strides = array<i32>} : memref<64x128xbf16, #tpu.memory_space<vmem>>, vector<64x128xbf16>,
    return
  }
  func.func @transform_0(%arg0: i32) -> (i32, i32) {
    %c0_i32 = arith.constant 0 : i32
    %c0_i32_0 = arith.constant 0 : i32
    %c0_i32_1 = arith.constant 0 : i32
    return %c0_i32, %c0_i32_0 : i32, i32
  }
  func.func @transform_1(%arg0: i32) -> (i32, i32) {
    %c0_i32 = arith.constant 0 : i32
    %c0_i32_0 = arith.constant 0 : i32
    %c0_i32_1 = arith.constant 0 : i32
    return %c0_i32, %c0_i32_0 : i32, i32
  }
  func.func @transform_2(%arg0: i32) -> (i32, i32) {
    %c0_i32 = arith.constant 0 : i32
    %c0_i32_0 = arith.constant 0 : i32
    %c0_i32_1 = arith.constant 0 : i32
    return %c0_i32, %c0_i32_0 : i32, i32
  }
  func.func @transform_3(%arg0: i32) -> (i32, i32) {
    %c0_i32 = arith.constant 0 : i32
    %c0_i32_0 = arith.constant 0 : i32
    return %c0_i32, %arg0 : i32, i32
  }
  func.func @transform_4(%arg0: i32) -> (i32, i32) {
    %c0_i32 = arith.constant 0 : i32
    %c0_i32_0 = arith.constant 0 : i32
    return %c0_i32, %arg0 : i32, i32
  }
}

module attributes {stable_mosaic.version = 11 : i64} {
  func.func @_fused_block_kernel(%arg0: i32, %arg1: memref<64x384xbf16, #tpu.memory_space<vmem>>, %arg2: memref<64x576xbf16, #tpu.memory_space<vmem>>, %arg3: memref<64x1xf32, #tpu.memory_space<vmem>>, %arg4: memref<64x576xbf16, #tpu.memory_space<vmem>>, %arg5: memref<64x1xf32, #tpu.memory_space<vmem>>, %arg6: memref<64x128xbf16, #tpu.memory_space<vmem>>, %arg7: memref<64x384xbf16, #tpu.memory_space<vmem>>) attributes {dimension_semantics = [#tpu.dimension_semantics<arbitrary>], iteration_bounds = array<i64: 1>, scalar_prefetch = 0 : i64, scratch_operands = 1 : i64, tpu.core_type = #tpu.core_type<tc>, window_params = [{pipeline_mode = #tpu.pipeline_mode<synchronous>, transform_indices = @transform_0, window_bounds = array<i64: 64, 384>}, {pipeline_mode = #tpu.pipeline_mode<synchronous>, transform_indices = @transform_1, window_bounds = array<i64: 64, 576>}, {pipeline_mode = #tpu.pipeline_mode<synchronous>, transform_indices = @transform_2, window_bounds = array<i64: 64, 1>}, {pipeline_mode = #tpu.pipeline_mode<synchronous>, transform_indices = @transform_3, window_bounds = array<i64: 64, 576>}, {pipeline_mode = #tpu.pipeline_mode<synchronous>, transform_indices = @transform_4, window_bounds = array<i64: 64, 1>}, {pipeline_mode = #tpu.pipeline_mode<synchronous>, transform_indices = @transform_5, window_bounds = array<i64: 64, 128>}]} {
    %cst = arith.constant 0.000000e+00 : bf16
    %0 = vector.broadcast %cst : bf16 to vector<64x384xbf16>
    %c0 = arith.constant 0 : index
    %c0_0 = arith.constant 0 : index
    %1 = vector.load %arg7[%c0, %c0_0] : memref<64x384xbf16, #tpu.memory_space<vmem>>, vector<64x384xbf16>
    tpu.vector_store %arg7[%c0, %c0_0], %0 {strides = array<i32>} : memref<64x384xbf16, #tpu.memory_space<vmem>>, vector<64x384xbf16>,
    %2 = tpu.iota {dimensions = array<i32: 1>} : vector<1x128xi32>
    %c0_i32 = arith.constant 0 : i32
    %3 = vector.broadcast %c0_i32 : i32 to vector<1x128xi32>
    %4 = arith.addi %2, %3 : vector<1x128xi32>
    %c3_i32 = arith.constant 3 : i32
    %5 = vector.broadcast %c3_i32 : i32 to vector<1x128xi32>
    %6 = arith.andi %4, %5 : vector<1x128xi32>
    %c15_i32 = arith.constant 15 : i32
    %7 = vector.broadcast %c15_i32 : i32 to vector<1x128xi32>
    %8 = arith.andi %4, %7 : vector<1x128xi32>
    %c0_1 = arith.constant 0 : index
    %c123 = arith.constant 123 : index
    %9 = vector.load %arg1[%c0_1, %c123] : memref<64x384xbf16, #tpu.memory_space<vmem>>, vector<64x128xbf16>
    %c1_i32 = arith.constant 1 : i32
    %10 = vector.broadcast %c1_i32 : i32 to vector<1x128xi32>
    %11 = arith.cmpi sge, %6, %10 : vector<1x128xi32>
    %c4_i32 = arith.constant 4 : i32
    %12 = vector.broadcast %c4_i32 : i32 to vector<1x128xi32>
    %13 = arith.cmpi sge, %8, %12 : vector<1x128xi32>
    %14 = arith.andi %11, %13 : vector<1x128xi1>
    %cst_2 = arith.constant 0.000000e+00 : bf16
    %15 = vector.broadcast %cst_2 : bf16 to vector<64x128xbf16>
    %16 = vector.shape_cast %14 : vector<1x128xi1> to vector<1x128xi1>
    %17 = vector.broadcast %16 : vector<1x128xi1> to vector<64x128xi1>
    %18 = arith.select %17, %9, %15 : vector<64x128xi1>, vector<64x128xbf16>
    %c0_3 = arith.constant 0 : index
    %c124 = arith.constant 124 : index
    %19 = vector.load %arg1[%c0_3, %c124] : memref<64x384xbf16, #tpu.memory_space<vmem>>, vector<64x128xbf16>
    %c4_i32_4 = arith.constant 4 : i32
    %20 = vector.broadcast %c4_i32_4 : i32 to vector<1x128xi32>
    %21 = arith.cmpi sge, %8, %20 : vector<1x128xi32>
    %cst_5 = arith.constant 0.000000e+00 : bf16
    %22 = vector.broadcast %cst_5 : bf16 to vector<64x128xbf16>
    %23 = vector.shape_cast %21 : vector<1x128xi1> to vector<1x128xi1>
    %24 = vector.broadcast %23 : vector<1x128xi1> to vector<64x128xi1>
    %25 = arith.select %24, %19, %22 : vector<64x128xi1>, vector<64x128xbf16>
    %c0_6 = arith.constant 0 : index
    %c125 = arith.constant 125 : index
    %26 = vector.load %arg1[%c0_6, %c125] : memref<64x384xbf16, #tpu.memory_space<vmem>>, vector<64x128xbf16>
    %c2_i32 = arith.constant 2 : i32
    %27 = vector.broadcast %c2_i32 : i32 to vector<1x128xi32>
    %28 = arith.cmpi sle, %6, %27 : vector<1x128xi32>
    %c4_i32_7 = arith.constant 4 : i32
    %29 = vector.broadcast %c4_i32_7 : i32 to vector<1x128xi32>
    %30 = arith.cmpi sge, %8, %29 : vector<1x128xi32>
    %31 = arith.andi %28, %30 : vector<1x128xi1>
    %cst_8 = arith.constant 0.000000e+00 : bf16
    %32 = vector.broadcast %cst_8 : bf16 to vector<64x128xbf16>
    %33 = vector.shape_cast %31 : vector<1x128xi1> to vector<1x128xi1>
    %34 = vector.broadcast %33 : vector<1x128xi1> to vector<64x128xi1>
    %35 = arith.select %34, %26, %32 : vector<64x128xi1>, vector<64x128xbf16>
    %c0_9 = arith.constant 0 : index
    %c127 = arith.constant 127 : index
    %36 = vector.load %arg1[%c0_9, %c127] : memref<64x384xbf16, #tpu.memory_space<vmem>>, vector<64x128xbf16>
    %c1_i32_10 = arith.constant 1 : i32
    %37 = vector.broadcast %c1_i32_10 : i32 to vector<1x128xi32>
    %38 = arith.cmpi sge, %6, %37 : vector<1x128xi32>
    %cst_11 = arith.constant 0.000000e+00 : bf16
    %39 = vector.broadcast %cst_11 : bf16 to vector<64x128xbf16>
    %40 = vector.shape_cast %38 : vector<1x128xi1> to vector<1x128xi1>
    %41 = vector.broadcast %40 : vector<1x128xi1> to vector<64x128xi1>
    %42 = arith.select %41, %36, %39 : vector<64x128xi1>, vector<64x128xbf16>
    %c0_12 = arith.constant 0 : index
    %c128 = arith.constant 128 : index
    %43 = vector.load %arg1[%c0_12, %c128] : memref<64x384xbf16, #tpu.memory_space<vmem>>, vector<64x128xbf16>
    %c0_13 = arith.constant 0 : index
    %c129 = arith.constant 129 : index
    %44 = vector.load %arg1[%c0_13, %c129] : memref<64x384xbf16, #tpu.memory_space<vmem>>, vector<64x128xbf16>
    %c2_i32_14 = arith.constant 2 : i32
    %45 = vector.broadcast %c2_i32_14 : i32 to vector<1x128xi32>
    %46 = arith.cmpi sle, %6, %45 : vector<1x128xi32>
    %cst_15 = arith.constant 0.000000e+00 : bf16
    %47 = vector.broadcast %cst_15 : bf16 to vector<64x128xbf16>
    %48 = vector.shape_cast %46 : vector<1x128xi1> to vector<1x128xi1>
    %49 = vector.broadcast %48 : vector<1x128xi1> to vector<64x128xi1>
    %50 = arith.select %49, %44, %47 : vector<64x128xi1>, vector<64x128xbf16>
    %c0_16 = arith.constant 0 : index
    %c131 = arith.constant 131 : index
    %51 = vector.load %arg1[%c0_16, %c131] : memref<64x384xbf16, #tpu.memory_space<vmem>>, vector<64x128xbf16>
    %c1_i32_17 = arith.constant 1 : i32
    %52 = vector.broadcast %c1_i32_17 : i32 to vector<1x128xi32>
    %53 = arith.cmpi sge, %6, %52 : vector<1x128xi32>
    %c12_i32 = arith.constant 12 : i32
    %54 = vector.broadcast %c12_i32 : i32 to vector<1x128xi32>
    %55 = arith.cmpi slt, %8, %54 : vector<1x128xi32>
    %56 = arith.andi %53, %55 : vector<1x128xi1>
    %cst_18 = arith.constant 0.000000e+00 : bf16
    %57 = vector.broadcast %cst_18 : bf16 to vector<64x128xbf16>
    %58 = vector.shape_cast %56 : vector<1x128xi1> to vector<1x128xi1>
    %59 = vector.broadcast %58 : vector<1x128xi1> to vector<64x128xi1>
    %60 = arith.select %59, %51, %57 : vector<64x128xi1>, vector<64x128xbf16>
    %c0_19 = arith.constant 0 : index
    %c132 = arith.constant 132 : index
    %61 = vector.load %arg1[%c0_19, %c132] : memref<64x384xbf16, #tpu.memory_space<vmem>>, vector<64x128xbf16>
    %c12_i32_20 = arith.constant 12 : i32
    %62 = vector.broadcast %c12_i32_20 : i32 to vector<1x128xi32>
    %63 = arith.cmpi slt, %8, %62 : vector<1x128xi32>
    %cst_21 = arith.constant 0.000000e+00 : bf16
    %64 = vector.broadcast %cst_21 : bf16 to vector<64x128xbf16>
    %65 = vector.shape_cast %63 : vector<1x128xi1> to vector<1x128xi1>
    %66 = vector.broadcast %65 : vector<1x128xi1> to vector<64x128xi1>
    %67 = arith.select %66, %61, %64 : vector<64x128xi1>, vector<64x128xbf16>
    %c0_22 = arith.constant 0 : index
    %c133 = arith.constant 133 : index
    %68 = vector.load %arg1[%c0_22, %c133] : memref<64x384xbf16, #tpu.memory_space<vmem>>, vector<64x128xbf16>
    %c2_i32_23 = arith.constant 2 : i32
    %69 = vector.broadcast %c2_i32_23 : i32 to vector<1x128xi32>
    %70 = arith.cmpi sle, %6, %69 : vector<1x128xi32>
    %c12_i32_24 = arith.constant 12 : i32
    %71 = vector.broadcast %c12_i32_24 : i32 to vector<1x128xi32>
    %72 = arith.cmpi slt, %8, %71 : vector<1x128xi32>
    %73 = arith.andi %70, %72 : vector<1x128xi1>
    %cst_25 = arith.constant 0.000000e+00 : bf16
    %74 = vector.broadcast %cst_25 : bf16 to vector<64x128xbf16>
    %75 = vector.shape_cast %73 : vector<1x128xi1> to vector<1x128xi1>
    %76 = vector.broadcast %75 : vector<1x128xi1> to vector<64x128xi1>
    %77 = arith.select %76, %68, %74 : vector<64x128xi1>, vector<64x128xbf16>
    %78 = tpu.concatenate %18, %25, %35, %42, %43, %50, %60, %67, %77 in 0 : vector<64x128xbf16>, vector<64x128xbf16>, vector<64x128xbf16>, vector<64x128xbf16>, vector<64x128xbf16>, vector<64x128xbf16>, vector<64x128xbf16>, vector<64x128xbf16>, vector<64x128xbf16> -> vector<576x128xbf16>
    %c0_26 = arith.constant 0 : index
    %c0_27 = arith.constant 0 : index
    %79 = vector.load %arg2[%c0_26, %c0_27] : memref<64x576xbf16, #tpu.memory_space<vmem>>, vector<64x576xbf16>
    %cst_28 = arith.constant dense<0.000000e+00> : vector<64x128xf32>
    %80 = tpu.matmul %79, %78, %cst_28 {dimension_numbers = #tpu.dot_dimension_numbers<[1], [0], [0], [1], [0, 0, 1, 1], [], []>} : vector<64x576xbf16>, vector<576x128xbf16>, vector<64x128xf32> -> vector<64x128xf32>
    %c0_29 = arith.constant 0 : index
    %c0_30 = arith.constant 0 : index
    %81 = vector.load %arg3[%c0_29, %c0_30] : memref<64x1xf32, #tpu.memory_space<vmem>>, vector<64x1xf32>
    %82 = vector.broadcast %81 : vector<64x1xf32> to vector<64x128xf32>
    %83 = arith.addf %80, %82 : vector<64x128xf32>
    %cst_31 = arith.constant 0.000000e+00 : f32
    %84 = vector.broadcast %cst_31 : f32 to vector<64x128xf32>
    %85 = arith.maximumf %83, %84 : vector<64x128xf32>
    %c32_i32 = arith.constant 32 : i32
    %86 = vector.broadcast %c32_i32 : i32 to vector<1x128xi32>
    %87 = arith.cmpi slt, %4, %86 : vector<1x128xi32>
    %cst_32 = arith.constant 0.000000e+00 : f32
    %88 = vector.broadcast %cst_32 : f32 to vector<64x128xf32>
    %89 = vector.shape_cast %87 : vector<1x128xi1> to vector<1x128xi1>
    %90 = vector.broadcast %89 : vector<1x128xi1> to vector<64x128xi1>
    %91 = arith.select %90, %85, %88 : vector<64x128xi1>, vector<64x128xf32>
    %92 = arith.truncf %91 : vector<64x128xf32> to vector<64x128xbf16>
    %c0_33 = arith.constant 0 : index
    %c128_34 = arith.constant 128 : index
    %93 = vector.load %arg7[%c0_33, %c128_34] : memref<64x384xbf16, #tpu.memory_space<vmem>>, vector<64x128xbf16>
    tpu.vector_store %arg7[%c0_33, %c128_34], %92 {strides = array<i32>} : memref<64x384xbf16, #tpu.memory_space<vmem>>, vector<64x128xbf16>,
    %94 = tpu.iota {dimensions = array<i32: 1>} : vector<1x128xi32>
    %c0_i32_35 = arith.constant 0 : i32
    %95 = vector.broadcast %c0_i32_35 : i32 to vector<1x128xi32>
    %96 = arith.addi %94, %95 : vector<1x128xi32>
    %c3_i32_36 = arith.constant 3 : i32
    %97 = vector.broadcast %c3_i32_36 : i32 to vector<1x128xi32>
    %98 = arith.andi %96, %97 : vector<1x128xi32>
    %c15_i32_37 = arith.constant 15 : i32
    %99 = vector.broadcast %c15_i32_37 : i32 to vector<1x128xi32>
    %100 = arith.andi %96, %99 : vector<1x128xi32>
    %c0_38 = arith.constant 0 : index
    %c123_39 = arith.constant 123 : index
    %101 = vector.load %arg7[%c0_38, %c123_39] : memref<64x384xbf16, #tpu.memory_space<vmem>>, vector<64x128xbf16>
    %c1_i32_40 = arith.constant 1 : i32
    %102 = vector.broadcast %c1_i32_40 : i32 to vector<1x128xi32>
    %103 = arith.cmpi sge, %98, %102 : vector<1x128xi32>
    %c4_i32_41 = arith.constant 4 : i32
    %104 = vector.broadcast %c4_i32_41 : i32 to vector<1x128xi32>
    %105 = arith.cmpi sge, %100, %104 : vector<1x128xi32>
    %106 = arith.andi %103, %105 : vector<1x128xi1>
    %cst_42 = arith.constant 0.000000e+00 : bf16
    %107 = vector.broadcast %cst_42 : bf16 to vector<64x128xbf16>
    %108 = vector.shape_cast %106 : vector<1x128xi1> to vector<1x128xi1>
    %109 = vector.broadcast %108 : vector<1x128xi1> to vector<64x128xi1>
    %110 = arith.select %109, %101, %107 : vector<64x128xi1>, vector<64x128xbf16>
    %c0_43 = arith.constant 0 : index
    %c124_44 = arith.constant 124 : index
    %111 = vector.load %arg7[%c0_43, %c124_44] : memref<64x384xbf16, #tpu.memory_space<vmem>>, vector<64x128xbf16>
    %c4_i32_45 = arith.constant 4 : i32
    %112 = vector.broadcast %c4_i32_45 : i32 to vector<1x128xi32>
    %113 = arith.cmpi sge, %100, %112 : vector<1x128xi32>
    %cst_46 = arith.constant 0.000000e+00 : bf16
    %114 = vector.broadcast %cst_46 : bf16 to vector<64x128xbf16>
    %115 = vector.shape_cast %113 : vector<1x128xi1> to vector<1x128xi1>
    %116 = vector.broadcast %115 : vector<1x128xi1> to vector<64x128xi1>
    %117 = arith.select %116, %111, %114 : vector<64x128xi1>, vector<64x128xbf16>
    %c0_47 = arith.constant 0 : index
    %c125_48 = arith.constant 125 : index
    %118 = vector.load %arg7[%c0_47, %c125_48] : memref<64x384xbf16, #tpu.memory_space<vmem>>, vector<64x128xbf16>
    %c2_i32_49 = arith.constant 2 : i32
    %119 = vector.broadcast %c2_i32_49 : i32 to vector<1x128xi32>
    %120 = arith.cmpi sle, %98, %119 : vector<1x128xi32>
    %c4_i32_50 = arith.constant 4 : i32
    %121 = vector.broadcast %c4_i32_50 : i32 to vector<1x128xi32>
    %122 = arith.cmpi sge, %100, %121 : vector<1x128xi32>
    %123 = arith.andi %120, %122 : vector<1x128xi1>
    %cst_51 = arith.constant 0.000000e+00 : bf16
    %124 = vector.broadcast %cst_51 : bf16 to vector<64x128xbf16>
    %125 = vector.shape_cast %123 : vector<1x128xi1> to vector<1x128xi1>
    %126 = vector.broadcast %125 : vector<1x128xi1> to vector<64x128xi1>
    %127 = arith.select %126, %118, %124 : vector<64x128xi1>, vector<64x128xbf16>
    %c0_52 = arith.constant 0 : index
    %c127_53 = arith.constant 127 : index
    %128 = vector.load %arg7[%c0_52, %c127_53] : memref<64x384xbf16, #tpu.memory_space<vmem>>, vector<64x128xbf16>
    %c1_i32_54 = arith.constant 1 : i32
    %129 = vector.broadcast %c1_i32_54 : i32 to vector<1x128xi32>
    %130 = arith.cmpi sge, %98, %129 : vector<1x128xi32>
    %cst_55 = arith.constant 0.000000e+00 : bf16
    %131 = vector.broadcast %cst_55 : bf16 to vector<64x128xbf16>
    %132 = vector.shape_cast %130 : vector<1x128xi1> to vector<1x128xi1>
    %133 = vector.broadcast %132 : vector<1x128xi1> to vector<64x128xi1>
    %134 = arith.select %133, %128, %131 : vector<64x128xi1>, vector<64x128xbf16>
    %c0_56 = arith.constant 0 : index
    %c128_57 = arith.constant 128 : index
    %135 = vector.load %arg7[%c0_56, %c128_57] : memref<64x384xbf16, #tpu.memory_space<vmem>>, vector<64x128xbf16>
    %c0_58 = arith.constant 0 : index
    %c129_59 = arith.constant 129 : index
    %136 = vector.load %arg7[%c0_58, %c129_59] : memref<64x384xbf16, #tpu.memory_space<vmem>>, vector<64x128xbf16>
    %c2_i32_60 = arith.constant 2 : i32
    %137 = vector.broadcast %c2_i32_60 : i32 to vector<1x128xi32>
    %138 = arith.cmpi sle, %98, %137 : vector<1x128xi32>
    %cst_61 = arith.constant 0.000000e+00 : bf16
    %139 = vector.broadcast %cst_61 : bf16 to vector<64x128xbf16>
    %140 = vector.shape_cast %138 : vector<1x128xi1> to vector<1x128xi1>
    %141 = vector.broadcast %140 : vector<1x128xi1> to vector<64x128xi1>
    %142 = arith.select %141, %136, %139 : vector<64x128xi1>, vector<64x128xbf16>
    %c0_62 = arith.constant 0 : index
    %c131_63 = arith.constant 131 : index
    %143 = vector.load %arg7[%c0_62, %c131_63] : memref<64x384xbf16, #tpu.memory_space<vmem>>, vector<64x128xbf16>
    %c1_i32_64 = arith.constant 1 : i32
    %144 = vector.broadcast %c1_i32_64 : i32 to vector<1x128xi32>
    %145 = arith.cmpi sge, %98, %144 : vector<1x128xi32>
    %c12_i32_65 = arith.constant 12 : i32
    %146 = vector.broadcast %c12_i32_65 : i32 to vector<1x128xi32>
    %147 = arith.cmpi slt, %100, %146 : vector<1x128xi32>
    %148 = arith.andi %145, %147 : vector<1x128xi1>
    %cst_66 = arith.constant 0.000000e+00 : bf16
    %149 = vector.broadcast %cst_66 : bf16 to vector<64x128xbf16>
    %150 = vector.shape_cast %148 : vector<1x128xi1> to vector<1x128xi1>
    %151 = vector.broadcast %150 : vector<1x128xi1> to vector<64x128xi1>
    %152 = arith.select %151, %143, %149 : vector<64x128xi1>, vector<64x128xbf16>
    %c0_67 = arith.constant 0 : index
    %c132_68 = arith.constant 132 : index
    %153 = vector.load %arg7[%c0_67, %c132_68] : memref<64x384xbf16, #tpu.memory_space<vmem>>, vector<64x128xbf16>
    %c12_i32_69 = arith.constant 12 : i32
    %154 = vector.broadcast %c12_i32_69 : i32 to vector<1x128xi32>
    %155 = arith.cmpi slt, %100, %154 : vector<1x128xi32>
    %cst_70 = arith.constant 0.000000e+00 : bf16
    %156 = vector.broadcast %cst_70 : bf16 to vector<64x128xbf16>
    %157 = vector.shape_cast %155 : vector<1x128xi1> to vector<1x128xi1>
    %158 = vector.broadcast %157 : vector<1x128xi1> to vector<64x128xi1>
    %159 = arith.select %158, %153, %156 : vector<64x128xi1>, vector<64x128xbf16>
    %c0_71 = arith.constant 0 : index
    %c133_72 = arith.constant 133 : index
    %160 = vector.load %arg7[%c0_71, %c133_72] : memref<64x384xbf16, #tpu.memory_space<vmem>>, vector<64x128xbf16>
    %c2_i32_73 = arith.constant 2 : i32
    %161 = vector.broadcast %c2_i32_73 : i32 to vector<1x128xi32>
    %162 = arith.cmpi sle, %98, %161 : vector<1x128xi32>
    %c12_i32_74 = arith.constant 12 : i32
    %163 = vector.broadcast %c12_i32_74 : i32 to vector<1x128xi32>
    %164 = arith.cmpi slt, %100, %163 : vector<1x128xi32>
    %165 = arith.andi %162, %164 : vector<1x128xi1>
    %cst_75 = arith.constant 0.000000e+00 : bf16
    %166 = vector.broadcast %cst_75 : bf16 to vector<64x128xbf16>
    %167 = vector.shape_cast %165 : vector<1x128xi1> to vector<1x128xi1>
    %168 = vector.broadcast %167 : vector<1x128xi1> to vector<64x128xi1>
    %169 = arith.select %168, %160, %166 : vector<64x128xi1>, vector<64x128xbf16>
    %170 = tpu.concatenate %110, %117, %127, %134, %135, %142, %152, %159, %169 in 0 : vector<64x128xbf16>, vector<64x128xbf16>, vector<64x128xbf16>, vector<64x128xbf16>, vector<64x128xbf16>, vector<64x128xbf16>, vector<64x128xbf16>, vector<64x128xbf16>, vector<64x128xbf16> -> vector<576x128xbf16>
    %c0_76 = arith.constant 0 : index
    %c0_77 = arith.constant 0 : index
    %171 = vector.load %arg4[%c0_76, %c0_77] : memref<64x576xbf16, #tpu.memory_space<vmem>>, vector<64x576xbf16>
    %cst_78 = arith.constant dense<0.000000e+00> : vector<64x128xf32>
    %172 = tpu.matmul %171, %170, %cst_78 {dimension_numbers = #tpu.dot_dimension_numbers<[1], [0], [0], [1], [0, 0, 1, 1], [], []>} : vector<64x576xbf16>, vector<576x128xbf16>, vector<64x128xf32> -> vector<64x128xf32>
    %c0_79 = arith.constant 0 : index
    %c0_80 = arith.constant 0 : index
    %173 = vector.load %arg5[%c0_79, %c0_80] : memref<64x1xf32, #tpu.memory_space<vmem>>, vector<64x1xf32>
    %174 = vector.broadcast %173 : vector<64x1xf32> to vector<64x128xf32>
    %175 = arith.addf %172, %174 : vector<64x128xf32>
    %c0_81 = arith.constant 0 : index
    %c128_82 = arith.constant 128 : index
    %176 = vector.load %arg1[%c0_81, %c128_82] : memref<64x384xbf16, #tpu.memory_space<vmem>>, vector<64x128xbf16>
    %177 = arith.extf %176 : vector<64x128xbf16> to vector<64x128xf32>
    %178 = arith.addf %175, %177 : vector<64x128xf32>
    %cst_83 = arith.constant 0.000000e+00 : f32
    %179 = vector.broadcast %cst_83 : f32 to vector<64x128xf32>
    %180 = arith.maximumf %178, %179 : vector<64x128xf32>
    %c32_i32_84 = arith.constant 32 : i32
    %181 = vector.broadcast %c32_i32_84 : i32 to vector<1x128xi32>
    %182 = arith.cmpi slt, %96, %181 : vector<1x128xi32>
    %cst_85 = arith.constant 0.000000e+00 : f32
    %183 = vector.broadcast %cst_85 : f32 to vector<64x128xf32>
    %184 = vector.shape_cast %182 : vector<1x128xi1> to vector<1x128xi1>
    %185 = vector.broadcast %184 : vector<1x128xi1> to vector<64x128xi1>
    %186 = arith.select %185, %180, %183 : vector<64x128xi1>, vector<64x128xf32>
    %187 = arith.truncf %186 : vector<64x128xf32> to vector<64x128xbf16>
    %c0_86 = arith.constant 0 : index
    %c0_87 = arith.constant 0 : index
    %188 = vector.load %arg6[%c0_86, %c0_87] : memref<64x128xbf16, #tpu.memory_space<vmem>>, vector<64x128xbf16>
    tpu.vector_store %arg6[%c0_86, %c0_87], %187 {strides = array<i32>} : memref<64x128xbf16, #tpu.memory_space<vmem>>, vector<64x128xbf16>,
    return
  }
  func.func @transform_0(%arg0: i32) -> (i32, i32) {
    %c0_i32 = arith.constant 0 : i32
    %c0_i32_0 = arith.constant 0 : i32
    %c0_i32_1 = arith.constant 0 : i32
    return %c0_i32, %c0_i32_0 : i32, i32
  }
  func.func @transform_1(%arg0: i32) -> (i32, i32) {
    %c0_i32 = arith.constant 0 : i32
    %c0_i32_0 = arith.constant 0 : i32
    %c0_i32_1 = arith.constant 0 : i32
    return %c0_i32, %c0_i32_0 : i32, i32
  }
  func.func @transform_2(%arg0: i32) -> (i32, i32) {
    %c0_i32 = arith.constant 0 : i32
    %c0_i32_0 = arith.constant 0 : i32
    %c0_i32_1 = arith.constant 0 : i32
    return %c0_i32, %c0_i32_0 : i32, i32
  }
  func.func @transform_3(%arg0: i32) -> (i32, i32) {
    %c0_i32 = arith.constant 0 : i32
    %c0_i32_0 = arith.constant 0 : i32
    %c0_i32_1 = arith.constant 0 : i32
    return %c0_i32, %c0_i32_0 : i32, i32
  }
  func.func @transform_4(%arg0: i32) -> (i32, i32) {
    %c0_i32 = arith.constant 0 : i32
    %c0_i32_0 = arith.constant 0 : i32
    %c0_i32_1 = arith.constant 0 : i32
    return %c0_i32, %c0_i32_0 : i32, i32
  }
  func.func @transform_5(%arg0: i32) -> (i32, i32) {
    %c0_i32 = arith.constant 0 : i32
    %c0_i32_0 = arith.constant 0 : i32
    %c0_i32_1 = arith.constant 0 : i32
    return %c0_i32, %c0_i32_0 : i32, i32
  }
}

module attributes {stable_mosaic.version = 11 : i64} {
  func.func @_gap_fc_kernel(%arg0: i32, %arg1: memref<64x128xbf16, #tpu.memory_space<vmem>>, %arg2: memref<128x2xbf16, #tpu.memory_space<vmem>>, %arg3: memref<100x64xf32, #tpu.memory_space<vmem>>, %arg4: memref<100x1xf32, #tpu.memory_space<vmem>>, %arg5: memref<100x2xf32, #tpu.memory_space<vmem>>) attributes {dimension_semantics = [#tpu.dimension_semantics<arbitrary>], iteration_bounds = array<i64: 1>, scalar_prefetch = 0 : i64, scratch_operands = 0 : i64, tpu.core_type = #tpu.core_type<tc>, window_params = [{pipeline_mode = #tpu.pipeline_mode<synchronous>, transform_indices = @transform_0, window_bounds = array<i64: 64, 128>}, {pipeline_mode = #tpu.pipeline_mode<synchronous>, transform_indices = @transform_1, window_bounds = array<i64: 128, 2>}, {pipeline_mode = #tpu.pipeline_mode<synchronous>, transform_indices = @transform_2, window_bounds = array<i64: 100, 64>}, {pipeline_mode = #tpu.pipeline_mode<synchronous>, transform_indices = @transform_3, window_bounds = array<i64: 100, 1>}, {pipeline_mode = #tpu.pipeline_mode<synchronous>, transform_indices = @transform_4, window_bounds = array<i64: 100, 2>}]} {
    %c0 = arith.constant 0 : index
    %c0_0 = arith.constant 0 : index
    %0 = vector.load %arg1[%c0, %c0_0] : memref<64x128xbf16, #tpu.memory_space<vmem>>, vector<64x128xbf16>
    %c0_1 = arith.constant 0 : index
    %c0_2 = arith.constant 0 : index
    %1 = vector.load %arg2[%c0_1, %c0_2] : memref<128x2xbf16, #tpu.memory_space<vmem>>, vector<128x2xbf16>
    %cst = arith.constant dense<0.000000e+00> : vector<64x2xf32>
    %2 = tpu.matmul %0, %1, %cst {dimension_numbers = #tpu.dot_dimension_numbers<[1], [0], [0], [1], [0, 0, 1, 1], [], []>} : vector<64x128xbf16>, vector<128x2xbf16>, vector<64x2xf32> -> vector<64x2xf32>
    %c0_3 = arith.constant 0 : index
    %c0_4 = arith.constant 0 : index
    %3 = vector.load %arg3[%c0_3, %c0_4] : memref<100x64xf32, #tpu.memory_space<vmem>>, vector<100x64xf32>
    %cst_5 = arith.constant dense<0.000000e+00> : vector<100x2xf32>
    %4 = tpu.matmul %3, %2, %cst_5 {dimension_numbers = #tpu.dot_dimension_numbers<[1], [0], [0], [1], [0, 0, 1, 1], [], []>} : vector<100x64xf32>, vector<64x2xf32>, vector<100x2xf32> -> vector<100x2xf32>
    %c0_6 = arith.constant 0 : index
    %c0_7 = arith.constant 0 : index
    %5 = vector.load %arg4[%c0_6, %c0_7] : memref<100x1xf32, #tpu.memory_space<vmem>>, vector<100x1xf32>
    %6 = vector.broadcast %5 : vector<100x1xf32> to vector<100x2xf32>
    %7 = arith.addf %4, %6 : vector<100x2xf32>
    %c0_8 = arith.constant 0 : index
    %c0_9 = arith.constant 0 : index
    %8 = vector.load %arg5[%c0_8, %c0_9] : memref<100x2xf32, #tpu.memory_space<vmem>>, vector<100x2xf32>
    tpu.vector_store %arg5[%c0_8, %c0_9], %7 {strides = array<i32>} : memref<100x2xf32, #tpu.memory_space<vmem>>, vector<100x2xf32>,
    return
  }
  func.func @transform_0(%arg0: i32) -> (i32, i32) {
    %c0_i32 = arith.constant 0 : i32
    %c0_i32_0 = arith.constant 0 : i32
    %c0_i32_1 = arith.constant 0 : i32
    return %c0_i32, %c0_i32_0 : i32, i32
  }
  func.func @transform_1(%arg0: i32) -> (i32, i32) {
    %c0_i32 = arith.constant 0 : i32
    %c0_i32_0 = arith.constant 0 : i32
    %c0_i32_1 = arith.constant 0 : i32
    return %c0_i32, %c0_i32_0 : i32, i32
  }
  func.func @transform_2(%arg0: i32) -> (i32, i32) {
    %c0_i32 = arith.constant 0 : i32
    %c0_i32_0 = arith.constant 0 : i32
    %c0_i32_1 = arith.constant 0 : i32
    return %c0_i32, %c0_i32_0 : i32, i32
  }
  func.func @transform_3(%arg0: i32) -> (i32, i32) {
    %c0_i32 = arith.constant 0 : i32
    %c0_i32_0 = arith.constant 0 : i32
    %c0_i32_1 = arith.constant 0 : i32
    return %c0_i32, %c0_i32_0 : i32, i32
  }
  func.func @transform_4(%arg0: i32) -> (i32, i32) {
    %c0_i32 = arith.constant 0 : i32
    %c0_i32_0 = arith.constant 0 : i32
    %c0_i32_1 = arith.constant 0 : i32
    return %c0_i32, %c0_i32_0 : i32, i32
  }
}

</mosaic_0001>

<llo_original>
// kernel: _lambda_.13
$region0: #{_lambda_.13}
  #allocation0 [shape = 'u32[]', space=smem, size = 0x4, offset = 0x4, fixed_abs, tag = 'smem constant byte address 0x4 - core index']
  #allocation1 [shape = 'u32[144,128]{1,0:T(1,128)}', space=vmem, size = 0x12000, scoped, tag = 'internal scratch']
  %s0 = inlined_call_operand.vmem [shape: bf16[16,32], index: 0, kind: input, shape index: {}]
  %s1 = inlined_call_operand.vmem [shape: bf16[32,512], index: 1, kind: input, shape index: {}]
  %s2 = inlined_call_operand.vmem [shape: f32[16,1], index: 2, kind: input, shape index: {}]
  %s3 = inlined_call_operand.vmem [shape: bf16[16,512], index: 3, kind: output, shape index: {}]
  %s4 = sld [smem:[#allocation0]]
  $region117: #{_lambda_.13} parent=0
    _
  %s6 = ssub.s32 1, %s4
  %s7 = scalar_select 0, %s6, %s4
  $region1: #{_lambda_.13} parent=0
    #allocation2 [shape = 'u8[32768]{0}', space=vmem, size = 0x8000, scoped, tag = 'input window, operand 1']
    #allocation3 [shape = 'u8[16384]{0}', space=vmem, size = 0x4000, scoped, tag = 'output window, operand 0']
    loop: start=0, step=1, limit=4
    $region2: #{_lambda_.13} parent=1 // loop_pre_header
      _
    $region3: #{_lambda_.13} parent=1 // loop_header
      %s9 = sphi 0, %s13
      %p10 = scmp.ge.s32.totalorder %s9, 4
      %s17 = sphi 0, %s17
      %s19 = sphi 0, %s17
      %s20 = sphi 0, %s19
      %s34 = sphi 0, %s20
      %s40 = sphi 0, %s42
      %s43 = sphi 0, %s40
      %s44 = sphi 0, %s43
      %s60 = sphi 0, %s44
      %s64 = sphi 0, %s64
      %s66 = sphi 0, %s64
      %s67 = sphi 0, %s66
      %s81 = sphi 0, %s67
      %s87 = sphi 0, %s89
      %s90 = sphi 0, %s87
      %s91 = sphi 0, %s90
      %s107 = sphi 0, %s91
    $region4: #{_lambda_.13} parent=1 // loop_header_branch
      %12 = sbr.rel (%p10) target = $region8
    $region5: #{_lambda_.13} parent=1 // loop_body
      %s14 = ssub.s32 %s9, 1
      %s15 = ssub.s32 %s9, 2
      %s16 = sadd.s32 %s9, 1
      %s18 = sadd.s32 %s17, 1
      %p21 = scmp.eq.s32.totalorder %s9, 1
      %p22 = scmp.ne.s32.totalorder %s17, %s19
      %p23 = scmp.eq.s32.totalorder %s9, 0
      %p24 = por %p22, %p23
      %p25 = scmp.ne.s32.totalorder %s17, %s19
      %p26 = scmp.eq.s32.totalorder %s14, 1
      %p27 = por %p25, %p26
      %p28 = scmp.ne.s32.totalorder %s19, %s20
      %p29 = scmp.eq.s32.totalorder %s14, 0
      %p30 = por %p28, %p29
      %p31 = scmp.ne.s32.totalorder %s19, %s20
      %p32 = scmp.eq.s32.totalorder %s15, 1
      %p33 = por %p31, %p32
      %p35 = scmp.ne.s32.totalorder %s20, %s34
      %p36 = scmp.eq.s32.totalorder %s15, 0
      %p37 = por %p35, %p36
      %s38 = ssub.s32 %s9, %s16
      %p39 = scmp.eq.s32.totalorder %s38, 0
      %s41 = sadd.s32 %s40, 1
      %s42 = scalar_select %p39, %s40, %s41
      %p45 = pneg %p39
      %p46 = scmp.eq.s32.totalorder %s9, 1
      %p47 = por %p45, %p46
      %p48 = scmp.ne.s32.totalorder %s40, %s43
      %p49 = scmp.eq.s32.totalorder %s9, 0
      %p50 = por %p48, %p49
      %p51 = scmp.ne.s32.totalorder %s40, %s43
      %p52 = scmp.eq.s32.totalorder %s14, 1
      %p53 = por %p51, %p52
      %p54 = scmp.ne.s32.totalorder %s43, %s44
      %p55 = scmp.eq.s32.totalorder %s14, 0
      %p56 = por %p54, %p55
      %p57 = scmp.ne.s32.totalorder %s43, %s44
      %p58 = scmp.eq.s32.totalorder %s15, 1
      %p59 = por %p57, %p58
      %p61 = scmp.ne.s32.totalorder %s44, %s60
      %p62 = scmp.eq.s32.totalorder %s15, 0
      %p63 = por %p61, %p62
      %s65 = sadd.s32 %s64, 1
      %p68 = scmp.eq.s32.totalorder %s9, 1
      %p69 = scmp.ne.s32.totalorder %s64, %s66
      %p70 = scmp.eq.s32.totalorder %s9, 0
      %p71 = por %p69, %p70
      %p72 = scmp.ne.s32.totalorder %s64, %s66
      %p73 = scmp.eq.s32.totalorder %s14, 1
      %p74 = por %p72, %p73
      %p75 = scmp.ne.s32.totalorder %s66, %s67
      %p76 = scmp.eq.s32.totalorder %s14, 0
      %p77 = por %p75, %p76
      %p78 = scmp.ne.s32.totalorder %s66, %s67
      %p79 = scmp.eq.s32.totalorder %s15, 1
      %p80 = por %p78, %p79
      %p82 = scmp.ne.s32.totalorder %s67, %s81
      %p83 = scmp.eq.s32.totalorder %s15, 0
      %p84 = por %p82, %p83
      %s85 = ssub.s32 %s9, %s16
      %p86 = scmp.eq.s32.totalorder %s85, 0
      %s88 = sadd.s32 %s87, 1
      %s89 = scalar_select %p86, %s87, %s88
      %p92 = pneg %p86
      %p93 = scmp.eq.s32.totalorder %s9, 1
      %p94 = por %p92, %p93
      %p95 = scmp.ne.s32.totalorder %s87, %s90
      %p96 = scmp.eq.s32.totalorder %s9, 0
      %p97 = por %p95, %p96
      %p98 = scmp.ne.s32.totalorder %s87, %s90
      %p99 = scmp.eq.s32.totalorder %s14, 1
      %p100 = por %p98, %p99
      %p101 = scmp.ne.s32.totalorder %s90, %s91
      %p102 = scmp.eq.s32.totalorder %s14, 0
      %p103 = por %p101, %p102
      %p104 = scmp.ne.s32.totalorder %s90, %s91
      %p105 = scmp.eq.s32.totalorder %s15, 1
      %p106 = por %p104, %p105
      %p108 = scmp.ne.s32.totalorder %s91, %s107
      %p109 = scmp.eq.s32.totalorder %s15, 0
      %p110 = por %p108, %p109
      %p111 = scmp.le.s32.totalorder 1, %s9
      %p112 = scmp.lt.s32.totalorder %s9, 3
      %p113 = pnand %p111, %p112
      %p114 = pneg %p113
      // Predicated region
      $region9: #{_lambda_.13} parent=5 // pred_check
        _
      $region10: #{_lambda_.13} parent=5 // pred_check_branch
        %116 = sbr.rel (%p113) target = $region12
      $region11: #{_lambda_.13} parent=5 // pred_region
        %s117 = ssub.s32 %s9, 1
        // Predicated region
        $region13: #{_lambda_.13} parent=11 // pred_check
          %p118 = pneg %p30
        $region14: #{_lambda_.13} parent=11 // pred_check_branch
          %120 = sbr.rel (%p118) target = $region16
        $region15: #{_lambda_.13} parent=11 // pred_region
          _
        $region16: #{_lambda_.13} parent=11 // pred_fallthru
          _
        // Predicated region
        $region17: #{_lambda_.13} parent=11 // pred_check
          %p121 = pneg %p77
        $region18: #{_lambda_.13} parent=11 // pred_check_branch
          %123 = sbr.rel (%p121) target = $region20
        $region19: #{_lambda_.13} parent=11 // pred_region
          _
        $region20: #{_lambda_.13} parent=11 // pred_fallthru
          _
      $region12: #{_lambda_.13} parent=5 // pred_fallthru
        _
      %p124 = scmp.lt.s32.totalorder %s9, 2
      // Predicated region
      $region21: #{_lambda_.13} parent=5 // pred_check
        %p125 = pneg %p124
      $region22: #{_lambda_.13} parent=5 // pred_check_branch
        %127 = sbr.rel (%p125) target = $region24
      $region23: #{_lambda_.13} parent=5 // pred_region
        // Predicated region
        $region25: #{_lambda_.13} parent=23 // pred_check
          %p128 = pneg %p50
        $region26: #{_lambda_.13} parent=23 // pred_check_branch
          %130 = sbr.rel (%p128) target = $region28
        $region27: #{_lambda_.13} parent=23 // pred_region
          %s131 = sand.u32 %s40, 1
          %s132 = sand.u32 %s40, 1
          %s133 = smul.addr %s132, 32
          %s134 = scalar_lea.vmem [#allocation2], %s133
          %s135 = smul.u32 2, %s9
          %s136 = smul.addr %s135, 4
          %s137 = scalar_lea.vmem %s1, %s136
          // Predicated region
          $region29: #{_lambda_.13} parent=27 // pred_check
            _
          $region30: #{_lambda_.13} parent=27 // pred_check_branch
            %139 = sbr.rel (0) target = $region32
          $region31: #{_lambda_.13} parent=27 // pred_region
            // Predicated region
            $region33: #{_lambda_.13} parent=31 // pred_check
              _
            $region34: #{_lambda_.13} parent=31 // pred_check_branch
              %141 = sbr.rel (0) target = $region36
            $region35: #{_lambda_.13} parent=31 // pred_region
              // Predicated region
              $region48: #{_lambda_.13} parent=35 // pred_check
                _
              $region49: #{_lambda_.13} parent=35 // pred_check_branch
                %162 = sbr.rel (0) target = $region51
              $region50: #{_lambda_.13} parent=35 // pred_region
                loop: start=0, step=1, limit=1
                $region52: #{_lambda_.13} parent=50 // loop_pre_header
                  _
                $region53: #{_lambda_.13} parent=50 // loop_header
                  %s164 = sphi 0, %s168
                  %p165 = scmp.ge.s32.totalorder %s164, 1
                  %s169 = sphi %s137, %s137
                  %s170 = sphi %s134, %s134
                $region54: #{_lambda_.13} parent=50 // loop_header_branch
                  %167 = sbr.rel (%p165) target = $region58
                $region55: #{_lambda_.13} parent=50 // loop_body
                  %v171 = vld [vmem:[%s169] sm:$0xff]
                  %172 = vst [vmem:[%s170] sm:$0xff] %v171
                  %v173 = vld [vmem:[%s169 + $0x10] sm:$0xff]
                  %174 = vst [vmem:[%s170 + $0x8] sm:$0xff] %v173
                  %v175 = vld [vmem:[%s169 + $0x20] sm:$0xff]
                  %176 = vst [vmem:[%s170 + $0x10] sm:$0xff] %v175
                  %v177 = vld [vmem:[%s169 + $0x30] sm:$0xff]
                  %178 = vst [vmem:[%s170 + $0x18] sm:$0xff] %v177
                $region56: #{_lambda_.13} parent=50 // loop_footer
                  %s168 = sadd.s32 1, %s164
                $region57: #{_lambda_.13} parent=50 // loop_footer_branch
                  %163 = sbr.rel target = $region53
                $region58: #{_lambda_.13} parent=50 // loop_exit
                  _
              $region51: #{_lambda_.13} parent=35 // pred_fallthru
                _
              // Predicated region
              $region59: #{_lambda_.13} parent=35 // pred_check
                _
              $region60: #{_lambda_.13} parent=35 // pred_check_branch
                %180 = sbr.rel target = $region62
              $region61: #{_lambda_.13} parent=35 // pred_region
                _
              $region62: #{_lambda_.13} parent=35 // pred_fallthru
                _
            $region36: #{_lambda_.13} parent=31 // pred_fallthru
              _
            // Predicated region
            $region37: #{_lambda_.13} parent=31 // pred_check
              _
            $region38: #{_lambda_.13} parent=31 // pred_check_branch
              %143 = sbr.rel target = $region40
            $region39: #{_lambda_.13} parent=31 // pred_region
              loop: start=0, step=1, limit=1
              $region41: #{_lambda_.13} parent=39 // loop_pre_header
                _
              $region42: #{_lambda_.13} parent=39 // loop_header
                %s146 = sphi 0, %s150
                %p147 = scmp.ge.s32.totalorder %s146, 1
                %s151 = sphi %s137, %s137
                %s152 = sphi %s134, %s134
              $region43: #{_lambda_.13} parent=39 // loop_header_branch
                %149 = sbr.rel (%p147) target = $region47
              $region44: #{_lambda_.13} parent=39 // loop_body
                %v153 = vld [vmem:[%s151] sm:$0xff]
                %154 = vst [vmem:[%s152] sm:$0xff] %v153
                %v155 = vld [vmem:[%s151 + $0x10] sm:$0xff]
                %156 = vst [vmem:[%s152 + $0x8] sm:$0xff] %v155
                %v157 = vld [vmem:[%s151 + $0x20] sm:$0xff]
                %158 = vst [vmem:[%s152 + $0x10] sm:$0xff] %v157
                %v159 = vld [vmem:[%s151 + $0x30] sm:$0xff]
                %160 = vst [vmem:[%s152 + $0x18] sm:$0xff] %v159
              $region45: #{_lambda_.13} parent=39 // loop_footer
                %s150 = sadd.s32 1, %s146
              $region46: #{_lambda_.13} parent=39 // loop_footer_branch
                %145 = sbr.rel target = $region42
              $region47: #{_lambda_.13} parent=39 // loop_exit
                _
            $region40: #{_lambda_.13} parent=31 // pred_fallthru
              _
          $region32: #{_lambda_.13} parent=27 // pred_fallthru
            _
          %181 = vnop
        $region28: #{_lambda_.13} parent=23 // pred_fallthru
          _
      $region24: #{_lambda_.13} parent=5 // pred_fallthru
        _
      %p182 = scmp.le.s32.totalorder 1, %s9
      %p183 = scmp.lt.s32.totalorder %s9, 3
      %p184 = pnand %p182, %p183
      %p185 = pneg %p184
      // Predicated region
      $region63: #{_lambda_.13} parent=5 // pred_check
        _
      $region64: #{_lambda_.13} parent=5 // pred_check_branch
        %187 = sbr.rel (%p184) target = $region66
      $region65: #{_lambda_.13} parent=5 // pred_region
        %s188 = ssub.s32 %s9, 1
        %s189 = sand.u32 %s43, 1
        %s190 = sand.u32 %s43, 1
        %s191 = smul.addr %s190, 32
        %s192 = scalar_lea.vmem [#allocation2], %s191
        // Predicated region
        $region67: #{_lambda_.13} parent=65 // pred_check
          %p193 = pneg %p56
        $region68: #{_lambda_.13} parent=65 // pred_check_branch
          %195 = sbr.rel (%p193) target = $region70
        $region69: #{_lambda_.13} parent=65 // pred_region
          _
        $region70: #{_lambda_.13} parent=65 // pred_fallthru
          _
        %p196 = pneg %p30
        %p197 = pneg %p27
        %s198 = sand.u32 %s43, 1
        %s199 = sand.u32 %s43, 1
        %s200 = smul.addr %s199, 32
        %s201 = scalar_lea.vmem [#allocation2], %s200
        %p202 = pneg %p56
        %p203 = pneg %p53
        %p204 = pneg %p77
        %p205 = pneg %p74
        %p206 = pneg %p103
        %p207 = pneg %p100
        %s208 = sand.u32 %s90, 1
        %s209 = sand.u32 %s90, 1
        %s210 = smul.addr %s209, 16
        %s211 = scalar_lea.vmem [#allocation3], %s210
        %s212 = smul.u32 2, %s14
        %s213 = smul.u32 2, %s14
        %v215 = vld [vmem:[%s0] sm:$0xf]
        %v216 = vld [vmem:[%s0 + $0x4] sm:$0xf]
        %v217 = vld [vmem:[%s192] sm:$0xff]
        %v218 = vld [vmem:[%s192 + $0x8] sm:$0xff]
        %v219 = vld [vmem:[%s192 + $0x10] sm:$0xff]
        %v220 = vld [vmem:[%s192 + $0x18] sm:$0xff]
        %v221 = vld [vmem:[%s2] sm:$0xff]
        %v222 = vld [vmem:[%s2 + $0x8] sm:$0xff]
        %224 = vset.pattern.permute.xlu0 0
        %225 = vperm.xlu0 %224, %v221
        %v226 = vpop.permute.xlu0 %225
        %229 = vset.pattern.permute.xlu0 0
        %230 = vperm.xlu0 %229, %v222
        %v231 = vpop.permute.xlu0 %230
        %v235 = vunpack.c.l.b16 %v215
        %v236 = vunpack.c.l.b16 %v216
        %v237 = vpack.c.b16 %v236, %v235
        %v242 = vunpack.c.l.b16 %v217
        %v243 = vunpack.c.h.b16 %v217
        %v244 = vunpack.c.l.b16 %v218
        %v245 = vunpack.c.h.b16 %v218
        %v246 = vunpack.c.l.b16 %v219
        %v247 = vunpack.c.h.b16 %v219
        %v248 = vunpack.c.l.b16 %v220
        %v249 = vunpack.c.h.b16 %v220
        %v250 = vpack.c.b16 %v244, %v242
        %v251 = vpack.c.b16 %v245, %v243
        %v252 = vpack.c.b16 %v248, %v246
        %v253 = vpack.c.b16 %v249, %v247
        %vm258 = vcmask 261120
        %v260 = vsel %vm258, %v237, 0
        %262 = vmatprep.subr.bf16.mxu0 %v251
        %263 = vmatpush1.bf16.msra.mxu0 %v250
        %264 = vmatprep.subr.bf16.mxu0 %v253
        %265 = vmatpush1.bf16.msra.mxu0 %v252
        %266 = vmatprep.subr.bf16.mxu0 0
        %267 = vmatpush1.bf16.msra.mxu0 0
        %268 = vmatprep.subr.bf16.mxu0 0
        %269 = vmatpush1.bf16.msra.mxu0 0
        %270 = vmatprep.subr.bf16.mxu0 0
        %271 = vmatpush1.bf16.msra.mxu0 0
        %272 = vmatprep.subr.bf16.mxu0 0
        %273 = vmatpush1.bf16.msra.mxu0 0
        %274 = vmatprep.subr.bf16.mxu0 0
        %275 = vmatpush1.bf16.msra.mxu0 0
        %276 = vmatprep.subr.bf16.mxu0 0
        %277 = vmatpush1.bf16.msra.mxu0 0
        %278 = vmatprep.subr.bf16.mxu0 0
        %279 = vmatpush1.bf16.msra.mxu0 0
        %280 = vmatprep.subr.bf16.mxu0 0
        %281 = vmatpush1.bf16.msra.mxu0 0
        %282 = vmatprep.subr.bf16.mxu0 0
        %283 = vmatpush1.bf16.msra.mxu0 0
        %284 = vmatprep.subr.bf16.mxu0 0
        %285 = vmatpush1.bf16.msra.mxu0 0
        %286 = vmatprep.subr.bf16.mxu0 0
        %287 = vmatpush1.bf16.msra.mxu0 0
        %288 = vmatprep.subr.bf16.mxu0 0
        %289 = vmatpush1.bf16.msra.mxu0 0
        %290 = vmatprep.subr.bf16.mxu0 0
        %291 = vmatpush1.bf16.msra.mxu0 0
        %292 = vmatprep.subr.bf16.mxu0 0
        %293 = vmatpush1.bf16.msra.mxu0 0
        %294 = vmatprep.mubr.bf16.mxu0 0
        %295 = vmatmul.mubr.bf16.gmra.mrb[0].mxu0 %v260
        %v296 = vpop.f32.mrb[0].mxu0
        %v297 = vadd.f32 %v226, %v296
        %v298 = vpop.f32.mrb[0].mxu0
        %v299 = vadd.f32 %v226, %v298
        %v300 = vpop.f32.mrb[0].mxu0
        %v301 = vadd.f32 %v231, %v300
        %v302 = vpop.f32.mrb[0].mxu0
        %v303 = vadd.f32 %v231, %v302
        %304 = vdwg.mxu0
        %v305 = vmax.f32 %v297, 0.0
        %v306 = vmax.f32 %v299, 0.0
        %v307 = vmax.f32 %v301, 0.0
        %v308 = vmax.f32 %v303, 0.0
        %v309 = vpack.c.bf16 %v307, %v305
        %v310 = vpack.c.bf16 %v308, %v306
        %v313 = vunpack.c.l.b16 %v309
        %v314 = vunpack.c.l.b16 %v310
        %v315 = vunpack.c.h.b16 %v309
        %v316 = vunpack.c.h.b16 %v310
        %v317 = vpack.c.b16 %v314, %v313
        %v318 = vpack.c.b16 %v316, %v315
        %321 = vst [vmem:[%s211] sm:$0xff] %v317
        %322 = vst [vmem:[%s211 + $0x8] sm:$0xff] %v318
        %s323 = sand.u32 %s90, 1
        %s324 = sand.u32 %s90, 1
        %s325 = smul.addr %s324, 16
        %s326 = scalar_lea.vmem [#allocation3], %s325
        // Predicated region
        $region71: #{_lambda_.13} parent=65 // pred_check
          %p327 = pneg %p100
        $region72: #{_lambda_.13} parent=65 // pred_check_branch
          %329 = sbr.rel (%p327) target = $region74
        $region73: #{_lambda_.13} parent=65 // pred_region
          %s330 = smul.u32 2, %s14
          %s331 = smul.addr %s330, 4
          %s332 = scalar_lea.vmem %s3, %s331
          // Predicated region
          $region75: #{_lambda_.13} parent=73 // pred_check
            _
          $region76: #{_lambda_.13} parent=73 // pred_check_branch
            %334 = sbr.rel (0) target = $region78
          $region77: #{_lambda_.13} parent=73 // pred_region
            // Predicated region
            $region79: #{_lambda_.13} parent=77 // pred_check
              _
            $region80: #{_lambda_.13} parent=77 // pred_check_branch
              %336 = sbr.rel (0) target = $region82
            $region81: #{_lambda_.13} parent=77 // pred_region
              // Predicated region
              $region94: #{_lambda_.13} parent=81 // pred_check
                _
              $region95: #{_lambda_.13} parent=81 // pred_check_branch
                %353 = sbr.rel (0) target = $region97
              $region96: #{_lambda_.13} parent=81 // pred_region
                loop: start=0, step=1, limit=1
                $region98: #{_lambda_.13} parent=96 // loop_pre_header
                  _
                $region99: #{_lambda_.13} parent=96 // loop_header
                  %s355 = sphi 0, %s359
                  %p356 = scmp.ge.s32.totalorder %s355, 1
                  %s360 = sphi %s326, %s326
                  %s361 = sphi %s332, %s332
                $region100: #{_lambda_.13} parent=96 // loop_header_branch
                  %358 = sbr.rel (%p356) target = $region104
                $region101: #{_lambda_.13} parent=96 // loop_body
                  %v362 = vld [vmem:[%s360] sm:$0xff]
                  %363 = vst [vmem:[%s361] sm:$0xff] %v362
                  %v364 = vld [vmem:[%s360 + $0x8] sm:$0xff]
                  %365 = vst [vmem:[%s361 + $0x10] sm:$0xff] %v364
                $region102: #{_lambda_.13} parent=96 // loop_footer
                  %s359 = sadd.s32 1, %s355
                $region103: #{_lambda_.13} parent=96 // loop_footer_branch
                  %354 = sbr.rel target = $region99
                $region104: #{_lambda_.13} parent=96 // loop_exit
                  _
              $region97: #{_lambda_.13} parent=81 // pred_fallthru
                _
              // Predicated region
              $region105: #{_lambda_.13} parent=81 // pred_check
                _
              $region106: #{_lambda_.13} parent=81 // pred_check_branch
                %367 = sbr.rel target = $region108
              $region107: #{_lambda_.13} parent=81 // pred_region
                _
              $region108: #{_lambda_.13} parent=81 // pred_fallthru
                _
            $region82: #{_lambda_.13} parent=77 // pred_fallthru
              _
            // Predicated region
            $region83: #{_lambda_.13} parent=77 // pred_check
              _
            $region84: #{_lambda_.13} parent=77 // pred_check_branch
              %338 = sbr.rel target = $region86
            $region85: #{_lambda_.13} parent=77 // pred_region
              loop: start=0, step=1, limit=1
              $region87: #{_lambda_.13} parent=85 // loop_pre_header
                _
              $region88: #{_lambda_.13} parent=85 // loop_header
                %s341 = sphi 0, %s345
                %p342 = scmp.ge.s32.totalorder %s341, 1
                %s346 = sphi %s326, %s326
                %s347 = sphi %s332, %s332
              $region89: #{_lambda_.13} parent=85 // loop_header_branch
                %344 = sbr.rel (%p342) target = $region93
              $region90: #{_lambda_.13} parent=85 // loop_body
                %v348 = vld [vmem:[%s346] sm:$0xff]
                %349 = vst [vmem:[%s347] sm:$0xff] %v348
                %v350 = vld [vmem:[%s346 + $0x8] sm:$0xff]
                %351 = vst [vmem:[%s347 + $0x10] sm:$0xff] %v350
              $region91: #{_lambda_.13} parent=85 // loop_footer
                %s345 = sadd.s32 1, %s341
              $region92: #{_lambda_.13} parent=85 // loop_footer_branch
                %340 = sbr.rel target = $region88
              $region93: #{_lambda_.13} parent=85 // loop_exit
                _
            $region86: #{_lambda_.13} parent=77 // pred_fallthru
              _
          $region78: #{_lambda_.13} parent=73 // pred_fallthru
            _
          %368 = vnop
        $region74: #{_lambda_.13} parent=65 // pred_fallthru
          _
      $region66: #{_lambda_.13} parent=5 // pred_fallthru
        _
      %p369 = scmp.le.s32.totalorder 2, %s9
      // Predicated region
      $region109: #{_lambda_.13} parent=5 // pred_check
        %p370 = pneg %p369
      $region110: #{_lambda_.13} parent=5 // pred_check_branch
        %372 = sbr.rel (%p370) target = $region112
      $region111: #{_lambda_.13} parent=5 // pred_region
        %s373 = ssub.s32 %s9, 2
        // Predicated region
        $region113: #{_lambda_.13} parent=111 // pred_check
          %p374 = pneg %p106
        $region114: #{_lambda_.13} parent=111 // pred_check_branch
          %376 = sbr.rel (%p374) target = $region116
        $region115: #{_lambda_.13} parent=111 // pred_region
          %s377 = sand.u32 %s91, 1
          %s378 = sand.u32 %s91, 1
          %s379 = smul.addr %s378, 16
          %s380 = scalar_lea.vmem [#allocation3], %s379
        $region116: #{_lambda_.13} parent=111 // pred_fallthru
          _
      $region112: #{_lambda_.13} parent=5 // pred_fallthru
        _
    $region6: #{_lambda_.13} parent=1 // loop_footer
      %s13 = sadd.s32 1, %s9
    $region7: #{_lambda_.13} parent=1 // loop_footer_branch
      %8 = sbr.rel target = $region3
    $region8: #{_lambda_.13} parent=1 // loop_exit
      _

// kernel: _lambda_.14
$region0: #{_lambda_.14}
  #allocation0 [shape = 'u32[]', space=smem, size = 0x4, offset = 0x4, fixed_abs, tag = 'smem constant byte address 0x4 - core index']
  #allocation1 [shape = 'u32[144,128]{1,0:T(1,128)}', space=vmem, size = 0x12000, scoped, tag = 'internal scratch']
  #allocation2 [shape = 'bf16[16,768]{1,0:T(16,128)(2,1)}', space=vmem, size = 0x6000, scoped, tag = 'scratch operand']
  %s0 = inlined_call_operand.vmem [shape: bf16[16,768], index: 0, kind: input, shape index: {}]
  %s1 = inlined_call_operand.vmem [shape: bf16[16,144], index: 1, kind: input, shape index: {}]
  %s2 = inlined_call_operand.vmem [shape: f32[16,1], index: 2, kind: input, shape index: {}]
  %s3 = inlined_call_operand.vmem [shape: bf16[16,144], index: 3, kind: input, shape index: {}]
  %s4 = inlined_call_operand.vmem [shape: f32[16,1], index: 4, kind: input, shape index: {}]
  %s5 = inlined_call_operand.vmem [shape: bf16[16,512], index: 5, kind: output, shape index: {}]
  %s6 = sld [smem:[#allocation0]]
  $region30: #{_lambda_.14} parent=0
    _
  %s8 = ssub.s32 1, %s6
  %s9 = scalar_select 0, %s8, %s6
  // Predicated region
  $region2: #{_lambda_.14} parent=0 // pred_check
    _
  $region3: #{_lambda_.14} parent=0 // pred_check_branch
    %11 = sbr.rel (0) target = $region5
  $region4: #{_lambda_.14} parent=0 // pred_region
    _
  $region5: #{_lambda_.14} parent=0 // pred_fallthru
    _
  // Predicated region
  $region6: #{_lambda_.14} parent=0 // pred_check
    _
  $region7: #{_lambda_.14} parent=0 // pred_check_branch
    %13 = sbr.rel (0) target = $region9
  $region8: #{_lambda_.14} parent=0 // pred_region
    _
  $region9: #{_lambda_.14} parent=0 // pred_fallthru
    _
  // Predicated region
  $region10: #{_lambda_.14} parent=0 // pred_check
    _
  $region11: #{_lambda_.14} parent=0 // pred_check_branch
    %15 = sbr.rel (0) target = $region13
  $region12: #{_lambda_.14} parent=0 // pred_region
    _
  $region13: #{_lambda_.14} parent=0 // pred_fallthru
    _
  // Predicated region
  $region14: #{_lambda_.14} parent=0 // pred_check
    _
  $region15: #{_lambda_.14} parent=0 // pred_check_branch
    %17 = sbr.rel (0) target = $region17
  $region16: #{_lambda_.14} parent=0 // pred_region
    _
  $region17: #{_lambda_.14} parent=0 // pred_fallthru
    _
  // Predicated region
  $region18: #{_lambda_.14} parent=0 // pred_check
    _
  $region19: #{_lambda_.14} parent=0 // pred_check_branch
    %19 = sbr.rel (0) target = $region21
  $region20: #{_lambda_.14} parent=0 // pred_region
    _
  $region21: #{_lambda_.14} parent=0 // pred_fallthru
    _
  %23 = vst [vmem:[#allocation2] sm:$0xff] 0
  %24 = vst [vmem:[#allocation2 + $0x8] sm:$0xff] 0
  %25 = vst [vmem:[#allocation2 + $0x10] sm:$0xff] 0
  %26 = vst [vmem:[#allocation2 + $0x18] sm:$0xff] 0
  %27 = vst [vmem:[#allocation2 + $0x20] sm:$0xff] 0
  %28 = vst [vmem:[#allocation2 + $0x28] sm:$0xff] 0
  %v29 = vlaneseq
  %v30 = vand.u32 %v29, 127
  %v31 = vadd.s32 %v30, 128
  %v32 = vand.u32 %v30, 15
  %v33 = vand.u32 %v31, 15
  %v34 = vand.u32 %v30, 255
  %v35 = vand.u32 %v31, 255
  %v36 = vld [vmem:[%s0] sm:$0xff]
  %v37 = vld [vmem:[%s0 + $0x8] sm:$0xf]
  %v38 = vld [vmem:[%s0 + $0x18] sm:$0xff]
  %v39 = vld [vmem:[%s0 + $0x20] sm:$0xf]
  %vm40 = vcmp.ge.s32.totalorder %v32, 1
  %vm41 = vcmp.ge.s32.totalorder %v33, 1
  %vm42 = vcmp.ge.s32.totalorder %v34, 16
  %vm43 = vcmp.ge.s32.totalorder %v35, 16
  %vm44 = vmand %vm40, %vm42
  %vm45 = vmand %vm41, %vm43
  %v46 = vsel %vm44, 1, 0
  %v47 = vsel %vm45, 1, 0
  %vm48 = vcmp.eq.s32.totalorder %v46, 1
  %vm49 = vcmp.eq.s32.totalorder %v47, 1
  %vm50 = vmpackc.low %vm49, %vm48
  %v51 = vsel %vm50, 65537, 0
  %52 = vrot.lane.b32.xlu0 %v51, 111
  %v53 = vpop.permute.xlu0 %52
  %v54 = vrot.slane %v53, 4
  %vm55 = vcmask 908288
  %v56 = vsel %vm55, %v54, %v53
  %vm57 = vcmp.ne.s16.totalorder %v56, 0
  %vm58 = vcmp.ne.s16.totalorder %v54, 0
  %v59 = vsel %vm57, %v36, 0
  %v60 = vsel %vm58, %v37, 0
  %v61 = vsel %vm57, %v38, 0
  %v62 = vsel %vm58, %v39, 0
  %v63 = vsel %vm42, 1, 0
  %v64 = vsel %vm43, 1, 0
  %vm65 = vcmp.eq.s32.totalorder %v63, 1
  %vm66 = vcmp.eq.s32.totalorder %v64, 1
  %vm67 = vmpackc.low %vm66, %vm65
  %v68 = vsel %vm67, 65537, 0
  %69 = vrot.lane.b32.xlu0 %v68, 112
  %v70 = vpop.permute.xlu0 %69
  %v71 = vrot.slane %v70, 4
  %vm72 = vcmask 916480
  %v73 = vsel %vm72, %v71, %v70
  %vm74 = vcmp.ne.s16.totalorder %v73, 0
  %vm75 = vcmp.ne.s16.totalorder %v71, 0
  %v76 = vsel %vm74, %v36, 0
  %v77 = vsel %vm75, %v37, 0
  %v78 = vsel %vm74, %v38, 0
  %v79 = vsel %vm75, %v39, 0
  %vm80 = vcmp.le.s32.totalorder %v32, 14
  %vm81 = vcmp.le.s32.totalorder %v33, 14
  %vm82 = vmand %vm80, %vm42
  %vm83 = vmand %vm81, %vm43
  %v84 = vsel %vm82, 1, 0
  %v85 = vsel %vm83, 1, 0
  %vm86 = vcmp.eq.s32.totalorder %v84, 1
  %vm87 = vcmp.eq.s32.totalorder %v85, 1
  %vm88 = vmpackc.low %vm87, %vm86
  %v89 = vsel %vm88, 65537, 0
  %90 = vrot.lane.b32.xlu0 %v89, 113
  %v91 = vpop.permute.xlu0 %90
  %v92 = vrot.slane %v91, 4
  %vm93 = vcmask 924672
  %v94 = vsel %vm93, %v92, %v91
  %vm95 = vcmp.ne.s16.totalorder %v94, 0
  %vm96 = vcmp.ne.s16.totalorder %v92, 0
  %v97 = vsel %vm95, %v36, 0
  %v98 = vsel %vm96, %v37, 0
  %v99 = vsel %vm95, %v38, 0
  %v100 = vsel %vm96, %v39, 0
  %v101 = vsel %vm40, 1, 0
  %v102 = vsel %vm41, 1, 0
  %vm103 = vcmp.eq.s32.totalorder %v101, 1
  %vm104 = vcmp.eq.s32.totalorder %v102, 1
  %vm105 = vmpackc.low %vm104, %vm103
  %v106 = vsel %vm105, 65537, 0
  %107 = vrot.lane.b32.xlu0 %v106, 127
  %v108 = vpop.permute.xlu0 %107
  %v109 = vrot.slane %v108, 4
  %vm110 = vcmask 1039360
  %v111 = vsel %vm110, %v109, %v108
  %vm112 = vcmp.ne.s16.totalorder %v111, 0
  %vm113 = vcmp.ne.s16.totalorder %v109, 0
  %v114 = vsel %vm112, %v36, 0
  %v115 = vsel %vm113, %v37, 0
  %v116 = vsel %vm112, %v38, 0
  %v117 = vsel %vm113, %v39, 0
  %v118 = vld [vmem:[%s0 + $0x4] sm:$0xff]
  %v119 = vld [vmem:[%s0 + $0x1c] sm:$0xff]
  %v120 = vld [vmem:[%s0 + $0xc] sm:$0xf]
  %v121 = vld [vmem:[%s0 + $0x24] sm:$0xf]
  %v122 = vsel %vm80, 1, 0
  %v123 = vsel %vm81, 1, 0
  %vm124 = vcmp.eq.s32.totalorder %v122, 1
  %vm125 = vcmp.eq.s32.totalorder %v123, 1
  %vm126 = vmpackc.low %vm125, %vm124
  %v127 = vsel %vm126, 65537, 0
  %128 = vrot.lane.b32.xlu0 %v127, 1
  %v129 = vpop.permute.xlu0 %128
  %v130 = vrot.slane %v129, 4
  %vm131 = vcmask 7168
  %v132 = vsel %vm131, %v130, %v129
  %vm133 = vcmp.ne.s16.totalorder %v132, 0
  %vm134 = vcmp.ne.s16.totalorder %v130, 0
  %v135 = vsel %vm133, %v118, 0
  %v136 = vsel %vm134, %v120, 0
  %v137 = vsel %vm133, %v119, 0
  %v138 = vsel %vm134, %v121, 0
  %vm139 = vcmp.lt.s32.totalorder %v34, 240
  %vm140 = vcmp.lt.s32.totalorder %v35, 240
  %vm141 = vmand %vm40, %vm139
  %vm142 = vmand %vm41, %vm140
  %v143 = vsel %vm141, 1, 0
  %v144 = vsel %vm142, 1, 0
  %vm145 = vcmp.eq.s32.totalorder %v143, 1
  %vm146 = vcmp.eq.s32.totalorder %v144, 1
  %vm147 = vmpackc.low %vm146, %vm145
  %v148 = vsel %vm147, 65537, 0
  %149 = vrot.lane.b32.xlu0 %v148, 15
  %v150 = vpop.permute.xlu0 %149
  %v151 = vrot.slane %v150, 4
  %vm152 = vcmask 121856
  %v153 = vsel %vm152, %v151, %v150
  %vm154 = vcmp.ne.s16.totalorder %v153, 0
  %vm155 = vcmp.ne.s16.totalorder %v151, 0
  %v156 = vsel %vm154, %v118, 0
  %v157 = vsel %vm155, %v120, 0
  %v158 = vsel %vm154, %v119, 0
  %v159 = vsel %vm155, %v121, 0
  %v160 = vsel %vm139, 1, 0
  %v161 = vsel %vm140, 1, 0
  %vm162 = vcmp.eq.s32.totalorder %v160, 1
  %vm163 = vcmp.eq.s32.totalorder %v161, 1
  %vm164 = vmpackc.low %vm163, %vm162
  %v165 = vsel %vm164, 65537, 0
  %166 = vrot.lane.b32.xlu0 %v165, 16
  %v167 = vpop.permute.xlu0 %166
  %v168 = vrot.slane %v167, 4
  %vm169 = vcmask 130048
  %v170 = vsel %vm169, %v168, %v167
  %vm171 = vcmp.ne.s16.totalorder %v170, 0
  %vm172 = vcmp.ne.s16.totalorder %v168, 0
  %v173 = vsel %vm171, %v118, 0
  %v174 = vsel %vm172, %v120, 0
  %v175 = vsel %vm171, %v119, 0
  %v176 = vsel %vm172, %v121, 0
  %vm177 = vmand %vm80, %vm139
  %vm178 = vmand %vm81, %vm140
  %v179 = vsel %vm177, 1, 0
  %v180 = vsel %vm178, 1, 0
  %vm181 = vcmp.eq.s32.totalorder %v179, 1
  %vm182 = vcmp.eq.s32.totalorder %v180, 1
  %vm183 = vmpackc.low %vm182, %vm181
  %v184 = vsel %vm183, 65537, 0
  %185 = vrot.lane.b32.xlu0 %v184, 17
  %v186 = vpop.permute.xlu0 %185
  %v187 = vrot.slane %v186, 4
  %vm188 = vcmask 138240
  %v189 = vsel %vm188, %v187, %v186
  %vm190 = vcmp.ne.s16.totalorder %v189, 0
  %vm191 = vcmp.ne.s16.totalorder %v187, 0
  %v192 = vsel %vm190, %v118, 0
  %v193 = vsel %vm191, %v120, 0
  %v194 = vsel %vm190, %v119, 0
  %v195 = vsel %vm191, %v121, 0
  %v200 = vunpack.c.l.b16 %v59
  %v201 = vunpack.c.h.b16 %v59
  %v202 = vunpack.c.l.b16 %v60
  %v203 = vunpack.c.l.b16 %v61
  %v204 = vunpack.c.h.b16 %v61
  %v205 = vunpack.c.l.b16 %v62
  %v206 = vpack.c.b16 %v203, %v200
  %v207 = vpack.c.b16 %v204, %v201
  %v208 = vpack.c.b16 %v205, %v202
  %v213 = vunpack.c.l.b16 %v76
  %v214 = vunpack.c.h.b16 %v76
  %v215 = vunpack.c.l.b16 %v77
  %v216 = vunpack.c.l.b16 %v78
  %v217 = vunpack.c.h.b16 %v78
  %v218 = vunpack.c.l.b16 %v79
  %v219 = vpack.c.b16 %v216, %v213
  %v220 = vpack.c.b16 %v217, %v214
  %v221 = vpack.c.b16 %v218, %v215
  %222 = vrot.lane.b32.xlu0 %v219, 127
  %v223 = vpop.permute.xlu0 %222
  %224 = vrot.lane.b32.xlu0 %v220, 127
  %v225 = vpop.permute.xlu0 %224
  %226 = vrot.lane.b32.xlu0 %v221, 127
  %v227 = vpop.permute.xlu0 %226
  %v228 = vsel %vm110, %v223, %v225
  %v229 = vsel %vm110, %v225, %v227
  %v234 = vunpack.c.l.b16 %v97
  %v235 = vunpack.c.h.b16 %v97
  %v236 = vunpack.c.l.b16 %v98
  %v237 = vunpack.c.l.b16 %v99
  %v238 = vunpack.c.h.b16 %v99
  %v239 = vunpack.c.l.b16 %v100
  %v240 = vpack.c.b16 %v237, %v234
  %v241 = vpack.c.b16 %v238, %v235
  %v242 = vpack.c.b16 %v239, %v236
  %243 = vrot.lane.b32.xlu0 %v240, 126
  %v244 = vpop.permute.xlu0 %243
  %245 = vrot.lane.b32.xlu0 %v241, 126
  %v246 = vpop.permute.xlu0 %245
  %247 = vrot.lane.b32.xlu0 %v242, 126
  %v248 = vpop.permute.xlu0 %247
  %vm249 = vcmask 1031168
  %v250 = vsel %vm249, %v244, %v246
  %v251 = vsel %vm249, %v246, %v248
  %v256 = vunpack.c.l.b16 %v114
  %v257 = vunpack.c.h.b16 %v114
  %v258 = vunpack.c.l.b16 %v115
  %v259 = vunpack.c.l.b16 %v116
  %v260 = vunpack.c.h.b16 %v116
  %v261 = vunpack.c.l.b16 %v117
  %v262 = vpack.c.b16 %v259, %v256
  %v263 = vpack.c.b16 %v260, %v257
  %v264 = vpack.c.b16 %v261, %v258
  %265 = vrot.lane.b32.xlu0 %v262, 112
  %v266 = vpop.permute.xlu0 %265
  %267 = vrot.lane.b32.xlu0 %v263, 112
  %v268 = vpop.permute.xlu0 %267
  %269 = vrot.lane.b32.xlu0 %v264, 112
  %v270 = vpop.permute.xlu0 %269
  %v271 = vsel %vm72, %v266, %v268
  %v272 = vsel %vm72, %v268, %v270
  %v275 = vunpack.c.l.b16 %v118
  %v276 = vunpack.c.h.b16 %v118
  %v277 = vunpack.c.l.b16 %v119
  %v278 = vunpack.c.h.b16 %v119
  %v279 = vpack.c.b16 %v277, %v275
  %v280 = vpack.c.b16 %v278, %v276
  %281 = vrot.lane.b32.xlu0 %v279, 111
  %v282 = vpop.permute.xlu0 %281
  %283 = vrot.lane.b32.xlu0 %v280, 111
  %v284 = vpop.permute.xlu0 %283
  %v285 = vsel %vm55, %v282, %v284
  %v290 = vunpack.c.l.b16 %v135
  %v291 = vunpack.c.h.b16 %v135
  %v292 = vunpack.c.l.b16 %v136
  %v293 = vunpack.c.l.b16 %v137
  %v294 = vunpack.c.h.b16 %v137
  %v295 = vunpack.c.l.b16 %v138
  %v296 = vpack.c.b16 %v293, %v290
  %v297 = vpack.c.b16 %v294, %v291
  %v298 = vpack.c.b16 %v295, %v292
  %299 = vrot.lane.b32.xlu0 %v296, 110
  %v300 = vpop.permute.xlu0 %299
  %301 = vrot.lane.b32.xlu0 %v297, 110
  %v302 = vpop.permute.xlu0 %301
  %303 = vrot.lane.b32.xlu0 %v298, 110
  %v304 = vpop.permute.xlu0 %303
  %vm305 = vcmask 900096
  %v306 = vsel %vm305, %v300, %v302
  %v307 = vsel %vm305, %v302, %v304
  %v312 = vunpack.c.l.b16 %v156
  %v313 = vunpack.c.h.b16 %v156
  %v314 = vunpack.c.l.b16 %v157
  %v315 = vunpack.c.l.b16 %v158
  %v316 = vunpack.c.h.b16 %v158
  %v317 = vunpack.c.l.b16 %v159
  %v318 = vpack.c.b16 %v315, %v312
  %v319 = vpack.c.b16 %v316, %v313
  %v320 = vpack.c.b16 %v317, %v314
  %321 = vrot.lane.b32.xlu0 %v318, 96
  %v322 = vpop.permute.xlu0 %321
  %323 = vrot.lane.b32.xlu0 %v319, 96
  %v324 = vpop.permute.xlu0 %323
  %325 = vrot.lane.b32.xlu0 %v320, 96
  %v326 = vpop.permute.xlu0 %325
  %vm327 = vcmask 785408
  %v328 = vsel %vm327, %v322, %v324
  %v329 = vsel %vm327, %v324, %v326
  %v334 = vunpack.c.l.b16 %v173
  %v335 = vunpack.c.h.b16 %v173
  %v336 = vunpack.c.l.b16 %v174
  %v337 = vunpack.c.l.b16 %v175
  %v338 = vunpack.c.h.b16 %v175
  %v339 = vunpack.c.l.b16 %v176
  %v340 = vpack.c.b16 %v337, %v334
  %v341 = vpack.c.b16 %v338, %v335
  %v342 = vpack.c.b16 %v339, %v336
  %343 = vrot.lane.b32.xlu0 %v340, 95
  %v344 = vpop.permute.xlu0 %343
  %345 = vrot.lane.b32.xlu0 %v341, 95
  %v346 = vpop.permute.xlu0 %345
  %347 = vrot.lane.b32.xlu0 %v342, 95
  %v348 = vpop.permute.xlu0 %347
  %vm349 = vcmask 777216
  %v350 = vsel %vm349, %v344, %v346
  %v351 = vsel %vm349, %v346, %v348
  %v356 = vunpack.c.l.b16 %v192
  %v357 = vunpack.c.h.b16 %v192
  %v358 = vunpack.c.l.b16 %v193
  %v359 = vunpack.c.l.b16 %v194
  %v360 = vunpack.c.h.b16 %v194
  %v361 = vunpack.c.l.b16 %v195
  %v362 = vpack.c.b16 %v359, %v356
  %v363 = vpack.c.b16 %v360, %v357
  %v364 = vpack.c.b16 %v361, %v358
  %365 = vrot.lane.b32.xlu0 %v362, 94
  %v366 = vpop.permute.xlu0 %365
  %367 = vrot.lane.b32.xlu0 %v363, 94
  %v368 = vpop.permute.xlu0 %367
  %369 = vrot.lane.b32.xlu0 %v364, 94
  %v370 = vpop.permute.xlu0 %369
  %vm371 = vcmask 769024
  %v372 = vsel %vm371, %v366, %v368
  %v373 = vsel %vm371, %v368, %v370
  %v374 = vld [vmem:[%s1] sm:$0xff]
  %v375 = vld [vmem:[%s1 + $0x8] sm:$0xff]
  %v376 = vld [vmem:[%s2] sm:$0xff]
  %v377 = vld [vmem:[%s2 + $0x8] sm:$0xff]
  %379 = vset.pattern.permute.xlu0 0
  %380 = vperm.xlu0 %379, %v376
  %v381 = vpop.permute.xlu0 %380
  %384 = vset.pattern.permute.xlu0 0
  %385 = vperm.xlu0 %384, %v377
  %v386 = vpop.permute.xlu0 %385
  %v390 = vunpack.c.l.b16 %v374
  %v391 = vunpack.c.h.b16 %v374
  %v392 = vunpack.c.l.b16 %v375
  %v393 = vunpack.c.h.b16 %v375
  %v394 = vpack.c.b16 %v392, %v390
  %v395 = vpack.c.b16 %v393, %v391
  %397 = vrot.lane.b32.xlu0 %v206, 17
  %v398 = vpop.permute.xlu0 %397
  %399 = vrot.lane.b32.xlu0 %v207, 17
  %v400 = vpop.permute.xlu0 %399
  %401 = vrot.lane.b32.xlu0 %v208, 17
  %v402 = vpop.permute.xlu0 %401
  %403 = vrot.lane.b32.xlu0 %v228, 17
  %v404 = vpop.permute.xlu0 %403
  %405 = vrot.lane.b32.xlu0 %v229, 17
  %v406 = vpop.permute.xlu0 %405
  %407 = vrot.lane.b32.xlu0 %v227, 17
  %v408 = vpop.permute.xlu0 %407
  %409 = vrot.lane.b32.xlu0 %v250, 17
  %v410 = vpop.permute.xlu0 %409
  %411 = vrot.lane.b32.xlu0 %v251, 17
  %v412 = vpop.permute.xlu0 %411
  %413 = vrot.lane.b32.xlu0 %v248, 17
  %v414 = vpop.permute.xlu0 %413
  %415 = vrot.lane.b32.xlu0 %v271, 17
  %v416 = vpop.permute.xlu0 %415
  %417 = vrot.lane.b32.xlu0 %v272, 17
  %v418 = vpop.permute.xlu0 %417
  %419 = vrot.lane.b32.xlu0 %v270, 17
  %v420 = vpop.permute.xlu0 %419
  %421 = vrot.lane.b32.xlu0 %v282, 17
  %v422 = vpop.permute.xlu0 %421
  %423 = vrot.lane.b32.xlu0 %v285, 17
  %v424 = vpop.permute.xlu0 %423
  %425 = vrot.lane.b32.xlu0 %v284, 17
  %v426 = vpop.permute.xlu0 %425
  %427 = vrot.lane.b32.xlu0 %v300, 17
  %v428 = vpop.permute.xlu0 %427
  %429 = vrot.lane.b32.xlu0 %v306, 17
  %v430 = vpop.permute.xlu0 %429
  %431 = vrot.lane.b32.xlu0 %v307, 17
  %v432 = vpop.permute.xlu0 %431
  %433 = vrot.lane.b32.xlu0 %v322, 17
  %v434 = vpop.permute.xlu0 %433
  %435 = vrot.lane.b32.xlu0 %v328, 17
  %v436 = vpop.permute.xlu0 %435
  %437 = vrot.lane.b32.xlu0 %v329, 17
  %v438 = vpop.permute.xlu0 %437
  %439 = vrot.lane.b32.xlu0 %v344, 17
  %v440 = vpop.permute.xlu0 %439
  %441 = vrot.lane.b32.xlu0 %v350, 17
  %v442 = vpop.permute.xlu0 %441
  %443 = vrot.lane.b32.xlu0 %v351, 17
  %v444 = vpop.permute.xlu0 %443
  %445 = vrot.lane.b32.xlu0 %v366, 17
  %v446 = vpop.permute.xlu0 %445
  %447 = vrot.lane.b32.xlu0 %v372, 17
  %v448 = vpop.permute.xlu0 %447
  %449 = vrot.lane.b32.xlu0 %v373, 17
  %v450 = vpop.permute.xlu0 %449
  %v451 = vsel %vm188, %v398, %v400
  %v452 = vsel %vm188, %v400, %v402
  %v453 = vsel %vm188, %v404, %v406
  %v454 = vsel %vm188, %v406, %v408
  %v455 = vsel %vm188, %v410, %v412
  %v456 = vsel %vm188, %v412, %v414
  %v457 = vsel %vm188, %v416, %v418
  %v458 = vsel %vm188, %v418, %v420
  %v459 = vsel %vm188, %v422, %v424
  %v460 = vsel %vm188, %v424, %v426
  %v461 = vsel %vm188, %v428, %v430
  %v462 = vsel %vm188, %v430, %v432
  %v463 = vsel %vm188, %v434, %v436
  %v464 = vsel %vm188, %v436, %v438
  %v465 = vsel %vm188, %v440, %v442
  %v466 = vsel %vm188, %v442, %v444
  %v467 = vsel %vm188, %v446, %v448
  %v468 = vsel %vm188, %v448, %v450
  %vm487 = vcmask 130048
  %v489 = vsel %vm487, %v395, 0
  %491 = vmatprep.subr.bf16.mxu0 %v452
  %492 = vmatpush1.bf16.msra.mxu0 %v451
  %493 = vmatprep.subr.bf16.mxu0 %v454
  %494 = vmatpush1.bf16.msra.mxu0 %v453
  %495 = vmatprep.subr.bf16.mxu0 %v456
  %496 = vmatpush1.bf16.msra.mxu0 %v455
  %497 = vmatprep.subr.bf16.mxu0 %v458
  %498 = vmatpush1.bf16.msra.mxu0 %v457
  %499 = vmatprep.subr.bf16.mxu0 %v460
  %500 = vmatpush1.bf16.msra.mxu0 %v459
  %501 = vmatprep.subr.bf16.mxu0 %v462
  %502 = vmatpush1.bf16.msra.mxu0 %v461
  %503 = vmatprep.subr.bf16.mxu0 %v464
  %504 = vmatpush1.bf16.msra.mxu0 %v463
  %505 = vmatprep.subr.bf16.mxu0 %v466
  %506 = vmatpush1.bf16.msra.mxu0 %v465
  %507 = vmatprep.subr.bf16.mxu0 %v468
  %508 = vmatpush1.bf16.msra.mxu0 %v467
  %509 = vmatprep.subr.bf16.mxu0 0
  %510 = vmatpush1.bf16.msra.mxu0 0
  %511 = vmatprep.subr.bf16.mxu0 0
  %512 = vmatpush1.bf16.msra.mxu0 0
  %513 = vmatprep.subr.bf16.mxu0 0
  %514 = vmatpush1.bf16.msra.mxu0 0
  %515 = vmatprep.subr.bf16.mxu0 0
  %516 = vmatpush1.bf16.msra.mxu0 0
  %517 = vmatprep.subr.bf16.mxu0 0
  %518 = vmatpush1.bf16.msra.mxu0 0
  %519 = vmatprep.subr.bf16.mxu0 0
  %520 = vmatpush1.bf16.msra.mxu0 0
  %521 = vmatprep.subr.bf16.mxu0 0
  %522 = vmatpush1.bf16.msra.mxu0 0
  %523 = vmatprep.mubr.bf16.mxu0 %v489
  %524 = vmatmul.mubr.bf16.gmra.mrb[0].mxu0 %v394
  %v525 = vpop.f32.mrb[0].mxu0
  %v526 = vadd.f32 %v381, %v525
  %v527 = vpop.f32.mrb[0].mxu0
  %v528 = vadd.f32 %v381, %v527
  %v529 = vpop.f32.mrb[0].mxu0
  %v530 = vadd.f32 %v386, %v529
  %v531 = vpop.f32.mrb[0].mxu0
  %v532 = vadd.f32 %v386, %v531
  %533 = vdwg.mxu0
  %v534 = vmax.f32 %v526, 0.0
  %v535 = vmax.f32 %v528, 0.0
  %v536 = vmax.f32 %v530, 0.0
  %v537 = vmax.f32 %v532, 0.0
  %v538 = vpack.c.bf16 %v536, %v534
  %v539 = vpack.c.bf16 %v537, %v535
  %540 = vst [vmem:[#allocation2 + $0x8] sm:$0xff] %v538
  %541 = vst [vmem:[#allocation2 + $0x10] sm:$0xff] %v539
  %v542 = vadd.s32 %v30, 256
  %v543 = vadd.s32 %v31, 256
  %v544 = vand.u32 %v542, 15
  %v545 = vand.u32 %v543, 15
  %v546 = vand.u32 %v542, 255
  %v547 = vand.u32 %v543, 255
  %v548 = vld [vmem:[%s0 + $0x8] sm:$0xff]
  %v549 = vld [vmem:[%s0 + $0x10] sm:$0xf]
  %v550 = vld [vmem:[%s0 + $0x20] sm:$0xff]
  %v551 = vld [vmem:[%s0 + $0x28] sm:$0xf]
  %vm552 = vcmp.ge.s32.totalorder %v544, 1
  %vm553 = vcmp.ge.s32.totalorder %v545, 1
  %vm554 = vcmp.ge.s32.totalorder %v546, 16
  %vm555 = vcmp.ge.s32.totalorder %v547, 16
  %vm556 = vmand %vm552, %vm554
  %vm557 = vmand %vm553, %vm555
  %v558 = vsel %vm556, 1, 0
  %v559 = vsel %vm557, 1, 0
  %vm560 = vcmp.eq.s32.totalorder %v558, 1
  %vm561 = vcmp.eq.s32.totalorder %v559, 1
  %vm562 = vmpackc.low %vm561, %vm560
  %v563 = vsel %vm562, 65537, 0
  %564 = vrot.lane.b32.xlu0 %v563, 111
  %v565 = vpop.permute.xlu0 %564
  %v566 = vrot.slane %v565, 4
  %v567 = vsel %vm55, %v566, %v565
  %vm568 = vcmp.ne.s16.totalorder %v567, 0
  %vm569 = vcmp.ne.s16.totalorder %v566, 0
  %v570 = vsel %vm568, %v548, 0
  %v571 = vsel %vm569, %v549, 0
  %v572 = vsel %vm568, %v550, 0
  %v573 = vsel %vm569, %v551, 0
  %v574 = vsel %vm554, 1, 0
  %v575 = vsel %vm555, 1, 0
  %vm576 = vcmp.eq.s32.totalorder %v574, 1
  %vm577 = vcmp.eq.s32.totalorder %v575, 1
  %vm578 = vmpackc.low %vm577, %vm576
  %v579 = vsel %vm578, 65537, 0
  %580 = vrot.lane.b32.xlu0 %v579, 112
  %v581 = vpop.permute.xlu0 %580
  %v582 = vrot.slane %v581, 4
  %v583 = vsel %vm72, %v582, %v581
  %vm584 = vcmp.ne.s16.totalorder %v583, 0
  %vm585 = vcmp.ne.s16.totalorder %v582, 0
  %v586 = vsel %vm584, %v548, 0
  %v587 = vsel %vm585, %v549, 0
  %v588 = vsel %vm584, %v550, 0
  %v589 = vsel %vm585, %v551, 0
  %vm590 = vcmp.le.s32.totalorder %v544, 14
  %vm591 = vcmp.le.s32.totalorder %v545, 14
  %vm592 = vmand %vm590, %vm554
  %vm593 = vmand %vm591, %vm555
  %v594 = vsel %vm592, 1, 0
  %v595 = vsel %vm593, 1, 0
  %vm596 = vcmp.eq.s32.totalorder %v594, 1
  %vm597 = vcmp.eq.s32.totalorder %v595, 1
  %vm598 = vmpackc.low %vm597, %vm596
  %v599 = vsel %vm598, 65537, 0
  %600 = vrot.lane.b32.xlu0 %v599, 113
  %v601 = vpop.permute.xlu0 %600
  %v602 = vrot.slane %v601, 4
  %v603 = vsel %vm93, %v602, %v601
  %vm604 = vcmp.ne.s16.totalorder %v603, 0
  %vm605 = vcmp.ne.s16.totalorder %v602, 0
  %v606 = vsel %vm604, %v548, 0
  %v607 = vsel %vm605, %v549, 0
  %v608 = vsel %vm604, %v550, 0
  %v609 = vsel %vm605, %v551, 0
  %v610 = vsel %vm552, 1, 0
  %v611 = vsel %vm553, 1, 0
  %vm612 = vcmp.eq.s32.totalorder %v610, 1
  %vm613 = vcmp.eq.s32.totalorder %v611, 1
  %vm614 = vmpackc.low %vm613, %vm612
  %v615 = vsel %vm614, 65537, 0
  %616 = vrot.lane.b32.xlu0 %v615, 127
  %v617 = vpop.permute.xlu0 %616
  %v618 = vrot.slane %v617, 4
  %v619 = vsel %vm110, %v618, %v617
  %vm620 = vcmp.ne.s16.totalorder %v619, 0
  %vm621 = vcmp.ne.s16.totalorder %v618, 0
  %v622 = vsel %vm620, %v548, 0
  %v623 = vsel %vm621, %v549, 0
  %v624 = vsel %vm620, %v550, 0
  %v625 = vsel %vm621, %v551, 0
  %v626 = vld [vmem:[%s0 + $0xc] sm:$0xff]
  %v627 = vld [vmem:[%s0 + $0x24] sm:$0xff]
  %v628 = vld [vmem:[%s0 + $0xc] sm:$0xff]
  %v629 = vld [vmem:[%s0 + $0x14] sm:$0xf]
  %v630 = vld [vmem:[%s0 + $0x24] sm:$0xff]
  %v631 = vld [vmem:[%s0 + $0x2c] sm:$0xf]
  %v632 = vsel %vm590, 1, 0
  %v633 = vsel %vm591, 1, 0
  %vm634 = vcmp.eq.s32.totalorder %v632, 1
  %vm635 = vcmp.eq.s32.totalorder %v633, 1
  %vm636 = vmpackc.low %vm635, %vm634
  %v637 = vsel %vm636, 65537, 0
  %638 = vrot.lane.b32.xlu0 %v637, 1
  %v639 = vpop.permute.xlu0 %638
  %v640 = vrot.slane %v639, 4
  %v641 = vsel %vm131, %v640, %v639
  %vm642 = vcmp.ne.s16.totalorder %v641, 0
  %vm643 = vcmp.ne.s16.totalorder %v640, 0
  %v644 = vsel %vm642, %v628, 0
  %v645 = vsel %vm643, %v629, 0
  %v646 = vsel %vm642, %v630, 0
  %v647 = vsel %vm643, %v631, 0
  %vm648 = vcmp.lt.s32.totalorder %v546, 240
  %vm649 = vcmp.lt.s32.totalorder %v547, 240
  %vm650 = vmand %vm552, %vm648
  %vm651 = vmand %vm553, %vm649
  %v652 = vsel %vm650, 1, 0
  %v653 = vsel %vm651, 1, 0
  %vm654 = vcmp.eq.s32.totalorder %v652, 1
  %vm655 = vcmp.eq.s32.totalorder %v653, 1
  %vm656 = vmpackc.low %vm655, %vm654
  %v657 = vsel %vm656, 65537, 0
  %658 = vrot.lane.b32.xlu0 %v657, 15
  %v659 = vpop.permute.xlu0 %658
  %v660 = vrot.slane %v659, 4
  %v661 = vsel %vm152, %v660, %v659
  %vm662 = vcmp.ne.s16.totalorder %v661, 0
  %vm663 = vcmp.ne.s16.totalorder %v660, 0
  %v664 = vsel %vm662, %v628, 0
  %v665 = vsel %vm663, %v629, 0
  %v666 = vsel %vm662, %v630, 0
  %v667 = vsel %vm663, %v631, 0
  %v668 = vsel %vm648, 1, 0
  %v669 = vsel %vm649, 1, 0
  %vm670 = vcmp.eq.s32.totalorder %v668, 1
  %vm671 = vcmp.eq.s32.totalorder %v669, 1
  %vm672 = vmpackc.low %vm671, %vm670
  %v673 = vsel %vm672, 65537, 0
  %674 = vrot.lane.b32.xlu0 %v673, 16
  %v675 = vpop.permute.xlu0 %674
  %v676 = vrot.slane %v675, 4
  %v677 = vsel %vm169, %v676, %v675
  %vm678 = vcmp.ne.s16.totalorder %v677, 0
  %vm679 = vcmp.ne.s16.totalorder %v676, 0
  %v680 = vsel %vm678, %v628, 0
  %v681 = vsel %vm679, %v629, 0
  %v682 = vsel %vm678, %v630, 0
  %v683 = vsel %vm679, %v631, 0
  %vm684 = vmand %vm590, %vm648
  %vm685 = vmand %vm591, %vm649
  %v686 = vsel %vm684, 1, 0
  %v687 = vsel %vm685, 1, 0
  %vm688 = vcmp.eq.s32.totalorder %v686, 1
  %vm689 = vcmp.eq.s32.totalorder %v687, 1
  %vm690 = vmpackc.low %vm689, %vm688
  %v691 = vsel %vm690, 65537, 0
  %692 = vrot.lane.b32.xlu0 %v691, 17
  %v693 = vpop.permute.xlu0 %692
  %v694 = vrot.slane %v693, 4
  %v695 = vsel %vm188, %v694, %v693
  %vm696 = vcmp.ne.s16.totalorder %v695, 0
  %vm697 = vcmp.ne.s16.totalorder %v694, 0
  %v698 = vsel %vm696, %v628, 0
  %v699 = vsel %vm697, %v629, 0
  %v700 = vsel %vm696, %v630, 0
  %v701 = vsel %vm697, %v631, 0
  %v706 = vunpack.c.l.b16 %v570
  %v707 = vunpack.c.h.b16 %v570
  %v708 = vunpack.c.l.b16 %v571
  %v709 = vunpack.c.l.b16 %v572
  %v710 = vunpack.c.h.b16 %v572
  %v711 = vunpack.c.l.b16 %v573
  %v712 = vpack.c.b16 %v709, %v706
  %v713 = vpack.c.b16 %v710, %v707
  %v714 = vpack.c.b16 %v711, %v708
  %v719 = vunpack.c.l.b16 %v586
  %v720 = vunpack.c.h.b16 %v586
  %v721 = vunpack.c.l.b16 %v587
  %v722 = vunpack.c.l.b16 %v588
  %v723 = vunpack.c.h.b16 %v588
  %v724 = vunpack.c.l.b16 %v589
  %v725 = vpack.c.b16 %v722, %v719
  %v726 = vpack.c.b16 %v723, %v720
  %v727 = vpack.c.b16 %v724, %v721
  %728 = vrot.lane.b32.xlu0 %v725, 127
  %v729 = vpop.permute.xlu0 %728
  %730 = vrot.lane.b32.xlu0 %v726, 127
  %v731 = vpop.permute.xlu0 %730
  %732 = vrot.lane.b32.xlu0 %v727, 127
  %v733 = vpop.permute.xlu0 %732
  %v734 = vsel %vm110, %v729, %v731
  %v735 = vsel %vm110, %v731, %v733
  %v740 = vunpack.c.l.b16 %v606
  %v741 = vunpack.c.h.b16 %v606
  %v742 = vunpack.c.l.b16 %v607
  %v743 = vunpack.c.l.b16 %v608
  %v744 = vunpack.c.h.b16 %v608
  %v745 = vunpack.c.l.b16 %v609
  %v746 = vpack.c.b16 %v743, %v740
  %v747 = vpack.c.b16 %v744, %v741
  %v748 = vpack.c.b16 %v745, %v742
  %749 = vrot.lane.b32.xlu0 %v746, 126
  %v750 = vpop.permute.xlu0 %749
  %751 = vrot.lane.b32.xlu0 %v747, 126
  %v752 = vpop.permute.xlu0 %751
  %753 = vrot.lane.b32.xlu0 %v748, 126
  %v754 = vpop.permute.xlu0 %753
  %v755 = vsel %vm249, %v750, %v752
  %v756 = vsel %vm249, %v752, %v754
  %v761 = vunpack.c.l.b16 %v622
  %v762 = vunpack.c.h.b16 %v622
  %v763 = vunpack.c.l.b16 %v623
  %v764 = vunpack.c.l.b16 %v624
  %v765 = vunpack.c.h.b16 %v624
  %v766 = vunpack.c.l.b16 %v625
  %v767 = vpack.c.b16 %v764, %v761
  %v768 = vpack.c.b16 %v765, %v762
  %v769 = vpack.c.b16 %v766, %v763
  %770 = vrot.lane.b32.xlu0 %v767, 112
  %v771 = vpop.permute.xlu0 %770
  %772 = vrot.lane.b32.xlu0 %v768, 112
  %v773 = vpop.permute.xlu0 %772
  %774 = vrot.lane.b32.xlu0 %v769, 112
  %v775 = vpop.permute.xlu0 %774
  %v776 = vsel %vm72, %v771, %v773
  %v777 = vsel %vm72, %v773, %v775
  %v780 = vunpack.c.l.b16 %v626
  %v781 = vunpack.c.h.b16 %v626
  %v782 = vunpack.c.l.b16 %v627
  %v783 = vunpack.c.h.b16 %v627
  %v784 = vpack.c.b16 %v782, %v780
  %v785 = vpack.c.b16 %v783, %v781
  %786 = vrot.lane.b32.xlu0 %v784, 111
  %v787 = vpop.permute.xlu0 %786
  %788 = vrot.lane.b32.xlu0 %v785, 111
  %v789 = vpop.permute.xlu0 %788
  %v790 = vsel %vm55, %v787, %v789
  %v795 = vunpack.c.l.b16 %v644
  %v796 = vunpack.c.h.b16 %v644
  %v797 = vunpack.c.l.b16 %v645
  %v798 = vunpack.c.l.b16 %v646
  %v799 = vunpack.c.h.b16 %v646
  %v800 = vunpack.c.l.b16 %v647
  %v801 = vpack.c.b16 %v798, %v795
  %v802 = vpack.c.b16 %v799, %v796
  %v803 = vpack.c.b16 %v800, %v797
  %804 = vrot.lane.b32.xlu0 %v801, 110
  %v805 = vpop.permute.xlu0 %804
  %806 = vrot.lane.b32.xlu0 %v802, 110
  %v807 = vpop.permute.xlu0 %806
  %808 = vrot.lane.b32.xlu0 %v803, 110
  %v809 = vpop.permute.xlu0 %808
  %v810 = vsel %vm305, %v805, %v807
  %v811 = vsel %vm305, %v807, %v809
  %v816 = vunpack.c.l.b16 %v664
  %v817 = vunpack.c.h.b16 %v664
  %v818 = vunpack.c.l.b16 %v665
  %v819 = vunpack.c.l.b16 %v666
  %v820 = vunpack.c.h.b16 %v666
  %v821 = vunpack.c.l.b16 %v667
  %v822 = vpack.c.b16 %v819, %v816
  %v823 = vpack.c.b16 %v820, %v817
  %v824 = vpack.c.b16 %v821, %v818
  %825 = vrot.lane.b32.xlu0 %v822, 96
  %v826 = vpop.permute.xlu0 %825
  %827 = vrot.lane.b32.xlu0 %v823, 96
  %v828 = vpop.permute.xlu0 %827
  %829 = vrot.lane.b32.xlu0 %v824, 96
  %v830 = vpop.permute.xlu0 %829
  %v831 = vsel %vm327, %v826, %v828
  %v832 = vsel %vm327, %v828, %v830
  %v837 = vunpack.c.l.b16 %v680
  %v838 = vunpack.c.h.b16 %v680
  %v839 = vunpack.c.l.b16 %v681
  %v840 = vunpack.c.l.b16 %v682
  %v841 = vunpack.c.h.b16 %v682
  %v842 = vunpack.c.l.b16 %v683
  %v843 = vpack.c.b16 %v840, %v837
  %v844 = vpack.c.b16 %v841, %v838
  %v845 = vpack.c.b16 %v842, %v839
  %846 = vrot.lane.b32.xlu0 %v843, 95
  %v847 = vpop.permute.xlu0 %846
  %848 = vrot.lane.b32.xlu0 %v844, 95
  %v849 = vpop.permute.xlu0 %848
  %850 = vrot.lane.b32.xlu0 %v845, 95
  %v851 = vpop.permute.xlu0 %850
  %v852 = vsel %vm349, %v847, %v849
  %v853 = vsel %vm349, %v849, %v851
  %v858 = vunpack.c.l.b16 %v698
  %v859 = vunpack.c.h.b16 %v698
  %v860 = vunpack.c.l.b16 %v699
  %v861 = vunpack.c.l.b16 %v700
  %v862 = vunpack.c.h.b16 %v700
  %v863 = vunpack.c.l.b16 %v701
  %v864 = vpack.c.b16 %v861, %v858
  %v865 = vpack.c.b16 %v862, %v859
  %v866 = vpack.c.b16 %v863, %v860
  %867 = vrot.lane.b32.xlu0 %v864, 94
  %v868 = vpop.permute.xlu0 %867
  %869 = vrot.lane.b32.xlu0 %v865, 94
  %v870 = vpop.permute.xlu0 %869
  %871 = vrot.lane.b32.xlu0 %v866, 94
  %v872 = vpop.permute.xlu0 %871
  %v873 = vsel %vm371, %v868, %v870
  %v874 = vsel %vm371, %v870, %v872
  %v875 = vld [vmem:[%s1] sm:$0xff]
  %v876 = vld [vmem:[%s1 + $0x8] sm:$0xff]
  %v877 = vld [vmem:[%s2] sm:$0xff]
  %v878 = vld [vmem:[%s2 + $0x8] sm:$0xff]
  %880 = vset.pattern.permute.xlu0 0
  %881 = vperm.xlu0 %880, %v877
  %v882 = vpop.permute.xlu0 %881
  %885 = vset.pattern.permute.xlu0 0
  %886 = vperm.xlu0 %885, %v878
  %v887 = vpop.permute.xlu0 %886
  %v891 = vunpack.c.l.b16 %v875
  %v892 = vunpack.c.h.b16 %v875
  %v893 = vunpack.c.l.b16 %v876
  %v894 = vunpack.c.h.b16 %v876
  %v895 = vpack.c.b16 %v893, %v891
  %v896 = vpack.c.b16 %v894, %v892
  %898 = vrot.lane.b32.xlu0 %v712, 17
  %v899 = vpop.permute.xlu0 %898
  %900 = vrot.lane.b32.xlu0 %v713, 17
  %v901 = vpop.permute.xlu0 %900
  %902 = vrot.lane.b32.xlu0 %v714, 17
  %v903 = vpop.permute.xlu0 %902
  %904 = vrot.lane.b32.xlu0 %v734, 17
  %v905 = vpop.permute.xlu0 %904
  %906 = vrot.lane.b32.xlu0 %v735, 17
  %v907 = vpop.permute.xlu0 %906
  %908 = vrot.lane.b32.xlu0 %v733, 17
  %v909 = vpop.permute.xlu0 %908
  %910 = vrot.lane.b32.xlu0 %v755, 17
  %v911 = vpop.permute.xlu0 %910
  %912 = vrot.lane.b32.xlu0 %v756, 17
  %v913 = vpop.permute.xlu0 %912
  %914 = vrot.lane.b32.xlu0 %v754, 17
  %v915 = vpop.permute.xlu0 %914
  %916 = vrot.lane.b32.xlu0 %v776, 17
  %v917 = vpop.permute.xlu0 %916
  %918 = vrot.lane.b32.xlu0 %v777, 17
  %v919 = vpop.permute.xlu0 %918
  %920 = vrot.lane.b32.xlu0 %v775, 17
  %v921 = vpop.permute.xlu0 %920
  %922 = vrot.lane.b32.xlu0 %v787, 17
  %v923 = vpop.permute.xlu0 %922
  %924 = vrot.lane.b32.xlu0 %v790, 17
  %v925 = vpop.permute.xlu0 %924
  %926 = vrot.lane.b32.xlu0 %v789, 17
  %v927 = vpop.permute.xlu0 %926
  %928 = vrot.lane.b32.xlu0 %v805, 17
  %v929 = vpop.permute.xlu0 %928
  %930 = vrot.lane.b32.xlu0 %v810, 17
  %v931 = vpop.permute.xlu0 %930
  %932 = vrot.lane.b32.xlu0 %v811, 17
  %v933 = vpop.permute.xlu0 %932
  %934 = vrot.lane.b32.xlu0 %v826, 17
  %v935 = vpop.permute.xlu0 %934
  %936 = vrot.lane.b32.xlu0 %v831, 17
  %v937 = vpop.permute.xlu0 %936
  %938 = vrot.lane.b32.xlu0 %v832, 17
  %v939 = vpop.permute.xlu0 %938
  %940 = vrot.lane.b32.xlu0 %v847, 17
  %v941 = vpop.permute.xlu0 %940
  %942 = vrot.lane.b32.xlu0 %v852, 17
  %v943 = vpop.permute.xlu0 %942
  %944 = vrot.lane.b32.xlu0 %v853, 17
  %v945 = vpop.permute.xlu0 %944
  %946 = vrot.lane.b32.xlu0 %v868, 17
  %v947 = vpop.permute.xlu0 %946
  %948 = vrot.lane.b32.xlu0 %v873, 17
  %v949 = vpop.permute.xlu0 %948
  %950 = vrot.lane.b32.xlu0 %v874, 17
  %v951 = vpop.permute.xlu0 %950
  %v952 = vsel %vm188, %v899, %v901
  %v953 = vsel %vm188, %v901, %v903
  %v954 = vsel %vm188, %v905, %v907
  %v955 = vsel %vm188, %v907, %v909
  %v956 = vsel %vm188, %v911, %v913
  %v957 = vsel %vm188, %v913, %v915
  %v958 = vsel %vm188, %v917, %v919
  %v959 = vsel %vm188, %v919, %v921
  %v960 = vsel %vm188, %v923, %v925
  %v961 = vsel %vm188, %v925, %v927
  %v962 = vsel %vm188, %v929, %v931
  %v963 = vsel %vm188, %v931, %v933
  %v964 = vsel %vm188, %v935, %v937
  %v965 = vsel %vm188, %v937, %v939
  %v966 = vsel %vm188, %v941, %v943
  %v967 = vsel %vm188, %v943, %v945
  %v968 = vsel %vm188, %v947, %v949
  %v969 = vsel %vm188, %v949, %v951
  %v989 = vsel %vm487, %v896, 0
  %991 = vmatprep.subr.bf16.mxu0 %v953
  %992 = vmatpush1.bf16.msra.mxu0 %v952
  %993 = vmatprep.subr.bf16.mxu0 %v955
  %994 = vmatpush1.bf16.msra.mxu0 %v954
  %995 = vmatprep.subr.bf16.mxu0 %v957
  %996 = vmatpush1.bf16.msra.mxu0 %v956
  %997 = vmatprep.subr.bf16.mxu0 %v959
  %998 = vmatpush1.bf16.msra.mxu0 %v958
  %999 = vmatprep.subr.bf16.mxu0 %v961
  %1000 = vmatpush1.bf16.msra.mxu0 %v960
  %1001 = vmatprep.subr.bf16.mxu0 %v963
  %1002 = vmatpush1.bf16.msra.mxu0 %v962
  %1003 = vmatprep.subr.bf16.mxu0 %v965
  %1004 = vmatpush1.bf16.msra.mxu0 %v964
  %1005 = vmatprep.subr.bf16.mxu0 %v967
  %1006 = vmatpush1.bf16.msra.mxu0 %v966
  %1007 = vmatprep.subr.bf16.mxu0 %v969
  %1008 = vmatpush1.bf16.msra.mxu0 %v968
  %1009 = vmatprep.subr.bf16.mxu0 0
  %1010 = vmatpush1.bf16.msra.mxu0 0
  %1011 = vmatprep.subr.bf16.mxu0 0
  %1012 = vmatpush1.bf16.msra.mxu0 0
  %1013 = vmatprep.subr.bf16.mxu0 0
  %1014 = vmatpush1.bf16.msra.mxu0 0
  %1015 = vmatprep.subr.bf16.mxu0 0
  %1016 = vmatpush1.bf16.msra.mxu0 0
  %1017 = vmatprep.subr.bf16.mxu0 0
  %1018 = vmatpush1.bf16.msra.mxu0 0
  %1019 = vmatprep.subr.bf16.mxu0 0
  %1020 = vmatpush1.bf16.msra.mxu0 0
  %1021 = vmatprep.subr.bf16.mxu0 0
  %1022 = vmatpush1.bf16.msra.mxu0 0
  %1023 = vmatprep.mubr.bf16.mxu0 %v989
  %1024 = vmatmul.mubr.bf16.gmra.mrb[0].mxu0 %v895
  %v1025 = vpop.f32.mrb[0].mxu0
  %v1026 = vadd.f32 %v882, %v1025
  %v1027 = vpop.f32.mrb[0].mxu0
  %v1028 = vadd.f32 %v882, %v1027
  %v1029 = vpop.f32.mrb[0].mxu0
  %v1030 = vadd.f32 %v887, %v1029
  %v1031 = vpop.f32.mrb[0].mxu0
  %v1032 = vadd.f32 %v887, %v1031
  %1033 = vdwg.mxu0
  %v1034 = vmax.f32 %v1026, 0.0
  %v1035 = vmax.f32 %v1028, 0.0
  %v1036 = vmax.f32 %v1030, 0.0
  %v1037 = vmax.f32 %v1032, 0.0
  %v1038 = vpack.c.bf16 %v1036, %v1034
  %v1039 = vpack.c.bf16 %v1037, %v1035
  %1040 = vst [vmem:[#allocation2 + $0x18] sm:$0xff] %v1038
  %1041 = vst [vmem:[#allocation2 + $0x20] sm:$0xff] %v1039
  %v1042 = vld [vmem:[#allocation2] sm:$0xff]
  %v1043 = vld [vmem:[#allocation2 + $0x8] sm:$0xff]
  %v1044 = vld [vmem:[#allocation2 + $0x10] sm:$0xff]
  %v1045 = vlaneseq
  %v1046 = vshrl.u32 %v1045, 7
  %v1047 = vsub.s32 0, %v1046
  %v1048 = vrot.slane %v51, %v1047
  %v1049 = vlaneseq
  %v1050 = vshrl.u32 %v1049, 7
  %v1051 = vsub.s32 4, %v1050
  %v1052 = vrot.slane %v51, %v1051
  %1053 = vrot.lane.b32.xlu0 %v1048, 111
  %v1054 = vpop.permute.xlu0 %1053
  %1055 = vrot.lane.b32.xlu0 %v1052, 111
  %v1056 = vpop.permute.xlu0 %1055
  %v1057 = vsel %vm55, %v1054, %v1056
  %vm1058 = vcmp.ne.s16.totalorder %v1054, 0
  %vm1059 = vcmp.ne.s16.totalorder %v1057, 0
  %vm1060 = vcmp.ne.s16.totalorder %v1056, 0
  %v1061 = vsel %vm1058, %v1042, 0
  %v1062 = vsel %vm1059, %v1043, 0
  %v1063 = vsel %vm1060, %v1044, 0
  %v1064 = vlaneseq
  %v1065 = vshrl.u32 %v1064, 7
  %v1066 = vsub.s32 0, %v1065
  %v1067 = vrot.slane %v68, %v1066
  %v1068 = vlaneseq
  %v1069 = vshrl.u32 %v1068, 7
  %v1070 = vsub.s32 4, %v1069
  %v1071 = vrot.slane %v68, %v1070
  %1072 = vrot.lane.b32.xlu0 %v1067, 112
  %v1073 = vpop.permute.xlu0 %1072
  %1074 = vrot.lane.b32.xlu0 %v1071, 112
  %v1075 = vpop.permute.xlu0 %1074
  %v1076 = vsel %vm72, %v1073, %v1075
  %vm1077 = vcmp.ne.s16.totalorder %v1073, 0
  %vm1078 = vcmp.ne.s16.totalorder %v1076, 0
  %vm1079 = vcmp.ne.s16.totalorder %v1075, 0
  %v1080 = vsel %vm1077, %v1042, 0
  %v1081 = vsel %vm1078, %v1043, 0
  %v1082 = vsel %vm1079, %v1044, 0
  %v1083 = vlaneseq
  %v1084 = vshrl.u32 %v1083, 7
  %v1085 = vsub.s32 0, %v1084
  %v1086 = vrot.slane %v89, %v1085
  %v1087 = vlaneseq
  %v1088 = vshrl.u32 %v1087, 7
  %v1089 = vsub.s32 4, %v1088
  %v1090 = vrot.slane %v89, %v1089
  %1091 = vrot.lane.b32.xlu0 %v1086, 113
  %v1092 = vpop.permute.xlu0 %1091
  %1093 = vrot.lane.b32.xlu0 %v1090, 113
  %v1094 = vpop.permute.xlu0 %1093
  %v1095 = vsel %vm93, %v1092, %v1094
  %vm1096 = vcmp.ne.s16.totalorder %v1092, 0
  %vm1097 = vcmp.ne.s16.totalorder %v1095, 0
  %vm1098 = vcmp.ne.s16.totalorder %v1094, 0
  %v1099 = vsel %vm1096, %v1042, 0
  %v1100 = vsel %vm1097, %v1043, 0
  %v1101 = vsel %vm1098, %v1044, 0
  %v1102 = vlaneseq
  %v1103 = vshrl.u32 %v1102, 7
  %v1104 = vsub.s32 0, %v1103
  %v1105 = vrot.slane %v106, %v1104
  %v1106 = vlaneseq
  %v1107 = vshrl.u32 %v1106, 7
  %v1108 = vsub.s32 4, %v1107
  %v1109 = vrot.slane %v106, %v1108
  %1110 = vrot.lane.b32.xlu0 %v1105, 127
  %v1111 = vpop.permute.xlu0 %1110
  %1112 = vrot.lane.b32.xlu0 %v1109, 127
  %v1113 = vpop.permute.xlu0 %1112
  %v1114 = vsel %vm110, %v1111, %v1113
  %vm1115 = vcmp.ne.s16.totalorder %v1111, 0
  %vm1116 = vcmp.ne.s16.totalorder %v1114, 0
  %vm1117 = vcmp.ne.s16.totalorder %v1113, 0
  %v1118 = vsel %vm1115, %v1042, 0
  %v1119 = vsel %vm1116, %v1043, 0
  %v1120 = vsel %vm1117, %v1044, 0
  %v1121 = vld [vmem:[#allocation2 + $0x18] sm:$0xff]
  %v1122 = vlaneseq
  %v1123 = vshrl.u32 %v1122, 7
  %v1124 = vsub.s32 0, %v1123
  %v1125 = vrot.slane %v127, %v1124
  %v1126 = vlaneseq
  %v1127 = vshrl.u32 %v1126, 7
  %v1128 = vsub.s32 4, %v1127
  %v1129 = vrot.slane %v127, %v1128
  %1130 = vrot.lane.b32.xlu0 %v1125, 1
  %v1131 = vpop.permute.xlu0 %1130
  %1132 = vrot.lane.b32.xlu0 %v1129, 1
  %v1133 = vpop.permute.xlu0 %1132
  %v1134 = vsel %vm131, %v1131, %v1133
  %vm1135 = vcmp.ne.s16.totalorder %v1131, 0
  %vm1136 = vcmp.ne.s16.totalorder %v1134, 0
  %vm1137 = vcmp.ne.s16.totalorder %v1133, 0
  %v1138 = vsel %vm1135, %v1043, 0
  %v1139 = vsel %vm1136, %v1044, 0
  %v1140 = vsel %vm1137, %v1121, 0
  %v1141 = vlaneseq
  %v1142 = vshrl.u32 %v1141, 7
  %v1143 = vsub.s32 0, %v1142
  %v1144 = vrot.slane %v148, %v1143
  %v1145 = vlaneseq
  %v1146 = vshrl.u32 %v1145, 7
  %v1147 = vsub.s32 4, %v1146
  %v1148 = vrot.slane %v148, %v1147
  %1149 = vrot.lane.b32.xlu0 %v1144, 15
  %v1150 = vpop.permute.xlu0 %1149
  %1151 = vrot.lane.b32.xlu0 %v1148, 15
  %v1152 = vpop.permute.xlu0 %1151
  %v1153 = vsel %vm152, %v1150, %v1152
  %vm1154 = vcmp.ne.s16.totalorder %v1150, 0
  %vm1155 = vcmp.ne.s16.totalorder %v1153, 0
  %vm1156 = vcmp.ne.s16.totalorder %v1152, 0
  %v1157 = vsel %vm1154, %v1043, 0
  %v1158 = vsel %vm1155, %v1044, 0
  %v1159 = vsel %vm1156, %v1121, 0
  %v1160 = vlaneseq
  %v1161 = vshrl.u32 %v1160, 7
  %v1162 = vsub.s32 0, %v1161
  %v1163 = vrot.slane %v165, %v1162
  %v1164 = vlaneseq
  %v1165 = vshrl.u32 %v1164, 7
  %v1166 = vsub.s32 4, %v1165
  %v1167 = vrot.slane %v165, %v1166
  %1168 = vrot.lane.b32.xlu0 %v1163, 16
  %v1169 = vpop.permute.xlu0 %1168
  %1170 = vrot.lane.b32.xlu0 %v1167, 16
  %v1171 = vpop.permute.xlu0 %1170
  %v1172 = vsel %vm169, %v1169, %v1171
  %vm1173 = vcmp.ne.s16.totalorder %v1169, 0
  %vm1174 = vcmp.ne.s16.totalorder %v1172, 0
  %vm1175 = vcmp.ne.s16.totalorder %v1171, 0
  %v1176 = vsel %vm1173, %v1043, 0
  %v1177 = vsel %vm1174, %v1044, 0
  %v1178 = vsel %vm1175, %v1121, 0
  %v1179 = vlaneseq
  %v1180 = vshrl.u32 %v1179, 7
  %v1181 = vsub.s32 0, %v1180
  %v1182 = vrot.slane %v184, %v1181
  %v1183 = vlaneseq
  %v1184 = vshrl.u32 %v1183, 7
  %v1185 = vsub.s32 4, %v1184
  %v1186 = vrot.slane %v184, %v1185
  %1187 = vrot.lane.b32.xlu0 %v1182, 17
  %v1188 = vpop.permute.xlu0 %1187
  %1189 = vrot.lane.b32.xlu0 %v1186, 17
  %v1190 = vpop.permute.xlu0 %1189
  %v1191 = vsel %vm188, %v1188, %v1190
  %vm1192 = vcmp.ne.s16.totalorder %v1188, 0
  %vm1193 = vcmp.ne.s16.totalorder %v1191, 0
  %vm1194 = vcmp.ne.s16.totalorder %v1190, 0
  %v1195 = vsel %vm1192, %v1043, 0
  %v1196 = vsel %vm1193, %v1044, 0
  %v1197 = vsel %vm1194, %v1121, 0
  %1201 = vrot.lane.b32.xlu0 %v1080, 127
  %v1202 = vpop.permute.xlu0 %1201
  %1203 = vrot.lane.b32.xlu0 %v1081, 127
  %v1204 = vpop.permute.xlu0 %1203
  %1205 = vrot.lane.b32.xlu0 %v1082, 127
  %v1206 = vpop.permute.xlu0 %1205
  %v1207 = vsel %vm110, %v1202, %v1204
  %v1208 = vsel %vm110, %v1204, %v1206
  %1212 = vrot.lane.b32.xlu0 %v1099, 126
  %v1213 = vpop.permute.xlu0 %1212
  %1214 = vrot.lane.b32.xlu0 %v1100, 126
  %v1215 = vpop.permute.xlu0 %1214
  %1216 = vrot.lane.b32.xlu0 %v1101, 126
  %v1217 = vpop.permute.xlu0 %1216
  %v1218 = vsel %vm249, %v1213, %v1215
  %v1219 = vsel %vm249, %v1215, %v1217
  %1223 = vrot.lane.b32.xlu0 %v1118, 112
  %v1224 = vpop.permute.xlu0 %1223
  %1225 = vrot.lane.b32.xlu0 %v1119, 112
  %v1226 = vpop.permute.xlu0 %1225
  %1227 = vrot.lane.b32.xlu0 %v1120, 112
  %v1228 = vpop.permute.xlu0 %1227
  %v1229 = vsel %vm72, %v1224, %v1226
  %v1230 = vsel %vm72, %v1226, %v1228
  %1233 = vrot.lane.b32.xlu0 %v1043, 111
  %v1234 = vpop.permute.xlu0 %1233
  %1235 = vrot.lane.b32.xlu0 %v1044, 111
  %v1236 = vpop.permute.xlu0 %1235
  %v1237 = vsel %vm55, %v1234, %v1236
  %1241 = vrot.lane.b32.xlu0 %v1138, 110
  %v1242 = vpop.permute.xlu0 %1241
  %1243 = vrot.lane.b32.xlu0 %v1139, 110
  %v1244 = vpop.permute.xlu0 %1243
  %1245 = vrot.lane.b32.xlu0 %v1140, 110
  %v1246 = vpop.permute.xlu0 %1245
  %v1247 = vsel %vm305, %v1242, %v1244
  %v1248 = vsel %vm305, %v1244, %v1246
  %1252 = vrot.lane.b32.xlu0 %v1157, 96
  %v1253 = vpop.permute.xlu0 %1252
  %1254 = vrot.lane.b32.xlu0 %v1158, 96
  %v1255 = vpop.permute.xlu0 %1254
  %1256 = vrot.lane.b32.xlu0 %v1159, 96
  %v1257 = vpop.permute.xlu0 %1256
  %v1258 = vsel %vm327, %v1253, %v1255
  %v1259 = vsel %vm327, %v1255, %v1257
  %1263 = vrot.lane.b32.xlu0 %v1176, 95
  %v1264 = vpop.permute.xlu0 %1263
  %1265 = vrot.lane.b32.xlu0 %v1177, 95
  %v1266 = vpop.permute.xlu0 %1265
  %1267 = vrot.lane.b32.xlu0 %v1178, 95
  %v1268 = vpop.permute.xlu0 %1267
  %v1269 = vsel %vm349, %v1264, %v1266
  %v1270 = vsel %vm349, %v1266, %v1268
  %1274 = vrot.lane.b32.xlu0 %v1195, 94
  %v1275 = vpop.permute.xlu0 %1274
  %1276 = vrot.lane.b32.xlu0 %v1196, 94
  %v1277 = vpop.permute.xlu0 %1276
  %1278 = vrot.lane.b32.xlu0 %v1197, 94
  %v1279 = vpop.permute.xlu0 %1278
  %v1280 = vsel %vm371, %v1275, %v1277
  %v1281 = vsel %vm371, %v1277, %v1279
  %v1282 = vld [vmem:[%s3] sm:$0xff]
  %v1283 = vld [vmem:[%s3 + $0x8] sm:$0xff]
  %v1284 = vld [vmem:[%s4] sm:$0xff]
  %v1285 = vld [vmem:[%s4 + $0x8] sm:$0xff]
  %1287 = vset.pattern.permute.xlu0 0
  %1288 = vperm.xlu0 %1287, %v1284
  %v1289 = vpop.permute.xlu0 %1288
  %1292 = vset.pattern.permute.xlu0 0
  %1293 = vperm.xlu0 %1292, %v1285
  %v1294 = vpop.permute.xlu0 %1293
  %v1298 = vunpack.c.l.b16 %v1282
  %v1299 = vunpack.c.h.b16 %v1282
  %v1300 = vunpack.c.l.b16 %v1283
  %v1301 = vunpack.c.h.b16 %v1283
  %v1302 = vpack.c.b16 %v1300, %v1298
  %v1303 = vpack.c.b16 %v1301, %v1299
  %1308 = vrot.lane.b32.xlu0 %v1061, 17
  %v1309 = vpop.permute.xlu0 %1308
  %1310 = vrot.lane.b32.xlu0 %v1062, 17
  %v1311 = vpop.permute.xlu0 %1310
  %1312 = vrot.lane.b32.xlu0 %v1063, 17
  %v1313 = vpop.permute.xlu0 %1312
  %1314 = vrot.lane.b32.xlu0 %v1207, 17
  %v1315 = vpop.permute.xlu0 %1314
  %1316 = vrot.lane.b32.xlu0 %v1208, 17
  %v1317 = vpop.permute.xlu0 %1316
  %1318 = vrot.lane.b32.xlu0 %v1206, 17
  %v1319 = vpop.permute.xlu0 %1318
  %1320 = vrot.lane.b32.xlu0 %v1218, 17
  %v1321 = vpop.permute.xlu0 %1320
  %1322 = vrot.lane.b32.xlu0 %v1219, 17
  %v1323 = vpop.permute.xlu0 %1322
  %1324 = vrot.lane.b32.xlu0 %v1217, 17
  %v1325 = vpop.permute.xlu0 %1324
  %1326 = vrot.lane.b32.xlu0 %v1229, 17
  %v1327 = vpop.permute.xlu0 %1326
  %1328 = vrot.lane.b32.xlu0 %v1230, 17
  %v1329 = vpop.permute.xlu0 %1328
  %1330 = vrot.lane.b32.xlu0 %v1228, 17
  %v1331 = vpop.permute.xlu0 %1330
  %1332 = vrot.lane.b32.xlu0 %v1234, 17
  %v1333 = vpop.permute.xlu0 %1332
  %1334 = vrot.lane.b32.xlu0 %v1237, 17
  %v1335 = vpop.permute.xlu0 %1334
  %1336 = vrot.lane.b32.xlu0 %v1236, 17
  %v1337 = vpop.permute.xlu0 %1336
  %1338 = vrot.lane.b32.xlu0 %v1242, 17
  %v1339 = vpop.permute.xlu0 %1338
  %1340 = vrot.lane.b32.xlu0 %v1247, 17
  %v1341 = vpop.permute.xlu0 %1340
  %1342 = vrot.lane.b32.xlu0 %v1248, 17
  %v1343 = vpop.permute.xlu0 %1342
  %1344 = vrot.lane.b32.xlu0 %v1253, 17
  %v1345 = vpop.permute.xlu0 %1344
  %1346 = vrot.lane.b32.xlu0 %v1258, 17
  %v1347 = vpop.permute.xlu0 %1346
  %1348 = vrot.lane.b32.xlu0 %v1259, 17
  %v1349 = vpop.permute.xlu0 %1348
  %1350 = vrot.lane.b32.xlu0 %v1264, 17
  %v1351 = vpop.permute.xlu0 %1350
  %1352 = vrot.lane.b32.xlu0 %v1269, 17
  %v1353 = vpop.permute.xlu0 %1352
  %1354 = vrot.lane.b32.xlu0 %v1270, 17
  %v1355 = vpop.permute.xlu0 %1354
  %1356 = vrot.lane.b32.xlu0 %v1275, 17
  %v1357 = vpop.permute.xlu0 %1356
  %1358 = vrot.lane.b32.xlu0 %v1280, 17
  %v1359 = vpop.permute.xlu0 %1358
  %1360 = vrot.lane.b32.xlu0 %v1281, 17
  %v1361 = vpop.permute.xlu0 %1360
  %v1362 = vsel %vm188, %v1309, %v1311
  %v1363 = vsel %vm188, %v1311, %v1313
  %v1364 = vsel %vm188, %v1315, %v1317
  %v1365 = vsel %vm188, %v1317, %v1319
  %v1366 = vsel %vm188, %v1321, %v1323
  %v1367 = vsel %vm188, %v1323, %v1325
  %v1368 = vsel %vm188, %v1327, %v1329
  %v1369 = vsel %vm188, %v1329, %v1331
  %v1370 = vsel %vm188, %v1333, %v1335
  %v1371 = vsel %vm188, %v1335, %v1337
  %v1372 = vsel %vm188, %v1339, %v1341
  %v1373 = vsel %vm188, %v1341, %v1343
  %v1374 = vsel %vm188, %v1345, %v1347
  %v1375 = vsel %vm188, %v1347, %v1349
  %v1376 = vsel %vm188, %v1351, %v1353
  %v1377 = vsel %vm188, %v1353, %v1355
  %v1378 = vsel %vm188, %v1357, %v1359
  %v1379 = vsel %vm188, %v1359, %v1361
  %v1399 = vsel %vm487, %v1303, 0
  %1401 = vmatprep.subr.bf16.mxu0 %v1363
  %1402 = vmatpush1.bf16.msra.mxu0 %v1362
  %1403 = vmatprep.subr.bf16.mxu0 %v1365
  %1404 = vmatpush1.bf16.msra.mxu0 %v1364
  %1405 = vmatprep.subr.bf16.mxu0 %v1367
  %1406 = vmatpush1.bf16.msra.mxu0 %v1366
  %1407 = vmatprep.subr.bf16.mxu0 %v1369
  %1408 = vmatpush1.bf16.msra.mxu0 %v1368
  %1409 = vmatprep.subr.bf16.mxu0 %v1371
  %1410 = vmatpush1.bf16.msra.mxu0 %v1370
  %1411 = vmatprep.subr.bf16.mxu0 %v1373
  %1412 = vmatpush1.bf16.msra.mxu0 %v1372
  %1413 = vmatprep.subr.bf16.mxu0 %v1375
  %1414 = vmatpush1.bf16.msra.mxu0 %v1374
  %1415 = vmatprep.subr.bf16.mxu0 %v1377
  %1416 = vmatpush1.bf16.msra.mxu0 %v1376
  %1417 = vmatprep.subr.bf16.mxu0 %v1379
  %1418 = vmatpush1.bf16.msra.mxu0 %v1378
  %1419 = vmatprep.subr.bf16.mxu0 0
  %1420 = vmatpush1.bf16.msra.mxu0 0
  %1421 = vmatprep.subr.bf16.mxu0 0
  %1422 = vmatpush1.bf16.msra.mxu0 0
  %1423 = vmatprep.subr.bf16.mxu0 0
  %1424 = vmatpush1.bf16.msra.mxu0 0
  %1425 = vmatprep.subr.bf16.mxu0 0
  %1426 = vmatpush1.bf16.msra.mxu0 0
  %1427 = vmatprep.subr.bf16.mxu0 0
  %1428 = vmatpush1.bf16.msra.mxu0 0
  %1429 = vmatprep.subr.bf16.mxu0 0
  %1430 = vmatpush1.bf16.msra.mxu0 0
  %1431 = vmatprep.subr.bf16.mxu0 0
  %1432 = vmatpush1.bf16.msra.mxu0 0
  %1433 = vmatprep.mubr.bf16.mxu0 %v1399
  %1434 = vmatmul.mubr.bf16.gmra.mrb[0].mxu0 %v1302
  %v1435 = vpop.f32.mrb[0].mxu0
  %v1436 = vadd.f32 %v1289, %v1435
  %v1437 = vpop.f32.mrb[0].mxu0
  %v1438 = vadd.f32 %v1289, %v1437
  %v1439 = vpop.f32.mrb[0].mxu0
  %v1440 = vadd.f32 %v1294, %v1439
  %v1441 = vpop.f32.mrb[0].mxu0
  %v1442 = vadd.f32 %v1294, %v1441
  %1443 = vdwg.mxu0
  %v1444 = vld [vmem:[%s0 + $0x4] sm:$0xff]
  %v1445 = vld [vmem:[%s0 + $0x1c] sm:$0xff]
  %v1446 = vunpack.c.l.bf16 %v1444
  %v1447 = vunpack.c.h.bf16 %v1444
  %v1448 = vunpack.c.l.bf16 %v1445
  %v1449 = vunpack.c.h.bf16 %v1445
  %v1450 = vadd.f32 %v1436, %v1446
  %v1451 = vadd.f32 %v1438, %v1447
  %v1452 = vadd.f32 %v1440, %v1448
  %v1453 = vadd.f32 %v1442, %v1449
  %v1454 = vmax.f32 %v1450, 0.0
  %v1455 = vmax.f32 %v1451, 0.0
  %v1456 = vmax.f32 %v1452, 0.0
  %v1457 = vmax.f32 %v1453, 0.0
  %v1458 = vpack.c.bf16 %v1456, %v1454
  %v1459 = vpack.c.bf16 %v1457, %v1455
  %v1462 = vunpack.c.l.b16 %v1458
  %v1463 = vunpack.c.l.b16 %v1459
  %v1464 = vunpack.c.h.b16 %v1458
  %v1465 = vunpack.c.h.b16 %v1459
  %v1466 = vpack.c.b16 %v1463, %v1462
  %v1467 = vpack.c.b16 %v1465, %v1464
  %1470 = vst [vmem:[%s5] sm:$0xff] %v1466
  %1471 = vst [vmem:[%s5 + $0x10] sm:$0xff] %v1467
  %v1472 = vld [vmem:[#allocation2 + $0x10] sm:$0xff]
  %v1473 = vld [vmem:[#allocation2 + $0x18] sm:$0xff]
  %v1474 = vld [vmem:[#allocation2 + $0x20] sm:$0xff]
  %v1475 = vlaneseq
  %v1476 = vshrl.u32 %v1475, 7
  %v1477 = vsub.s32 0, %v1476
  %v1478 = vrot.slane %v563, %v1477
  %v1479 = vlaneseq
  %v1480 = vshrl.u32 %v1479, 7
  %v1481 = vsub.s32 4, %v1480
  %v1482 = vrot.slane %v563, %v1481
  %1483 = vrot.lane.b32.xlu0 %v1478, 111
  %v1484 = vpop.permute.xlu0 %1483
  %1485 = vrot.lane.b32.xlu0 %v1482, 111
  %v1486 = vpop.permute.xlu0 %1485
  %v1487 = vsel %vm55, %v1484, %v1486
  %vm1488 = vcmp.ne.s16.totalorder %v1484, 0
  %vm1489 = vcmp.ne.s16.totalorder %v1487, 0
  %vm1490 = vcmp.ne.s16.totalorder %v1486, 0
  %v1491 = vsel %vm1488, %v1472, 0
  %v1492 = vsel %vm1489, %v1473, 0
  %v1493 = vsel %vm1490, %v1474, 0
  %v1494 = vlaneseq
  %v1495 = vshrl.u32 %v1494, 7
  %v1496 = vsub.s32 0, %v1495
  %v1497 = vrot.slane %v579, %v1496
  %v1498 = vlaneseq
  %v1499 = vshrl.u32 %v1498, 7
  %v1500 = vsub.s32 4, %v1499
  %v1501 = vrot.slane %v579, %v1500
  %1502 = vrot.lane.b32.xlu0 %v1497, 112
  %v1503 = vpop.permute.xlu0 %1502
  %1504 = vrot.lane.b32.xlu0 %v1501, 112
  %v1505 = vpop.permute.xlu0 %1504
  %v1506 = vsel %vm72, %v1503, %v1505
  %vm1507 = vcmp.ne.s16.totalorder %v1503, 0
  %vm1508 = vcmp.ne.s16.totalorder %v1506, 0
  %vm1509 = vcmp.ne.s16.totalorder %v1505, 0
  %v1510 = vsel %vm1507, %v1472, 0
  %v1511 = vsel %vm1508, %v1473, 0
  %v1512 = vsel %vm1509, %v1474, 0
  %v1513 = vlaneseq
  %v1514 = vshrl.u32 %v1513, 7
  %v1515 = vsub.s32 0, %v1514
  %v1516 = vrot.slane %v599, %v1515
  %v1517 = vlaneseq
  %v1518 = vshrl.u32 %v1517, 7
  %v1519 = vsub.s32 4, %v1518
  %v1520 = vrot.slane %v599, %v1519
  %1521 = vrot.lane.b32.xlu0 %v1516, 113
  %v1522 = vpop.permute.xlu0 %1521
  %1523 = vrot.lane.b32.xlu0 %v1520, 113
  %v1524 = vpop.permute.xlu0 %1523
  %v1525 = vsel %vm93, %v1522, %v1524
  %vm1526 = vcmp.ne.s16.totalorder %v1522, 0
  %vm1527 = vcmp.ne.s16.totalorder %v1525, 0
  %vm1528 = vcmp.ne.s16.totalorder %v1524, 0
  %v1529 = vsel %vm1526, %v1472, 0
  %v1530 = vsel %vm1527, %v1473, 0
  %v1531 = vsel %vm1528, %v1474, 0
  %v1532 = vlaneseq
  %v1533 = vshrl.u32 %v1532, 7
  %v1534 = vsub.s32 0, %v1533
  %v1535 = vrot.slane %v615, %v1534
  %v1536 = vlaneseq
  %v1537 = vshrl.u32 %v1536, 7
  %v1538 = vsub.s32 4, %v1537
  %v1539 = vrot.slane %v615, %v1538
  %1540 = vrot.lane.b32.xlu0 %v1535, 127
  %v1541 = vpop.permute.xlu0 %1540
  %1542 = vrot.lane.b32.xlu0 %v1539, 127
  %v1543 = vpop.permute.xlu0 %1542
  %v1544 = vsel %vm110, %v1541, %v1543
  %vm1545 = vcmp.ne.s16.totalorder %v1541, 0
  %vm1546 = vcmp.ne.s16.totalorder %v1544, 0
  %vm1547 = vcmp.ne.s16.totalorder %v1543, 0
  %v1548 = vsel %vm1545, %v1472, 0
  %v1549 = vsel %vm1546, %v1473, 0
  %v1550 = vsel %vm1547, %v1474, 0
  %v1551 = vld [vmem:[#allocation2 + $0x18] sm:$0xff]
  %v1552 = vld [vmem:[#allocation2 + $0x20] sm:$0xff]
  %v1553 = vld [vmem:[#allocation2 + $0x28] sm:$0xff]
  %v1554 = vlaneseq
  %v1555 = vshrl.u32 %v1554, 7
  %v1556 = vsub.s32 0, %v1555
  %v1557 = vrot.slane %v637, %v1556
  %v1558 = vlaneseq
  %v1559 = vshrl.u32 %v1558, 7
  %v1560 = vsub.s32 4, %v1559
  %v1561 = vrot.slane %v637, %v1560
  %1562 = vrot.lane.b32.xlu0 %v1557, 1
  %v1563 = vpop.permute.xlu0 %1562
  %1564 = vrot.lane.b32.xlu0 %v1561, 1
  %v1565 = vpop.permute.xlu0 %1564
  %v1566 = vsel %vm131, %v1563, %v1565
  %vm1567 = vcmp.ne.s16.totalorder %v1563, 0
  %vm1568 = vcmp.ne.s16.totalorder %v1566, 0
  %vm1569 = vcmp.ne.s16.totalorder %v1565, 0
  %v1570 = vsel %vm1567, %v1551, 0
  %v1571 = vsel %vm1568, %v1552, 0
  %v1572 = vsel %vm1569, %v1553, 0
  %v1573 = vlaneseq
  %v1574 = vshrl.u32 %v1573, 7
  %v1575 = vsub.s32 0, %v1574
  %v1576 = vrot.slane %v657, %v1575
  %v1577 = vlaneseq
  %v1578 = vshrl.u32 %v1577, 7
  %v1579 = vsub.s32 4, %v1578
  %v1580 = vrot.slane %v657, %v1579
  %1581 = vrot.lane.b32.xlu0 %v1576, 15
  %v1582 = vpop.permute.xlu0 %1581
  %1583 = vrot.lane.b32.xlu0 %v1580, 15
  %v1584 = vpop.permute.xlu0 %1583
  %v1585 = vsel %vm152, %v1582, %v1584
  %vm1586 = vcmp.ne.s16.totalorder %v1582, 0
  %vm1587 = vcmp.ne.s16.totalorder %v1585, 0
  %vm1588 = vcmp.ne.s16.totalorder %v1584, 0
  %v1589 = vsel %vm1586, %v1551, 0
  %v1590 = vsel %vm1587, %v1552, 0
  %v1591 = vsel %vm1588, %v1553, 0
  %v1592 = vlaneseq
  %v1593 = vshrl.u32 %v1592, 7
  %v1594 = vsub.s32 0, %v1593
  %v1595 = vrot.slane %v673, %v1594
  %v1596 = vlaneseq
  %v1597 = vshrl.u32 %v1596, 7
  %v1598 = vsub.s32 4, %v1597
  %v1599 = vrot.slane %v673, %v1598
  %1600 = vrot.lane.b32.xlu0 %v1595, 16
  %v1601 = vpop.permute.xlu0 %1600
  %1602 = vrot.lane.b32.xlu0 %v1599, 16
  %v1603 = vpop.permute.xlu0 %1602
  %v1604 = vsel %vm169, %v1601, %v1603
  %vm1605 = vcmp.ne.s16.totalorder %v1601, 0
  %vm1606 = vcmp.ne.s16.totalorder %v1604, 0
  %vm1607 = vcmp.ne.s16.totalorder %v1603, 0
  %v1608 = vsel %vm1605, %v1551, 0
  %v1609 = vsel %vm1606, %v1552, 0
  %v1610 = vsel %vm1607, %v1553, 0
  %v1611 = vlaneseq
  %v1612 = vshrl.u32 %v1611, 7
  %v1613 = vsub.s32 0, %v1612
  %v1614 = vrot.slane %v691, %v1613
  %v1615 = vlaneseq
  %v1616 = vshrl.u32 %v1615, 7
  %v1617 = vsub.s32 4, %v1616
  %v1618 = vrot.slane %v691, %v1617
  %1619 = vrot.lane.b32.xlu0 %v1614, 17
  %v1620 = vpop.permute.xlu0 %1619
  %1621 = vrot.lane.b32.xlu0 %v1618, 17
  %v1622 = vpop.permute.xlu0 %1621
  %v1623 = vsel %vm188, %v1620, %v1622
  %vm1624 = vcmp.ne.s16.totalorder %v1620, 0
  %vm1625 = vcmp.ne.s16.totalorder %v1623, 0
  %vm1626 = vcmp.ne.s16.totalorder %v1622, 0
  %v1627 = vsel %vm1624, %v1551, 0
  %v1628 = vsel %vm1625, %v1552, 0
  %v1629 = vsel %vm1626, %v1553, 0
  %1633 = vrot.lane.b32.xlu0 %v1510, 127
  %v1634 = vpop.permute.xlu0 %1633
  %1635 = vrot.lane.b32.xlu0 %v1511, 127
  %v1636 = vpop.permute.xlu0 %1635
  %1637 = vrot.lane.b32.xlu0 %v1512, 127
  %v1638 = vpop.permute.xlu0 %1637
  %v1639 = vsel %vm110, %v1634, %v1636
  %v1640 = vsel %vm110, %v1636, %v1638
  %1644 = vrot.lane.b32.xlu0 %v1529, 126
  %v1645 = vpop.permute.xlu0 %1644
  %1646 = vrot.lane.b32.xlu0 %v1530, 126
  %v1647 = vpop.permute.xlu0 %1646
  %1648 = vrot.lane.b32.xlu0 %v1531, 126
  %v1649 = vpop.permute.xlu0 %1648
  %v1650 = vsel %vm249, %v1645, %v1647
  %v1651 = vsel %vm249, %v1647, %v1649
  %1655 = vrot.lane.b32.xlu0 %v1548, 112
  %v1656 = vpop.permute.xlu0 %1655
  %1657 = vrot.lane.b32.xlu0 %v1549, 112
  %v1658 = vpop.permute.xlu0 %1657
  %1659 = vrot.lane.b32.xlu0 %v1550, 112
  %v1660 = vpop.permute.xlu0 %1659
  %v1661 = vsel %vm72, %v1656, %v1658
  %v1662 = vsel %vm72, %v1658, %v1660
  %1665 = vrot.lane.b32.xlu0 %v1473, 111
  %v1666 = vpop.permute.xlu0 %1665
  %1667 = vrot.lane.b32.xlu0 %v1474, 111
  %v1668 = vpop.permute.xlu0 %1667
  %v1669 = vsel %vm55, %v1666, %v1668
  %1673 = vrot.lane.b32.xlu0 %v1570, 110
  %v1674 = vpop.permute.xlu0 %1673
  %1675 = vrot.lane.b32.xlu0 %v1571, 110
  %v1676 = vpop.permute.xlu0 %1675
  %1677 = vrot.lane.b32.xlu0 %v1572, 110
  %v1678 = vpop.permute.xlu0 %1677
  %v1679 = vsel %vm305, %v1674, %v1676
  %v1680 = vsel %vm305, %v1676, %v1678
  %1684 = vrot.lane.b32.xlu0 %v1589, 96
  %v1685 = vpop.permute.xlu0 %1684
  %1686 = vrot.lane.b32.xlu0 %v1590, 96
  %v1687 = vpop.permute.xlu0 %1686
  %1688 = vrot.lane.b32.xlu0 %v1591, 96
  %v1689 = vpop.permute.xlu0 %1688
  %v1690 = vsel %vm327, %v1685, %v1687
  %v1691 = vsel %vm327, %v1687, %v1689
  %1695 = vrot.lane.b32.xlu0 %v1608, 95
  %v1696 = vpop.permute.xlu0 %1695
  %1697 = vrot.lane.b32.xlu0 %v1609, 95
  %v1698 = vpop.permute.xlu0 %1697
  %1699 = vrot.lane.b32.xlu0 %v1610, 95
  %v1700 = vpop.permute.xlu0 %1699
  %v1701 = vsel %vm349, %v1696, %v1698
  %v1702 = vsel %vm349, %v1698, %v1700
  %1706 = vrot.lane.b32.xlu0 %v1627, 94
  %v1707 = vpop.permute.xlu0 %1706
  %1708 = vrot.lane.b32.xlu0 %v1628, 94
  %v1709 = vpop.permute.xlu0 %1708
  %1710 = vrot.lane.b32.xlu0 %v1629, 94
  %v1711 = vpop.permute.xlu0 %1710
  %v1712 = vsel %vm371, %v1707, %v1709
  %v1713 = vsel %vm371, %v1709, %v1711
  %v1714 = vld [vmem:[%s3] sm:$0xff]
  %v1715 = vld [vmem:[%s3 + $0x8] sm:$0xff]
  %v1716 = vld [vmem:[%s4] sm:$0xff]
  %v1717 = vld [vmem:[%s4 + $0x8] sm:$0xff]
  %1719 = vset.pattern.permute.xlu0 0
  %1720 = vperm.xlu0 %1719, %v1716
  %v1721 = vpop.permute.xlu0 %1720
  %1724 = vset.pattern.permute.xlu0 0
  %1725 = vperm.xlu0 %1724, %v1717
  %v1726 = vpop.permute.xlu0 %1725
  %v1730 = vunpack.c.l.b16 %v1714
  %v1731 = vunpack.c.h.b16 %v1714
  %v1732 = vunpack.c.l.b16 %v1715
  %v1733 = vunpack.c.h.b16 %v1715
  %v1734 = vpack.c.b16 %v1732, %v1730
  %v1735 = vpack.c.b16 %v1733, %v1731
  %1740 = vrot.lane.b32.xlu0 %v1491, 17
  %v1741 = vpop.permute.xlu0 %1740
  %1742 = vrot.lane.b32.xlu0 %v1492, 17
  %v1743 = vpop.permute.xlu0 %1742
  %1744 = vrot.lane.b32.xlu0 %v1493, 17
  %v1745 = vpop.permute.xlu0 %1744
  %1746 = vrot.lane.b32.xlu0 %v1639, 17
  %v1747 = vpop.permute.xlu0 %1746
  %1748 = vrot.lane.b32.xlu0 %v1640, 17
  %v1749 = vpop.permute.xlu0 %1748
  %1750 = vrot.lane.b32.xlu0 %v1638, 17
  %v1751 = vpop.permute.xlu0 %1750
  %1752 = vrot.lane.b32.xlu0 %v1650, 17
  %v1753 = vpop.permute.xlu0 %1752
  %1754 = vrot.lane.b32.xlu0 %v1651, 17
  %v1755 = vpop.permute.xlu0 %1754
  %1756 = vrot.lane.b32.xlu0 %v1649, 17
  %v1757 = vpop.permute.xlu0 %1756
  %1758 = vrot.lane.b32.xlu0 %v1661, 17
  %v1759 = vpop.permute.xlu0 %1758
  %1760 = vrot.lane.b32.xlu0 %v1662, 17
  %v1761 = vpop.permute.xlu0 %1760
  %1762 = vrot.lane.b32.xlu0 %v1660, 17
  %v1763 = vpop.permute.xlu0 %1762
  %1764 = vrot.lane.b32.xlu0 %v1666, 17
  %v1765 = vpop.permute.xlu0 %1764
  %1766 = vrot.lane.b32.xlu0 %v1669, 17
  %v1767 = vpop.permute.xlu0 %1766
  %1768 = vrot.lane.b32.xlu0 %v1668, 17
  %v1769 = vpop.permute.xlu0 %1768
  %1770 = vrot.lane.b32.xlu0 %v1674, 17
  %v1771 = vpop.permute.xlu0 %1770
  %1772 = vrot.lane.b32.xlu0 %v1679, 17
  %v1773 = vpop.permute.xlu0 %1772
  %1774 = vrot.lane.b32.xlu0 %v1680, 17
  %v1775 = vpop.permute.xlu0 %1774
  %1776 = vrot.lane.b32.xlu0 %v1685, 17
  %v1777 = vpop.permute.xlu0 %1776
  %1778 = vrot.lane.b32.xlu0 %v1690, 17
  %v1779 = vpop.permute.xlu0 %1778
  %1780 = vrot.lane.b32.xlu0 %v1691, 17
  %v1781 = vpop.permute.xlu0 %1780
  %1782 = vrot.lane.b32.xlu0 %v1696, 17
  %v1783 = vpop.permute.xlu0 %1782
  %1784 = vrot.lane.b32.xlu0 %v1701, 17
  %v1785 = vpop.permute.xlu0 %1784
  %1786 = vrot.lane.b32.xlu0 %v1702, 17
  %v1787 = vpop.permute.xlu0 %1786
  %1788 = vrot.lane.b32.xlu0 %v1707, 17
  %v1789 = vpop.permute.xlu0 %1788
  %1790 = vrot.lane.b32.xlu0 %v1712, 17
  %v1791 = vpop.permute.xlu0 %1790
  %1792 = vrot.lane.b32.xlu0 %v1713, 17
  %v1793 = vpop.permute.xlu0 %1792
  %v1794 = vsel %vm188, %v1741, %v1743
  %v1795 = vsel %vm188, %v1743, %v1745
  %v1796 = vsel %vm188, %v1747, %v1749
  %v1797 = vsel %vm188, %v1749, %v1751
  %v1798 = vsel %vm188, %v1753, %v1755
  %v1799 = vsel %vm188, %v1755, %v1757
  %v1800 = vsel %vm188, %v1759, %v1761
  %v1801 = vsel %vm188, %v1761, %v1763
  %v1802 = vsel %vm188, %v1765, %v1767
  %v1803 = vsel %vm188, %v1767, %v1769
  %v1804 = vsel %vm188, %v1771, %v1773
  %v1805 = vsel %vm188, %v1773, %v1775
  %v1806 = vsel %vm188, %v1777, %v1779
  %v1807 = vsel %vm188, %v1779, %v1781
  %v1808 = vsel %vm188, %v1783, %v1785
  %v1809 = vsel %vm188, %v1785, %v1787
  %v1810 = vsel %vm188, %v1789, %v1791
  %v1811 = vsel %vm188, %v1791, %v1793
  %v1831 = vsel %vm487, %v1735, 0
  %1833 = vmatprep.subr.bf16.mxu0 %v1795
  %1834 = vmatpush1.bf16.msra.mxu0 %v1794
  %1835 = vmatprep.subr.bf16.mxu0 %v1797
  %1836 = vmatpush1.bf16.msra.mxu0 %v1796
  %1837 = vmatprep.subr.bf16.mxu0 %v1799
  %1838 = vmatpush1.bf16.msra.mxu0 %v1798
  %1839 = vmatprep.subr.bf16.mxu0 %v1801
  %1840 = vmatpush1.bf16.msra.mxu0 %v1800
  %1841 = vmatprep.subr.bf16.mxu0 %v1803
  %1842 = vmatpush1.bf16.msra.mxu0 %v1802
  %1843 = vmatprep.subr.bf16.mxu0 %v1805
  %1844 = vmatpush1.bf16.msra.mxu0 %v1804
  %1845 = vmatprep.subr.bf16.mxu0 %v1807
  %1846 = vmatpush1.bf16.msra.mxu0 %v1806
  %1847 = vmatprep.subr.bf16.mxu0 %v1809
  %1848 = vmatpush1.bf16.msra.mxu0 %v1808
  %1849 = vmatprep.subr.bf16.mxu0 %v1811
  %1850 = vmatpush1.bf16.msra.mxu0 %v1810
  %1851 = vmatprep.subr.bf16.mxu0 0
  %1852 = vmatpush1.bf16.msra.mxu0 0
  %1853 = vmatprep.subr.bf16.mxu0 0
  %1854 = vmatpush1.bf16.msra.mxu0 0
  %1855 = vmatprep.subr.bf16.mxu0 0
  %1856 = vmatpush1.bf16.msra.mxu0 0
  %1857 = vmatprep.subr.bf16.mxu0 0
  %1858 = vmatpush1.bf16.msra.mxu0 0
  %1859 = vmatprep.subr.bf16.mxu0 0
  %1860 = vmatpush1.bf16.msra.mxu0 0
  %1861 = vmatprep.subr.bf16.mxu0 0
  %1862 = vmatpush1.bf16.msra.mxu0 0
  %1863 = vmatprep.subr.bf16.mxu0 0
  %1864 = vmatpush1.bf16.msra.mxu0 0
  %1865 = vmatprep.mubr.bf16.mxu0 %v1831
  %1866 = vmatmul.mubr.bf16.gmra.mrb[0].mxu0 %v1734
  %v1867 = vpop.f32.mrb[0].mxu0
  %v1868 = vadd.f32 %v1721, %v1867
  %v1869 = vpop.f32.mrb[0].mxu0
  %v1870 = vadd.f32 %v1721, %v1869
  %v1871 = vpop.f32.mrb[0].mxu0
  %v1872 = vadd.f32 %v1726, %v1871
  %v1873 = vpop.f32.mrb[0].mxu0
  %v1874 = vadd.f32 %v1726, %v1873
  %1875 = vdwg.mxu0
  %v1876 = vld [vmem:[%s0 + $0xc] sm:$0xff]
  %v1877 = vld [vmem:[%s0 + $0x24] sm:$0xff]
  %v1878 = vunpack.c.l.bf16 %v1876
  %v1879 = vunpack.c.h.bf16 %v1876
  %v1880 = vunpack.c.l.bf16 %v1877
  %v1881 = vunpack.c.h.bf16 %v1877
  %v1882 = vadd.f32 %v1868, %v1878
  %v1883 = vadd.f32 %v1870, %v1879
  %v1884 = vadd.f32 %v1872, %v1880
  %v1885 = vadd.f32 %v1874, %v1881
  %v1886 = vmax.f32 %v1882, 0.0
  %v1887 = vmax.f32 %v1883, 0.0
  %v1888 = vmax.f32 %v1884, 0.0
  %v1889 = vmax.f32 %v1885, 0.0
  %v1890 = vpack.c.bf16 %v1888, %v1886
  %v1891 = vpack.c.bf16 %v1889, %v1887
  %v1894 = vunpack.c.l.b16 %v1890
  %v1895 = vunpack.c.l.b16 %v1891
  %v1896 = vunpack.c.h.b16 %v1890
  %v1897 = vunpack.c.h.b16 %v1891
  %v1898 = vpack.c.b16 %v1895, %v1894
  %v1899 = vpack.c.b16 %v1897, %v1896
  %1902 = vst [vmem:[%s5 + $0x8] sm:$0xff] %v1898
  %1903 = vst [vmem:[%s5 + $0x18] sm:$0xff] %v1899
  // Predicated region
  $region22: #{_lambda_.14} parent=0 // pred_check
    _
  $region23: #{_lambda_.14} parent=0 // pred_check_branch
    %1905 = sbr.rel (0) target = $region25
  $region24: #{_lambda_.14} parent=0 // pred_region
    _
  $region25: #{_lambda_.14} parent=0 // pred_fallthru
    _
  // Predicated region
  $region26: #{_lambda_.14} parent=0 // pred_check
    _
  $region27: #{_lambda_.14} parent=0 // pred_check_branch
    %1907 = sbr.rel (0) target = $region29
  $region28: #{_lambda_.14} parent=0 // pred_region
    _
  $region29: #{_lambda_.14} parent=0 // pred_fallthru
    _

// kernel: _lambda_.17
$region0: #{_lambda_.17}
  #allocation0 [shape = 'u32[]', space=smem, size = 0x4, offset = 0x4, fixed_abs, tag = 'smem constant byte address 0x4 - core index']
  #allocation1 [shape = 'u32[144,128]{1,0:T(1,128)}', space=vmem, size = 0x12000, scoped, tag = 'internal scratch']
  %s0 = inlined_call_operand.vmem [shape: bf16[32,144], index: 0, kind: input, shape index: {}]
  %s1 = inlined_call_operand.vmem [shape: bf16[144,128], index: 1, kind: input, shape index: {}]
  %s2 = inlined_call_operand.vmem [shape: f32[32,1], index: 2, kind: input, shape index: {}]
  %s3 = inlined_call_operand.vmem [shape: bf16[32,128], index: 3, kind: output, shape index: {}]
  %s4 = sld [smem:[#allocation0]]
  $region22: #{_lambda_.17} parent=0
    _
  %s6 = ssub.s32 1, %s4
  %s7 = scalar_select 0, %s6, %s4
  // Predicated region
  $region2: #{_lambda_.17} parent=0 // pred_check
    _
  $region3: #{_lambda_.17} parent=0 // pred_check_branch
    %9 = sbr.rel (0) target = $region5
  $region4: #{_lambda_.17} parent=0 // pred_region
    _
  $region5: #{_lambda_.17} parent=0 // pred_fallthru
    _
  // Predicated region
  $region6: #{_lambda_.17} parent=0 // pred_check
    _
  $region7: #{_lambda_.17} parent=0 // pred_check_branch
    %11 = sbr.rel (0) target = $region9
  $region8: #{_lambda_.17} parent=0 // pred_region
    _
  $region9: #{_lambda_.17} parent=0 // pred_fallthru
    _
  // Predicated region
  $region10: #{_lambda_.17} parent=0 // pred_check
    _
  $region11: #{_lambda_.17} parent=0 // pred_check_branch
    %13 = sbr.rel (0) target = $region13
  $region12: #{_lambda_.17} parent=0 // pred_region
    _
  $region13: #{_lambda_.17} parent=0 // pred_fallthru
    _
  %v15 = vld [vmem:[%s0] sm:$0xff]
  %v16 = vld [vmem:[%s0 + $0x8] sm:$0xff]
  %v17 = vld [vmem:[%s0 + $0x10] sm:$0xff]
  %v18 = vld [vmem:[%s0 + $0x18] sm:$0xff]
  %v19 = vld [vmem:[%s1] sm:$0xf]
  %v20 = vld [vmem:[%s1 + $0x4] sm:$0xf]
  %v21 = vld [vmem:[%s1 + $0x8] sm:$0xf]
  %v22 = vld [vmem:[%s1 + $0xc] sm:$0xf]
  %v23 = vld [vmem:[%s1 + $0x10] sm:$0xf]
  %v24 = vld [vmem:[%s1 + $0x14] sm:$0xf]
  %v25 = vld [vmem:[%s1 + $0x18] sm:$0xf]
  %v26 = vld [vmem:[%s1 + $0x1c] sm:$0xf]
  %v27 = vld [vmem:[%s1 + $0x20] sm:$0xf]
  %v28 = vld [vmem:[%s1 + $0x24] sm:$0xf]
  %v29 = vld [vmem:[%s1 + $0x28] sm:$0xf]
  %v30 = vld [vmem:[%s1 + $0x2c] sm:$0xf]
  %v31 = vld [vmem:[%s1 + $0x30] sm:$0xf]
  %v32 = vld [vmem:[%s1 + $0x34] sm:$0xf]
  %v33 = vld [vmem:[%s1 + $0x38] sm:$0xf]
  %v34 = vld [vmem:[%s1 + $0x3c] sm:$0xf]
  %v35 = vld [vmem:[%s1 + $0x40] sm:$0xf]
  %v36 = vld [vmem:[%s1 + $0x44] sm:$0xf]
  %v37 = vld [vmem:[%s2] sm:$0xff]
  %v38 = vld [vmem:[%s2 + $0x8] sm:$0xff]
  %v39 = vld [vmem:[%s2 + $0x10] sm:$0xff]
  %v40 = vld [vmem:[%s2 + $0x18] sm:$0xff]
  %42 = vset.pattern.permute.xlu0 0
  %43 = vperm.xlu0 %42, %v37
  %v44 = vpop.permute.xlu0 %43
  %47 = vset.pattern.permute.xlu0 0
  %48 = vperm.xlu0 %47, %v38
  %v49 = vpop.permute.xlu0 %48
  %52 = vset.pattern.permute.xlu0 0
  %53 = vperm.xlu0 %52, %v39
  %v54 = vpop.permute.xlu0 %53
  %57 = vset.pattern.permute.xlu0 0
  %58 = vperm.xlu0 %57, %v40
  %v59 = vpop.permute.xlu0 %58
  %v65 = vunpack.c.l.b16 %v15
  %v66 = vunpack.c.h.b16 %v15
  %v67 = vunpack.c.l.b16 %v16
  %v68 = vunpack.c.h.b16 %v16
  %v69 = vunpack.c.l.b16 %v17
  %v70 = vunpack.c.h.b16 %v17
  %v71 = vunpack.c.l.b16 %v18
  %v72 = vunpack.c.h.b16 %v18
  %v73 = vpack.c.b16 %v67, %v65
  %v74 = vpack.c.b16 %v68, %v66
  %v75 = vpack.c.b16 %v71, %v69
  %v76 = vpack.c.b16 %v72, %v70
  %v97 = vunpack.c.l.b16 %v19
  %v98 = vunpack.c.l.b16 %v20
  %v99 = vunpack.c.l.b16 %v21
  %v100 = vunpack.c.l.b16 %v22
  %v101 = vunpack.c.l.b16 %v23
  %v102 = vunpack.c.l.b16 %v24
  %v103 = vunpack.c.l.b16 %v25
  %v104 = vunpack.c.l.b16 %v26
  %v105 = vunpack.c.l.b16 %v27
  %v106 = vunpack.c.l.b16 %v28
  %v107 = vunpack.c.l.b16 %v29
  %v108 = vunpack.c.l.b16 %v30
  %v109 = vunpack.c.l.b16 %v31
  %v110 = vunpack.c.l.b16 %v32
  %v111 = vunpack.c.l.b16 %v33
  %v112 = vunpack.c.l.b16 %v34
  %v113 = vunpack.c.l.b16 %v35
  %v114 = vunpack.c.l.b16 %v36
  %v115 = vpack.c.b16 %v98, %v97
  %v116 = vpack.c.b16 %v100, %v99
  %v117 = vpack.c.b16 %v102, %v101
  %v118 = vpack.c.b16 %v104, %v103
  %v119 = vpack.c.b16 %v106, %v105
  %v120 = vpack.c.b16 %v108, %v107
  %v121 = vpack.c.b16 %v110, %v109
  %v122 = vpack.c.b16 %v112, %v111
  %v123 = vpack.c.b16 %v114, %v113
  %vm133 = vcmask 130048
  %v135 = vsel %vm133, %v74, 0
  %v138 = vsel %vm133, %v76, 0
  %140 = vmatprep.subr.bf16.mxu0 0
  %141 = vmatpush1.bf16.msra.mxu0 %v115
  %142 = vmatprep.subr.bf16.mxu0 0
  %143 = vmatpush1.bf16.msra.mxu0 %v116
  %144 = vmatprep.subr.bf16.mxu0 0
  %145 = vmatpush1.bf16.msra.mxu0 %v117
  %146 = vmatprep.subr.bf16.mxu0 0
  %147 = vmatpush1.bf16.msra.mxu0 %v118
  %148 = vmatprep.subr.bf16.mxu0 0
  %149 = vmatpush1.bf16.msra.mxu0 %v119
  %150 = vmatprep.subr.bf16.mxu0 0
  %151 = vmatpush1.bf16.msra.mxu0 %v120
  %152 = vmatprep.subr.bf16.mxu0 0
  %153 = vmatpush1.bf16.msra.mxu0 %v121
  %154 = vmatprep.subr.bf16.mxu0 0
  %155 = vmatpush1.bf16.msra.mxu0 %v122
  %156 = vmatprep.subr.bf16.mxu0 0
  %157 = vmatpush1.bf16.msra.mxu0 %v123
  %158 = vmatprep.subr.bf16.mxu0 0
  %159 = vmatpush1.bf16.msra.mxu0 0
  %160 = vmatprep.subr.bf16.mxu0 0
  %161 = vmatpush1.bf16.msra.mxu0 0
  %162 = vmatprep.subr.bf16.mxu0 0
  %163 = vmatpush1.bf16.msra.mxu0 0
  %164 = vmatprep.subr.bf16.mxu0 0
  %165 = vmatpush1.bf16.msra.mxu0 0
  %166 = vmatprep.subr.bf16.mxu0 0
  %167 = vmatpush1.bf16.msra.mxu0 0
  %168 = vmatprep.subr.bf16.mxu0 0
  %169 = vmatpush1.bf16.msra.mxu0 0
  %170 = vmatprep.subr.bf16.mxu0 0
  %171 = vmatpush1.bf16.msra.mxu0 0
  %172 = vmatprep.mubr.bf16.mxu0 %v135
  %173 = vmatmul.mubr.bf16.gmra.mrb[0].mxu0 %v73
  %v174 = vpop.f32.mrb[0].mxu0
  %v175 = vadd.f32 %v44, %v174
  %v176 = vpop.f32.mrb[0].mxu0
  %v177 = vpop.f32.mrb[0].mxu0
  %v178 = vadd.f32 %v49, %v177
  %v179 = vpop.f32.mrb[0].mxu0
  %180 = vmatprep.mubr.bf16.mxu0 %v138
  %181 = vmatmul.mubr.bf16.gmra.mrb[0].mxu0 %v75
  %v182 = vpop.f32.mrb[0].mxu0
  %v183 = vadd.f32 %v54, %v182
  %v184 = vpop.f32.mrb[0].mxu0
  %v185 = vpop.f32.mrb[0].mxu0
  %v186 = vadd.f32 %v59, %v185
  %v187 = vpop.f32.mrb[0].mxu0
  %188 = vdwg.mxu0
  %v189 = vmax.f32 %v175, 0.0
  %v190 = vmax.f32 %v178, 0.0
  %v191 = vmax.f32 %v183, 0.0
  %v192 = vmax.f32 %v186, 0.0
  %v193 = vpack.c.bf16 %v190, %v189
  %v194 = vpack.c.bf16 %v192, %v191
  %v197 = vunpack.c.l.b16 %v193
  %v198 = vunpack.c.h.b16 %v193
  %v199 = vunpack.c.l.b16 %v194
  %v200 = vunpack.c.h.b16 %v194
  %v201 = vpack.c.b16 %v197, %v197
  %v202 = vpack.c.b16 %v198, %v198
  %v203 = vpack.c.b16 %v199, %v199
  %v204 = vpack.c.b16 %v200, %v200
  %209 = vst [vmem:[%s3] sm:$0xf] %v201
  %210 = vst [vmem:[%s3 + $0x4] sm:$0xf] %v202
  %211 = vst [vmem:[%s3 + $0x8] sm:$0xf] %v203
  %212 = vst [vmem:[%s3 + $0xc] sm:$0xf] %v204
  // Predicated region
  $region14: #{_lambda_.17} parent=0 // pred_check
    _
  $region15: #{_lambda_.17} parent=0 // pred_check_branch
    %214 = sbr.rel (0) target = $region17
  $region16: #{_lambda_.17} parent=0 // pred_region
    _
  $region17: #{_lambda_.17} parent=0 // pred_fallthru
    _
  // Predicated region
  $region18: #{_lambda_.17} parent=0 // pred_check
    _
  $region19: #{_lambda_.17} parent=0 // pred_check_branch
    %216 = sbr.rel (0) target = $region21
  $region20: #{_lambda_.17} parent=0 // pred_region
    _
  $region21: #{_lambda_.17} parent=0 // pred_fallthru
    _

// kernel: _lambda_.18
$region0: #{_lambda_.18}
  #allocation0 [shape = 'u32[]', space=smem, size = 0x4, offset = 0x4, fixed_abs, tag = 'smem constant byte address 0x4 - core index']
  #allocation1 [shape = 'u32[144,128]{1,0:T(1,128)}', space=vmem, size = 0x12000, scoped, tag = 'internal scratch']
  %s0 = inlined_call_operand.vmem [shape: bf16[32,384], index: 0, kind: input, shape index: {}]
  %s1 = inlined_call_operand.vmem [shape: bf16[32,288], index: 1, kind: input, shape index: {}]
  %s2 = inlined_call_operand.vmem [shape: f32[32,1], index: 2, kind: input, shape index: {}]
  %s3 = inlined_call_operand.vmem [shape: bf16[16,128], index: 3, kind: input, shape index: {}]
  %s4 = inlined_call_operand.vmem [shape: bf16[32,128], index: 4, kind: output, shape index: {}]
  %s5 = sld [smem:[#allocation0]]
  $region26: #{_lambda_.18} parent=0
    _
  %s7 = ssub.s32 1, %s5
  %s8 = scalar_select 0, %s7, %s5
  // Predicated region
  $region2: #{_lambda_.18} parent=0 // pred_check
    _
  $region3: #{_lambda_.18} parent=0 // pred_check_branch
    %10 = sbr.rel (0) target = $region5
  $region4: #{_lambda_.18} parent=0 // pred_region
    _
  $region5: #{_lambda_.18} parent=0 // pred_fallthru
    _
  // Predicated region
  $region6: #{_lambda_.18} parent=0 // pred_check
    _
  $region7: #{_lambda_.18} parent=0 // pred_check_branch
    %12 = sbr.rel (0) target = $region9
  $region8: #{_lambda_.18} parent=0 // pred_region
    _
  $region9: #{_lambda_.18} parent=0 // pred_fallthru
    _
  // Predicated region
  $region10: #{_lambda_.18} parent=0 // pred_check
    _
  $region11: #{_lambda_.18} parent=0 // pred_check_branch
    %14 = sbr.rel (0) target = $region13
  $region12: #{_lambda_.18} parent=0 // pred_region
    _
  $region13: #{_lambda_.18} parent=0 // pred_fallthru
    _
  // Predicated region
  $region14: #{_lambda_.18} parent=0 // pred_check
    _
  $region15: #{_lambda_.18} parent=0 // pred_check_branch
    %16 = sbr.rel (0) target = $region17
  $region16: #{_lambda_.18} parent=0 // pred_region
    _
  $region17: #{_lambda_.18} parent=0 // pred_fallthru
    _
  %v20 = vlaneseq
  %v21 = vand.u32 %v20, 127
  %v22 = vand.u32 %v21, 7
  %v23 = vand.u32 %v21, 63
  %v24 = vld [vmem:[%s0] sm:$0xff]
  %v25 = vld [vmem:[%s0 + $0xc] sm:$0xff]
  %v26 = vld [vmem:[%s0 + $0x18] sm:$0xff]
  %v27 = vld [vmem:[%s0 + $0x24] sm:$0xff]
  %vm28 = vcmp.ge.s32.totalorder %v22, 1
  %vm29 = vcmp.ge.s32.totalorder %v23, 8
  %vm30 = vmand %vm28, %vm29
  %v31 = vsel %vm30, 1, 0
  %vm32 = vcmp.eq.s32.totalorder %v31, 1
  %vm33 = vmpackc.low %vm32, %vm32
  %v34 = vsel %vm33, 65537, 0
  %35 = vrot.lane.b32.xlu0 %v34, 119
  %v36 = vpop.permute.xlu0 %35
  %v37 = vrot.slane %v36, 4
  %vm38 = vcmask 973824
  %v39 = vsel %vm38, %v37, %v36
  %vm40 = vcmp.ne.s16.totalorder %v39, 0
  %v41 = vsel %vm40, %v24, 0
  %v42 = vsel %vm40, %v25, 0
  %v43 = vsel %vm40, %v26, 0
  %v44 = vsel %vm40, %v27, 0
  %v45 = vsel %vm29, 1, 0
  %vm46 = vcmp.eq.s32.totalorder %v45, 1
  %vm47 = vmpackc.low %vm46, %vm46
  %v48 = vsel %vm47, 65537, 0
  %49 = vrot.lane.b32.xlu0 %v48, 120
  %v50 = vpop.permute.xlu0 %49
  %v51 = vrot.slane %v50, 4
  %vm52 = vcmask 982016
  %v53 = vsel %vm52, %v51, %v50
  %vm54 = vcmp.ne.s16.totalorder %v53, 0
  %v55 = vsel %vm54, %v24, 0
  %v56 = vsel %vm54, %v25, 0
  %v57 = vsel %vm54, %v26, 0
  %v58 = vsel %vm54, %v27, 0
  %vm59 = vcmp.le.s32.totalorder %v22, 6
  %vm60 = vmand %vm59, %vm29
  %v61 = vsel %vm60, 1, 0
  %vm62 = vcmp.eq.s32.totalorder %v61, 1
  %vm63 = vmpackc.low %vm62, %vm62
  %v64 = vsel %vm63, 65537, 0
  %65 = vrot.lane.b32.xlu0 %v64, 121
  %v66 = vpop.permute.xlu0 %65
  %v67 = vrot.slane %v66, 4
  %vm68 = vcmask 990208
  %v69 = vsel %vm68, %v67, %v66
  %vm70 = vcmp.ne.s16.totalorder %v69, 0
  %v71 = vsel %vm70, %v24, 0
  %v72 = vsel %vm70, %v25, 0
  %v73 = vsel %vm70, %v26, 0
  %v74 = vsel %vm70, %v27, 0
  %v75 = vsel %vm28, 1, 0
  %vm76 = vcmp.eq.s32.totalorder %v75, 1
  %vm77 = vmpackc.low %vm76, %vm76
  %v78 = vsel %vm77, 65537, 0
  %79 = vrot.lane.b32.xlu0 %v78, 127
  %v80 = vpop.permute.xlu0 %79
  %v81 = vrot.slane %v80, 4
  %vm82 = vcmask 1039360
  %v83 = vsel %vm82, %v81, %v80
  %vm84 = vcmp.ne.s16.totalorder %v83, 0
  %v85 = vsel %vm84, %v24, 0
  %v86 = vsel %vm84, %v25, 0
  %v87 = vsel %vm84, %v26, 0
  %v88 = vsel %vm84, %v27, 0
  %v89 = vld [vmem:[%s0 + $0x4] sm:$0xf]
  %v90 = vld [vmem:[%s0 + $0x10] sm:$0xf]
  %v91 = vld [vmem:[%s0 + $0x1c] sm:$0xf]
  %v92 = vld [vmem:[%s0 + $0x28] sm:$0xf]
  %v93 = vld [vmem:[%s0 + $0x4] sm:$0xff]
  %v94 = vld [vmem:[%s0 + $0x10] sm:$0xff]
  %v95 = vld [vmem:[%s0 + $0x1c] sm:$0xff]
  %v96 = vld [vmem:[%s0 + $0x28] sm:$0xff]
  %v97 = vsel %vm59, 1, 0
  %vm98 = vcmp.eq.s32.totalorder %v97, 1
  %vm99 = vmpackc.low %vm98, %vm98
  %v100 = vsel %vm99, 65537, 0
  %101 = vrot.lane.b32.xlu0 %v100, 1
  %v102 = vpop.permute.xlu0 %101
  %v103 = vrot.slane %v102, 4
  %vm104 = vcmask 7168
  %v105 = vsel %vm104, %v103, %v102
  %vm106 = vcmp.ne.s16.totalorder %v105, 0
  %v107 = vsel %vm106, %v93, 0
  %v108 = vsel %vm106, %v94, 0
  %v109 = vsel %vm106, %v95, 0
  %v110 = vsel %vm106, %v96, 0
  %vm111 = vcmp.lt.s32.totalorder %v23, 56
  %vm112 = vmand %vm28, %vm111
  %v113 = vsel %vm112, 1, 0
  %vm114 = vcmp.eq.s32.totalorder %v113, 1
  %vm115 = vmpackc.low %vm114, %vm114
  %v116 = vsel %vm115, 65537, 0
  %117 = vrot.lane.b32.xlu0 %v116, 7
  %v118 = vpop.permute.xlu0 %117
  %v119 = vrot.slane %v118, 4
  %vm120 = vcmask 56320
  %v121 = vsel %vm120, %v119, %v118
  %vm122 = vcmp.ne.s16.totalorder %v121, 0
  %v123 = vsel %vm122, %v93, 0
  %v124 = vsel %vm122, %v94, 0
  %v125 = vsel %vm122, %v95, 0
  %v126 = vsel %vm122, %v96, 0
  %v127 = vsel %vm111, 1, 0
  %vm128 = vcmp.eq.s32.totalorder %v127, 1
  %vm129 = vmpackc.low %vm128, %vm128
  %v130 = vsel %vm129, 65537, 0
  %131 = vrot.lane.b32.xlu0 %v130, 8
  %v132 = vpop.permute.xlu0 %131
  %v133 = vrot.slane %v132, 4
  %vm134 = vcmask 64512
  %v135 = vsel %vm134, %v133, %v132
  %vm136 = vcmp.ne.s16.totalorder %v135, 0
  %v137 = vsel %vm136, %v93, 0
  %v138 = vsel %vm136, %v94, 0
  %v139 = vsel %vm136, %v95, 0
  %v140 = vsel %vm136, %v96, 0
  %vm141 = vmand %vm59, %vm111
  %v142 = vsel %vm141, 1, 0
  %vm143 = vcmp.eq.s32.totalorder %v142, 1
  %vm144 = vmpackc.low %vm143, %vm143
  %v145 = vsel %vm144, 65537, 0
  %146 = vrot.lane.b32.xlu0 %v145, 9
  %v147 = vpop.permute.xlu0 %146
  %v148 = vrot.slane %v147, 4
  %vm149 = vcmask 72704
  %v150 = vsel %vm149, %v148, %v147
  %vm151 = vcmp.ne.s16.totalorder %v150, 0
  %v152 = vsel %vm151, %v93, 0
  %v153 = vsel %vm151, %v94, 0
  %v154 = vsel %vm151, %v95, 0
  %v155 = vsel %vm151, %v96, 0
  %v160 = vunpack.c.l.b16 %v41
  %v161 = vunpack.c.h.b16 %v41
  %v162 = vunpack.c.l.b16 %v42
  %v163 = vunpack.c.h.b16 %v42
  %v164 = vunpack.c.l.b16 %v43
  %v165 = vunpack.c.h.b16 %v43
  %v166 = vunpack.c.l.b16 %v44
  %v167 = vunpack.c.h.b16 %v44
  %v168 = vpack.c.b16 %v162, %v160
  %v169 = vpack.c.b16 %v163, %v161
  %v170 = vpack.c.b16 %v166, %v164
  %v171 = vpack.c.b16 %v167, %v165
  %v176 = vunpack.c.l.b16 %v55
  %v177 = vunpack.c.h.b16 %v55
  %v178 = vunpack.c.l.b16 %v56
  %v179 = vunpack.c.h.b16 %v56
  %v180 = vunpack.c.l.b16 %v57
  %v181 = vunpack.c.h.b16 %v57
  %v182 = vunpack.c.l.b16 %v58
  %v183 = vunpack.c.h.b16 %v58
  %v184 = vpack.c.b16 %v178, %v176
  %v185 = vpack.c.b16 %v179, %v177
  %v186 = vpack.c.b16 %v182, %v180
  %v187 = vpack.c.b16 %v183, %v181
  %188 = vrot.lane.b32.xlu0 %v184, 127
  %v189 = vpop.permute.xlu0 %188
  %190 = vrot.lane.b32.xlu0 %v185, 127
  %v191 = vpop.permute.xlu0 %190
  %192 = vrot.lane.b32.xlu0 %v186, 127
  %v193 = vpop.permute.xlu0 %192
  %194 = vrot.lane.b32.xlu0 %v187, 127
  %v195 = vpop.permute.xlu0 %194
  %v196 = vsel %vm82, %v189, %v191
  %v197 = vsel %vm82, %v193, %v195
  %v202 = vunpack.c.l.b16 %v71
  %v203 = vunpack.c.h.b16 %v71
  %v204 = vunpack.c.l.b16 %v72
  %v205 = vunpack.c.h.b16 %v72
  %v206 = vunpack.c.l.b16 %v73
  %v207 = vunpack.c.h.b16 %v73
  %v208 = vunpack.c.l.b16 %v74
  %v209 = vunpack.c.h.b16 %v74
  %v210 = vpack.c.b16 %v204, %v202
  %v211 = vpack.c.b16 %v205, %v203
  %v212 = vpack.c.b16 %v208, %v206
  %v213 = vpack.c.b16 %v209, %v207
  %214 = vrot.lane.b32.xlu0 %v210, 126
  %v215 = vpop.permute.xlu0 %214
  %216 = vrot.lane.b32.xlu0 %v211, 126
  %v217 = vpop.permute.xlu0 %216
  %218 = vrot.lane.b32.xlu0 %v212, 126
  %v219 = vpop.permute.xlu0 %218
  %220 = vrot.lane.b32.xlu0 %v213, 126
  %v221 = vpop.permute.xlu0 %220
  %vm222 = vcmask 1031168
  %v223 = vsel %vm222, %v215, %v217
  %v224 = vsel %vm222, %v219, %v221
  %v229 = vunpack.c.l.b16 %v85
  %v230 = vunpack.c.h.b16 %v85
  %v231 = vunpack.c.l.b16 %v86
  %v232 = vunpack.c.h.b16 %v86
  %v233 = vunpack.c.l.b16 %v87
  %v234 = vunpack.c.h.b16 %v87
  %v235 = vunpack.c.l.b16 %v88
  %v236 = vunpack.c.h.b16 %v88
  %v237 = vpack.c.b16 %v231, %v229
  %v238 = vpack.c.b16 %v232, %v230
  %v239 = vpack.c.b16 %v235, %v233
  %v240 = vpack.c.b16 %v236, %v234
  %241 = vrot.lane.b32.xlu0 %v237, 120
  %v242 = vpop.permute.xlu0 %241
  %243 = vrot.lane.b32.xlu0 %v238, 120
  %v244 = vpop.permute.xlu0 %243
  %245 = vrot.lane.b32.xlu0 %v239, 120
  %v246 = vpop.permute.xlu0 %245
  %247 = vrot.lane.b32.xlu0 %v240, 120
  %v248 = vpop.permute.xlu0 %247
  %v249 = vsel %vm52, %v242, %v244
  %v250 = vsel %vm52, %v246, %v248
  %v255 = vunpack.c.l.b16 %v89
  %v256 = vunpack.c.l.b16 %v90
  %v257 = vunpack.c.l.b16 %v91
  %v258 = vunpack.c.l.b16 %v92
  %v259 = vpack.c.b16 %v256, %v255
  %v260 = vpack.c.b16 %v258, %v257
  %261 = vrot.lane.b32.xlu0 %v259, 119
  %v262 = vpop.permute.xlu0 %261
  %263 = vrot.lane.b32.xlu0 %v260, 119
  %v264 = vpop.permute.xlu0 %263
  %v269 = vunpack.c.l.b16 %v107
  %v270 = vunpack.c.h.b16 %v107
  %v271 = vunpack.c.l.b16 %v108
  %v272 = vunpack.c.h.b16 %v108
  %v273 = vunpack.c.l.b16 %v109
  %v274 = vunpack.c.h.b16 %v109
  %v275 = vunpack.c.l.b16 %v110
  %v276 = vunpack.c.h.b16 %v110
  %v277 = vpack.c.b16 %v271, %v269
  %v278 = vpack.c.b16 %v272, %v270
  %v279 = vpack.c.b16 %v275, %v273
  %v280 = vpack.c.b16 %v276, %v274
  %281 = vrot.lane.b32.xlu0 %v277, 118
  %v282 = vpop.permute.xlu0 %281
  %283 = vrot.lane.b32.xlu0 %v278, 118
  %v284 = vpop.permute.xlu0 %283
  %285 = vrot.lane.b32.xlu0 %v279, 118
  %v286 = vpop.permute.xlu0 %285
  %287 = vrot.lane.b32.xlu0 %v280, 118
  %v288 = vpop.permute.xlu0 %287
  %vm289 = vcmask 965632
  %v290 = vsel %vm289, %v282, %v284
  %v291 = vsel %vm289, %v286, %v288
  %v296 = vunpack.c.l.b16 %v123
  %v297 = vunpack.c.h.b16 %v123
  %v298 = vunpack.c.l.b16 %v124
  %v299 = vunpack.c.h.b16 %v124
  %v300 = vunpack.c.l.b16 %v125
  %v301 = vunpack.c.h.b16 %v125
  %v302 = vunpack.c.l.b16 %v126
  %v303 = vunpack.c.h.b16 %v126
  %v304 = vpack.c.b16 %v298, %v296
  %v305 = vpack.c.b16 %v299, %v297
  %v306 = vpack.c.b16 %v302, %v300
  %v307 = vpack.c.b16 %v303, %v301
  %308 = vrot.lane.b32.xlu0 %v304, 112
  %v309 = vpop.permute.xlu0 %308
  %310 = vrot.lane.b32.xlu0 %v305, 112
  %v311 = vpop.permute.xlu0 %310
  %312 = vrot.lane.b32.xlu0 %v306, 112
  %v313 = vpop.permute.xlu0 %312
  %314 = vrot.lane.b32.xlu0 %v307, 112
  %v315 = vpop.permute.xlu0 %314
  %vm316 = vcmask 916480
  %v317 = vsel %vm316, %v309, %v311
  %v318 = vsel %vm316, %v313, %v315
  %v323 = vunpack.c.l.b16 %v137
  %v324 = vunpack.c.h.b16 %v137
  %v325 = vunpack.c.l.b16 %v138
  %v326 = vunpack.c.h.b16 %v138
  %v327 = vunpack.c.l.b16 %v139
  %v328 = vunpack.c.h.b16 %v139
  %v329 = vunpack.c.l.b16 %v140
  %v330 = vunpack.c.h.b16 %v140
  %v331 = vpack.c.b16 %v325, %v323
  %v332 = vpack.c.b16 %v326, %v324
  %v333 = vpack.c.b16 %v329, %v327
  %v334 = vpack.c.b16 %v330, %v328
  %335 = vrot.lane.b32.xlu0 %v331, 111
  %v336 = vpop.permute.xlu0 %335
  %337 = vrot.lane.b32.xlu0 %v332, 111
  %v338 = vpop.permute.xlu0 %337
  %339 = vrot.lane.b32.xlu0 %v333, 111
  %v340 = vpop.permute.xlu0 %339
  %341 = vrot.lane.b32.xlu0 %v334, 111
  %v342 = vpop.permute.xlu0 %341
  %vm343 = vcmask 908288
  %v344 = vsel %vm343, %v336, %v338
  %v345 = vsel %vm343, %v340, %v342
  %v350 = vunpack.c.l.b16 %v152
  %v351 = vunpack.c.h.b16 %v152
  %v352 = vunpack.c.l.b16 %v153
  %v353 = vunpack.c.h.b16 %v153
  %v354 = vunpack.c.l.b16 %v154
  %v355 = vunpack.c.h.b16 %v154
  %v356 = vunpack.c.l.b16 %v155
  %v357 = vunpack.c.h.b16 %v155
  %v358 = vpack.c.b16 %v352, %v350
  %v359 = vpack.c.b16 %v353, %v351
  %v360 = vpack.c.b16 %v356, %v354
  %v361 = vpack.c.b16 %v357, %v355
  %362 = vrot.lane.b32.xlu0 %v358, 110
  %v363 = vpop.permute.xlu0 %362
  %364 = vrot.lane.b32.xlu0 %v359, 110
  %v365 = vpop.permute.xlu0 %364
  %366 = vrot.lane.b32.xlu0 %v360, 110
  %v367 = vpop.permute.xlu0 %366
  %368 = vrot.lane.b32.xlu0 %v361, 110
  %v369 = vpop.permute.xlu0 %368
  %vm370 = vcmask 900096
  %v371 = vsel %vm370, %v363, %v365
  %v372 = vsel %vm370, %v367, %v369
  %v373 = vld [vmem:[%s1] sm:$0xff]
  %v374 = vld [vmem:[%s1 + $0x8] sm:$0xf]
  %v375 = vld [vmem:[%s1 + $0xc] sm:$0xff]
  %v376 = vld [vmem:[%s1 + $0x14] sm:$0xf]
  %v377 = vld [vmem:[%s1 + $0x18] sm:$0xff]
  %v378 = vld [vmem:[%s1 + $0x20] sm:$0xf]
  %v379 = vld [vmem:[%s1 + $0x24] sm:$0xff]
  %v380 = vld [vmem:[%s1 + $0x2c] sm:$0xf]
  %v381 = vld [vmem:[%s2] sm:$0xff]
  %v382 = vld [vmem:[%s2 + $0x8] sm:$0xff]
  %v383 = vld [vmem:[%s2 + $0x10] sm:$0xff]
  %v384 = vld [vmem:[%s2 + $0x18] sm:$0xff]
  %386 = vset.pattern.permute.xlu0 0
  %387 = vperm.xlu0 %386, %v381
  %v388 = vpop.permute.xlu0 %387
  %391 = vset.pattern.permute.xlu0 0
  %392 = vperm.xlu0 %391, %v382
  %v393 = vpop.permute.xlu0 %392
  %396 = vset.pattern.permute.xlu0 0
  %397 = vperm.xlu0 %396, %v383
  %v398 = vpop.permute.xlu0 %397
  %401 = vset.pattern.permute.xlu0 0
  %402 = vperm.xlu0 %401, %v384
  %v403 = vpop.permute.xlu0 %402
  %v413 = vunpack.c.l.b16 %v373
  %v414 = vunpack.c.h.b16 %v373
  %v415 = vunpack.c.l.b16 %v374
  %v416 = vunpack.c.l.b16 %v375
  %v417 = vunpack.c.h.b16 %v375
  %v418 = vunpack.c.l.b16 %v376
  %v419 = vunpack.c.l.b16 %v377
  %v420 = vunpack.c.h.b16 %v377
  %v421 = vunpack.c.l.b16 %v378
  %v422 = vunpack.c.l.b16 %v379
  %v423 = vunpack.c.h.b16 %v379
  %v424 = vunpack.c.l.b16 %v380
  %v425 = vpack.c.b16 %v416, %v413
  %v426 = vpack.c.b16 %v417, %v414
  %v427 = vpack.c.b16 %v418, %v415
  %v428 = vpack.c.b16 %v422, %v419
  %v429 = vpack.c.b16 %v423, %v420
  %v430 = vpack.c.b16 %v424, %v421
  %435 = vrot.lane.b32.xlu0 %v168, 9
  %v436 = vpop.permute.xlu0 %435
  %437 = vrot.lane.b32.xlu0 %v169, 9
  %v438 = vpop.permute.xlu0 %437
  %439 = vrot.lane.b32.xlu0 %v170, 9
  %v440 = vpop.permute.xlu0 %439
  %441 = vrot.lane.b32.xlu0 %v171, 9
  %v442 = vpop.permute.xlu0 %441
  %443 = vrot.lane.b32.xlu0 %v196, 9
  %v444 = vpop.permute.xlu0 %443
  %445 = vrot.lane.b32.xlu0 %v191, 9
  %v446 = vpop.permute.xlu0 %445
  %447 = vrot.lane.b32.xlu0 %v197, 9
  %v448 = vpop.permute.xlu0 %447
  %449 = vrot.lane.b32.xlu0 %v195, 9
  %v450 = vpop.permute.xlu0 %449
  %451 = vrot.lane.b32.xlu0 %v223, 9
  %v452 = vpop.permute.xlu0 %451
  %453 = vrot.lane.b32.xlu0 %v217, 9
  %v454 = vpop.permute.xlu0 %453
  %455 = vrot.lane.b32.xlu0 %v224, 9
  %v456 = vpop.permute.xlu0 %455
  %457 = vrot.lane.b32.xlu0 %v221, 9
  %v458 = vpop.permute.xlu0 %457
  %459 = vrot.lane.b32.xlu0 %v249, 9
  %v460 = vpop.permute.xlu0 %459
  %461 = vrot.lane.b32.xlu0 %v244, 9
  %v462 = vpop.permute.xlu0 %461
  %463 = vrot.lane.b32.xlu0 %v250, 9
  %v464 = vpop.permute.xlu0 %463
  %465 = vrot.lane.b32.xlu0 %v248, 9
  %v466 = vpop.permute.xlu0 %465
  %467 = vrot.lane.b32.xlu0 %v262, 9
  %v468 = vpop.permute.xlu0 %467
  %469 = vrot.lane.b32.xlu0 %v264, 9
  %v470 = vpop.permute.xlu0 %469
  %471 = vrot.lane.b32.xlu0 %v282, 9
  %v472 = vpop.permute.xlu0 %471
  %473 = vrot.lane.b32.xlu0 %v290, 9
  %v474 = vpop.permute.xlu0 %473
  %475 = vrot.lane.b32.xlu0 %v286, 9
  %v476 = vpop.permute.xlu0 %475
  %477 = vrot.lane.b32.xlu0 %v291, 9
  %v478 = vpop.permute.xlu0 %477
  %479 = vrot.lane.b32.xlu0 %v309, 9
  %v480 = vpop.permute.xlu0 %479
  %481 = vrot.lane.b32.xlu0 %v317, 9
  %v482 = vpop.permute.xlu0 %481
  %483 = vrot.lane.b32.xlu0 %v313, 9
  %v484 = vpop.permute.xlu0 %483
  %485 = vrot.lane.b32.xlu0 %v318, 9
  %v486 = vpop.permute.xlu0 %485
  %487 = vrot.lane.b32.xlu0 %v336, 9
  %v488 = vpop.permute.xlu0 %487
  %489 = vrot.lane.b32.xlu0 %v344, 9
  %v490 = vpop.permute.xlu0 %489
  %491 = vrot.lane.b32.xlu0 %v340, 9
  %v492 = vpop.permute.xlu0 %491
  %493 = vrot.lane.b32.xlu0 %v345, 9
  %v494 = vpop.permute.xlu0 %493
  %495 = vrot.lane.b32.xlu0 %v363, 9
  %v496 = vpop.permute.xlu0 %495
  %497 = vrot.lane.b32.xlu0 %v371, 9
  %v498 = vpop.permute.xlu0 %497
  %499 = vrot.lane.b32.xlu0 %v367, 9
  %v500 = vpop.permute.xlu0 %499
  %501 = vrot.lane.b32.xlu0 %v372, 9
  %v502 = vpop.permute.xlu0 %501
  %v503 = vsel %vm149, %v436, %v438
  %v504 = vsel %vm149, %v440, %v442
  %v505 = vsel %vm149, %v444, %v446
  %v506 = vsel %vm149, %v448, %v450
  %v507 = vsel %vm149, %v452, %v454
  %v508 = vsel %vm149, %v456, %v458
  %v509 = vsel %vm149, %v460, %v462
  %v510 = vsel %vm149, %v464, %v466
  %v511 = vsel %vm149, %v472, %v474
  %v512 = vsel %vm149, %v476, %v478
  %v513 = vsel %vm149, %v480, %v482
  %v514 = vsel %vm149, %v484, %v486
  %v515 = vsel %vm149, %v488, %v490
  %v516 = vsel %vm149, %v492, %v494
  %v517 = vsel %vm149, %v496, %v498
  %v518 = vsel %vm149, %v500, %v502
  %vm537 = vcmask 261120
  %v539 = vsel %vm537, %v427, 0
  %v542 = vsel %vm537, %v430, 0
  %544 = vmatprep.subr.bf16.mxu0 0
  %545 = vmatpush1.bf16.msra.mxu0 %v503
  %546 = vmatprep.subr.bf16.mxu0 0
  %547 = vmatpush1.bf16.msra.mxu0 %v504
  %548 = vmatprep.subr.bf16.mxu0 0
  %549 = vmatpush1.bf16.msra.mxu0 %v505
  %550 = vmatprep.subr.bf16.mxu0 0
  %551 = vmatpush1.bf16.msra.mxu0 %v506
  %552 = vmatprep.subr.bf16.mxu0 0
  %553 = vmatpush1.bf16.msra.mxu0 %v507
  %554 = vmatprep.subr.bf16.mxu0 0
  %555 = vmatpush1.bf16.msra.mxu0 %v508
  %556 = vmatprep.subr.bf16.mxu0 0
  %557 = vmatpush1.bf16.msra.mxu0 %v509
  %558 = vmatprep.subr.bf16.mxu0 0
  %559 = vmatpush1.bf16.msra.mxu0 %v510
  %560 = vmatprep.subr.bf16.mxu0 0
  %561 = vmatpush1.bf16.msra.mxu0 %v468
  %562 = vmatprep.subr.bf16.mxu0 0
  %563 = vmatpush1.bf16.msra.mxu0 %v470
  %564 = vmatprep.subr.bf16.mxu0 0
  %565 = vmatpush1.bf16.msra.mxu0 %v511
  %566 = vmatprep.subr.bf16.mxu0 0
  %567 = vmatpush1.bf16.msra.mxu0 %v512
  %568 = vmatprep.subr.bf16.mxu0 0
  %569 = vmatpush1.bf16.msra.mxu0 %v513
  %570 = vmatprep.subr.bf16.mxu0 0
  %571 = vmatpush1.bf16.msra.mxu0 %v514
  %572 = vmatprep.subr.bf16.mxu0 0
  %573 = vmatpush1.bf16.msra.mxu0 %v515
  %574 = vmatprep.subr.bf16.mxu0 0
  %575 = vmatpush1.bf16.msra.mxu0 %v516
  %576 = vmatprep.mubr.bf16.mxu0 %v426
  %577 = vmatmul.mubr.bf16.gmra.mrb[0].mxu0 %v425
  %v578 = vpop.f32.mrb[0].mxu0
  %v579 = vadd.f32 %v388, %v578
  %v580 = vpop.f32.mrb[0].mxu0
  %v581 = vpop.f32.mrb[0].mxu0
  %v582 = vadd.f32 %v393, %v581
  %v583 = vpop.f32.mrb[0].mxu0
  %584 = vmatprep.mubr.bf16.mxu0 %v429
  %585 = vmatmul.mubr.bf16.gmra.mrb[0].mxu0 %v428
  %v586 = vpop.f32.mrb[0].mxu0
  %v587 = vadd.f32 %v398, %v586
  %v588 = vpop.f32.mrb[0].mxu0
  %v589 = vpop.f32.mrb[0].mxu0
  %v590 = vadd.f32 %v403, %v589
  %v591 = vpop.f32.mrb[0].mxu0
  %592 = vdwg.mxu0
  %593 = vmatprep.subr.bf16.mxu0 0
  %594 = vmatpush1.bf16.msra.mxu0 %v517
  %595 = vmatprep.subr.bf16.mxu0 0
  %596 = vmatpush1.bf16.msra.mxu0 %v518
  %597 = vmatprep.subr.bf16.mxu0 0
  %598 = vmatpush1.bf16.msra.mxu0 0
  %599 = vmatprep.subr.bf16.mxu0 0
  %600 = vmatpush1.bf16.msra.mxu0 0
  %601 = vmatprep.subr.bf16.mxu0 0
  %602 = vmatpush1.bf16.msra.mxu0 0
  %603 = vmatprep.subr.bf16.mxu0 0
  %604 = vmatpush1.bf16.msra.mxu0 0
  %605 = vmatprep.subr.bf16.mxu0 0
  %606 = vmatpush1.bf16.msra.mxu0 0
  %607 = vmatprep.subr.bf16.mxu0 0
  %608 = vmatpush1.bf16.msra.mxu0 0
  %609 = vmatprep.subr.bf16.mxu0 0
  %610 = vmatpush1.bf16.msra.mxu0 0
  %611 = vmatprep.subr.bf16.mxu0 0
  %612 = vmatpush1.bf16.msra.mxu0 0
  %613 = vmatprep.subr.bf16.mxu0 0
  %614 = vmatpush1.bf16.msra.mxu0 0
  %615 = vmatprep.subr.bf16.mxu0 0
  %616 = vmatpush1.bf16.msra.mxu0 0
  %617 = vmatprep.subr.bf16.mxu0 0
  %618 = vmatpush1.bf16.msra.mxu0 0
  %619 = vmatprep.subr.bf16.mxu0 0
  %620 = vmatpush1.bf16.msra.mxu0 0
  %621 = vmatprep.subr.bf16.mxu0 0
  %622 = vmatpush1.bf16.msra.mxu0 0
  %623 = vmatprep.subr.bf16.mxu0 0
  %624 = vmatpush1.bf16.msra.mxu0 0
  %625 = vmatprep.mubr.bf16.mxu0 0
  %626 = vmatmul.mubr.bf16.gmra.mrb[0].mxu0 %v539
  %v627 = vpop.f32.mrb[0].mxu0
  %v628 = vadd.f32 %v579, %v627
  %v629 = vpop.f32.mrb[0].mxu0
  %v630 = vpop.f32.mrb[0].mxu0
  %v631 = vadd.f32 %v582, %v630
  %v632 = vpop.f32.mrb[0].mxu0
  %633 = vmatprep.mubr.bf16.mxu0 0
  %634 = vmatmul.mubr.bf16.gmra.mrb[0].mxu0 %v542
  %v635 = vpop.f32.mrb[0].mxu0
  %v636 = vadd.f32 %v587, %v635
  %v637 = vpop.f32.mrb[0].mxu0
  %v638 = vpop.f32.mrb[0].mxu0
  %v639 = vadd.f32 %v590, %v638
  %v640 = vpop.f32.mrb[0].mxu0
  %641 = vdwg.mxu0
  %v642 = vld [vmem:[%s3] sm:$0xf]
  %v643 = vld [vmem:[%s3 + $0x4] sm:$0xf]
  %v644 = vunpack.c.l.bf16 %v642
  %v645 = vunpack.c.l.bf16 %v643
  %v646 = vadd.f32 %v628, 0.0
  %v647 = vadd.f32 %v631, %v644
  %v648 = vadd.f32 %v636, %v645
  %v649 = vadd.f32 %v639, 0.0
  %v650 = vmax.f32 %v646, 0.0
  %v651 = vmax.f32 %v647, 0.0
  %v652 = vmax.f32 %v648, 0.0
  %v653 = vmax.f32 %v649, 0.0
  %v654 = vpack.c.bf16 %v651, %v650
  %v655 = vpack.c.bf16 %v653, %v652
  %v658 = vunpack.c.l.b16 %v654
  %v659 = vunpack.c.h.b16 %v654
  %v660 = vunpack.c.l.b16 %v655
  %v661 = vunpack.c.h.b16 %v655
  %v662 = vpack.c.b16 %v658, %v658
  %v663 = vpack.c.b16 %v659, %v659
  %v664 = vpack.c.b16 %v660, %v660
  %v665 = vpack.c.b16 %v661, %v661
  %670 = vst [vmem:[%s4] sm:$0xf] %v662
  %671 = vst [vmem:[%s4 + $0x4] sm:$0xf] %v663
  %672 = vst [vmem:[%s4 + $0x8] sm:$0xf] %v664
  %673 = vst [vmem:[%s4 + $0xc] sm:$0xf] %v665
  // Predicated region
  $region18: #{_lambda_.18} parent=0 // pred_check
    _
  $region19: #{_lambda_.18} parent=0 // pred_check_branch
    %675 = sbr.rel (0) target = $region21
  $region20: #{_lambda_.18} parent=0 // pred_region
    _
  $region21: #{_lambda_.18} parent=0 // pred_fallthru
    _
  // Predicated region
  $region22: #{_lambda_.18} parent=0 // pred_check
    _
  $region23: #{_lambda_.18} parent=0 // pred_check_branch
    %677 = sbr.rel (0) target = $region25
  $region24: #{_lambda_.18} parent=0 // pred_region
    _
  $region25: #{_lambda_.18} parent=0 // pred_fallthru
    _

// kernel: _lambda_.19
$region0: #{_lambda_.19}
  #allocation0 [shape = 'u32[]', space=smem, size = 0x4, offset = 0x4, fixed_abs, tag = 'smem constant byte address 0x4 - core index']
  #allocation1 [shape = 'u32[144,128]{1,0:T(1,128)}', space=vmem, size = 0x12000, scoped, tag = 'internal scratch']
  #allocation2 [shape = 'bf16[32,384]{1,0:T(16,128)(2,1)}', space=vmem, size = 0x6000, scoped, tag = 'scratch operand']
  %s0 = inlined_call_operand.vmem [shape: bf16[32,384], index: 0, kind: input, shape index: {}]
  %s1 = inlined_call_operand.vmem [shape: bf16[32,288], index: 1, kind: input, shape index: {}]
  %s2 = inlined_call_operand.vmem [shape: f32[32,1], index: 2, kind: input, shape index: {}]
  %s3 = inlined_call_operand.vmem [shape: bf16[32,288], index: 3, kind: input, shape index: {}]
  %s4 = inlined_call_operand.vmem [shape: f32[32,1], index: 4, kind: input, shape index: {}]
  %s5 = inlined_call_operand.vmem [shape: bf16[32,128], index: 5, kind: output, shape index: {}]
  %s6 = sld [smem:[#allocation0]]
  $region30: #{_lambda_.19} parent=0
    _
  %s8 = ssub.s32 1, %s6
  %s9 = scalar_select 0, %s8, %s6
  // Predicated region
  $region2: #{_lambda_.19} parent=0 // pred_check
    _
  $region3: #{_lambda_.19} parent=0 // pred_check_branch
    %11 = sbr.rel (0) target = $region5
  $region4: #{_lambda_.19} parent=0 // pred_region
    _
  $region5: #{_lambda_.19} parent=0 // pred_fallthru
    _
  // Predicated region
  $region6: #{_lambda_.19} parent=0 // pred_check
    _
  $region7: #{_lambda_.19} parent=0 // pred_check_branch
    %13 = sbr.rel (0) target = $region9
  $region8: #{_lambda_.19} parent=0 // pred_region
    _
  $region9: #{_lambda_.19} parent=0 // pred_fallthru
    _
  // Predicated region
  $region10: #{_lambda_.19} parent=0 // pred_check
    _
  $region11: #{_lambda_.19} parent=0 // pred_check_branch
    %15 = sbr.rel (0) target = $region13
  $region12: #{_lambda_.19} parent=0 // pred_region
    _
  $region13: #{_lambda_.19} parent=0 // pred_fallthru
    _
  // Predicated region
  $region14: #{_lambda_.19} parent=0 // pred_check
    _
  $region15: #{_lambda_.19} parent=0 // pred_check_branch
    %17 = sbr.rel (0) target = $region17
  $region16: #{_lambda_.19} parent=0 // pred_region
    _
  $region17: #{_lambda_.19} parent=0 // pred_fallthru
    _
  // Predicated region
  $region18: #{_lambda_.19} parent=0 // pred_check
    _
  $region19: #{_lambda_.19} parent=0 // pred_check_branch
    %19 = sbr.rel (0) target = $region21
  $region20: #{_lambda_.19} parent=0 // pred_region
    _
  $region21: #{_lambda_.19} parent=0 // pred_fallthru
    _
  %23 = vst [vmem:[#allocation2] sm:$0xff] 0
  %24 = vst [vmem:[#allocation2 + $0x8] sm:$0xff] 0
  %25 = vst [vmem:[#allocation2 + $0x10] sm:$0xff] 0
  %26 = vst [vmem:[#allocation2 + $0x18] sm:$0xff] 0
  %27 = vst [vmem:[#allocation2 + $0x20] sm:$0xff] 0
  %28 = vst [vmem:[#allocation2 + $0x28] sm:$0xff] 0
  %v29 = vlaneseq
  %v30 = vand.u32 %v29, 127
  %v31 = vand.u32 %v30, 7
  %v32 = vand.u32 %v30, 63
  %v33 = vld [vmem:[%s0] sm:$0xff]
  %v34 = vld [vmem:[%s0 + $0xc] sm:$0xff]
  %v35 = vld [vmem:[%s0 + $0x18] sm:$0xff]
  %v36 = vld [vmem:[%s0 + $0x24] sm:$0xff]
  %vm37 = vcmp.ge.s32.totalorder %v31, 1
  %vm38 = vcmp.ge.s32.totalorder %v32, 8
  %vm39 = vmand %vm37, %vm38
  %v40 = vsel %vm39, 1, 0
  %vm41 = vcmp.eq.s32.totalorder %v40, 1
  %vm42 = vmpackc.low %vm41, %vm41
  %v43 = vsel %vm42, 65537, 0
  %44 = vrot.lane.b32.xlu0 %v43, 119
  %v45 = vpop.permute.xlu0 %44
  %v46 = vrot.slane %v45, 4
  %vm47 = vcmask 973824
  %v48 = vsel %vm47, %v46, %v45
  %vm49 = vcmp.ne.s16.totalorder %v48, 0
  %v50 = vsel %vm49, %v33, 0
  %v51 = vsel %vm49, %v34, 0
  %v52 = vsel %vm49, %v35, 0
  %v53 = vsel %vm49, %v36, 0
  %v54 = vsel %vm38, 1, 0
  %vm55 = vcmp.eq.s32.totalorder %v54, 1
  %vm56 = vmpackc.low %vm55, %vm55
  %v57 = vsel %vm56, 65537, 0
  %58 = vrot.lane.b32.xlu0 %v57, 120
  %v59 = vpop.permute.xlu0 %58
  %v60 = vrot.slane %v59, 4
  %vm61 = vcmask 982016
  %v62 = vsel %vm61, %v60, %v59
  %vm63 = vcmp.ne.s16.totalorder %v62, 0
  %v64 = vsel %vm63, %v33, 0
  %v65 = vsel %vm63, %v34, 0
  %v66 = vsel %vm63, %v35, 0
  %v67 = vsel %vm63, %v36, 0
  %vm68 = vcmp.le.s32.totalorder %v31, 6
  %vm69 = vmand %vm68, %vm38
  %v70 = vsel %vm69, 1, 0
  %vm71 = vcmp.eq.s32.totalorder %v70, 1
  %vm72 = vmpackc.low %vm71, %vm71
  %v73 = vsel %vm72, 65537, 0
  %74 = vrot.lane.b32.xlu0 %v73, 121
  %v75 = vpop.permute.xlu0 %74
  %v76 = vrot.slane %v75, 4
  %vm77 = vcmask 990208
  %v78 = vsel %vm77, %v76, %v75
  %vm79 = vcmp.ne.s16.totalorder %v78, 0
  %v80 = vsel %vm79, %v33, 0
  %v81 = vsel %vm79, %v34, 0
  %v82 = vsel %vm79, %v35, 0
  %v83 = vsel %vm79, %v36, 0
  %v84 = vsel %vm37, 1, 0
  %vm85 = vcmp.eq.s32.totalorder %v84, 1
  %vm86 = vmpackc.low %vm85, %vm85
  %v87 = vsel %vm86, 65537, 0
  %88 = vrot.lane.b32.xlu0 %v87, 127
  %v89 = vpop.permute.xlu0 %88
  %v90 = vrot.slane %v89, 4
  %vm91 = vcmask 1039360
  %v92 = vsel %vm91, %v90, %v89
  %vm93 = vcmp.ne.s16.totalorder %v92, 0
  %v94 = vsel %vm93, %v33, 0
  %v95 = vsel %vm93, %v34, 0
  %v96 = vsel %vm93, %v35, 0
  %v97 = vsel %vm93, %v36, 0
  %v98 = vld [vmem:[%s0 + $0x4] sm:$0xf]
  %v99 = vld [vmem:[%s0 + $0x10] sm:$0xf]
  %v100 = vld [vmem:[%s0 + $0x1c] sm:$0xf]
  %v101 = vld [vmem:[%s0 + $0x28] sm:$0xf]
  %v102 = vld [vmem:[%s0 + $0x4] sm:$0xff]
  %v103 = vld [vmem:[%s0 + $0x10] sm:$0xff]
  %v104 = vld [vmem:[%s0 + $0x1c] sm:$0xff]
  %v105 = vld [vmem:[%s0 + $0x28] sm:$0xff]
  %v106 = vsel %vm68, 1, 0
  %vm107 = vcmp.eq.s32.totalorder %v106, 1
  %vm108 = vmpackc.low %vm107, %vm107
  %v109 = vsel %vm108, 65537, 0
  %110 = vrot.lane.b32.xlu0 %v109, 1
  %v111 = vpop.permute.xlu0 %110
  %v112 = vrot.slane %v111, 4
  %vm113 = vcmask 7168
  %v114 = vsel %vm113, %v112, %v111
  %vm115 = vcmp.ne.s16.totalorder %v114, 0
  %v116 = vsel %vm115, %v102, 0
  %v117 = vsel %vm115, %v103, 0
  %v118 = vsel %vm115, %v104, 0
  %v119 = vsel %vm115, %v105, 0
  %vm120 = vcmp.lt.s32.totalorder %v32, 56
  %vm121 = vmand %vm37, %vm120
  %v122 = vsel %vm121, 1, 0
  %vm123 = vcmp.eq.s32.totalorder %v122, 1
  %vm124 = vmpackc.low %vm123, %vm123
  %v125 = vsel %vm124, 65537, 0
  %126 = vrot.lane.b32.xlu0 %v125, 7
  %v127 = vpop.permute.xlu0 %126
  %v128 = vrot.slane %v127, 4
  %vm129 = vcmask 56320
  %v130 = vsel %vm129, %v128, %v127
  %vm131 = vcmp.ne.s16.totalorder %v130, 0
  %v132 = vsel %vm131, %v102, 0
  %v133 = vsel %vm131, %v103, 0
  %v134 = vsel %vm131, %v104, 0
  %v135 = vsel %vm131, %v105, 0
  %v136 = vsel %vm120, 1, 0
  %vm137 = vcmp.eq.s32.totalorder %v136, 1
  %vm138 = vmpackc.low %vm137, %vm137
  %v139 = vsel %vm138, 65537, 0
  %140 = vrot.lane.b32.xlu0 %v139, 8
  %v141 = vpop.permute.xlu0 %140
  %v142 = vrot.slane %v141, 4
  %vm143 = vcmask 64512
  %v144 = vsel %vm143, %v142, %v141
  %vm145 = vcmp.ne.s16.totalorder %v144, 0
  %v146 = vsel %vm145, %v102, 0
  %v147 = vsel %vm145, %v103, 0
  %v148 = vsel %vm145, %v104, 0
  %v149 = vsel %vm145, %v105, 0
  %vm150 = vmand %vm68, %vm120
  %v151 = vsel %vm150, 1, 0
  %vm152 = vcmp.eq.s32.totalorder %v151, 1
  %vm153 = vmpackc.low %vm152, %vm152
  %v154 = vsel %vm153, 65537, 0
  %155 = vrot.lane.b32.xlu0 %v154, 9
  %v156 = vpop.permute.xlu0 %155
  %v157 = vrot.slane %v156, 4
  %vm158 = vcmask 72704
  %v159 = vsel %vm158, %v157, %v156
  %vm160 = vcmp.ne.s16.totalorder %v159, 0
  %v161 = vsel %vm160, %v102, 0
  %v162 = vsel %vm160, %v103, 0
  %v163 = vsel %vm160, %v104, 0
  %v164 = vsel %vm160, %v105, 0
  %v169 = vunpack.c.l.b16 %v50
  %v170 = vunpack.c.h.b16 %v50
  %v171 = vunpack.c.l.b16 %v51
  %v172 = vunpack.c.h.b16 %v51
  %v173 = vunpack.c.l.b16 %v52
  %v174 = vunpack.c.h.b16 %v52
  %v175 = vunpack.c.l.b16 %v53
  %v176 = vunpack.c.h.b16 %v53
  %v177 = vpack.c.b16 %v171, %v169
  %v178 = vpack.c.b16 %v172, %v170
  %v179 = vpack.c.b16 %v175, %v173
  %v180 = vpack.c.b16 %v176, %v174
  %v185 = vunpack.c.l.b16 %v64
  %v186 = vunpack.c.h.b16 %v64
  %v187 = vunpack.c.l.b16 %v65
  %v188 = vunpack.c.h.b16 %v65
  %v189 = vunpack.c.l.b16 %v66
  %v190 = vunpack.c.h.b16 %v66
  %v191 = vunpack.c.l.b16 %v67
  %v192 = vunpack.c.h.b16 %v67
  %v193 = vpack.c.b16 %v187, %v185
  %v194 = vpack.c.b16 %v188, %v186
  %v195 = vpack.c.b16 %v191, %v189
  %v196 = vpack.c.b16 %v192, %v190
  %197 = vrot.lane.b32.xlu0 %v193, 127
  %v198 = vpop.permute.xlu0 %197
  %199 = vrot.lane.b32.xlu0 %v194, 127
  %v200 = vpop.permute.xlu0 %199
  %201 = vrot.lane.b32.xlu0 %v195, 127
  %v202 = vpop.permute.xlu0 %201
  %203 = vrot.lane.b32.xlu0 %v196, 127
  %v204 = vpop.permute.xlu0 %203
  %v205 = vsel %vm91, %v198, %v200
  %v206 = vsel %vm91, %v202, %v204
  %v211 = vunpack.c.l.b16 %v80
  %v212 = vunpack.c.h.b16 %v80
  %v213 = vunpack.c.l.b16 %v81
  %v214 = vunpack.c.h.b16 %v81
  %v215 = vunpack.c.l.b16 %v82
  %v216 = vunpack.c.h.b16 %v82
  %v217 = vunpack.c.l.b16 %v83
  %v218 = vunpack.c.h.b16 %v83
  %v219 = vpack.c.b16 %v213, %v211
  %v220 = vpack.c.b16 %v214, %v212
  %v221 = vpack.c.b16 %v217, %v215
  %v222 = vpack.c.b16 %v218, %v216
  %223 = vrot.lane.b32.xlu0 %v219, 126
  %v224 = vpop.permute.xlu0 %223
  %225 = vrot.lane.b32.xlu0 %v220, 126
  %v226 = vpop.permute.xlu0 %225
  %227 = vrot.lane.b32.xlu0 %v221, 126
  %v228 = vpop.permute.xlu0 %227
  %229 = vrot.lane.b32.xlu0 %v222, 126
  %v230 = vpop.permute.xlu0 %229
  %vm231 = vcmask 1031168
  %v232 = vsel %vm231, %v224, %v226
  %v233 = vsel %vm231, %v228, %v230
  %v238 = vunpack.c.l.b16 %v94
  %v239 = vunpack.c.h.b16 %v94
  %v240 = vunpack.c.l.b16 %v95
  %v241 = vunpack.c.h.b16 %v95
  %v242 = vunpack.c.l.b16 %v96
  %v243 = vunpack.c.h.b16 %v96
  %v244 = vunpack.c.l.b16 %v97
  %v245 = vunpack.c.h.b16 %v97
  %v246 = vpack.c.b16 %v240, %v238
  %v247 = vpack.c.b16 %v241, %v239
  %v248 = vpack.c.b16 %v244, %v242
  %v249 = vpack.c.b16 %v245, %v243
  %250 = vrot.lane.b32.xlu0 %v246, 120
  %v251 = vpop.permute.xlu0 %250
  %252 = vrot.lane.b32.xlu0 %v247, 120
  %v253 = vpop.permute.xlu0 %252
  %254 = vrot.lane.b32.xlu0 %v248, 120
  %v255 = vpop.permute.xlu0 %254
  %256 = vrot.lane.b32.xlu0 %v249, 120
  %v257 = vpop.permute.xlu0 %256
  %v258 = vsel %vm61, %v251, %v253
  %v259 = vsel %vm61, %v255, %v257
  %v264 = vunpack.c.l.b16 %v98
  %v265 = vunpack.c.l.b16 %v99
  %v266 = vunpack.c.l.b16 %v100
  %v267 = vunpack.c.l.b16 %v101
  %v268 = vpack.c.b16 %v265, %v264
  %v269 = vpack.c.b16 %v267, %v266
  %270 = vrot.lane.b32.xlu0 %v268, 119
  %v271 = vpop.permute.xlu0 %270
  %272 = vrot.lane.b32.xlu0 %v269, 119
  %v273 = vpop.permute.xlu0 %272
  %v278 = vunpack.c.l.b16 %v116
  %v279 = vunpack.c.h.b16 %v116
  %v280 = vunpack.c.l.b16 %v117
  %v281 = vunpack.c.h.b16 %v117
  %v282 = vunpack.c.l.b16 %v118
  %v283 = vunpack.c.h.b16 %v118
  %v284 = vunpack.c.l.b16 %v119
  %v285 = vunpack.c.h.b16 %v119
  %v286 = vpack.c.b16 %v280, %v278
  %v287 = vpack.c.b16 %v281, %v279
  %v288 = vpack.c.b16 %v284, %v282
  %v289 = vpack.c.b16 %v285, %v283
  %290 = vrot.lane.b32.xlu0 %v286, 118
  %v291 = vpop.permute.xlu0 %290
  %292 = vrot.lane.b32.xlu0 %v287, 118
  %v293 = vpop.permute.xlu0 %292
  %294 = vrot.lane.b32.xlu0 %v288, 118
  %v295 = vpop.permute.xlu0 %294
  %296 = vrot.lane.b32.xlu0 %v289, 118
  %v297 = vpop.permute.xlu0 %296
  %vm298 = vcmask 965632
  %v299 = vsel %vm298, %v291, %v293
  %v300 = vsel %vm298, %v295, %v297
  %v305 = vunpack.c.l.b16 %v132
  %v306 = vunpack.c.h.b16 %v132
  %v307 = vunpack.c.l.b16 %v133
  %v308 = vunpack.c.h.b16 %v133
  %v309 = vunpack.c.l.b16 %v134
  %v310 = vunpack.c.h.b16 %v134
  %v311 = vunpack.c.l.b16 %v135
  %v312 = vunpack.c.h.b16 %v135
  %v313 = vpack.c.b16 %v307, %v305
  %v314 = vpack.c.b16 %v308, %v306
  %v315 = vpack.c.b16 %v311, %v309
  %v316 = vpack.c.b16 %v312, %v310
  %317 = vrot.lane.b32.xlu0 %v313, 112
  %v318 = vpop.permute.xlu0 %317
  %319 = vrot.lane.b32.xlu0 %v314, 112
  %v320 = vpop.permute.xlu0 %319
  %321 = vrot.lane.b32.xlu0 %v315, 112
  %v322 = vpop.permute.xlu0 %321
  %323 = vrot.lane.b32.xlu0 %v316, 112
  %v324 = vpop.permute.xlu0 %323
  %vm325 = vcmask 916480
  %v326 = vsel %vm325, %v318, %v320
  %v327 = vsel %vm325, %v322, %v324
  %v332 = vunpack.c.l.b16 %v146
  %v333 = vunpack.c.h.b16 %v146
  %v334 = vunpack.c.l.b16 %v147
  %v335 = vunpack.c.h.b16 %v147
  %v336 = vunpack.c.l.b16 %v148
  %v337 = vunpack.c.h.b16 %v148
  %v338 = vunpack.c.l.b16 %v149
  %v339 = vunpack.c.h.b16 %v149
  %v340 = vpack.c.b16 %v334, %v332
  %v341 = vpack.c.b16 %v335, %v333
  %v342 = vpack.c.b16 %v338, %v336
  %v343 = vpack.c.b16 %v339, %v337
  %344 = vrot.lane.b32.xlu0 %v340, 111
  %v345 = vpop.permute.xlu0 %344
  %346 = vrot.lane.b32.xlu0 %v341, 111
  %v347 = vpop.permute.xlu0 %346
  %348 = vrot.lane.b32.xlu0 %v342, 111
  %v349 = vpop.permute.xlu0 %348
  %350 = vrot.lane.b32.xlu0 %v343, 111
  %v351 = vpop.permute.xlu0 %350
  %vm352 = vcmask 908288
  %v353 = vsel %vm352, %v345, %v347
  %v354 = vsel %vm352, %v349, %v351
  %v359 = vunpack.c.l.b16 %v161
  %v360 = vunpack.c.h.b16 %v161
  %v361 = vunpack.c.l.b16 %v162
  %v362 = vunpack.c.h.b16 %v162
  %v363 = vunpack.c.l.b16 %v163
  %v364 = vunpack.c.h.b16 %v163
  %v365 = vunpack.c.l.b16 %v164
  %v366 = vunpack.c.h.b16 %v164
  %v367 = vpack.c.b16 %v361, %v359
  %v368 = vpack.c.b16 %v362, %v360
  %v369 = vpack.c.b16 %v365, %v363
  %v370 = vpack.c.b16 %v366, %v364
  %371 = vrot.lane.b32.xlu0 %v367, 110
  %v372 = vpop.permute.xlu0 %371
  %373 = vrot.lane.b32.xlu0 %v368, 110
  %v374 = vpop.permute.xlu0 %373
  %375 = vrot.lane.b32.xlu0 %v369, 110
  %v376 = vpop.permute.xlu0 %375
  %377 = vrot.lane.b32.xlu0 %v370, 110
  %v378 = vpop.permute.xlu0 %377
  %vm379 = vcmask 900096
  %v380 = vsel %vm379, %v372, %v374
  %v381 = vsel %vm379, %v376, %v378
  %v382 = vld [vmem:[%s1] sm:$0xff]
  %v383 = vld [vmem:[%s1 + $0x8] sm:$0xf]
  %v384 = vld [vmem:[%s1 + $0xc] sm:$0xff]
  %v385 = vld [vmem:[%s1 + $0x14] sm:$0xf]
  %v386 = vld [vmem:[%s1 + $0x18] sm:$0xff]
  %v387 = vld [vmem:[%s1 + $0x20] sm:$0xf]
  %v388 = vld [vmem:[%s1 + $0x24] sm:$0xff]
  %v389 = vld [vmem:[%s1 + $0x2c] sm:$0xf]
  %v390 = vld [vmem:[%s2] sm:$0xff]
  %v391 = vld [vmem:[%s2 + $0x8] sm:$0xff]
  %v392 = vld [vmem:[%s2 + $0x10] sm:$0xff]
  %v393 = vld [vmem:[%s2 + $0x18] sm:$0xff]
  %395 = vset.pattern.permute.xlu0 0
  %396 = vperm.xlu0 %395, %v390
  %v397 = vpop.permute.xlu0 %396
  %400 = vset.pattern.permute.xlu0 0
  %401 = vperm.xlu0 %400, %v391
  %v402 = vpop.permute.xlu0 %401
  %405 = vset.pattern.permute.xlu0 0
  %406 = vperm.xlu0 %405, %v392
  %v407 = vpop.permute.xlu0 %406
  %410 = vset.pattern.permute.xlu0 0
  %411 = vperm.xlu0 %410, %v393
  %v412 = vpop.permute.xlu0 %411
  %v422 = vunpack.c.l.b16 %v382
  %v423 = vunpack.c.h.b16 %v382
  %v424 = vunpack.c.l.b16 %v383
  %v425 = vunpack.c.l.b16 %v384
  %v426 = vunpack.c.h.b16 %v384
  %v427 = vunpack.c.l.b16 %v385
  %v428 = vunpack.c.l.b16 %v386
  %v429 = vunpack.c.h.b16 %v386
  %v430 = vunpack.c.l.b16 %v387
  %v431 = vunpack.c.l.b16 %v388
  %v432 = vunpack.c.h.b16 %v388
  %v433 = vunpack.c.l.b16 %v389
  %v434 = vpack.c.b16 %v425, %v422
  %v435 = vpack.c.b16 %v426, %v423
  %v436 = vpack.c.b16 %v427, %v424
  %v437 = vpack.c.b16 %v431, %v428
  %v438 = vpack.c.b16 %v432, %v429
  %v439 = vpack.c.b16 %v433, %v430
  %444 = vrot.lane.b32.xlu0 %v177, 9
  %v445 = vpop.permute.xlu0 %444
  %446 = vrot.lane.b32.xlu0 %v178, 9
  %v447 = vpop.permute.xlu0 %446
  %448 = vrot.lane.b32.xlu0 %v179, 9
  %v449 = vpop.permute.xlu0 %448
  %450 = vrot.lane.b32.xlu0 %v180, 9
  %v451 = vpop.permute.xlu0 %450
  %452 = vrot.lane.b32.xlu0 %v205, 9
  %v453 = vpop.permute.xlu0 %452
  %454 = vrot.lane.b32.xlu0 %v200, 9
  %v455 = vpop.permute.xlu0 %454
  %456 = vrot.lane.b32.xlu0 %v206, 9
  %v457 = vpop.permute.xlu0 %456
  %458 = vrot.lane.b32.xlu0 %v204, 9
  %v459 = vpop.permute.xlu0 %458
  %460 = vrot.lane.b32.xlu0 %v232, 9
  %v461 = vpop.permute.xlu0 %460
  %462 = vrot.lane.b32.xlu0 %v226, 9
  %v463 = vpop.permute.xlu0 %462
  %464 = vrot.lane.b32.xlu0 %v233, 9
  %v465 = vpop.permute.xlu0 %464
  %466 = vrot.lane.b32.xlu0 %v230, 9
  %v467 = vpop.permute.xlu0 %466
  %468 = vrot.lane.b32.xlu0 %v258, 9
  %v469 = vpop.permute.xlu0 %468
  %470 = vrot.lane.b32.xlu0 %v253, 9
  %v471 = vpop.permute.xlu0 %470
  %472 = vrot.lane.b32.xlu0 %v259, 9
  %v473 = vpop.permute.xlu0 %472
  %474 = vrot.lane.b32.xlu0 %v257, 9
  %v475 = vpop.permute.xlu0 %474
  %476 = vrot.lane.b32.xlu0 %v271, 9
  %v477 = vpop.permute.xlu0 %476
  %478 = vrot.lane.b32.xlu0 %v273, 9
  %v479 = vpop.permute.xlu0 %478
  %480 = vrot.lane.b32.xlu0 %v291, 9
  %v481 = vpop.permute.xlu0 %480
  %482 = vrot.lane.b32.xlu0 %v299, 9
  %v483 = vpop.permute.xlu0 %482
  %484 = vrot.lane.b32.xlu0 %v295, 9
  %v485 = vpop.permute.xlu0 %484
  %486 = vrot.lane.b32.xlu0 %v300, 9
  %v487 = vpop.permute.xlu0 %486
  %488 = vrot.lane.b32.xlu0 %v318, 9
  %v489 = vpop.permute.xlu0 %488
  %490 = vrot.lane.b32.xlu0 %v326, 9
  %v491 = vpop.permute.xlu0 %490
  %492 = vrot.lane.b32.xlu0 %v322, 9
  %v493 = vpop.permute.xlu0 %492
  %494 = vrot.lane.b32.xlu0 %v327, 9
  %v495 = vpop.permute.xlu0 %494
  %496 = vrot.lane.b32.xlu0 %v345, 9
  %v497 = vpop.permute.xlu0 %496
  %498 = vrot.lane.b32.xlu0 %v353, 9
  %v499 = vpop.permute.xlu0 %498
  %500 = vrot.lane.b32.xlu0 %v349, 9
  %v501 = vpop.permute.xlu0 %500
  %502 = vrot.lane.b32.xlu0 %v354, 9
  %v503 = vpop.permute.xlu0 %502
  %504 = vrot.lane.b32.xlu0 %v372, 9
  %v505 = vpop.permute.xlu0 %504
  %506 = vrot.lane.b32.xlu0 %v380, 9
  %v507 = vpop.permute.xlu0 %506
  %508 = vrot.lane.b32.xlu0 %v376, 9
  %v509 = vpop.permute.xlu0 %508
  %510 = vrot.lane.b32.xlu0 %v381, 9
  %v511 = vpop.permute.xlu0 %510
  %v512 = vsel %vm158, %v445, %v447
  %v513 = vsel %vm158, %v449, %v451
  %v514 = vsel %vm158, %v453, %v455
  %v515 = vsel %vm158, %v457, %v459
  %v516 = vsel %vm158, %v461, %v463
  %v517 = vsel %vm158, %v465, %v467
  %v518 = vsel %vm158, %v469, %v471
  %v519 = vsel %vm158, %v473, %v475
  %v520 = vsel %vm158, %v481, %v483
  %v521 = vsel %vm158, %v485, %v487
  %v522 = vsel %vm158, %v489, %v491
  %v523 = vsel %vm158, %v493, %v495
  %v524 = vsel %vm158, %v497, %v499
  %v525 = vsel %vm158, %v501, %v503
  %v526 = vsel %vm158, %v505, %v507
  %v527 = vsel %vm158, %v509, %v511
  %vm546 = vcmask 261120
  %v548 = vsel %vm546, %v436, 0
  %v551 = vsel %vm546, %v439, 0
  %553 = vmatprep.subr.bf16.mxu0 0
  %554 = vmatpush1.bf16.msra.mxu0 %v512
  %555 = vmatprep.subr.bf16.mxu0 0
  %556 = vmatpush1.bf16.msra.mxu0 %v513
  %557 = vmatprep.subr.bf16.mxu0 0
  %558 = vmatpush1.bf16.msra.mxu0 %v514
  %559 = vmatprep.subr.bf16.mxu0 0
  %560 = vmatpush1.bf16.msra.mxu0 %v515
  %561 = vmatprep.subr.bf16.mxu0 0
  %562 = vmatpush1.bf16.msra.mxu0 %v516
  %563 = vmatprep.subr.bf16.mxu0 0
  %564 = vmatpush1.bf16.msra.mxu0 %v517
  %565 = vmatprep.subr.bf16.mxu0 0
  %566 = vmatpush1.bf16.msra.mxu0 %v518
  %567 = vmatprep.subr.bf16.mxu0 0
  %568 = vmatpush1.bf16.msra.mxu0 %v519
  %569 = vmatprep.subr.bf16.mxu0 0
  %570 = vmatpush1.bf16.msra.mxu0 %v477
  %571 = vmatprep.subr.bf16.mxu0 0
  %572 = vmatpush1.bf16.msra.mxu0 %v479
  %573 = vmatprep.subr.bf16.mxu0 0
  %574 = vmatpush1.bf16.msra.mxu0 %v520
  %575 = vmatprep.subr.bf16.mxu0 0
  %576 = vmatpush1.bf16.msra.mxu0 %v521
  %577 = vmatprep.subr.bf16.mxu0 0
  %578 = vmatpush1.bf16.msra.mxu0 %v522
  %579 = vmatprep.subr.bf16.mxu0 0
  %580 = vmatpush1.bf16.msra.mxu0 %v523
  %581 = vmatprep.subr.bf16.mxu0 0
  %582 = vmatpush1.bf16.msra.mxu0 %v524
  %583 = vmatprep.subr.bf16.mxu0 0
  %584 = vmatpush1.bf16.msra.mxu0 %v525
  %585 = vmatprep.mubr.bf16.mxu0 %v435
  %586 = vmatmul.mubr.bf16.gmra.mrb[0].mxu0 %v434
  %v587 = vpop.f32.mrb[0].mxu0
  %v588 = vadd.f32 %v397, %v587
  %v589 = vpop.f32.mrb[0].mxu0
  %v590 = vpop.f32.mrb[0].mxu0
  %v591 = vadd.f32 %v402, %v590
  %v592 = vpop.f32.mrb[0].mxu0
  %593 = vmatprep.mubr.bf16.mxu0 %v438
  %594 = vmatmul.mubr.bf16.gmra.mrb[0].mxu0 %v437
  %v595 = vpop.f32.mrb[0].mxu0
  %v596 = vadd.f32 %v407, %v595
  %v597 = vpop.f32.mrb[0].mxu0
  %v598 = vpop.f32.mrb[0].mxu0
  %v599 = vadd.f32 %v412, %v598
  %v600 = vpop.f32.mrb[0].mxu0
  %601 = vdwg.mxu0
  %602 = vmatprep.subr.bf16.mxu0 0
  %603 = vmatpush1.bf16.msra.mxu0 %v526
  %604 = vmatprep.subr.bf16.mxu0 0
  %605 = vmatpush1.bf16.msra.mxu0 %v527
  %606 = vmatprep.subr.bf16.mxu0 0
  %607 = vmatpush1.bf16.msra.mxu0 0
  %608 = vmatprep.subr.bf16.mxu0 0
  %609 = vmatpush1.bf16.msra.mxu0 0
  %610 = vmatprep.subr.bf16.mxu0 0
  %611 = vmatpush1.bf16.msra.mxu0 0
  %612 = vmatprep.subr.bf16.mxu0 0
  %613 = vmatpush1.bf16.msra.mxu0 0
  %614 = vmatprep.subr.bf16.mxu0 0
  %615 = vmatpush1.bf16.msra.mxu0 0
  %616 = vmatprep.subr.bf16.mxu0 0
  %617 = vmatpush1.bf16.msra.mxu0 0
  %618 = vmatprep.subr.bf16.mxu0 0
  %619 = vmatpush1.bf16.msra.mxu0 0
  %620 = vmatprep.subr.bf16.mxu0 0
  %621 = vmatpush1.bf16.msra.mxu0 0
  %622 = vmatprep.subr.bf16.mxu0 0
  %623 = vmatpush1.bf16.msra.mxu0 0
  %624 = vmatprep.subr.bf16.mxu0 0
  %625 = vmatpush1.bf16.msra.mxu0 0
  %626 = vmatprep.subr.bf16.mxu0 0
  %627 = vmatpush1.bf16.msra.mxu0 0
  %628 = vmatprep.subr.bf16.mxu0 0
  %629 = vmatpush1.bf16.msra.mxu0 0
  %630 = vmatprep.subr.bf16.mxu0 0
  %631 = vmatpush1.bf16.msra.mxu0 0
  %632 = vmatprep.subr.bf16.mxu0 0
  %633 = vmatpush1.bf16.msra.mxu0 0
  %634 = vmatprep.mubr.bf16.mxu0 0
  %635 = vmatmul.mubr.bf16.gmra.mrb[0].mxu0 %v548
  %v636 = vpop.f32.mrb[0].mxu0
  %v637 = vadd.f32 %v588, %v636
  %v638 = vpop.f32.mrb[0].mxu0
  %v639 = vpop.f32.mrb[0].mxu0
  %v640 = vadd.f32 %v591, %v639
  %v641 = vpop.f32.mrb[0].mxu0
  %642 = vmatprep.mubr.bf16.mxu0 0
  %643 = vmatmul.mubr.bf16.gmra.mrb[0].mxu0 %v551
  %v644 = vpop.f32.mrb[0].mxu0
  %v645 = vadd.f32 %v596, %v644
  %v646 = vpop.f32.mrb[0].mxu0
  %v647 = vpop.f32.mrb[0].mxu0
  %v648 = vadd.f32 %v599, %v647
  %v649 = vpop.f32.mrb[0].mxu0
  %650 = vdwg.mxu0
  %v651 = vmax.f32 %v637, 0.0
  %v652 = vmax.f32 %v640, 0.0
  %v653 = vmax.f32 %v645, 0.0
  %v654 = vmax.f32 %v648, 0.0
  %v655 = vpack.c.bf16 %v652, %v651
  %v656 = vpack.c.bf16 %v654, %v653
  %657 = vst [vmem:[#allocation2 + $0x8] sm:$0xff] %v655
  %658 = vst [vmem:[#allocation2 + $0x20] sm:$0xff] %v656
  %v659 = vld [vmem:[#allocation2] sm:$0xff]
  %v660 = vld [vmem:[#allocation2 + $0x8] sm:$0xff]
  %v661 = vld [vmem:[#allocation2 + $0x18] sm:$0xff]
  %v662 = vld [vmem:[#allocation2 + $0x20] sm:$0xff]
  %v663 = vlaneseq
  %v664 = vshrl.u32 %v663, 7
  %v665 = vsub.s32 0, %v664
  %v666 = vrot.slane %v43, %v665
  %667 = vrot.lane.b32.xlu0 %v666, 119
  %v668 = vpop.permute.xlu0 %667
  %vm669 = vcmp.ne.s16.totalorder %v668, 0
  %v670 = vsel %vm669, %v659, 0
  %v671 = vsel %vm669, %v660, 0
  %v672 = vsel %vm669, %v661, 0
  %v673 = vsel %vm669, %v662, 0
  %v674 = vlaneseq
  %v675 = vshrl.u32 %v674, 7
  %v676 = vsub.s32 0, %v675
  %v677 = vrot.slane %v57, %v676
  %678 = vrot.lane.b32.xlu0 %v677, 120
  %v679 = vpop.permute.xlu0 %678
  %vm680 = vcmp.ne.s16.totalorder %v679, 0
  %v681 = vsel %vm680, %v659, 0
  %v682 = vsel %vm680, %v660, 0
  %v683 = vsel %vm680, %v661, 0
  %v684 = vsel %vm680, %v662, 0
  %v685 = vlaneseq
  %v686 = vshrl.u32 %v685, 7
  %v687 = vsub.s32 0, %v686
  %v688 = vrot.slane %v73, %v687
  %689 = vrot.lane.b32.xlu0 %v688, 121
  %v690 = vpop.permute.xlu0 %689
  %vm691 = vcmp.ne.s16.totalorder %v690, 0
  %v692 = vsel %vm691, %v659, 0
  %v693 = vsel %vm691, %v660, 0
  %v694 = vsel %vm691, %v661, 0
  %v695 = vsel %vm691, %v662, 0
  %v696 = vlaneseq
  %v697 = vshrl.u32 %v696, 7
  %v698 = vsub.s32 0, %v697
  %v699 = vrot.slane %v87, %v698
  %700 = vrot.lane.b32.xlu0 %v699, 127
  %v701 = vpop.permute.xlu0 %700
  %vm702 = vcmp.ne.s16.totalorder %v701, 0
  %v703 = vsel %vm702, %v659, 0
  %v704 = vsel %vm702, %v660, 0
  %v705 = vsel %vm702, %v661, 0
  %v706 = vsel %vm702, %v662, 0
  %v707 = vld [vmem:[#allocation2 + $0x8] sm:$0xff]
  %v708 = vld [vmem:[#allocation2 + $0x10] sm:$0xff]
  %v709 = vld [vmem:[#allocation2 + $0x20] sm:$0xff]
  %v710 = vld [vmem:[#allocation2 + $0x28] sm:$0xff]
  %v711 = vlaneseq
  %v712 = vshrl.u32 %v711, 7
  %v713 = vsub.s32 0, %v712
  %v714 = vrot.slane %v109, %v713
  %715 = vrot.lane.b32.xlu0 %v714, 1
  %v716 = vpop.permute.xlu0 %715
  %vm717 = vcmp.ne.s16.totalorder %v716, 0
  %v718 = vsel %vm717, %v707, 0
  %v719 = vsel %vm717, %v708, 0
  %v720 = vsel %vm717, %v709, 0
  %v721 = vsel %vm717, %v710, 0
  %v722 = vlaneseq
  %v723 = vshrl.u32 %v722, 7
  %v724 = vsub.s32 0, %v723
  %v725 = vrot.slane %v125, %v724
  %726 = vrot.lane.b32.xlu0 %v725, 7
  %v727 = vpop.permute.xlu0 %726
  %vm728 = vcmp.ne.s16.totalorder %v727, 0
  %v729 = vsel %vm728, %v707, 0
  %v730 = vsel %vm728, %v708, 0
  %v731 = vsel %vm728, %v709, 0
  %v732 = vsel %vm728, %v710, 0
  %v733 = vlaneseq
  %v734 = vshrl.u32 %v733, 7
  %v735 = vsub.s32 0, %v734
  %v736 = vrot.slane %v139, %v735
  %737 = vrot.lane.b32.xlu0 %v736, 8
  %v738 = vpop.permute.xlu0 %737
  %vm739 = vcmp.ne.s16.totalorder %v738, 0
  %v740 = vsel %vm739, %v707, 0
  %v741 = vsel %vm739, %v708, 0
  %v742 = vsel %vm739, %v709, 0
  %v743 = vsel %vm739, %v710, 0
  %v744 = vlaneseq
  %v745 = vshrl.u32 %v744, 7
  %v746 = vsub.s32 0, %v745
  %v747 = vrot.slane %v154, %v746
  %748 = vrot.lane.b32.xlu0 %v747, 9
  %v749 = vpop.permute.xlu0 %748
  %vm750 = vcmp.ne.s16.totalorder %v749, 0
  %v751 = vsel %vm750, %v707, 0
  %v752 = vsel %vm750, %v708, 0
  %v753 = vsel %vm750, %v709, 0
  %v754 = vsel %vm750, %v710, 0
  %759 = vrot.lane.b32.xlu0 %v681, 127
  %v760 = vpop.permute.xlu0 %759
  %761 = vrot.lane.b32.xlu0 %v682, 127
  %v762 = vpop.permute.xlu0 %761
  %763 = vrot.lane.b32.xlu0 %v683, 127
  %v764 = vpop.permute.xlu0 %763
  %765 = vrot.lane.b32.xlu0 %v684, 127
  %v766 = vpop.permute.xlu0 %765
  %v767 = vsel %vm91, %v760, %v762
  %v768 = vsel %vm91, %v764, %v766
  %773 = vrot.lane.b32.xlu0 %v692, 126
  %v774 = vpop.permute.xlu0 %773
  %775 = vrot.lane.b32.xlu0 %v693, 126
  %v776 = vpop.permute.xlu0 %775
  %777 = vrot.lane.b32.xlu0 %v694, 126
  %v778 = vpop.permute.xlu0 %777
  %779 = vrot.lane.b32.xlu0 %v695, 126
  %v780 = vpop.permute.xlu0 %779
  %v781 = vsel %vm231, %v774, %v776
  %v782 = vsel %vm231, %v778, %v780
  %787 = vrot.lane.b32.xlu0 %v703, 120
  %v788 = vpop.permute.xlu0 %787
  %789 = vrot.lane.b32.xlu0 %v704, 120
  %v790 = vpop.permute.xlu0 %789
  %791 = vrot.lane.b32.xlu0 %v705, 120
  %v792 = vpop.permute.xlu0 %791
  %793 = vrot.lane.b32.xlu0 %v706, 120
  %v794 = vpop.permute.xlu0 %793
  %v795 = vsel %vm61, %v788, %v790
  %v796 = vsel %vm61, %v792, %v794
  %799 = vrot.lane.b32.xlu0 %v660, 119
  %v800 = vpop.permute.xlu0 %799
  %801 = vrot.lane.b32.xlu0 %v662, 119
  %v802 = vpop.permute.xlu0 %801
  %807 = vrot.lane.b32.xlu0 %v718, 118
  %v808 = vpop.permute.xlu0 %807
  %809 = vrot.lane.b32.xlu0 %v719, 118
  %v810 = vpop.permute.xlu0 %809
  %811 = vrot.lane.b32.xlu0 %v720, 118
  %v812 = vpop.permute.xlu0 %811
  %813 = vrot.lane.b32.xlu0 %v721, 118
  %v814 = vpop.permute.xlu0 %813
  %v815 = vsel %vm298, %v808, %v810
  %v816 = vsel %vm298, %v812, %v814
  %821 = vrot.lane.b32.xlu0 %v729, 112
  %v822 = vpop.permute.xlu0 %821
  %823 = vrot.lane.b32.xlu0 %v730, 112
  %v824 = vpop.permute.xlu0 %823
  %825 = vrot.lane.b32.xlu0 %v731, 112
  %v826 = vpop.permute.xlu0 %825
  %827 = vrot.lane.b32.xlu0 %v732, 112
  %v828 = vpop.permute.xlu0 %827
  %v829 = vsel %vm325, %v822, %v824
  %v830 = vsel %vm325, %v826, %v828
  %835 = vrot.lane.b32.xlu0 %v740, 111
  %v836 = vpop.permute.xlu0 %835
  %837 = vrot.lane.b32.xlu0 %v741, 111
  %v838 = vpop.permute.xlu0 %837
  %839 = vrot.lane.b32.xlu0 %v742, 111
  %v840 = vpop.permute.xlu0 %839
  %841 = vrot.lane.b32.xlu0 %v743, 111
  %v842 = vpop.permute.xlu0 %841
  %v843 = vsel %vm352, %v836, %v838
  %v844 = vsel %vm352, %v840, %v842
  %849 = vrot.lane.b32.xlu0 %v751, 110
  %v850 = vpop.permute.xlu0 %849
  %851 = vrot.lane.b32.xlu0 %v752, 110
  %v852 = vpop.permute.xlu0 %851
  %853 = vrot.lane.b32.xlu0 %v753, 110
  %v854 = vpop.permute.xlu0 %853
  %855 = vrot.lane.b32.xlu0 %v754, 110
  %v856 = vpop.permute.xlu0 %855
  %v857 = vsel %vm379, %v850, %v852
  %v858 = vsel %vm379, %v854, %v856
  %v859 = vld [vmem:[%s3] sm:$0xff]
  %v860 = vld [vmem:[%s3 + $0x8] sm:$0xf]
  %v861 = vld [vmem:[%s3 + $0xc] sm:$0xff]
  %v862 = vld [vmem:[%s3 + $0x14] sm:$0xf]
  %v863 = vld [vmem:[%s3 + $0x18] sm:$0xff]
  %v864 = vld [vmem:[%s3 + $0x20] sm:$0xf]
  %v865 = vld [vmem:[%s3 + $0x24] sm:$0xff]
  %v866 = vld [vmem:[%s3 + $0x2c] sm:$0xf]
  %v867 = vld [vmem:[%s4] sm:$0xff]
  %v868 = vld [vmem:[%s4 + $0x8] sm:$0xff]
  %v869 = vld [vmem:[%s4 + $0x10] sm:$0xff]
  %v870 = vld [vmem:[%s4 + $0x18] sm:$0xff]
  %872 = vset.pattern.permute.xlu0 0
  %873 = vperm.xlu0 %872, %v867
  %v874 = vpop.permute.xlu0 %873
  %877 = vset.pattern.permute.xlu0 0
  %878 = vperm.xlu0 %877, %v868
  %v879 = vpop.permute.xlu0 %878
  %882 = vset.pattern.permute.xlu0 0
  %883 = vperm.xlu0 %882, %v869
  %v884 = vpop.permute.xlu0 %883
  %887 = vset.pattern.permute.xlu0 0
  %888 = vperm.xlu0 %887, %v870
  %v889 = vpop.permute.xlu0 %888
  %v899 = vunpack.c.l.b16 %v859
  %v900 = vunpack.c.h.b16 %v859
  %v901 = vunpack.c.l.b16 %v860
  %v902 = vunpack.c.l.b16 %v861
  %v903 = vunpack.c.h.b16 %v861
  %v904 = vunpack.c.l.b16 %v862
  %v905 = vunpack.c.l.b16 %v863
  %v906 = vunpack.c.h.b16 %v863
  %v907 = vunpack.c.l.b16 %v864
  %v908 = vunpack.c.l.b16 %v865
  %v909 = vunpack.c.h.b16 %v865
  %v910 = vunpack.c.l.b16 %v866
  %v911 = vpack.c.b16 %v902, %v899
  %v912 = vpack.c.b16 %v903, %v900
  %v913 = vpack.c.b16 %v904, %v901
  %v914 = vpack.c.b16 %v908, %v905
  %v915 = vpack.c.b16 %v909, %v906
  %v916 = vpack.c.b16 %v910, %v907
  %925 = vrot.lane.b32.xlu0 %v670, 9
  %v926 = vpop.permute.xlu0 %925
  %927 = vrot.lane.b32.xlu0 %v671, 9
  %v928 = vpop.permute.xlu0 %927
  %929 = vrot.lane.b32.xlu0 %v672, 9
  %v930 = vpop.permute.xlu0 %929
  %931 = vrot.lane.b32.xlu0 %v673, 9
  %v932 = vpop.permute.xlu0 %931
  %933 = vrot.lane.b32.xlu0 %v767, 9
  %v934 = vpop.permute.xlu0 %933
  %935 = vrot.lane.b32.xlu0 %v762, 9
  %v936 = vpop.permute.xlu0 %935
  %937 = vrot.lane.b32.xlu0 %v768, 9
  %v938 = vpop.permute.xlu0 %937
  %939 = vrot.lane.b32.xlu0 %v766, 9
  %v940 = vpop.permute.xlu0 %939
  %941 = vrot.lane.b32.xlu0 %v781, 9
  %v942 = vpop.permute.xlu0 %941
  %943 = vrot.lane.b32.xlu0 %v776, 9
  %v944 = vpop.permute.xlu0 %943
  %945 = vrot.lane.b32.xlu0 %v782, 9
  %v946 = vpop.permute.xlu0 %945
  %947 = vrot.lane.b32.xlu0 %v780, 9
  %v948 = vpop.permute.xlu0 %947
  %949 = vrot.lane.b32.xlu0 %v795, 9
  %v950 = vpop.permute.xlu0 %949
  %951 = vrot.lane.b32.xlu0 %v790, 9
  %v952 = vpop.permute.xlu0 %951
  %953 = vrot.lane.b32.xlu0 %v796, 9
  %v954 = vpop.permute.xlu0 %953
  %955 = vrot.lane.b32.xlu0 %v794, 9
  %v956 = vpop.permute.xlu0 %955
  %957 = vrot.lane.b32.xlu0 %v800, 9
  %v958 = vpop.permute.xlu0 %957
  %959 = vrot.lane.b32.xlu0 %v802, 9
  %v960 = vpop.permute.xlu0 %959
  %961 = vrot.lane.b32.xlu0 %v808, 9
  %v962 = vpop.permute.xlu0 %961
  %963 = vrot.lane.b32.xlu0 %v815, 9
  %v964 = vpop.permute.xlu0 %963
  %965 = vrot.lane.b32.xlu0 %v812, 9
  %v966 = vpop.permute.xlu0 %965
  %967 = vrot.lane.b32.xlu0 %v816, 9
  %v968 = vpop.permute.xlu0 %967
  %969 = vrot.lane.b32.xlu0 %v822, 9
  %v970 = vpop.permute.xlu0 %969
  %971 = vrot.lane.b32.xlu0 %v829, 9
  %v972 = vpop.permute.xlu0 %971
  %973 = vrot.lane.b32.xlu0 %v826, 9
  %v974 = vpop.permute.xlu0 %973
  %975 = vrot.lane.b32.xlu0 %v830, 9
  %v976 = vpop.permute.xlu0 %975
  %977 = vrot.lane.b32.xlu0 %v836, 9
  %v978 = vpop.permute.xlu0 %977
  %979 = vrot.lane.b32.xlu0 %v843, 9
  %v980 = vpop.permute.xlu0 %979
  %981 = vrot.lane.b32.xlu0 %v840, 9
  %v982 = vpop.permute.xlu0 %981
  %983 = vrot.lane.b32.xlu0 %v844, 9
  %v984 = vpop.permute.xlu0 %983
  %985 = vrot.lane.b32.xlu0 %v850, 9
  %v986 = vpop.permute.xlu0 %985
  %987 = vrot.lane.b32.xlu0 %v857, 9
  %v988 = vpop.permute.xlu0 %987
  %989 = vrot.lane.b32.xlu0 %v854, 9
  %v990 = vpop.permute.xlu0 %989
  %991 = vrot.lane.b32.xlu0 %v858, 9
  %v992 = vpop.permute.xlu0 %991
  %v993 = vsel %vm158, %v926, %v928
  %v994 = vsel %vm158, %v930, %v932
  %v995 = vsel %vm158, %v934, %v936
  %v996 = vsel %vm158, %v938, %v940
  %v997 = vsel %vm158, %v942, %v944
  %v998 = vsel %vm158, %v946, %v948
  %v999 = vsel %vm158, %v950, %v952
  %v1000 = vsel %vm158, %v954, %v956
  %v1001 = vsel %vm158, %v962, %v964
  %v1002 = vsel %vm158, %v966, %v968
  %v1003 = vsel %vm158, %v970, %v972
  %v1004 = vsel %vm158, %v974, %v976
  %v1005 = vsel %vm158, %v978, %v980
  %v1006 = vsel %vm158, %v982, %v984
  %v1007 = vsel %vm158, %v986, %v988
  %v1008 = vsel %vm158, %v990, %v992
  %v1028 = vsel %vm546, %v913, 0
  %v1031 = vsel %vm546, %v916, 0
  %1033 = vmatprep.subr.bf16.mxu0 0
  %1034 = vmatpush1.bf16.msra.mxu0 %v993
  %1035 = vmatprep.subr.bf16.mxu0 0
  %1036 = vmatpush1.bf16.msra.mxu0 %v994
  %1037 = vmatprep.subr.bf16.mxu0 0
  %1038 = vmatpush1.bf16.msra.mxu0 %v995
  %1039 = vmatprep.subr.bf16.mxu0 0
  %1040 = vmatpush1.bf16.msra.mxu0 %v996
  %1041 = vmatprep.subr.bf16.mxu0 0
  %1042 = vmatpush1.bf16.msra.mxu0 %v997
  %1043 = vmatprep.subr.bf16.mxu0 0
  %1044 = vmatpush1.bf16.msra.mxu0 %v998
  %1045 = vmatprep.subr.bf16.mxu0 0
  %1046 = vmatpush1.bf16.msra.mxu0 %v999
  %1047 = vmatprep.subr.bf16.mxu0 0
  %1048 = vmatpush1.bf16.msra.mxu0 %v1000
  %1049 = vmatprep.subr.bf16.mxu0 0
  %1050 = vmatpush1.bf16.msra.mxu0 %v958
  %1051 = vmatprep.subr.bf16.mxu0 0
  %1052 = vmatpush1.bf16.msra.mxu0 %v960
  %1053 = vmatprep.subr.bf16.mxu0 0
  %1054 = vmatpush1.bf16.msra.mxu0 %v1001
  %1055 = vmatprep.subr.bf16.mxu0 0
  %1056 = vmatpush1.bf16.msra.mxu0 %v1002
  %1057 = vmatprep.subr.bf16.mxu0 0
  %1058 = vmatpush1.bf16.msra.mxu0 %v1003
  %1059 = vmatprep.subr.bf16.mxu0 0
  %1060 = vmatpush1.bf16.msra.mxu0 %v1004
  %1061 = vmatprep.subr.bf16.mxu0 0
  %1062 = vmatpush1.bf16.msra.mxu0 %v1005
  %1063 = vmatprep.subr.bf16.mxu0 0
  %1064 = vmatpush1.bf16.msra.mxu0 %v1006
  %1065 = vmatprep.mubr.bf16.mxu0 %v912
  %1066 = vmatmul.mubr.bf16.gmra.mrb[0].mxu0 %v911
  %v1067 = vpop.f32.mrb[0].mxu0
  %v1068 = vadd.f32 %v874, %v1067
  %v1069 = vpop.f32.mrb[0].mxu0
  %v1070 = vpop.f32.mrb[0].mxu0
  %v1071 = vadd.f32 %v879, %v1070
  %v1072 = vpop.f32.mrb[0].mxu0
  %1073 = vmatprep.mubr.bf16.mxu0 %v915
  %1074 = vmatmul.mubr.bf16.gmra.mrb[0].mxu0 %v914
  %v1075 = vpop.f32.mrb[0].mxu0
  %v1076 = vadd.f32 %v884, %v1075
  %v1077 = vpop.f32.mrb[0].mxu0
  %v1078 = vpop.f32.mrb[0].mxu0
  %v1079 = vadd.f32 %v889, %v1078
  %v1080 = vpop.f32.mrb[0].mxu0
  %1081 = vdwg.mxu0
  %1082 = vmatprep.subr.bf16.mxu0 0
  %1083 = vmatpush1.bf16.msra.mxu0 %v1007
  %1084 = vmatprep.subr.bf16.mxu0 0
  %1085 = vmatpush1.bf16.msra.mxu0 %v1008
  %1086 = vmatprep.subr.bf16.mxu0 0
  %1087 = vmatpush1.bf16.msra.mxu0 0
  %1088 = vmatprep.subr.bf16.mxu0 0
  %1089 = vmatpush1.bf16.msra.mxu0 0
  %1090 = vmatprep.subr.bf16.mxu0 0
  %1091 = vmatpush1.bf16.msra.mxu0 0
  %1092 = vmatprep.subr.bf16.mxu0 0
  %1093 = vmatpush1.bf16.msra.mxu0 0
  %1094 = vmatprep.subr.bf16.mxu0 0
  %1095 = vmatpush1.bf16.msra.mxu0 0
  %1096 = vmatprep.subr.bf16.mxu0 0
  %1097 = vmatpush1.bf16.msra.mxu0 0
  %1098 = vmatprep.subr.bf16.mxu0 0
  %1099 = vmatpush1.bf16.msra.mxu0 0
  %1100 = vmatprep.subr.bf16.mxu0 0
  %1101 = vmatpush1.bf16.msra.mxu0 0
  %1102 = vmatprep.subr.bf16.mxu0 0
  %1103 = vmatpush1.bf16.msra.mxu0 0
  %1104 = vmatprep.subr.bf16.mxu0 0
  %1105 = vmatpush1.bf16.msra.mxu0 0
  %1106 = vmatprep.subr.bf16.mxu0 0
  %1107 = vmatpush1.bf16.msra.mxu0 0
  %1108 = vmatprep.subr.bf16.mxu0 0
  %1109 = vmatpush1.bf16.msra.mxu0 0
  %1110 = vmatprep.subr.bf16.mxu0 0
  %1111 = vmatpush1.bf16.msra.mxu0 0
  %1112 = vmatprep.subr.bf16.mxu0 0
  %1113 = vmatpush1.bf16.msra.mxu0 0
  %1114 = vmatprep.mubr.bf16.mxu0 0
  %1115 = vmatmul.mubr.bf16.gmra.mrb[0].mxu0 %v1028
  %v1116 = vpop.f32.mrb[0].mxu0
  %v1117 = vadd.f32 %v1068, %v1116
  %v1118 = vpop.f32.mrb[0].mxu0
  %v1119 = vpop.f32.mrb[0].mxu0
  %v1120 = vadd.f32 %v1071, %v1119
  %v1121 = vpop.f32.mrb[0].mxu0
  %1122 = vmatprep.mubr.bf16.mxu0 0
  %1123 = vmatmul.mubr.bf16.gmra.mrb[0].mxu0 %v1031
  %v1124 = vpop.f32.mrb[0].mxu0
  %v1125 = vadd.f32 %v1076, %v1124
  %v1126 = vpop.f32.mrb[0].mxu0
  %v1127 = vpop.f32.mrb[0].mxu0
  %v1128 = vadd.f32 %v1079, %v1127
  %v1129 = vpop.f32.mrb[0].mxu0
  %1130 = vdwg.mxu0
  %v1131 = vld [vmem:[%s0 + $0x4] sm:$0xf]
  %v1132 = vld [vmem:[%s0 + $0x10] sm:$0xf]
  %v1133 = vld [vmem:[%s0 + $0x1c] sm:$0xf]
  %v1134 = vld [vmem:[%s0 + $0x28] sm:$0xf]
  %v1135 = vunpack.c.l.bf16 %v1131
  %v1136 = vunpack.c.l.bf16 %v1132
  %v1137 = vunpack.c.l.bf16 %v1133
  %v1138 = vunpack.c.l.bf16 %v1134
  %v1139 = vadd.f32 %v1117, %v1135
  %v1140 = vadd.f32 %v1120, %v1136
  %v1141 = vadd.f32 %v1125, %v1137
  %v1142 = vadd.f32 %v1128, %v1138
  %v1143 = vmax.f32 %v1139, 0.0
  %v1144 = vmax.f32 %v1140, 0.0
  %v1145 = vmax.f32 %v1141, 0.0
  %v1146 = vmax.f32 %v1142, 0.0
  %v1147 = vpack.c.bf16 %v1144, %v1143
  %v1148 = vpack.c.bf16 %v1146, %v1145
  %v1151 = vunpack.c.l.b16 %v1147
  %v1152 = vunpack.c.h.b16 %v1147
  %v1153 = vunpack.c.l.b16 %v1148
  %v1154 = vunpack.c.h.b16 %v1148
  %v1155 = vpack.c.b16 %v1151, %v1151
  %v1156 = vpack.c.b16 %v1152, %v1152
  %v1157 = vpack.c.b16 %v1153, %v1153
  %v1158 = vpack.c.b16 %v1154, %v1154
  %1163 = vst [vmem:[%s5] sm:$0xf] %v1155
  %1164 = vst [vmem:[%s5 + $0x4] sm:$0xf] %v1156
  %1165 = vst [vmem:[%s5 + $0x8] sm:$0xf] %v1157
  %1166 = vst [vmem:[%s5 + $0xc] sm:$0xf] %v1158
  // Predicated region
  $region22: #{_lambda_.19} parent=0 // pred_check
    _
  $region23: #{_lambda_.19} parent=0 // pred_check_branch
    %1168 = sbr.rel (0) target = $region25
  $region24: #{_lambda_.19} parent=0 // pred_region
    _
  $region25: #{_lambda_.19} parent=0 // pred_fallthru
    _
  // Predicated region
  $region26: #{_lambda_.19} parent=0 // pred_check
    _
  $region27: #{_lambda_.19} parent=0 // pred_check_branch
    %1170 = sbr.rel (0) target = $region29
  $region28: #{_lambda_.19} parent=0 // pred_region
    _
  $region29: #{_lambda_.19} parent=0 // pred_fallthru
    _

// kernel: _lambda_.21
$region0: #{_lambda_.21}
  #allocation0 [shape = 'u32[]', space=smem, size = 0x4, offset = 0x4, fixed_abs, tag = 'smem constant byte address 0x4 - core index']
  #allocation1 [shape = 'u32[144,128]{1,0:T(1,128)}', space=vmem, size = 0x12000, scoped, tag = 'internal scratch']
  %s0 = inlined_call_operand.vmem [shape: bf16[64,288], index: 0, kind: input, shape index: {}]
  %s1 = inlined_call_operand.vmem [shape: bf16[288,128], index: 1, kind: input, shape index: {}]
  %s2 = inlined_call_operand.vmem [shape: f32[64,1], index: 2, kind: input, shape index: {}]
  %s3 = inlined_call_operand.vmem [shape: bf16[64,128], index: 3, kind: output, shape index: {}]
  %s4 = sld [smem:[#allocation0]]
  $region22: #{_lambda_.21} parent=0
    _
  %s6 = ssub.s32 1, %s4
  %s7 = scalar_select 0, %s6, %s4
  // Predicated region
  $region2: #{_lambda_.21} parent=0 // pred_check
    _
  $region3: #{_lambda_.21} parent=0 // pred_check_branch
    %9 = sbr.rel (0) target = $region5
  $region4: #{_lambda_.21} parent=0 // pred_region
    _
  $region5: #{_lambda_.21} parent=0 // pred_fallthru
    _
  // Predicated region
  $region6: #{_lambda_.21} parent=0 // pred_check
    _
  $region7: #{_lambda_.21} parent=0 // pred_check_branch
    %11 = sbr.rel (0) target = $region9
  $region8: #{_lambda_.21} parent=0 // pred_region
    _
  $region9: #{_lambda_.21} parent=0 // pred_fallthru
    _
  // Predicated region
  $region10: #{_lambda_.21} parent=0 // pred_check
    _
  $region11: #{_lambda_.21} parent=0 // pred_check_branch
    %13 = sbr.rel (0) target = $region13
  $region12: #{_lambda_.21} parent=0 // pred_region
    _
  $region13: #{_lambda_.21} parent=0 // pred_fallthru
    _
  %v15 = vld [vmem:[%s0] sm:$0xff]
  %v16 = vld [vmem:[%s0 + $0x8] sm:$0xf]
  %v17 = vld [vmem:[%s0 + $0xc] sm:$0xff]
  %v18 = vld [vmem:[%s0 + $0x14] sm:$0xf]
  %v19 = vld [vmem:[%s0 + $0x18] sm:$0xff]
  %v20 = vld [vmem:[%s0 + $0x20] sm:$0xf]
  %v21 = vld [vmem:[%s0 + $0x24] sm:$0xff]
  %v22 = vld [vmem:[%s0 + $0x2c] sm:$0xf]
  %v23 = vld [vmem:[%s0 + $0x30] sm:$0xff]
  %v24 = vld [vmem:[%s0 + $0x38] sm:$0xf]
  %v25 = vld [vmem:[%s0 + $0x3c] sm:$0xff]
  %v26 = vld [vmem:[%s0 + $0x44] sm:$0xf]
  %v27 = vld [vmem:[%s0 + $0x48] sm:$0xff]
  %v28 = vld [vmem:[%s0 + $0x50] sm:$0xf]
  %v29 = vld [vmem:[%s0 + $0x54] sm:$0xff]
  %v30 = vld [vmem:[%s0 + $0x5c] sm:$0xf]
  %v31 = vld [vmem:[%s1] sm:$0xf]
  %v32 = vld [vmem:[%s1 + $0x4] sm:$0xf]
  %v33 = vld [vmem:[%s1 + $0x8] sm:$0xf]
  %v34 = vld [vmem:[%s1 + $0xc] sm:$0xf]
  %v35 = vld [vmem:[%s1 + $0x10] sm:$0xf]
  %v36 = vld [vmem:[%s1 + $0x14] sm:$0xf]
  %v37 = vld [vmem:[%s1 + $0x18] sm:$0xf]
  %v38 = vld [vmem:[%s1 + $0x1c] sm:$0xf]
  %v39 = vld [vmem:[%s1 + $0x20] sm:$0xf]
  %v40 = vld [vmem:[%s1 + $0x24] sm:$0xf]
  %v41 = vld [vmem:[%s1 + $0x28] sm:$0xf]
  %v42 = vld [vmem:[%s1 + $0x2c] sm:$0xf]
  %v43 = vld [vmem:[%s1 + $0x30] sm:$0xf]
  %v44 = vld [vmem:[%s1 + $0x34] sm:$0xf]
  %v45 = vld [vmem:[%s1 + $0x38] sm:$0xf]
  %v46 = vld [vmem:[%s1 + $0x3c] sm:$0xf]
  %v47 = vld [vmem:[%s1 + $0x40] sm:$0xf]
  %v48 = vld [vmem:[%s1 + $0x44] sm:$0xf]
  %v49 = vld [vmem:[%s1 + $0x48] sm:$0xf]
  %v50 = vld [vmem:[%s1 + $0x4c] sm:$0xf]
  %v51 = vld [vmem:[%s1 + $0x50] sm:$0xf]
  %v52 = vld [vmem:[%s1 + $0x54] sm:$0xf]
  %v53 = vld [vmem:[%s1 + $0x58] sm:$0xf]
  %v54 = vld [vmem:[%s1 + $0x5c] sm:$0xf]
  %v55 = vld [vmem:[%s1 + $0x60] sm:$0xf]
  %v56 = vld [vmem:[%s1 + $0x64] sm:$0xf]
  %v57 = vld [vmem:[%s1 + $0x68] sm:$0xf]
  %v58 = vld [vmem:[%s1 + $0x6c] sm:$0xf]
  %v59 = vld [vmem:[%s1 + $0x70] sm:$0xf]
  %v60 = vld [vmem:[%s1 + $0x74] sm:$0xf]
  %v61 = vld [vmem:[%s1 + $0x78] sm:$0xf]
  %v62 = vld [vmem:[%s1 + $0x7c] sm:$0xf]
  %v63 = vld [vmem:[%s1 + $0x80] sm:$0xf]
  %v64 = vld [vmem:[%s1 + $0x84] sm:$0xf]
  %v65 = vld [vmem:[%s1 + $0x88] sm:$0xf]
  %v66 = vld [vmem:[%s1 + $0x8c] sm:$0xf]
  %v67 = vld [vmem:[%s2] sm:$0xff]
  %v68 = vld [vmem:[%s2 + $0x8] sm:$0xff]
  %v69 = vld [vmem:[%s2 + $0x10] sm:$0xff]
  %v70 = vld [vmem:[%s2 + $0x18] sm:$0xff]
  %v71 = vld [vmem:[%s2 + $0x20] sm:$0xff]
  %v72 = vld [vmem:[%s2 + $0x28] sm:$0xff]
  %v73 = vld [vmem:[%s2 + $0x30] sm:$0xff]
  %v74 = vld [vmem:[%s2 + $0x38] sm:$0xff]
  %76 = vset.pattern.permute.xlu0 0
  %77 = vperm.xlu0 %76, %v67
  %v78 = vpop.permute.xlu0 %77
  %81 = vset.pattern.permute.xlu0 0
  %82 = vperm.xlu0 %81, %v68
  %v83 = vpop.permute.xlu0 %82
  %86 = vset.pattern.permute.xlu0 0
  %87 = vperm.xlu0 %86, %v69
  %v88 = vpop.permute.xlu0 %87
  %91 = vset.pattern.permute.xlu0 0
  %92 = vperm.xlu0 %91, %v70
  %v93 = vpop.permute.xlu0 %92
  %96 = vset.pattern.permute.xlu0 0
  %97 = vperm.xlu0 %96, %v71
  %v98 = vpop.permute.xlu0 %97
  %101 = vset.pattern.permute.xlu0 0
  %102 = vperm.xlu0 %101, %v72
  %v103 = vpop.permute.xlu0 %102
  %106 = vset.pattern.permute.xlu0 0
  %107 = vperm.xlu0 %106, %v73
  %v108 = vpop.permute.xlu0 %107
  %111 = vset.pattern.permute.xlu0 0
  %112 = vperm.xlu0 %111, %v74
  %v113 = vpop.permute.xlu0 %112
  %v131 = vunpack.c.l.b16 %v15
  %v132 = vunpack.c.h.b16 %v15
  %v133 = vunpack.c.l.b16 %v16
  %v134 = vunpack.c.l.b16 %v17
  %v135 = vunpack.c.h.b16 %v17
  %v136 = vunpack.c.l.b16 %v18
  %v137 = vunpack.c.l.b16 %v19
  %v138 = vunpack.c.h.b16 %v19
  %v139 = vunpack.c.l.b16 %v20
  %v140 = vunpack.c.l.b16 %v21
  %v141 = vunpack.c.h.b16 %v21
  %v142 = vunpack.c.l.b16 %v22
  %v143 = vunpack.c.l.b16 %v23
  %v144 = vunpack.c.h.b16 %v23
  %v145 = vunpack.c.l.b16 %v24
  %v146 = vunpack.c.l.b16 %v25
  %v147 = vunpack.c.h.b16 %v25
  %v148 = vunpack.c.l.b16 %v26
  %v149 = vunpack.c.l.b16 %v27
  %v150 = vunpack.c.h.b16 %v27
  %v151 = vunpack.c.l.b16 %v28
  %v152 = vunpack.c.l.b16 %v29
  %v153 = vunpack.c.h.b16 %v29
  %v154 = vunpack.c.l.b16 %v30
  %v155 = vpack.c.b16 %v134, %v131
  %v156 = vpack.c.b16 %v135, %v132
  %v157 = vpack.c.b16 %v136, %v133
  %v158 = vpack.c.b16 %v140, %v137
  %v159 = vpack.c.b16 %v141, %v138
  %v160 = vpack.c.b16 %v142, %v139
  %v161 = vpack.c.b16 %v146, %v143
  %v162 = vpack.c.b16 %v147, %v144
  %v163 = vpack.c.b16 %v148, %v145
  %v164 = vpack.c.b16 %v152, %v149
  %v165 = vpack.c.b16 %v153, %v150
  %v166 = vpack.c.b16 %v154, %v151
  %v211 = vunpack.c.l.b16 %v31
  %v212 = vunpack.c.l.b16 %v32
  %v213 = vunpack.c.l.b16 %v33
  %v214 = vunpack.c.l.b16 %v34
  %v215 = vunpack.c.l.b16 %v35
  %v216 = vunpack.c.l.b16 %v36
  %v217 = vunpack.c.l.b16 %v37
  %v218 = vunpack.c.l.b16 %v38
  %v219 = vunpack.c.l.b16 %v39
  %v220 = vunpack.c.l.b16 %v40
  %v221 = vunpack.c.l.b16 %v41
  %v222 = vunpack.c.l.b16 %v42
  %v223 = vunpack.c.l.b16 %v43
  %v224 = vunpack.c.l.b16 %v44
  %v225 = vunpack.c.l.b16 %v45
  %v226 = vunpack.c.l.b16 %v46
  %v227 = vunpack.c.l.b16 %v47
  %v228 = vunpack.c.l.b16 %v48
  %v229 = vunpack.c.l.b16 %v49
  %v230 = vunpack.c.l.b16 %v50
  %v231 = vunpack.c.l.b16 %v51
  %v232 = vunpack.c.l.b16 %v52
  %v233 = vunpack.c.l.b16 %v53
  %v234 = vunpack.c.l.b16 %v54
  %v235 = vunpack.c.l.b16 %v55
  %v236 = vunpack.c.l.b16 %v56
  %v237 = vunpack.c.l.b16 %v57
  %v238 = vunpack.c.l.b16 %v58
  %v239 = vunpack.c.l.b16 %v59
  %v240 = vunpack.c.l.b16 %v60
  %v241 = vunpack.c.l.b16 %v61
  %v242 = vunpack.c.l.b16 %v62
  %v243 = vunpack.c.l.b16 %v63
  %v244 = vunpack.c.l.b16 %v64
  %v245 = vunpack.c.l.b16 %v65
  %v246 = vunpack.c.l.b16 %v66
  %v247 = vpack.c.b16 %v212, %v211
  %v248 = vpack.c.b16 %v214, %v213
  %v249 = vpack.c.b16 %v216, %v215
  %v250 = vpack.c.b16 %v218, %v217
  %v251 = vpack.c.b16 %v220, %v219
  %v252 = vpack.c.b16 %v222, %v221
  %v253 = vpack.c.b16 %v224, %v223
  %v254 = vpack.c.b16 %v226, %v225
  %v255 = vpack.c.b16 %v228, %v227
  %v256 = vpack.c.b16 %v230, %v229
  %v257 = vpack.c.b16 %v232, %v231
  %v258 = vpack.c.b16 %v234, %v233
  %v259 = vpack.c.b16 %v236, %v235
  %v260 = vpack.c.b16 %v238, %v237
  %v261 = vpack.c.b16 %v240, %v239
  %v262 = vpack.c.b16 %v242, %v241
  %v263 = vpack.c.b16 %v244, %v243
  %v264 = vpack.c.b16 %v246, %v245
  %vm283 = vcmask 261120
  %v285 = vsel %vm283, %v157, 0
  %v288 = vsel %vm283, %v160, 0
  %v291 = vsel %vm283, %v163, 0
  %v294 = vsel %vm283, %v166, 0
  %296 = vmatprep.subr.bf16.mxu0 0
  %297 = vmatpush1.bf16.msra.mxu0 %v247
  %298 = vmatprep.subr.bf16.mxu0 0
  %299 = vmatpush1.bf16.msra.mxu0 %v248
  %300 = vmatprep.subr.bf16.mxu0 0
  %301 = vmatpush1.bf16.msra.mxu0 %v249
  %302 = vmatprep.subr.bf16.mxu0 0
  %303 = vmatpush1.bf16.msra.mxu0 %v250
  %304 = vmatprep.subr.bf16.mxu0 0
  %305 = vmatpush1.bf16.msra.mxu0 %v251
  %306 = vmatprep.subr.bf16.mxu0 0
  %307 = vmatpush1.bf16.msra.mxu0 %v252
  %308 = vmatprep.subr.bf16.mxu0 0
  %309 = vmatpush1.bf16.msra.mxu0 %v253
  %310 = vmatprep.subr.bf16.mxu0 0
  %311 = vmatpush1.bf16.msra.mxu0 %v254
  %312 = vmatprep.subr.bf16.mxu0 0
  %313 = vmatpush1.bf16.msra.mxu0 %v255
  %314 = vmatprep.subr.bf16.mxu0 0
  %315 = vmatpush1.bf16.msra.mxu0 %v256
  %316 = vmatprep.subr.bf16.mxu0 0
  %317 = vmatpush1.bf16.msra.mxu0 %v257
  %318 = vmatprep.subr.bf16.mxu0 0
  %319 = vmatpush1.bf16.msra.mxu0 %v258
  %320 = vmatprep.subr.bf16.mxu0 0
  %321 = vmatpush1.bf16.msra.mxu0 %v259
  %322 = vmatprep.subr.bf16.mxu0 0
  %323 = vmatpush1.bf16.msra.mxu0 %v260
  %324 = vmatprep.subr.bf16.mxu0 0
  %325 = vmatpush1.bf16.msra.mxu0 %v261
  %326 = vmatprep.subr.bf16.mxu0 0
  %327 = vmatpush1.bf16.msra.mxu0 %v262
  %328 = vmatprep.mubr.bf16.mxu0 %v156
  %329 = vmatmul.mubr.bf16.gmra.mrb[0].mxu0 %v155
  %v330 = vpop.f32.mrb[0].mxu0
  %v331 = vadd.f32 %v78, %v330
  %v332 = vpop.f32.mrb[0].mxu0
  %v333 = vpop.f32.mrb[0].mxu0
  %v334 = vadd.f32 %v83, %v333
  %v335 = vpop.f32.mrb[0].mxu0
  %336 = vmatprep.mubr.bf16.mxu0 %v159
  %337 = vmatmul.mubr.bf16.gmra.mrb[0].mxu0 %v158
  %v338 = vpop.f32.mrb[0].mxu0
  %v339 = vadd.f32 %v88, %v338
  %v340 = vpop.f32.mrb[0].mxu0
  %v341 = vpop.f32.mrb[0].mxu0
  %v342 = vadd.f32 %v93, %v341
  %v343 = vpop.f32.mrb[0].mxu0
  %344 = vmatprep.mubr.bf16.mxu0 %v162
  %345 = vmatmul.mubr.bf16.gmra.mrb[0].mxu0 %v161
  %v346 = vpop.f32.mrb[0].mxu0
  %v347 = vadd.f32 %v98, %v346
  %v348 = vpop.f32.mrb[0].mxu0
  %v349 = vpop.f32.mrb[0].mxu0
  %v350 = vadd.f32 %v103, %v349
  %v351 = vpop.f32.mrb[0].mxu0
  %352 = vmatprep.mubr.bf16.mxu0 %v165
  %353 = vmatmul.mubr.bf16.gmra.mrb[0].mxu0 %v164
  %v354 = vpop.f32.mrb[0].mxu0
  %v355 = vadd.f32 %v108, %v354
  %v356 = vpop.f32.mrb[0].mxu0
  %v357 = vpop.f32.mrb[0].mxu0
  %v358 = vadd.f32 %v113, %v357
  %v359 = vpop.f32.mrb[0].mxu0
  %360 = vdwg.mxu0
  %361 = vmatprep.subr.bf16.mxu0 0
  %362 = vmatpush1.bf16.msra.mxu0 %v263
  %363 = vmatprep.subr.bf16.mxu0 0
  %364 = vmatpush1.bf16.msra.mxu0 %v264
  %365 = vmatprep.subr.bf16.mxu0 0
  %366 = vmatpush1.bf16.msra.mxu0 0
  %367 = vmatprep.subr.bf16.mxu0 0
  %368 = vmatpush1.bf16.msra.mxu0 0
  %369 = vmatprep.subr.bf16.mxu0 0
  %370 = vmatpush1.bf16.msra.mxu0 0
  %371 = vmatprep.subr.bf16.mxu0 0
  %372 = vmatpush1.bf16.msra.mxu0 0
  %373 = vmatprep.subr.bf16.mxu0 0
  %374 = vmatpush1.bf16.msra.mxu0 0
  %375 = vmatprep.subr.bf16.mxu0 0
  %376 = vmatpush1.bf16.msra.mxu0 0
  %377 = vmatprep.subr.bf16.mxu0 0
  %378 = vmatpush1.bf16.msra.mxu0 0
  %379 = vmatprep.subr.bf16.mxu0 0
  %380 = vmatpush1.bf16.msra.mxu0 0
  %381 = vmatprep.subr.bf16.mxu0 0
  %382 = vmatpush1.bf16.msra.mxu0 0
  %383 = vmatprep.subr.bf16.mxu0 0
  %384 = vmatpush1.bf16.msra.mxu0 0
  %385 = vmatprep.subr.bf16.mxu0 0
  %386 = vmatpush1.bf16.msra.mxu0 0
  %387 = vmatprep.subr.bf16.mxu0 0
  %388 = vmatpush1.bf16.msra.mxu0 0
  %389 = vmatprep.subr.bf16.mxu0 0
  %390 = vmatpush1.bf16.msra.mxu0 0
  %391 = vmatprep.subr.bf16.mxu0 0
  %392 = vmatpush1.bf16.msra.mxu0 0
  %393 = vmatprep.mubr.bf16.mxu0 0
  %394 = vmatmul.mubr.bf16.gmra.mrb[0].mxu0 %v285
  %v395 = vpop.f32.mrb[0].mxu0
  %v396 = vadd.f32 %v331, %v395
  %v397 = vpop.f32.mrb[0].mxu0
  %v398 = vpop.f32.mrb[0].mxu0
  %v399 = vadd.f32 %v334, %v398
  %v400 = vpop.f32.mrb[0].mxu0
  %401 = vmatprep.mubr.bf16.mxu0 0
  %402 = vmatmul.mubr.bf16.gmra.mrb[0].mxu0 %v288
  %v403 = vpop.f32.mrb[0].mxu0
  %v404 = vadd.f32 %v339, %v403
  %v405 = vpop.f32.mrb[0].mxu0
  %v406 = vpop.f32.mrb[0].mxu0
  %v407 = vadd.f32 %v342, %v406
  %v408 = vpop.f32.mrb[0].mxu0
  %409 = vmatprep.mubr.bf16.mxu0 0
  %410 = vmatmul.mubr.bf16.gmra.mrb[0].mxu0 %v291
  %v411 = vpop.f32.mrb[0].mxu0
  %v412 = vadd.f32 %v347, %v411
  %v413 = vpop.f32.mrb[0].mxu0
  %v414 = vpop.f32.mrb[0].mxu0
  %v415 = vadd.f32 %v350, %v414
  %v416 = vpop.f32.mrb[0].mxu0
  %417 = vmatprep.mubr.bf16.mxu0 0
  %418 = vmatmul.mubr.bf16.gmra.mrb[0].mxu0 %v294
  %v419 = vpop.f32.mrb[0].mxu0
  %v420 = vadd.f32 %v355, %v419
  %v421 = vpop.f32.mrb[0].mxu0
  %v422 = vpop.f32.mrb[0].mxu0
  %v423 = vadd.f32 %v358, %v422
  %v424 = vpop.f32.mrb[0].mxu0
  %425 = vdwg.mxu0
  %v426 = vmax.f32 %v396, 0.0
  %v427 = vmax.f32 %v399, 0.0
  %v428 = vmax.f32 %v404, 0.0
  %v429 = vmax.f32 %v407, 0.0
  %v430 = vmax.f32 %v412, 0.0
  %v431 = vmax.f32 %v415, 0.0
  %v432 = vmax.f32 %v420, 0.0
  %v433 = vmax.f32 %v423, 0.0
  %v434 = vlaneseq
  %v435 = vand.u32 %v434, 127
  %s436 = smul.u32 0, 128
  %v437 = vstv %s436
  %v438 = vadd.s32 %v435, %v437
  %vm439 = vcmp.lt.s32.totalorder %v438, 32
  %v440 = vsel %vm439, 1, 0
  %vm441 = vcmp.eq.s32.totalorder %v440, 1
  %v442 = vsel %vm441, %v426, 0.0
  %v443 = vsel %vm441, %v427, 0.0
  %v444 = vsel %vm441, %v428, 0.0
  %v445 = vsel %vm441, %v429, 0.0
  %v446 = vsel %vm441, %v430, 0.0
  %v447 = vsel %vm441, %v431, 0.0
  %v448 = vsel %vm441, %v432, 0.0
  %v449 = vsel %vm441, %v433, 0.0
  %v450 = vpack.c.bf16 %v443, %v442
  %v451 = vpack.c.bf16 %v445, %v444
  %v452 = vpack.c.bf16 %v447, %v446
  %v453 = vpack.c.bf16 %v449, %v448
  %v458 = vunpack.c.l.b16 %v450
  %v459 = vunpack.c.h.b16 %v450
  %v460 = vunpack.c.l.b16 %v451
  %v461 = vunpack.c.h.b16 %v451
  %v462 = vunpack.c.l.b16 %v452
  %v463 = vunpack.c.h.b16 %v452
  %v464 = vunpack.c.l.b16 %v453
  %v465 = vunpack.c.h.b16 %v453
  %v466 = vpack.c.b16 %v458, %v458
  %v467 = vpack.c.b16 %v459, %v459
  %v468 = vpack.c.b16 %v460, %v460
  %v469 = vpack.c.b16 %v461, %v461
  %v470 = vpack.c.b16 %v462, %v462
  %v471 = vpack.c.b16 %v463, %v463
  %v472 = vpack.c.b16 %v464, %v464
  %v473 = vpack.c.b16 %v465, %v465
  %482 = vst [vmem:[%s3] sm:$0xf] %v466
  %483 = vst [vmem:[%s3 + $0x4] sm:$0xf] %v467
  %484 = vst [vmem:[%s3 + $0x8] sm:$0xf] %v468
  %485 = vst [vmem:[%s3 + $0xc] sm:$0xf] %v469
  %486 = vst [vmem:[%s3 + $0x10] sm:$0xf] %v470
  %487 = vst [vmem:[%s3 + $0x14] sm:$0xf] %v471
  %488 = vst [vmem:[%s3 + $0x18] sm:$0xf] %v472
  %489 = vst [vmem:[%s3 + $0x1c] sm:$0xf] %v473
  // Predicated region
  $region14: #{_lambda_.21} parent=0 // pred_check
    _
  $region15: #{_lambda_.21} parent=0 // pred_check_branch
    %491 = sbr.rel (0) target = $region17
  $region16: #{_lambda_.21} parent=0 // pred_region
    _
  $region17: #{_lambda_.21} parent=0 // pred_fallthru
    _
  // Predicated region
  $region18: #{_lambda_.21} parent=0 // pred_check
    _
  $region19: #{_lambda_.21} parent=0 // pred_check_branch
    %493 = sbr.rel (0) target = $region21
  $region20: #{_lambda_.21} parent=0 // pred_region
    _
  $region21: #{_lambda_.21} parent=0 // pred_fallthru
    _

// kernel: _lambda_.25
$region0: #{_lambda_.25}
  #allocation0 [shape = 'u32[]', space=smem, size = 0x4, offset = 0x4, fixed_abs, tag = 'smem constant byte address 0x4 - core index']
  #allocation1 [shape = 'u32[144,128]{1,0:T(1,128)}', space=vmem, size = 0x12000, scoped, tag = 'internal scratch']
  %s0 = inlined_call_operand.vmem [shape: bf16[64,128], index: 0, kind: input, shape index: {}]
  %s1 = inlined_call_operand.vmem [shape: bf16[128,2], index: 1, kind: input, shape index: {}]
  %s2 = inlined_call_operand.vmem [shape: f32[100,64], index: 2, kind: input, shape index: {}]
  %s3 = inlined_call_operand.vmem [shape: f32[100,1], index: 3, kind: input, shape index: {}]
  %s4 = inlined_call_operand.vmem [shape: f32[100,2], index: 4, kind: output, shape index: {}]
  %s5 = sld [smem:[#allocation0]]
  $region26: #{_lambda_.25} parent=0
    _
  %s7 = ssub.s32 1, %s5
  %s8 = scalar_select 0, %s7, %s5
  // Predicated region
  $region2: #{_lambda_.25} parent=0 // pred_check
    _
  $region3: #{_lambda_.25} parent=0 // pred_check_branch
    %10 = sbr.rel (0) target = $region5
  $region4: #{_lambda_.25} parent=0 // pred_region
    _
  $region5: #{_lambda_.25} parent=0 // pred_fallthru
    _
  // Predicated region
  $region6: #{_lambda_.25} parent=0 // pred_check
    _
  $region7: #{_lambda_.25} parent=0 // pred_check_branch
    %12 = sbr.rel (0) target = $region9
  $region8: #{_lambda_.25} parent=0 // pred_region
    _
  $region9: #{_lambda_.25} parent=0 // pred_fallthru
    _
  // Predicated region
  $region10: #{_lambda_.25} parent=0 // pred_check
    _
  $region11: #{_lambda_.25} parent=0 // pred_check_branch
    %14 = sbr.rel (0) target = $region13
  $region12: #{_lambda_.25} parent=0 // pred_region
    _
  $region13: #{_lambda_.25} parent=0 // pred_fallthru
    _
  // Predicated region
  $region14: #{_lambda_.25} parent=0 // pred_check
    _
  $region15: #{_lambda_.25} parent=0 // pred_check_branch
    %16 = sbr.rel (0) target = $region17
  $region16: #{_lambda_.25} parent=0 // pred_region
    _
  $region17: #{_lambda_.25} parent=0 // pred_fallthru
    _
  %v18 = vld [vmem:[%s0] sm:$0xf]
  %v19 = vld [vmem:[%s0 + $0x4] sm:$0xf]
  %v20 = vld [vmem:[%s0 + $0x8] sm:$0xf]
  %v21 = vld [vmem:[%s0 + $0xc] sm:$0xf]
  %v22 = vld [vmem:[%s0 + $0x10] sm:$0xf]
  %v23 = vld [vmem:[%s0 + $0x14] sm:$0xf]
  %v24 = vld [vmem:[%s0 + $0x18] sm:$0xf]
  %v25 = vld [vmem:[%s0 + $0x1c] sm:$0xf]
  %v26 = vld [vmem:[%s1] sm:$0xf]
  %v27 = vld [vmem:[%s1 + $0x4] sm:$0xf]
  %v28 = vld [vmem:[%s1 + $0x8] sm:$0xf]
  %v29 = vld [vmem:[%s1 + $0xc] sm:$0xf]
  %v30 = vld [vmem:[%s1 + $0x10] sm:$0xf]
  %v31 = vld [vmem:[%s1 + $0x14] sm:$0xf]
  %v32 = vld [vmem:[%s1 + $0x18] sm:$0xf]
  %v33 = vld [vmem:[%s1 + $0x1c] sm:$0xf]
  %v34 = vld [vmem:[%s1 + $0x20] sm:$0xf]
  %v35 = vld [vmem:[%s1 + $0x24] sm:$0xf]
  %v36 = vld [vmem:[%s1 + $0x28] sm:$0xf]
  %v37 = vld [vmem:[%s1 + $0x2c] sm:$0xf]
  %v38 = vld [vmem:[%s1 + $0x30] sm:$0xf]
  %v39 = vld [vmem:[%s1 + $0x34] sm:$0xf]
  %v40 = vld [vmem:[%s1 + $0x38] sm:$0xf]
  %v41 = vld [vmem:[%s1 + $0x3c] sm:$0xf]
  %v50 = vunpack.c.l.b16 %v18
  %v51 = vunpack.c.l.b16 %v19
  %v52 = vunpack.c.l.b16 %v20
  %v53 = vunpack.c.l.b16 %v21
  %v54 = vunpack.c.l.b16 %v22
  %v55 = vunpack.c.l.b16 %v23
  %v56 = vunpack.c.l.b16 %v24
  %v57 = vunpack.c.l.b16 %v25
  %v58 = vpack.c.b16 %v51, %v50
  %v59 = vpack.c.b16 %v53, %v52
  %v60 = vpack.c.b16 %v55, %v54
  %v61 = vpack.c.b16 %v57, %v56
  %v82 = vunpack.c.l.b16 %v26
  %v83 = vunpack.c.l.b16 %v27
  %v84 = vunpack.c.l.b16 %v28
  %v85 = vunpack.c.l.b16 %v29
  %v86 = vunpack.c.l.b16 %v30
  %v87 = vunpack.c.l.b16 %v31
  %v88 = vunpack.c.l.b16 %v32
  %v89 = vunpack.c.l.b16 %v33
  %v90 = vunpack.c.l.b16 %v34
  %v91 = vunpack.c.l.b16 %v35
  %v92 = vunpack.c.l.b16 %v36
  %v93 = vunpack.c.l.b16 %v37
  %v94 = vunpack.c.l.b16 %v38
  %v95 = vunpack.c.l.b16 %v39
  %v96 = vunpack.c.l.b16 %v40
  %v97 = vunpack.c.l.b16 %v41
  %v98 = vpack.c.b16 %v83, %v82
  %v99 = vpack.c.b16 %v85, %v84
  %v100 = vpack.c.b16 %v87, %v86
  %v101 = vpack.c.b16 %v89, %v88
  %v102 = vpack.c.b16 %v91, %v90
  %v103 = vpack.c.b16 %v93, %v92
  %v104 = vpack.c.b16 %v95, %v94
  %v105 = vpack.c.b16 %v97, %v96
  %114 = vmatprep.subr.bf16.mxu0 0
  %115 = vmatpush1.bf16.msra.mxu0 %v98
  %116 = vmatprep.subr.bf16.mxu0 0
  %117 = vmatpush1.bf16.msra.mxu0 %v99
  %118 = vmatprep.subr.bf16.mxu0 0
  %119 = vmatpush1.bf16.msra.mxu0 %v100
  %120 = vmatprep.subr.bf16.mxu0 0
  %121 = vmatpush1.bf16.msra.mxu0 %v101
  %122 = vmatprep.subr.bf16.mxu0 0
  %123 = vmatpush1.bf16.msra.mxu0 %v102
  %124 = vmatprep.subr.bf16.mxu0 0
  %125 = vmatpush1.bf16.msra.mxu0 %v103
  %126 = vmatprep.subr.bf16.mxu0 0
  %127 = vmatpush1.bf16.msra.mxu0 %v104
  %128 = vmatprep.subr.bf16.mxu0 0
  %129 = vmatpush1.bf16.msra.mxu0 %v105
  %130 = vmatprep.subr.bf16.mxu0 0
  %131 = vmatpush1.bf16.msra.mxu0 0
  %132 = vmatprep.subr.bf16.mxu0 0
  %133 = vmatpush1.bf16.msra.mxu0 0
  %134 = vmatprep.subr.bf16.mxu0 0
  %135 = vmatpush1.bf16.msra.mxu0 0
  %136 = vmatprep.subr.bf16.mxu0 0
  %137 = vmatpush1.bf16.msra.mxu0 0
  %138 = vmatprep.subr.bf16.mxu0 0
  %139 = vmatpush1.bf16.msra.mxu0 0
  %140 = vmatprep.subr.bf16.mxu0 0
  %141 = vmatpush1.bf16.msra.mxu0 0
  %142 = vmatprep.subr.bf16.mxu0 0
  %143 = vmatpush1.bf16.msra.mxu0 0
  %144 = vmatprep.subr.bf16.mxu0 0
  %145 = vmatpush1.bf16.msra.mxu0 0
  %146 = vmatprep.mubr.bf16.mxu0 0
  %147 = vmatmul.mubr.bf16.gmra.mrb[0].mxu0 %v58
  %v148 = vpop.f32.mrb[0].mxu0
  %v149 = vadd.f32 0.0, %v148
  %v150 = vpop.f32.mrb[0].mxu0
  %v151 = vpop.f32.mrb[0].mxu0
  %v152 = vadd.f32 0.0, %v151
  %v153 = vpop.f32.mrb[0].mxu0
  %154 = vmatprep.mubr.bf16.mxu0 0
  %155 = vmatmul.mubr.bf16.gmra.mrb[0].mxu0 %v59
  %v156 = vpop.f32.mrb[0].mxu0
  %v157 = vadd.f32 0.0, %v156
  %v158 = vpop.f32.mrb[0].mxu0
  %v159 = vpop.f32.mrb[0].mxu0
  %v160 = vadd.f32 0.0, %v159
  %v161 = vpop.f32.mrb[0].mxu0
  %162 = vmatprep.mubr.bf16.mxu0 0
  %163 = vmatmul.mubr.bf16.gmra.mrb[0].mxu0 %v60
  %v164 = vpop.f32.mrb[0].mxu0
  %v165 = vadd.f32 0.0, %v164
  %v166 = vpop.f32.mrb[0].mxu0
  %v167 = vpop.f32.mrb[0].mxu0
  %v168 = vadd.f32 0.0, %v167
  %v169 = vpop.f32.mrb[0].mxu0
  %170 = vmatprep.mubr.bf16.mxu0 0
  %171 = vmatmul.mubr.bf16.gmra.mrb[0].mxu0 %v61
  %v172 = vpop.f32.mrb[0].mxu0
  %v173 = vadd.f32 0.0, %v172
  %v174 = vpop.f32.mrb[0].mxu0
  %v175 = vpop.f32.mrb[0].mxu0
  %v176 = vadd.f32 0.0, %v175
  %v177 = vpop.f32.mrb[0].mxu0
  %178 = vdwg.mxu0
  %v179 = vld [vmem:[%s2] sm:$0xff]
  %v180 = vld [vmem:[%s2 + $0x8] sm:$0xff]
  %v181 = vld [vmem:[%s2 + $0x10] sm:$0xff]
  %v182 = vld [vmem:[%s2 + $0x18] sm:$0xff]
  %v183 = vld [vmem:[%s2 + $0x20] sm:$0xff]
  %v184 = vld [vmem:[%s2 + $0x28] sm:$0xff]
  %v185 = vld [vmem:[%s2 + $0x30] sm:$0xff]
  %v186 = vld [vmem:[%s2 + $0x38] sm:$0xff]
  %v187 = vld [vmem:[%s2 + $0x40] sm:$0xff]
  %v188 = vld [vmem:[%s2 + $0x48] sm:$0xff]
  %v189 = vld [vmem:[%s2 + $0x50] sm:$0xff]
  %v190 = vld [vmem:[%s2 + $0x58] sm:$0xff]
  %v191 = vld [vmem:[%s2 + $0x60] sm:$0xf]
  %v192 = vld [vmem:[%s3] sm:$0xff]
  %v193 = vld [vmem:[%s3 + $0x8] sm:$0xff]
  %v194 = vld [vmem:[%s3 + $0x10] sm:$0xff]
  %v195 = vld [vmem:[%s3 + $0x18] sm:$0xff]
  %v196 = vld [vmem:[%s3 + $0x20] sm:$0xff]
  %v197 = vld [vmem:[%s3 + $0x28] sm:$0xff]
  %v198 = vld [vmem:[%s3 + $0x30] sm:$0xff]
  %v199 = vld [vmem:[%s3 + $0x38] sm:$0xff]
  %v200 = vld [vmem:[%s3 + $0x40] sm:$0xff]
  %v201 = vld [vmem:[%s3 + $0x48] sm:$0xff]
  %v202 = vld [vmem:[%s3 + $0x50] sm:$0xff]
  %v203 = vld [vmem:[%s3 + $0x58] sm:$0xff]
  %v204 = vld [vmem:[%s3 + $0x60] sm:$0xf]
  %206 = vset.pattern.permute.xlu0 0
  %207 = vperm.xlu0 %206, %v192
  %v208 = vpop.permute.xlu0 %207
  %211 = vset.pattern.permute.xlu0 0
  %212 = vperm.xlu0 %211, %v193
  %v213 = vpop.permute.xlu0 %212
  %216 = vset.pattern.permute.xlu0 0
  %217 = vperm.xlu0 %216, %v194
  %v218 = vpop.permute.xlu0 %217
  %221 = vset.pattern.permute.xlu0 0
  %222 = vperm.xlu0 %221, %v195
  %v223 = vpop.permute.xlu0 %222
  %226 = vset.pattern.permute.xlu0 0
  %227 = vperm.xlu0 %226, %v196
  %v228 = vpop.permute.xlu0 %227
  %231 = vset.pattern.permute.xlu0 0
  %232 = vperm.xlu0 %231, %v197
  %v233 = vpop.permute.xlu0 %232
  %236 = vset.pattern.permute.xlu0 0
  %237 = vperm.xlu0 %236, %v198
  %v238 = vpop.permute.xlu0 %237
  %241 = vset.pattern.permute.xlu0 0
  %242 = vperm.xlu0 %241, %v199
  %v243 = vpop.permute.xlu0 %242
  %246 = vset.pattern.permute.xlu0 0
  %247 = vperm.xlu0 %246, %v200
  %v248 = vpop.permute.xlu0 %247
  %251 = vset.pattern.permute.xlu0 0
  %252 = vperm.xlu0 %251, %v201
  %v253 = vpop.permute.xlu0 %252
  %256 = vset.pattern.permute.xlu0 0
  %257 = vperm.xlu0 %256, %v202
  %v258 = vpop.permute.xlu0 %257
  %261 = vset.pattern.permute.xlu0 0
  %262 = vperm.xlu0 %261, %v203
  %v263 = vpop.permute.xlu0 %262
  %266 = vset.pattern.permute.xlu0 0
  %267 = vperm.xlu0 %266, %v204
  %v268 = vpop.permute.xlu0 %267
  %vm270 = vcmask 523264
  %v272 = vsel %vm270, %v179, 0
  %v275 = vsel %vm270, %v180, 0
  %v278 = vsel %vm270, %v181, 0
  %v281 = vsel %vm270, %v182, 0
  %v284 = vsel %vm270, %v183, 0
  %v287 = vsel %vm270, %v184, 0
  %v290 = vsel %vm270, %v185, 0
  %v293 = vsel %vm270, %v186, 0
  %v296 = vsel %vm270, %v187, 0
  %v299 = vsel %vm270, %v188, 0
  %v302 = vsel %vm270, %v189, 0
  %v305 = vsel %vm270, %v190, 0
  %v308 = vsel %vm270, %v191, 0
  %310 = vmatprep.subr.mxu0 0.0
  %311 = vmatpush1.msra.mxu0 %v149
  %312 = vmatprep.subr.mxu0 0.0
  %313 = vmatpush1.msra.mxu0 %v152
  %314 = vmatprep.subr.mxu0 0.0
  %315 = vmatpush1.msra.mxu0 %v157
  %316 = vmatprep.subr.mxu0 0.0
  %317 = vmatpush1.msra.mxu0 %v160
  %318 = vmatprep.subr.mxu0 0.0
  %319 = vmatpush1.msra.mxu0 %v165
  %320 = vmatprep.subr.mxu0 0.0
  %321 = vmatpush1.msra.mxu0 %v168
  %322 = vmatprep.subr.mxu0 0.0
  %323 = vmatpush1.msra.mxu0 %v173
  %324 = vmatprep.subr.mxu0 0.0
  %325 = vmatpush1.msra.mxu0 %v176
  %326 = vmatprep.subr.mxu0 0.0
  %327 = vmatpush1.msra.mxu0 0.0
  %328 = vmatprep.subr.mxu0 0.0
  %329 = vmatpush1.msra.mxu0 0.0
  %330 = vmatprep.subr.mxu0 0.0
  %331 = vmatpush1.msra.mxu0 0.0
  %332 = vmatprep.subr.mxu0 0.0
  %333 = vmatpush1.msra.mxu0 0.0
  %334 = vmatprep.subr.mxu0 0.0
  %335 = vmatpush1.msra.mxu0 0.0
  %336 = vmatprep.subr.mxu0 0.0
  %337 = vmatpush1.msra.mxu0 0.0
  %338 = vmatprep.subr.mxu0 0.0
  %339 = vmatpush1.msra.mxu0 0.0
  %340 = vmatprep.subr.mxu0 0.0
  %341 = vmatpush1.msra.mxu0 0.0
  %342 = vmatprep.subr.mxu0 0.0
  %343 = vmatpush1.msra.mxu0 0.0
  %344 = vmatprep.subr.mxu0 0.0
  %345 = vmatpush1.msra.mxu0 0.0
  %346 = vmatprep.subr.mxu0 0.0
  %347 = vmatpush1.msra.mxu0 0.0
  %348 = vmatprep.subr.mxu0 0.0
  %349 = vmatpush1.msra.mxu0 0.0
  %350 = vmatprep.subr.mxu0 0.0
  %351 = vmatpush1.msra.mxu0 0.0
  %352 = vmatprep.subr.mxu0 0.0
  %353 = vmatpush1.msra.mxu0 0.0
  %354 = vmatprep.subr.mxu0 0.0
  %355 = vmatpush1.msra.mxu0 0.0
  %356 = vmatprep.subr.mxu0 0.0
  %357 = vmatpush1.msra.mxu0 0.0
  %358 = vmatprep.subr.mxu0 0.0
  %359 = vmatpush1.msra.mxu0 0.0
  %360 = vmatprep.subr.mxu0 0.0
  %361 = vmatpush1.msra.mxu0 0.0
  %362 = vmatprep.subr.mxu0 0.0
  %363 = vmatpush1.msra.mxu0 0.0
  %364 = vmatprep.subr.mxu0 0.0
  %365 = vmatpush1.msra.mxu0 0.0
  %366 = vmatprep.subr.mxu0 0.0
  %367 = vmatpush1.msra.mxu0 0.0
  %368 = vmatprep.subr.mxu0 0.0
  %369 = vmatpush1.msra.mxu0 0.0
  %370 = vmatprep.subr.mxu0 0.0
  %371 = vmatpush1.msra.mxu0 0.0
  %372 = vmatprep.subr.mxu0 0.0
  %373 = vmatpush1.msra.mxu0 0.0
  %374 = vmatprep.mubr.f32.mxu0 0.0
  %375 = vmatmul.mubr.f32.gmra.mrb[0].mxu0 %v272
  %v376 = vpop.f32.mrb[0].mxu0
  %v377 = vadd.f32 %v208, %v376
  %v378 = vpop.f32.mrb[0].mxu0
  %379 = vmatprep.mubr.f32.mxu0 0.0
  %380 = vmatmul.mubr.f32.gmra.mrb[0].mxu0 %v275
  %v381 = vpop.f32.mrb[0].mxu0
  %v382 = vadd.f32 %v213, %v381
  %v383 = vpop.f32.mrb[0].mxu0
  %384 = vmatprep.mubr.f32.mxu0 0.0
  %385 = vmatmul.mubr.f32.gmra.mrb[0].mxu0 %v278
  %v386 = vpop.f32.mrb[0].mxu0
  %v387 = vadd.f32 %v218, %v386
  %v388 = vpop.f32.mrb[0].mxu0
  %389 = vmatprep.mubr.f32.mxu0 0.0
  %390 = vmatmul.mubr.f32.gmra.mrb[0].mxu0 %v281
  %v391 = vpop.f32.mrb[0].mxu0
  %v392 = vadd.f32 %v223, %v391
  %v393 = vpop.f32.mrb[0].mxu0
  %394 = vmatprep.mubr.f32.mxu0 0.0
  %395 = vmatmul.mubr.f32.gmra.mrb[0].mxu0 %v284
  %v396 = vpop.f32.mrb[0].mxu0
  %v397 = vadd.f32 %v228, %v396
  %v398 = vpop.f32.mrb[0].mxu0
  %399 = vmatprep.mubr.f32.mxu0 0.0
  %400 = vmatmul.mubr.f32.gmra.mrb[0].mxu0 %v287
  %v401 = vpop.f32.mrb[0].mxu0
  %v402 = vadd.f32 %v233, %v401
  %v403 = vpop.f32.mrb[0].mxu0
  %404 = vmatprep.mubr.f32.mxu0 0.0
  %405 = vmatmul.mubr.f32.gmra.mrb[0].mxu0 %v290
  %v406 = vpop.f32.mrb[0].mxu0
  %v407 = vadd.f32 %v238, %v406
  %v408 = vpop.f32.mrb[0].mxu0
  %409 = vmatprep.mubr.f32.mxu0 0.0
  %410 = vmatmul.mubr.f32.gmra.mrb[0].mxu0 %v293
  %v411 = vpop.f32.mrb[0].mxu0
  %v412 = vadd.f32 %v243, %v411
  %v413 = vpop.f32.mrb[0].mxu0
  %414 = vmatprep.mubr.f32.mxu0 0.0
  %415 = vmatmul.mubr.f32.gmra.mrb[0].mxu0 %v296
  %v416 = vpop.f32.mrb[0].mxu0
  %v417 = vadd.f32 %v248, %v416
  %v418 = vpop.f32.mrb[0].mxu0
  %419 = vmatprep.mubr.f32.mxu0 0.0
  %420 = vmatmul.mubr.f32.gmra.mrb[0].mxu0 %v299
  %v421 = vpop.f32.mrb[0].mxu0
  %v422 = vadd.f32 %v253, %v421
  %v423 = vpop.f32.mrb[0].mxu0
  %424 = vmatprep.mubr.f32.mxu0 0.0
  %425 = vmatmul.mubr.f32.gmra.mrb[0].mxu0 %v302
  %v426 = vpop.f32.mrb[0].mxu0
  %v427 = vadd.f32 %v258, %v426
  %v428 = vpop.f32.mrb[0].mxu0
  %429 = vmatprep.mubr.f32.mxu0 0.0
  %430 = vmatmul.mubr.f32.gmra.mrb[0].mxu0 %v305
  %v431 = vpop.f32.mrb[0].mxu0
  %v432 = vadd.f32 %v263, %v431
  %v433 = vpop.f32.mrb[0].mxu0
  %434 = vmatprep.mubr.f32.mxu0 0.0
  %435 = vmatmul.mubr.f32.gmra.mrb[0].mxu0 %v308
  %v436 = vpop.f32.mrb[0].mxu0
  %v437 = vadd.f32 %v268, %v436
  %v438 = vpop.f32.mrb[0].mxu0
  %439 = vdwg.mxu0
  %vm440 = vcmask 15360
  %441 = vst.msk [vmem:[%s4] sm:$0xff] %vm440, %v377
  %442 = vst.msk [vmem:[%s4 + $0x8] sm:$0xff] %vm440, %v382
  %443 = vst.msk [vmem:[%s4 + $0x10] sm:$0xff] %vm440, %v387
  %444 = vst.msk [vmem:[%s4 + $0x18] sm:$0xff] %vm440, %v392
  %445 = vst.msk [vmem:[%s4 + $0x20] sm:$0xff] %vm440, %v397
  %446 = vst.msk [vmem:[%s4 + $0x28] sm:$0xff] %vm440, %v402
  %447 = vst.msk [vmem:[%s4 + $0x30] sm:$0xff] %vm440, %v407
  %448 = vst.msk [vmem:[%s4 + $0x38] sm:$0xff] %vm440, %v412
  %449 = vst.msk [vmem:[%s4 + $0x40] sm:$0xff] %vm440, %v417
  %450 = vst.msk [vmem:[%s4 + $0x48] sm:$0xff] %vm440, %v422
  %451 = vst.msk [vmem:[%s4 + $0x50] sm:$0xff] %vm440, %v427
  %452 = vst.msk [vmem:[%s4 + $0x58] sm:$0xff] %vm440, %v432
  %vm453 = vcmask 11264
  %454 = vst.msk [vmem:[%s4 + $0x60] sm:$0xf] %vm453, %v437
  // Predicated region
  $region18: #{_lambda_.25} parent=0 // pred_check
    _
  $region19: #{_lambda_.25} parent=0 // pred_check_branch
    %456 = sbr.rel (0) target = $region21
  $region20: #{_lambda_.25} parent=0 // pred_region
    _
  $region21: #{_lambda_.25} parent=0 // pred_fallthru
    _
  // Predicated region
  $region22: #{_lambda_.25} parent=0 // pred_check
    _
  $region23: #{_lambda_.25} parent=0 // pred_check_branch
    %458 = sbr.rel (0) target = $region25
  $region24: #{_lambda_.25} parent=0 // pred_region
    _
  $region25: #{_lambda_.25} parent=0 // pred_fallthru
    _

// kernel: _lambda_.22
$region0: #{_lambda_.22}
  #allocation0 [shape = 'u32[]', space=smem, size = 0x4, offset = 0x4, fixed_abs, tag = 'smem constant byte address 0x4 - core index']
  #allocation1 [shape = 'u32[144,128]{1,0:T(1,128)}', space=vmem, size = 0x12000, scoped, tag = 'internal scratch']
  %s0 = inlined_call_operand.vmem [shape: bf16[64,384], index: 0, kind: input, shape index: {}]
  %s1 = inlined_call_operand.vmem [shape: bf16[64,576], index: 1, kind: input, shape index: {}]
  %s2 = inlined_call_operand.vmem [shape: f32[64,1], index: 2, kind: input, shape index: {}]
  %s3 = inlined_call_operand.vmem [shape: bf16[32,128], index: 3, kind: input, shape index: {}]
  %s4 = inlined_call_operand.vmem [shape: bf16[64,128], index: 4, kind: output, shape index: {}]
  %s5 = sld [smem:[#allocation0]]
  $region26: #{_lambda_.22} parent=0
    _
  %s7 = ssub.s32 1, %s5
  %s8 = scalar_select 0, %s7, %s5
  // Predicated region
  $region2: #{_lambda_.22} parent=0 // pred_check
    _
  $region3: #{_lambda_.22} parent=0 // pred_check_branch
    %10 = sbr.rel (0) target = $region5
  $region4: #{_lambda_.22} parent=0 // pred_region
    _
  $region5: #{_lambda_.22} parent=0 // pred_fallthru
    _
  // Predicated region
  $region6: #{_lambda_.22} parent=0 // pred_check
    _
  $region7: #{_lambda_.22} parent=0 // pred_check_branch
    %12 = sbr.rel (0) target = $region9
  $region8: #{_lambda_.22} parent=0 // pred_region
    _
  $region9: #{_lambda_.22} parent=0 // pred_fallthru
    _
  // Predicated region
  $region10: #{_lambda_.22} parent=0 // pred_check
    _
  $region11: #{_lambda_.22} parent=0 // pred_check_branch
    %14 = sbr.rel (0) target = $region13
  $region12: #{_lambda_.22} parent=0 // pred_region
    _
  $region13: #{_lambda_.22} parent=0 // pred_fallthru
    _
  // Predicated region
  $region14: #{_lambda_.22} parent=0 // pred_check
    _
  $region15: #{_lambda_.22} parent=0 // pred_check_branch
    %16 = sbr.rel (0) target = $region17
  $region16: #{_lambda_.22} parent=0 // pred_region
    _
  $region17: #{_lambda_.22} parent=0 // pred_fallthru
    _
  %v20 = vlaneseq
  %v21 = vand.u32 %v20, 127
  %v22 = vand.u32 %v21, 3
  %v23 = vand.u32 %v21, 15
  %v24 = vld [vmem:[%s0] sm:$0xff]
  %v25 = vld [vmem:[%s0 + $0xc] sm:$0xff]
  %v26 = vld [vmem:[%s0 + $0x18] sm:$0xff]
  %v27 = vld [vmem:[%s0 + $0x24] sm:$0xff]
  %v28 = vld [vmem:[%s0 + $0x30] sm:$0xff]
  %v29 = vld [vmem:[%s0 + $0x3c] sm:$0xff]
  %v30 = vld [vmem:[%s0 + $0x48] sm:$0xff]
  %v31 = vld [vmem:[%s0 + $0x54] sm:$0xff]
  %vm32 = vcmp.ge.s32.totalorder %v22, 1
  %vm33 = vcmp.ge.s32.totalorder %v23, 4
  %vm34 = vmand %vm32, %vm33
  %v35 = vsel %vm34, 1, 0
  %vm36 = vcmp.eq.s32.totalorder %v35, 1
  %vm37 = vmpackc.low %vm36, %vm36
  %v38 = vsel %vm37, 65537, 0
  %39 = vrot.lane.b32.xlu0 %v38, 123
  %v40 = vpop.permute.xlu0 %39
  %v41 = vrot.slane %v40, 4
  %vm42 = vcmask 1006592
  %v43 = vsel %vm42, %v41, %v40
  %vm44 = vcmp.ne.s16.totalorder %v43, 0
  %v45 = vsel %vm44, %v24, 0
  %v46 = vsel %vm44, %v25, 0
  %v47 = vsel %vm44, %v26, 0
  %v48 = vsel %vm44, %v27, 0
  %v49 = vsel %vm44, %v28, 0
  %v50 = vsel %vm44, %v29, 0
  %v51 = vsel %vm44, %v30, 0
  %v52 = vsel %vm44, %v31, 0
  %v53 = vsel %vm33, 1, 0
  %vm54 = vcmp.eq.s32.totalorder %v53, 1
  %vm55 = vmpackc.low %vm54, %vm54
  %v56 = vsel %vm55, 65537, 0
  %57 = vrot.lane.b32.xlu0 %v56, 124
  %v58 = vpop.permute.xlu0 %57
  %v59 = vrot.slane %v58, 4
  %vm60 = vcmask 1014784
  %v61 = vsel %vm60, %v59, %v58
  %vm62 = vcmp.ne.s16.totalorder %v61, 0
  %v63 = vsel %vm62, %v24, 0
  %v64 = vsel %vm62, %v25, 0
  %v65 = vsel %vm62, %v26, 0
  %v66 = vsel %vm62, %v27, 0
  %v67 = vsel %vm62, %v28, 0
  %v68 = vsel %vm62, %v29, 0
  %v69 = vsel %vm62, %v30, 0
  %v70 = vsel %vm62, %v31, 0
  %vm71 = vcmp.le.s32.totalorder %v22, 2
  %vm72 = vmand %vm71, %vm33
  %v73 = vsel %vm72, 1, 0
  %vm74 = vcmp.eq.s32.totalorder %v73, 1
  %vm75 = vmpackc.low %vm74, %vm74
  %v76 = vsel %vm75, 65537, 0
  %77 = vrot.lane.b32.xlu0 %v76, 125
  %v78 = vpop.permute.xlu0 %77
  %v79 = vrot.slane %v78, 4
  %vm80 = vcmask 1022976
  %v81 = vsel %vm80, %v79, %v78
  %vm82 = vcmp.ne.s16.totalorder %v81, 0
  %v83 = vsel %vm82, %v24, 0
  %v84 = vsel %vm82, %v25, 0
  %v85 = vsel %vm82, %v26, 0
  %v86 = vsel %vm82, %v27, 0
  %v87 = vsel %vm82, %v28, 0
  %v88 = vsel %vm82, %v29, 0
  %v89 = vsel %vm82, %v30, 0
  %v90 = vsel %vm82, %v31, 0
  %v91 = vsel %vm32, 1, 0
  %vm92 = vcmp.eq.s32.totalorder %v91, 1
  %vm93 = vmpackc.low %vm92, %vm92
  %v94 = vsel %vm93, 65537, 0
  %95 = vrot.lane.b32.xlu0 %v94, 127
  %v96 = vpop.permute.xlu0 %95
  %v97 = vrot.slane %v96, 4
  %vm98 = vcmask 1039360
  %v99 = vsel %vm98, %v97, %v96
  %vm100 = vcmp.ne.s16.totalorder %v99, 0
  %v101 = vsel %vm100, %v24, 0
  %v102 = vsel %vm100, %v25, 0
  %v103 = vsel %vm100, %v26, 0
  %v104 = vsel %vm100, %v27, 0
  %v105 = vsel %vm100, %v28, 0
  %v106 = vsel %vm100, %v29, 0
  %v107 = vsel %vm100, %v30, 0
  %v108 = vsel %vm100, %v31, 0
  %v109 = vld [vmem:[%s0 + $0x4] sm:$0xf]
  %v110 = vld [vmem:[%s0 + $0x10] sm:$0xf]
  %v111 = vld [vmem:[%s0 + $0x1c] sm:$0xf]
  %v112 = vld [vmem:[%s0 + $0x28] sm:$0xf]
  %v113 = vld [vmem:[%s0 + $0x34] sm:$0xf]
  %v114 = vld [vmem:[%s0 + $0x40] sm:$0xf]
  %v115 = vld [vmem:[%s0 + $0x4c] sm:$0xf]
  %v116 = vld [vmem:[%s0 + $0x58] sm:$0xf]
  %v117 = vld [vmem:[%s0 + $0x4] sm:$0xff]
  %v118 = vld [vmem:[%s0 + $0x10] sm:$0xff]
  %v119 = vld [vmem:[%s0 + $0x1c] sm:$0xff]
  %v120 = vld [vmem:[%s0 + $0x28] sm:$0xff]
  %v121 = vld [vmem:[%s0 + $0x34] sm:$0xff]
  %v122 = vld [vmem:[%s0 + $0x40] sm:$0xff]
  %v123 = vld [vmem:[%s0 + $0x4c] sm:$0xff]
  %v124 = vld [vmem:[%s0 + $0x58] sm:$0xff]
  %v125 = vsel %vm71, 1, 0
  %vm126 = vcmp.eq.s32.totalorder %v125, 1
  %vm127 = vmpackc.low %vm126, %vm126
  %v128 = vsel %vm127, 65537, 0
  %129 = vrot.lane.b32.xlu0 %v128, 1
  %v130 = vpop.permute.xlu0 %129
  %v131 = vrot.slane %v130, 4
  %vm132 = vcmask 7168
  %v133 = vsel %vm132, %v131, %v130
  %vm134 = vcmp.ne.s16.totalorder %v133, 0
  %v135 = vsel %vm134, %v117, 0
  %v136 = vsel %vm134, %v118, 0
  %v137 = vsel %vm134, %v119, 0
  %v138 = vsel %vm134, %v120, 0
  %v139 = vsel %vm134, %v121, 0
  %v140 = vsel %vm134, %v122, 0
  %v141 = vsel %vm134, %v123, 0
  %v142 = vsel %vm134, %v124, 0
  %vm143 = vcmp.lt.s32.totalorder %v23, 12
  %vm144 = vmand %vm32, %vm143
  %v145 = vsel %vm144, 1, 0
  %vm146 = vcmp.eq.s32.totalorder %v145, 1
  %vm147 = vmpackc.low %vm146, %vm146
  %v148 = vsel %vm147, 65537, 0
  %149 = vrot.lane.b32.xlu0 %v148, 3
  %v150 = vpop.permute.xlu0 %149
  %v151 = vrot.slane %v150, 4
  %vm152 = vcmask 23552
  %v153 = vsel %vm152, %v151, %v150
  %vm154 = vcmp.ne.s16.totalorder %v153, 0
  %v155 = vsel %vm154, %v117, 0
  %v156 = vsel %vm154, %v118, 0
  %v157 = vsel %vm154, %v119, 0
  %v158 = vsel %vm154, %v120, 0
  %v159 = vsel %vm154, %v121, 0
  %v160 = vsel %vm154, %v122, 0
  %v161 = vsel %vm154, %v123, 0
  %v162 = vsel %vm154, %v124, 0
  %v163 = vsel %vm143, 1, 0
  %vm164 = vcmp.eq.s32.totalorder %v163, 1
  %vm165 = vmpackc.low %vm164, %vm164
  %v166 = vsel %vm165, 65537, 0
  %167 = vrot.lane.b32.xlu0 %v166, 4
  %v168 = vpop.permute.xlu0 %167
  %v169 = vrot.slane %v168, 4
  %vm170 = vcmask 31744
  %v171 = vsel %vm170, %v169, %v168
  %vm172 = vcmp.ne.s16.totalorder %v171, 0
  %v173 = vsel %vm172, %v117, 0
  %v174 = vsel %vm172, %v118, 0
  %v175 = vsel %vm172, %v119, 0
  %v176 = vsel %vm172, %v120, 0
  %v177 = vsel %vm172, %v121, 0
  %v178 = vsel %vm172, %v122, 0
  %v179 = vsel %vm172, %v123, 0
  %v180 = vsel %vm172, %v124, 0
  %vm181 = vmand %vm71, %vm143
  %v182 = vsel %vm181, 1, 0
  %vm183 = vcmp.eq.s32.totalorder %v182, 1
  %vm184 = vmpackc.low %vm183, %vm183
  %v185 = vsel %vm184, 65537, 0
  %186 = vrot.lane.b32.xlu0 %v185, 5
  %v187 = vpop.permute.xlu0 %186
  %v188 = vrot.slane %v187, 4
  %vm189 = vcmask 39936
  %v190 = vsel %vm189, %v188, %v187
  %vm191 = vcmp.ne.s16.totalorder %v190, 0
  %v192 = vsel %vm191, %v117, 0
  %v193 = vsel %vm191, %v118, 0
  %v194 = vsel %vm191, %v119, 0
  %v195 = vsel %vm191, %v120, 0
  %v196 = vsel %vm191, %v121, 0
  %v197 = vsel %vm191, %v122, 0
  %v198 = vsel %vm191, %v123, 0
  %v199 = vsel %vm191, %v124, 0
  %v208 = vunpack.c.l.b16 %v45
  %v209 = vunpack.c.h.b16 %v45
  %v210 = vunpack.c.l.b16 %v46
  %v211 = vunpack.c.h.b16 %v46
  %v212 = vunpack.c.l.b16 %v47
  %v213 = vunpack.c.h.b16 %v47
  %v214 = vunpack.c.l.b16 %v48
  %v215 = vunpack.c.h.b16 %v48
  %v216 = vunpack.c.l.b16 %v49
  %v217 = vunpack.c.h.b16 %v49
  %v218 = vunpack.c.l.b16 %v50
  %v219 = vunpack.c.h.b16 %v50
  %v220 = vunpack.c.l.b16 %v51
  %v221 = vunpack.c.h.b16 %v51
  %v222 = vunpack.c.l.b16 %v52
  %v223 = vunpack.c.h.b16 %v52
  %v224 = vpack.c.b16 %v210, %v208
  %v225 = vpack.c.b16 %v211, %v209
  %v226 = vpack.c.b16 %v214, %v212
  %v227 = vpack.c.b16 %v215, %v213
  %v228 = vpack.c.b16 %v218, %v216
  %v229 = vpack.c.b16 %v219, %v217
  %v230 = vpack.c.b16 %v222, %v220
  %v231 = vpack.c.b16 %v223, %v221
  %v240 = vunpack.c.l.b16 %v63
  %v241 = vunpack.c.h.b16 %v63
  %v242 = vunpack.c.l.b16 %v64
  %v243 = vunpack.c.h.b16 %v64
  %v244 = vunpack.c.l.b16 %v65
  %v245 = vunpack.c.h.b16 %v65
  %v246 = vunpack.c.l.b16 %v66
  %v247 = vunpack.c.h.b16 %v66
  %v248 = vunpack.c.l.b16 %v67
  %v249 = vunpack.c.h.b16 %v67
  %v250 = vunpack.c.l.b16 %v68
  %v251 = vunpack.c.h.b16 %v68
  %v252 = vunpack.c.l.b16 %v69
  %v253 = vunpack.c.h.b16 %v69
  %v254 = vunpack.c.l.b16 %v70
  %v255 = vunpack.c.h.b16 %v70
  %v256 = vpack.c.b16 %v242, %v240
  %v257 = vpack.c.b16 %v243, %v241
  %v258 = vpack.c.b16 %v246, %v244
  %v259 = vpack.c.b16 %v247, %v245
  %v260 = vpack.c.b16 %v250, %v248
  %v261 = vpack.c.b16 %v251, %v249
  %v262 = vpack.c.b16 %v254, %v252
  %v263 = vpack.c.b16 %v255, %v253
  %264 = vrot.lane.b32.xlu0 %v256, 127
  %v265 = vpop.permute.xlu0 %264
  %266 = vrot.lane.b32.xlu0 %v257, 127
  %v267 = vpop.permute.xlu0 %266
  %268 = vrot.lane.b32.xlu0 %v258, 127
  %v269 = vpop.permute.xlu0 %268
  %270 = vrot.lane.b32.xlu0 %v259, 127
  %v271 = vpop.permute.xlu0 %270
  %272 = vrot.lane.b32.xlu0 %v260, 127
  %v273 = vpop.permute.xlu0 %272
  %274 = vrot.lane.b32.xlu0 %v261, 127
  %v275 = vpop.permute.xlu0 %274
  %276 = vrot.lane.b32.xlu0 %v262, 127
  %v277 = vpop.permute.xlu0 %276
  %278 = vrot.lane.b32.xlu0 %v263, 127
  %v279 = vpop.permute.xlu0 %278
  %v280 = vsel %vm98, %v265, %v267
  %v281 = vsel %vm98, %v269, %v271
  %v282 = vsel %vm98, %v273, %v275
  %v283 = vsel %vm98, %v277, %v279
  %v292 = vunpack.c.l.b16 %v83
  %v293 = vunpack.c.h.b16 %v83
  %v294 = vunpack.c.l.b16 %v84
  %v295 = vunpack.c.h.b16 %v84
  %v296 = vunpack.c.l.b16 %v85
  %v297 = vunpack.c.h.b16 %v85
  %v298 = vunpack.c.l.b16 %v86
  %v299 = vunpack.c.h.b16 %v86
  %v300 = vunpack.c.l.b16 %v87
  %v301 = vunpack.c.h.b16 %v87
  %v302 = vunpack.c.l.b16 %v88
  %v303 = vunpack.c.h.b16 %v88
  %v304 = vunpack.c.l.b16 %v89
  %v305 = vunpack.c.h.b16 %v89
  %v306 = vunpack.c.l.b16 %v90
  %v307 = vunpack.c.h.b16 %v90
  %v308 = vpack.c.b16 %v294, %v292
  %v309 = vpack.c.b16 %v295, %v293
  %v310 = vpack.c.b16 %v298, %v296
  %v311 = vpack.c.b16 %v299, %v297
  %v312 = vpack.c.b16 %v302, %v300
  %v313 = vpack.c.b16 %v303, %v301
  %v314 = vpack.c.b16 %v306, %v304
  %v315 = vpack.c.b16 %v307, %v305
  %316 = vrot.lane.b32.xlu0 %v308, 126
  %v317 = vpop.permute.xlu0 %316
  %318 = vrot.lane.b32.xlu0 %v309, 126
  %v319 = vpop.permute.xlu0 %318
  %320 = vrot.lane.b32.xlu0 %v310, 126
  %v321 = vpop.permute.xlu0 %320
  %322 = vrot.lane.b32.xlu0 %v311, 126
  %v323 = vpop.permute.xlu0 %322
  %324 = vrot.lane.b32.xlu0 %v312, 126
  %v325 = vpop.permute.xlu0 %324
  %326 = vrot.lane.b32.xlu0 %v313, 126
  %v327 = vpop.permute.xlu0 %326
  %328 = vrot.lane.b32.xlu0 %v314, 126
  %v329 = vpop.permute.xlu0 %328
  %330 = vrot.lane.b32.xlu0 %v315, 126
  %v331 = vpop.permute.xlu0 %330
  %vm332 = vcmask 1031168
  %v333 = vsel %vm332, %v317, %v319
  %v334 = vsel %vm332, %v321, %v323
  %v335 = vsel %vm332, %v325, %v327
  %v336 = vsel %vm332, %v329, %v331
  %v345 = vunpack.c.l.b16 %v101
  %v346 = vunpack.c.h.b16 %v101
  %v347 = vunpack.c.l.b16 %v102
  %v348 = vunpack.c.h.b16 %v102
  %v349 = vunpack.c.l.b16 %v103
  %v350 = vunpack.c.h.b16 %v103
  %v351 = vunpack.c.l.b16 %v104
  %v352 = vunpack.c.h.b16 %v104
  %v353 = vunpack.c.l.b16 %v105
  %v354 = vunpack.c.h.b16 %v105
  %v355 = vunpack.c.l.b16 %v106
  %v356 = vunpack.c.h.b16 %v106
  %v357 = vunpack.c.l.b16 %v107
  %v358 = vunpack.c.h.b16 %v107
  %v359 = vunpack.c.l.b16 %v108
  %v360 = vunpack.c.h.b16 %v108
  %v361 = vpack.c.b16 %v347, %v345
  %v362 = vpack.c.b16 %v348, %v346
  %v363 = vpack.c.b16 %v351, %v349
  %v364 = vpack.c.b16 %v352, %v350
  %v365 = vpack.c.b16 %v355, %v353
  %v366 = vpack.c.b16 %v356, %v354
  %v367 = vpack.c.b16 %v359, %v357
  %v368 = vpack.c.b16 %v360, %v358
  %369 = vrot.lane.b32.xlu0 %v361, 124
  %v370 = vpop.permute.xlu0 %369
  %371 = vrot.lane.b32.xlu0 %v362, 124
  %v372 = vpop.permute.xlu0 %371
  %373 = vrot.lane.b32.xlu0 %v363, 124
  %v374 = vpop.permute.xlu0 %373
  %375 = vrot.lane.b32.xlu0 %v364, 124
  %v376 = vpop.permute.xlu0 %375
  %377 = vrot.lane.b32.xlu0 %v365, 124
  %v378 = vpop.permute.xlu0 %377
  %379 = vrot.lane.b32.xlu0 %v366, 124
  %v380 = vpop.permute.xlu0 %379
  %381 = vrot.lane.b32.xlu0 %v367, 124
  %v382 = vpop.permute.xlu0 %381
  %383 = vrot.lane.b32.xlu0 %v368, 124
  %v384 = vpop.permute.xlu0 %383
  %v385 = vsel %vm60, %v370, %v372
  %v386 = vsel %vm60, %v374, %v376
  %v387 = vsel %vm60, %v378, %v380
  %v388 = vsel %vm60, %v382, %v384
  %v397 = vunpack.c.l.b16 %v109
  %v398 = vunpack.c.l.b16 %v110
  %v399 = vunpack.c.l.b16 %v111
  %v400 = vunpack.c.l.b16 %v112
  %v401 = vunpack.c.l.b16 %v113
  %v402 = vunpack.c.l.b16 %v114
  %v403 = vunpack.c.l.b16 %v115
  %v404 = vunpack.c.l.b16 %v116
  %v405 = vpack.c.b16 %v398, %v397
  %v406 = vpack.c.b16 %v400, %v399
  %v407 = vpack.c.b16 %v402, %v401
  %v408 = vpack.c.b16 %v404, %v403
  %409 = vrot.lane.b32.xlu0 %v405, 123
  %v410 = vpop.permute.xlu0 %409
  %411 = vrot.lane.b32.xlu0 %v406, 123
  %v412 = vpop.permute.xlu0 %411
  %413 = vrot.lane.b32.xlu0 %v407, 123
  %v414 = vpop.permute.xlu0 %413
  %415 = vrot.lane.b32.xlu0 %v408, 123
  %v416 = vpop.permute.xlu0 %415
  %v425 = vunpack.c.l.b16 %v135
  %v426 = vunpack.c.h.b16 %v135
  %v427 = vunpack.c.l.b16 %v136
  %v428 = vunpack.c.h.b16 %v136
  %v429 = vunpack.c.l.b16 %v137
  %v430 = vunpack.c.h.b16 %v137
  %v431 = vunpack.c.l.b16 %v138
  %v432 = vunpack.c.h.b16 %v138
  %v433 = vunpack.c.l.b16 %v139
  %v434 = vunpack.c.h.b16 %v139
  %v435 = vunpack.c.l.b16 %v140
  %v436 = vunpack.c.h.b16 %v140
  %v437 = vunpack.c.l.b16 %v141
  %v438 = vunpack.c.h.b16 %v141
  %v439 = vunpack.c.l.b16 %v142
  %v440 = vunpack.c.h.b16 %v142
  %v441 = vpack.c.b16 %v427, %v425
  %v442 = vpack.c.b16 %v428, %v426
  %v443 = vpack.c.b16 %v431, %v429
  %v444 = vpack.c.b16 %v432, %v430
  %v445 = vpack.c.b16 %v435, %v433
  %v446 = vpack.c.b16 %v436, %v434
  %v447 = vpack.c.b16 %v439, %v437
  %v448 = vpack.c.b16 %v440, %v438
  %449 = vrot.lane.b32.xlu0 %v441, 122
  %v450 = vpop.permute.xlu0 %449
  %451 = vrot.lane.b32.xlu0 %v442, 122
  %v452 = vpop.permute.xlu0 %451
  %453 = vrot.lane.b32.xlu0 %v443, 122
  %v454 = vpop.permute.xlu0 %453
  %455 = vrot.lane.b32.xlu0 %v444, 122
  %v456 = vpop.permute.xlu0 %455
  %457 = vrot.lane.b32.xlu0 %v445, 122
  %v458 = vpop.permute.xlu0 %457
  %459 = vrot.lane.b32.xlu0 %v446, 122
  %v460 = vpop.permute.xlu0 %459
  %461 = vrot.lane.b32.xlu0 %v447, 122
  %v462 = vpop.permute.xlu0 %461
  %463 = vrot.lane.b32.xlu0 %v448, 122
  %v464 = vpop.permute.xlu0 %463
  %vm465 = vcmask 998400
  %v466 = vsel %vm465, %v450, %v452
  %v467 = vsel %vm465, %v454, %v456
  %v468 = vsel %vm465, %v458, %v460
  %v469 = vsel %vm465, %v462, %v464
  %v478 = vunpack.c.l.b16 %v155
  %v479 = vunpack.c.h.b16 %v155
  %v480 = vunpack.c.l.b16 %v156
  %v481 = vunpack.c.h.b16 %v156
  %v482 = vunpack.c.l.b16 %v157
  %v483 = vunpack.c.h.b16 %v157
  %v484 = vunpack.c.l.b16 %v158
  %v485 = vunpack.c.h.b16 %v158
  %v486 = vunpack.c.l.b16 %v159
  %v487 = vunpack.c.h.b16 %v159
  %v488 = vunpack.c.l.b16 %v160
  %v489 = vunpack.c.h.b16 %v160
  %v490 = vunpack.c.l.b16 %v161
  %v491 = vunpack.c.h.b16 %v161
  %v492 = vunpack.c.l.b16 %v162
  %v493 = vunpack.c.h.b16 %v162
  %v494 = vpack.c.b16 %v480, %v478
  %v495 = vpack.c.b16 %v481, %v479
  %v496 = vpack.c.b16 %v484, %v482
  %v497 = vpack.c.b16 %v485, %v483
  %v498 = vpack.c.b16 %v488, %v486
  %v499 = vpack.c.b16 %v489, %v487
  %v500 = vpack.c.b16 %v492, %v490
  %v501 = vpack.c.b16 %v493, %v491
  %502 = vrot.lane.b32.xlu0 %v494, 120
  %v503 = vpop.permute.xlu0 %502
  %504 = vrot.lane.b32.xlu0 %v495, 120
  %v505 = vpop.permute.xlu0 %504
  %506 = vrot.lane.b32.xlu0 %v496, 120
  %v507 = vpop.permute.xlu0 %506
  %508 = vrot.lane.b32.xlu0 %v497, 120
  %v509 = vpop.permute.xlu0 %508
  %510 = vrot.lane.b32.xlu0 %v498, 120
  %v511 = vpop.permute.xlu0 %510
  %512 = vrot.lane.b32.xlu0 %v499, 120
  %v513 = vpop.permute.xlu0 %512
  %514 = vrot.lane.b32.xlu0 %v500, 120
  %v515 = vpop.permute.xlu0 %514
  %516 = vrot.lane.b32.xlu0 %v501, 120
  %v517 = vpop.permute.xlu0 %516
  %vm518 = vcmask 982016
  %v519 = vsel %vm518, %v503, %v505
  %v520 = vsel %vm518, %v507, %v509
  %v521 = vsel %vm518, %v511, %v513
  %v522 = vsel %vm518, %v515, %v517
  %v531 = vunpack.c.l.b16 %v173
  %v532 = vunpack.c.h.b16 %v173
  %v533 = vunpack.c.l.b16 %v174
  %v534 = vunpack.c.h.b16 %v174
  %v535 = vunpack.c.l.b16 %v175
  %v536 = vunpack.c.h.b16 %v175
  %v537 = vunpack.c.l.b16 %v176
  %v538 = vunpack.c.h.b16 %v176
  %v539 = vunpack.c.l.b16 %v177
  %v540 = vunpack.c.h.b16 %v177
  %v541 = vunpack.c.l.b16 %v178
  %v542 = vunpack.c.h.b16 %v178
  %v543 = vunpack.c.l.b16 %v179
  %v544 = vunpack.c.h.b16 %v179
  %v545 = vunpack.c.l.b16 %v180
  %v546 = vunpack.c.h.b16 %v180
  %v547 = vpack.c.b16 %v533, %v531
  %v548 = vpack.c.b16 %v534, %v532
  %v549 = vpack.c.b16 %v537, %v535
  %v550 = vpack.c.b16 %v538, %v536
  %v551 = vpack.c.b16 %v541, %v539
  %v552 = vpack.c.b16 %v542, %v540
  %v553 = vpack.c.b16 %v545, %v543
  %v554 = vpack.c.b16 %v546, %v544
  %555 = vrot.lane.b32.xlu0 %v547, 119
  %v556 = vpop.permute.xlu0 %555
  %557 = vrot.lane.b32.xlu0 %v548, 119
  %v558 = vpop.permute.xlu0 %557
  %559 = vrot.lane.b32.xlu0 %v549, 119
  %v560 = vpop.permute.xlu0 %559
  %561 = vrot.lane.b32.xlu0 %v550, 119
  %v562 = vpop.permute.xlu0 %561
  %563 = vrot.lane.b32.xlu0 %v551, 119
  %v564 = vpop.permute.xlu0 %563
  %565 = vrot.lane.b32.xlu0 %v552, 119
  %v566 = vpop.permute.xlu0 %565
  %567 = vrot.lane.b32.xlu0 %v553, 119
  %v568 = vpop.permute.xlu0 %567
  %569 = vrot.lane.b32.xlu0 %v554, 119
  %v570 = vpop.permute.xlu0 %569
  %vm571 = vcmask 973824
  %v572 = vsel %vm571, %v556, %v558
  %v573 = vsel %vm571, %v560, %v562
  %v574 = vsel %vm571, %v564, %v566
  %v575 = vsel %vm571, %v568, %v570
  %v584 = vunpack.c.l.b16 %v192
  %v585 = vunpack.c.h.b16 %v192
  %v586 = vunpack.c.l.b16 %v193
  %v587 = vunpack.c.h.b16 %v193
  %v588 = vunpack.c.l.b16 %v194
  %v589 = vunpack.c.h.b16 %v194
  %v590 = vunpack.c.l.b16 %v195
  %v591 = vunpack.c.h.b16 %v195
  %v592 = vunpack.c.l.b16 %v196
  %v593 = vunpack.c.h.b16 %v196
  %v594 = vunpack.c.l.b16 %v197
  %v595 = vunpack.c.h.b16 %v197
  %v596 = vunpack.c.l.b16 %v198
  %v597 = vunpack.c.h.b16 %v198
  %v598 = vunpack.c.l.b16 %v199
  %v599 = vunpack.c.h.b16 %v199
  %v600 = vpack.c.b16 %v586, %v584
  %v601 = vpack.c.b16 %v587, %v585
  %v602 = vpack.c.b16 %v590, %v588
  %v603 = vpack.c.b16 %v591, %v589
  %v604 = vpack.c.b16 %v594, %v592
  %v605 = vpack.c.b16 %v595, %v593
  %v606 = vpack.c.b16 %v598, %v596
  %v607 = vpack.c.b16 %v599, %v597
  %608 = vrot.lane.b32.xlu0 %v600, 118
  %v609 = vpop.permute.xlu0 %608
  %610 = vrot.lane.b32.xlu0 %v601, 118
  %v611 = vpop.permute.xlu0 %610
  %612 = vrot.lane.b32.xlu0 %v602, 118
  %v613 = vpop.permute.xlu0 %612
  %614 = vrot.lane.b32.xlu0 %v603, 118
  %v615 = vpop.permute.xlu0 %614
  %616 = vrot.lane.b32.xlu0 %v604, 118
  %v617 = vpop.permute.xlu0 %616
  %618 = vrot.lane.b32.xlu0 %v605, 118
  %v619 = vpop.permute.xlu0 %618
  %620 = vrot.lane.b32.xlu0 %v606, 118
  %v621 = vpop.permute.xlu0 %620
  %622 = vrot.lane.b32.xlu0 %v607, 118
  %v623 = vpop.permute.xlu0 %622
  %vm624 = vcmask 965632
  %v625 = vsel %vm624, %v609, %v611
  %v626 = vsel %vm624, %v613, %v615
  %v627 = vsel %vm624, %v617, %v619
  %v628 = vsel %vm624, %v621, %v623
  %v629 = vld [vmem:[%s1] sm:$0xff]
  %v630 = vld [vmem:[%s1 + $0x8] sm:$0xff]
  %v631 = vld [vmem:[%s1 + $0x10] sm:$0xf]
  %v632 = vld [vmem:[%s1 + $0x14] sm:$0xff]
  %v633 = vld [vmem:[%s1 + $0x1c] sm:$0xff]
  %v634 = vld [vmem:[%s1 + $0x24] sm:$0xf]
  %v635 = vld [vmem:[%s1 + $0x28] sm:$0xff]
  %v636 = vld [vmem:[%s1 + $0x30] sm:$0xff]
  %v637 = vld [vmem:[%s1 + $0x38] sm:$0xf]
  %v638 = vld [vmem:[%s1 + $0x3c] sm:$0xff]
  %v639 = vld [vmem:[%s1 + $0x44] sm:$0xff]
  %v640 = vld [vmem:[%s1 + $0x4c] sm:$0xf]
  %v641 = vld [vmem:[%s1 + $0x50] sm:$0xff]
  %v642 = vld [vmem:[%s1 + $0x58] sm:$0xff]
  %v643 = vld [vmem:[%s1 + $0x60] sm:$0xf]
  %v644 = vld [vmem:[%s1 + $0x64] sm:$0xff]
  %v645 = vld [vmem:[%s1 + $0x6c] sm:$0xff]
  %v646 = vld [vmem:[%s1 + $0x74] sm:$0xf]
  %v647 = vld [vmem:[%s1 + $0x78] sm:$0xff]
  %v648 = vld [vmem:[%s1 + $0x80] sm:$0xff]
  %v649 = vld [vmem:[%s1 + $0x88] sm:$0xf]
  %v650 = vld [vmem:[%s1 + $0x8c] sm:$0xff]
  %v651 = vld [vmem:[%s1 + $0x94] sm:$0xff]
  %v652 = vld [vmem:[%s1 + $0x9c] sm:$0xf]
  %v653 = vld [vmem:[%s2] sm:$0xff]
  %v654 = vld [vmem:[%s2 + $0x8] sm:$0xff]
  %v655 = vld [vmem:[%s2 + $0x10] sm:$0xff]
  %v656 = vld [vmem:[%s2 + $0x18] sm:$0xff]
  %v657 = vld [vmem:[%s2 + $0x20] sm:$0xff]
  %v658 = vld [vmem:[%s2 + $0x28] sm:$0xff]
  %v659 = vld [vmem:[%s2 + $0x30] sm:$0xff]
  %v660 = vld [vmem:[%s2 + $0x38] sm:$0xff]
  %662 = vset.pattern.permute.xlu0 0
  %663 = vperm.xlu0 %662, %v653
  %v664 = vpop.permute.xlu0 %663
  %667 = vset.pattern.permute.xlu0 0
  %668 = vperm.xlu0 %667, %v654
  %v669 = vpop.permute.xlu0 %668
  %672 = vset.pattern.permute.xlu0 0
  %673 = vperm.xlu0 %672, %v655
  %v674 = vpop.permute.xlu0 %673
  %677 = vset.pattern.permute.xlu0 0
  %678 = vperm.xlu0 %677, %v656
  %v679 = vpop.permute.xlu0 %678
  %682 = vset.pattern.permute.xlu0 0
  %683 = vperm.xlu0 %682, %v657
  %v684 = vpop.permute.xlu0 %683
  %687 = vset.pattern.permute.xlu0 0
  %688 = vperm.xlu0 %687, %v658
  %v689 = vpop.permute.xlu0 %688
  %692 = vset.pattern.permute.xlu0 0
  %693 = vperm.xlu0 %692, %v659
  %v694 = vpop.permute.xlu0 %693
  %697 = vset.pattern.permute.xlu0 0
  %698 = vperm.xlu0 %697, %v660
  %v699 = vpop.permute.xlu0 %698
  %v725 = vunpack.c.l.b16 %v629
  %v726 = vunpack.c.h.b16 %v629
  %v727 = vunpack.c.l.b16 %v630
  %v728 = vunpack.c.h.b16 %v630
  %v729 = vunpack.c.l.b16 %v631
  %v730 = vunpack.c.l.b16 %v632
  %v731 = vunpack.c.h.b16 %v632
  %v732 = vunpack.c.l.b16 %v633
  %v733 = vunpack.c.h.b16 %v633
  %v734 = vunpack.c.l.b16 %v634
  %v735 = vunpack.c.l.b16 %v635
  %v736 = vunpack.c.h.b16 %v635
  %v737 = vunpack.c.l.b16 %v636
  %v738 = vunpack.c.h.b16 %v636
  %v739 = vunpack.c.l.b16 %v637
  %v740 = vunpack.c.l.b16 %v638
  %v741 = vunpack.c.h.b16 %v638
  %v742 = vunpack.c.l.b16 %v639
  %v743 = vunpack.c.h.b16 %v639
  %v744 = vunpack.c.l.b16 %v640
  %v745 = vunpack.c.l.b16 %v641
  %v746 = vunpack.c.h.b16 %v641
  %v747 = vunpack.c.l.b16 %v642
  %v748 = vunpack.c.h.b16 %v642
  %v749 = vunpack.c.l.b16 %v643
  %v750 = vunpack.c.l.b16 %v644
  %v751 = vunpack.c.h.b16 %v644
  %v752 = vunpack.c.l.b16 %v645
  %v753 = vunpack.c.h.b16 %v645
  %v754 = vunpack.c.l.b16 %v646
  %v755 = vunpack.c.l.b16 %v647
  %v756 = vunpack.c.h.b16 %v647
  %v757 = vunpack.c.l.b16 %v648
  %v758 = vunpack.c.h.b16 %v648
  %v759 = vunpack.c.l.b16 %v649
  %v760 = vunpack.c.l.b16 %v650
  %v761 = vunpack.c.h.b16 %v650
  %v762 = vunpack.c.l.b16 %v651
  %v763 = vunpack.c.h.b16 %v651
  %v764 = vunpack.c.l.b16 %v652
  %v765 = vpack.c.b16 %v730, %v725
  %v766 = vpack.c.b16 %v731, %v726
  %v767 = vpack.c.b16 %v732, %v727
  %v768 = vpack.c.b16 %v733, %v728
  %v769 = vpack.c.b16 %v734, %v729
  %v770 = vpack.c.b16 %v740, %v735
  %v771 = vpack.c.b16 %v741, %v736
  %v772 = vpack.c.b16 %v742, %v737
  %v773 = vpack.c.b16 %v743, %v738
  %v774 = vpack.c.b16 %v744, %v739
  %v775 = vpack.c.b16 %v750, %v745
  %v776 = vpack.c.b16 %v751, %v746
  %v777 = vpack.c.b16 %v752, %v747
  %v778 = vpack.c.b16 %v753, %v748
  %v779 = vpack.c.b16 %v754, %v749
  %v780 = vpack.c.b16 %v760, %v755
  %v781 = vpack.c.b16 %v761, %v756
  %v782 = vpack.c.b16 %v762, %v757
  %v783 = vpack.c.b16 %v763, %v758
  %v784 = vpack.c.b16 %v764, %v759
  %801 = vrot.lane.b32.xlu0 %v224, 5
  %v802 = vpop.permute.xlu0 %801
  %803 = vrot.lane.b32.xlu0 %v225, 5
  %v804 = vpop.permute.xlu0 %803
  %805 = vrot.lane.b32.xlu0 %v226, 5
  %v806 = vpop.permute.xlu0 %805
  %807 = vrot.lane.b32.xlu0 %v227, 5
  %v808 = vpop.permute.xlu0 %807
  %809 = vrot.lane.b32.xlu0 %v228, 5
  %v810 = vpop.permute.xlu0 %809
  %811 = vrot.lane.b32.xlu0 %v229, 5
  %v812 = vpop.permute.xlu0 %811
  %813 = vrot.lane.b32.xlu0 %v230, 5
  %v814 = vpop.permute.xlu0 %813
  %815 = vrot.lane.b32.xlu0 %v231, 5
  %v816 = vpop.permute.xlu0 %815
  %817 = vrot.lane.b32.xlu0 %v280, 5
  %v818 = vpop.permute.xlu0 %817
  %819 = vrot.lane.b32.xlu0 %v267, 5
  %v820 = vpop.permute.xlu0 %819
  %821 = vrot.lane.b32.xlu0 %v281, 5
  %v822 = vpop.permute.xlu0 %821
  %823 = vrot.lane.b32.xlu0 %v271, 5
  %v824 = vpop.permute.xlu0 %823
  %825 = vrot.lane.b32.xlu0 %v282, 5
  %v826 = vpop.permute.xlu0 %825
  %827 = vrot.lane.b32.xlu0 %v275, 5
  %v828 = vpop.permute.xlu0 %827
  %829 = vrot.lane.b32.xlu0 %v283, 5
  %v830 = vpop.permute.xlu0 %829
  %831 = vrot.lane.b32.xlu0 %v279, 5
  %v832 = vpop.permute.xlu0 %831
  %833 = vrot.lane.b32.xlu0 %v333, 5
  %v834 = vpop.permute.xlu0 %833
  %835 = vrot.lane.b32.xlu0 %v319, 5
  %v836 = vpop.permute.xlu0 %835
  %837 = vrot.lane.b32.xlu0 %v334, 5
  %v838 = vpop.permute.xlu0 %837
  %839 = vrot.lane.b32.xlu0 %v323, 5
  %v840 = vpop.permute.xlu0 %839
  %841 = vrot.lane.b32.xlu0 %v335, 5
  %v842 = vpop.permute.xlu0 %841
  %843 = vrot.lane.b32.xlu0 %v327, 5
  %v844 = vpop.permute.xlu0 %843
  %845 = vrot.lane.b32.xlu0 %v336, 5
  %v846 = vpop.permute.xlu0 %845
  %847 = vrot.lane.b32.xlu0 %v331, 5
  %v848 = vpop.permute.xlu0 %847
  %849 = vrot.lane.b32.xlu0 %v385, 5
  %v850 = vpop.permute.xlu0 %849
  %851 = vrot.lane.b32.xlu0 %v372, 5
  %v852 = vpop.permute.xlu0 %851
  %853 = vrot.lane.b32.xlu0 %v386, 5
  %v854 = vpop.permute.xlu0 %853
  %855 = vrot.lane.b32.xlu0 %v376, 5
  %v856 = vpop.permute.xlu0 %855
  %857 = vrot.lane.b32.xlu0 %v387, 5
  %v858 = vpop.permute.xlu0 %857
  %859 = vrot.lane.b32.xlu0 %v380, 5
  %v860 = vpop.permute.xlu0 %859
  %861 = vrot.lane.b32.xlu0 %v388, 5
  %v862 = vpop.permute.xlu0 %861
  %863 = vrot.lane.b32.xlu0 %v384, 5
  %v864 = vpop.permute.xlu0 %863
  %865 = vrot.lane.b32.xlu0 %v410, 5
  %v866 = vpop.permute.xlu0 %865
  %867 = vrot.lane.b32.xlu0 %v412, 5
  %v868 = vpop.permute.xlu0 %867
  %869 = vrot.lane.b32.xlu0 %v414, 5
  %v870 = vpop.permute.xlu0 %869
  %871 = vrot.lane.b32.xlu0 %v416, 5
  %v872 = vpop.permute.xlu0 %871
  %873 = vrot.lane.b32.xlu0 %v450, 5
  %v874 = vpop.permute.xlu0 %873
  %875 = vrot.lane.b32.xlu0 %v466, 5
  %v876 = vpop.permute.xlu0 %875
  %877 = vrot.lane.b32.xlu0 %v454, 5
  %v878 = vpop.permute.xlu0 %877
  %879 = vrot.lane.b32.xlu0 %v467, 5
  %v880 = vpop.permute.xlu0 %879
  %881 = vrot.lane.b32.xlu0 %v458, 5
  %v882 = vpop.permute.xlu0 %881
  %883 = vrot.lane.b32.xlu0 %v468, 5
  %v884 = vpop.permute.xlu0 %883
  %885 = vrot.lane.b32.xlu0 %v462, 5
  %v886 = vpop.permute.xlu0 %885
  %887 = vrot.lane.b32.xlu0 %v469, 5
  %v888 = vpop.permute.xlu0 %887
  %889 = vrot.lane.b32.xlu0 %v503, 5
  %v890 = vpop.permute.xlu0 %889
  %891 = vrot.lane.b32.xlu0 %v519, 5
  %v892 = vpop.permute.xlu0 %891
  %893 = vrot.lane.b32.xlu0 %v507, 5
  %v894 = vpop.permute.xlu0 %893
  %895 = vrot.lane.b32.xlu0 %v520, 5
  %v896 = vpop.permute.xlu0 %895
  %897 = vrot.lane.b32.xlu0 %v511, 5
  %v898 = vpop.permute.xlu0 %897
  %899 = vrot.lane.b32.xlu0 %v521, 5
  %v900 = vpop.permute.xlu0 %899
  %901 = vrot.lane.b32.xlu0 %v515, 5
  %v902 = vpop.permute.xlu0 %901
  %903 = vrot.lane.b32.xlu0 %v522, 5
  %v904 = vpop.permute.xlu0 %903
  %905 = vrot.lane.b32.xlu0 %v556, 5
  %v906 = vpop.permute.xlu0 %905
  %907 = vrot.lane.b32.xlu0 %v572, 5
  %v908 = vpop.permute.xlu0 %907
  %909 = vrot.lane.b32.xlu0 %v560, 5
  %v910 = vpop.permute.xlu0 %909
  %911 = vrot.lane.b32.xlu0 %v573, 5
  %v912 = vpop.permute.xlu0 %911
  %913 = vrot.lane.b32.xlu0 %v564, 5
  %v914 = vpop.permute.xlu0 %913
  %915 = vrot.lane.b32.xlu0 %v574, 5
  %v916 = vpop.permute.xlu0 %915
  %917 = vrot.lane.b32.xlu0 %v568, 5
  %v918 = vpop.permute.xlu0 %917
  %919 = vrot.lane.b32.xlu0 %v575, 5
  %v920 = vpop.permute.xlu0 %919
  %921 = vrot.lane.b32.xlu0 %v609, 5
  %v922 = vpop.permute.xlu0 %921
  %923 = vrot.lane.b32.xlu0 %v625, 5
  %v924 = vpop.permute.xlu0 %923
  %925 = vrot.lane.b32.xlu0 %v613, 5
  %v926 = vpop.permute.xlu0 %925
  %927 = vrot.lane.b32.xlu0 %v626, 5
  %v928 = vpop.permute.xlu0 %927
  %929 = vrot.lane.b32.xlu0 %v617, 5
  %v930 = vpop.permute.xlu0 %929
  %931 = vrot.lane.b32.xlu0 %v627, 5
  %v932 = vpop.permute.xlu0 %931
  %933 = vrot.lane.b32.xlu0 %v621, 5
  %v934 = vpop.permute.xlu0 %933
  %935 = vrot.lane.b32.xlu0 %v628, 5
  %v936 = vpop.permute.xlu0 %935
  %v937 = vsel %vm189, %v802, %v804
  %v938 = vsel %vm189, %v806, %v808
  %v939 = vsel %vm189, %v810, %v812
  %v940 = vsel %vm189, %v814, %v816
  %v941 = vsel %vm189, %v818, %v820
  %v942 = vsel %vm189, %v822, %v824
  %v943 = vsel %vm189, %v826, %v828
  %v944 = vsel %vm189, %v830, %v832
  %v945 = vsel %vm189, %v834, %v836
  %v946 = vsel %vm189, %v838, %v840
  %v947 = vsel %vm189, %v842, %v844
  %v948 = vsel %vm189, %v846, %v848
  %v949 = vsel %vm189, %v850, %v852
  %v950 = vsel %vm189, %v854, %v856
  %v951 = vsel %vm189, %v858, %v860
  %v952 = vsel %vm189, %v862, %v864
  %v953 = vsel %vm189, %v874, %v876
  %v954 = vsel %vm189, %v878, %v880
  %v955 = vsel %vm189, %v882, %v884
  %v956 = vsel %vm189, %v886, %v888
  %v957 = vsel %vm189, %v890, %v892
  %v958 = vsel %vm189, %v894, %v896
  %v959 = vsel %vm189, %v898, %v900
  %v960 = vsel %vm189, %v902, %v904
  %v961 = vsel %vm189, %v906, %v908
  %v962 = vsel %vm189, %v910, %v912
  %v963 = vsel %vm189, %v914, %v916
  %v964 = vsel %vm189, %v918, %v920
  %v965 = vsel %vm189, %v922, %v924
  %v966 = vsel %vm189, %v926, %v928
  %v967 = vsel %vm189, %v930, %v932
  %v968 = vsel %vm189, %v934, %v936
  %vm1005 = vcmask 523264
  %v1007 = vsel %vm1005, %v769, 0
  %v1010 = vsel %vm1005, %v774, 0
  %v1013 = vsel %vm1005, %v779, 0
  %v1016 = vsel %vm1005, %v784, 0
  %1018 = vmatprep.subr.bf16.mxu0 0
  %1019 = vmatpush1.bf16.msra.mxu0 %v937
  %1020 = vmatprep.subr.bf16.mxu0 0
  %1021 = vmatpush1.bf16.msra.mxu0 %v938
  %1022 = vmatprep.subr.bf16.mxu0 0
  %1023 = vmatpush1.bf16.msra.mxu0 %v939
  %1024 = vmatprep.subr.bf16.mxu0 0
  %1025 = vmatpush1.bf16.msra.mxu0 %v940
  %1026 = vmatprep.subr.bf16.mxu0 0
  %1027 = vmatpush1.bf16.msra.mxu0 %v941
  %1028 = vmatprep.subr.bf16.mxu0 0
  %1029 = vmatpush1.bf16.msra.mxu0 %v942
  %1030 = vmatprep.subr.bf16.mxu0 0
  %1031 = vmatpush1.bf16.msra.mxu0 %v943
  %1032 = vmatprep.subr.bf16.mxu0 0
  %1033 = vmatpush1.bf16.msra.mxu0 %v944
  %1034 = vmatprep.subr.bf16.mxu0 0
  %1035 = vmatpush1.bf16.msra.mxu0 %v945
  %1036 = vmatprep.subr.bf16.mxu0 0
  %1037 = vmatpush1.bf16.msra.mxu0 %v946
  %1038 = vmatprep.subr.bf16.mxu0 0
  %1039 = vmatpush1.bf16.msra.mxu0 %v947
  %1040 = vmatprep.subr.bf16.mxu0 0
  %1041 = vmatpush1.bf16.msra.mxu0 %v948
  %1042 = vmatprep.subr.bf16.mxu0 0
  %1043 = vmatpush1.bf16.msra.mxu0 %v949
  %1044 = vmatprep.subr.bf16.mxu0 0
  %1045 = vmatpush1.bf16.msra.mxu0 %v950
  %1046 = vmatprep.subr.bf16.mxu0 0
  %1047 = vmatpush1.bf16.msra.mxu0 %v951
  %1048 = vmatprep.subr.bf16.mxu0 0
  %1049 = vmatpush1.bf16.msra.mxu0 %v952
  %1050 = vmatprep.mubr.bf16.mxu0 %v766
  %1051 = vmatmul.mubr.bf16.gmra.mrb[0].mxu0 %v765
  %v1052 = vpop.f32.mrb[0].mxu0
  %v1053 = vadd.f32 %v664, %v1052
  %v1054 = vpop.f32.mrb[0].mxu0
  %v1055 = vpop.f32.mrb[0].mxu0
  %v1056 = vadd.f32 %v669, %v1055
  %v1057 = vpop.f32.mrb[0].mxu0
  %1058 = vmatprep.mubr.bf16.mxu0 %v771
  %1059 = vmatmul.mubr.bf16.gmra.mrb[0].mxu0 %v770
  %v1060 = vpop.f32.mrb[0].mxu0
  %v1061 = vadd.f32 %v674, %v1060
  %v1062 = vpop.f32.mrb[0].mxu0
  %v1063 = vpop.f32.mrb[0].mxu0
  %v1064 = vadd.f32 %v679, %v1063
  %v1065 = vpop.f32.mrb[0].mxu0
  %1066 = vmatprep.mubr.bf16.mxu0 %v776
  %1067 = vmatmul.mubr.bf16.gmra.mrb[0].mxu0 %v775
  %v1068 = vpop.f32.mrb[0].mxu0
  %v1069 = vadd.f32 %v684, %v1068
  %v1070 = vpop.f32.mrb[0].mxu0
  %v1071 = vpop.f32.mrb[0].mxu0
  %v1072 = vadd.f32 %v689, %v1071
  %v1073 = vpop.f32.mrb[0].mxu0
  %1074 = vmatprep.mubr.bf16.mxu0 %v781
  %1075 = vmatmul.mubr.bf16.gmra.mrb[0].mxu0 %v780
  %v1076 = vpop.f32.mrb[0].mxu0
  %v1077 = vadd.f32 %v694, %v1076
  %v1078 = vpop.f32.mrb[0].mxu0
  %v1079 = vpop.f32.mrb[0].mxu0
  %v1080 = vadd.f32 %v699, %v1079
  %v1081 = vpop.f32.mrb[0].mxu0
  %1082 = vdwg.mxu0
  %1083 = vmatprep.subr.bf16.mxu0 0
  %1084 = vmatpush1.bf16.msra.mxu0 %v866
  %1085 = vmatprep.subr.bf16.mxu0 0
  %1086 = vmatpush1.bf16.msra.mxu0 %v868
  %1087 = vmatprep.subr.bf16.mxu0 0
  %1088 = vmatpush1.bf16.msra.mxu0 %v870
  %1089 = vmatprep.subr.bf16.mxu0 0
  %1090 = vmatpush1.bf16.msra.mxu0 %v872
  %1091 = vmatprep.subr.bf16.mxu0 0
  %1092 = vmatpush1.bf16.msra.mxu0 %v953
  %1093 = vmatprep.subr.bf16.mxu0 0
  %1094 = vmatpush1.bf16.msra.mxu0 %v954
  %1095 = vmatprep.subr.bf16.mxu0 0
  %1096 = vmatpush1.bf16.msra.mxu0 %v955
  %1097 = vmatprep.subr.bf16.mxu0 0
  %1098 = vmatpush1.bf16.msra.mxu0 %v956
  %1099 = vmatprep.subr.bf16.mxu0 0
  %1100 = vmatpush1.bf16.msra.mxu0 %v957
  %1101 = vmatprep.subr.bf16.mxu0 0
  %1102 = vmatpush1.bf16.msra.mxu0 %v958
  %1103 = vmatprep.subr.bf16.mxu0 0
  %1104 = vmatpush1.bf16.msra.mxu0 %v959
  %1105 = vmatprep.subr.bf16.mxu0 0
  %1106 = vmatpush1.bf16.msra.mxu0 %v960
  %1107 = vmatprep.subr.bf16.mxu0 0
  %1108 = vmatpush1.bf16.msra.mxu0 %v961
  %1109 = vmatprep.subr.bf16.mxu0 0
  %1110 = vmatpush1.bf16.msra.mxu0 %v962
  %1111 = vmatprep.subr.bf16.mxu0 0
  %1112 = vmatpush1.bf16.msra.mxu0 %v963
  %1113 = vmatprep.subr.bf16.mxu0 0
  %1114 = vmatpush1.bf16.msra.mxu0 %v964
  %1115 = vmatprep.mubr.bf16.mxu0 %v768
  %1116 = vmatmul.mubr.bf16.gmra.mrb[0].mxu0 %v767
  %v1117 = vpop.f32.mrb[0].mxu0
  %v1118 = vadd.f32 %v1053, %v1117
  %v1119 = vpop.f32.mrb[0].mxu0
  %v1120 = vpop.f32.mrb[0].mxu0
  %v1121 = vadd.f32 %v1056, %v1120
  %v1122 = vpop.f32.mrb[0].mxu0
  %1123 = vmatprep.mubr.bf16.mxu0 %v773
  %1124 = vmatmul.mubr.bf16.gmra.mrb[0].mxu0 %v772
  %v1125 = vpop.f32.mrb[0].mxu0
  %v1126 = vadd.f32 %v1061, %v1125
  %v1127 = vpop.f32.mrb[0].mxu0
  %v1128 = vpop.f32.mrb[0].mxu0
  %v1129 = vadd.f32 %v1064, %v1128
  %v1130 = vpop.f32.mrb[0].mxu0
  %1131 = vmatprep.mubr.bf16.mxu0 %v778
  %1132 = vmatmul.mubr.bf16.gmra.mrb[0].mxu0 %v777
  %v1133 = vpop.f32.mrb[0].mxu0
  %v1134 = vadd.f32 %v1069, %v1133
  %v1135 = vpop.f32.mrb[0].mxu0
  %v1136 = vpop.f32.mrb[0].mxu0
  %v1137 = vadd.f32 %v1072, %v1136
  %v1138 = vpop.f32.mrb[0].mxu0
  %1139 = vmatprep.mubr.bf16.mxu0 %v783
  %1140 = vmatmul.mubr.bf16.gmra.mrb[0].mxu0 %v782
  %v1141 = vpop.f32.mrb[0].mxu0
  %v1142 = vadd.f32 %v1077, %v1141
  %v1143 = vpop.f32.mrb[0].mxu0
  %v1144 = vpop.f32.mrb[0].mxu0
  %v1145 = vadd.f32 %v1080, %v1144
  %v1146 = vpop.f32.mrb[0].mxu0
  %1147 = vdwg.mxu0
  %1148 = vmatprep.subr.bf16.mxu0 0
  %1149 = vmatpush1.bf16.msra.mxu0 %v965
  %1150 = vmatprep.subr.bf16.mxu0 0
  %1151 = vmatpush1.bf16.msra.mxu0 %v966
  %1152 = vmatprep.subr.bf16.mxu0 0
  %1153 = vmatpush1.bf16.msra.mxu0 %v967
  %1154 = vmatprep.subr.bf16.mxu0 0
  %1155 = vmatpush1.bf16.msra.mxu0 %v968
  %1156 = vmatprep.subr.bf16.mxu0 0
  %1157 = vmatpush1.bf16.msra.mxu0 0
  %1158 = vmatprep.subr.bf16.mxu0 0
  %1159 = vmatpush1.bf16.msra.mxu0 0
  %1160 = vmatprep.subr.bf16.mxu0 0
  %1161 = vmatpush1.bf16.msra.mxu0 0
  %1162 = vmatprep.subr.bf16.mxu0 0
  %1163 = vmatpush1.bf16.msra.mxu0 0
  %1164 = vmatprep.subr.bf16.mxu0 0
  %1165 = vmatpush1.bf16.msra.mxu0 0
  %1166 = vmatprep.subr.bf16.mxu0 0
  %1167 = vmatpush1.bf16.msra.mxu0 0
  %1168 = vmatprep.subr.bf16.mxu0 0
  %1169 = vmatpush1.bf16.msra.mxu0 0
  %1170 = vmatprep.subr.bf16.mxu0 0
  %1171 = vmatpush1.bf16.msra.mxu0 0
  %1172 = vmatprep.subr.bf16.mxu0 0
  %1173 = vmatpush1.bf16.msra.mxu0 0
  %1174 = vmatprep.subr.bf16.mxu0 0
  %1175 = vmatpush1.bf16.msra.mxu0 0
  %1176 = vmatprep.subr.bf16.mxu0 0
  %1177 = vmatpush1.bf16.msra.mxu0 0
  %1178 = vmatprep.subr.bf16.mxu0 0
  %1179 = vmatpush1.bf16.msra.mxu0 0
  %1180 = vmatprep.mubr.bf16.mxu0 0
  %1181 = vmatmul.mubr.bf16.gmra.mrb[0].mxu0 %v1007
  %v1182 = vpop.f32.mrb[0].mxu0
  %v1183 = vadd.f32 %v1118, %v1182
  %v1184 = vpop.f32.mrb[0].mxu0
  %v1185 = vpop.f32.mrb[0].mxu0
  %v1186 = vadd.f32 %v1121, %v1185
  %v1187 = vpop.f32.mrb[0].mxu0
  %1188 = vmatprep.mubr.bf16.mxu0 0
  %1189 = vmatmul.mubr.bf16.gmra.mrb[0].mxu0 %v1010
  %v1190 = vpop.f32.mrb[0].mxu0
  %v1191 = vadd.f32 %v1126, %v1190
  %v1192 = vpop.f32.mrb[0].mxu0
  %v1193 = vpop.f32.mrb[0].mxu0
  %v1194 = vadd.f32 %v1129, %v1193
  %v1195 = vpop.f32.mrb[0].mxu0
  %1196 = vmatprep.mubr.bf16.mxu0 0
  %1197 = vmatmul.mubr.bf16.gmra.mrb[0].mxu0 %v1013
  %v1198 = vpop.f32.mrb[0].mxu0
  %v1199 = vadd.f32 %v1134, %v1198
  %v1200 = vpop.f32.mrb[0].mxu0
  %v1201 = vpop.f32.mrb[0].mxu0
  %v1202 = vadd.f32 %v1137, %v1201
  %v1203 = vpop.f32.mrb[0].mxu0
  %1204 = vmatprep.mubr.bf16.mxu0 0
  %1205 = vmatmul.mubr.bf16.gmra.mrb[0].mxu0 %v1016
  %v1206 = vpop.f32.mrb[0].mxu0
  %v1207 = vadd.f32 %v1142, %v1206
  %v1208 = vpop.f32.mrb[0].mxu0
  %v1209 = vpop.f32.mrb[0].mxu0
  %v1210 = vadd.f32 %v1145, %v1209
  %v1211 = vpop.f32.mrb[0].mxu0
  %1212 = vdwg.mxu0
  %v1213 = vld [vmem:[%s3] sm:$0xf]
  %v1214 = vld [vmem:[%s3 + $0x4] sm:$0xf]
  %v1215 = vld [vmem:[%s3 + $0x8] sm:$0xf]
  %v1216 = vld [vmem:[%s3 + $0xc] sm:$0xf]
  %v1217 = vunpack.c.l.bf16 %v1213
  %v1218 = vunpack.c.l.bf16 %v1214
  %v1219 = vunpack.c.l.bf16 %v1215
  %v1220 = vunpack.c.l.bf16 %v1216
  %v1221 = vadd.f32 %v1183, 0.0
  %v1222 = vadd.f32 %v1186, 0.0
  %v1223 = vadd.f32 %v1191, %v1217
  %v1224 = vadd.f32 %v1194, %v1218
  %v1225 = vadd.f32 %v1199, %v1219
  %v1226 = vadd.f32 %v1202, %v1220
  %v1227 = vadd.f32 %v1207, 0.0
  %v1228 = vadd.f32 %v1210, 0.0
  %v1229 = vmax.f32 %v1221, 0.0
  %v1230 = vmax.f32 %v1222, 0.0
  %v1231 = vmax.f32 %v1223, 0.0
  %v1232 = vmax.f32 %v1224, 0.0
  %v1233 = vmax.f32 %v1225, 0.0
  %v1234 = vmax.f32 %v1226, 0.0
  %v1235 = vmax.f32 %v1227, 0.0
  %v1236 = vmax.f32 %v1228, 0.0
  %vm1237 = vcmp.lt.s32.totalorder %v21, 32
  %v1238 = vsel %vm1237, 1, 0
  %vm1239 = vcmp.eq.s32.totalorder %v1238, 1
  %v1240 = vsel %vm1239, %v1229, 0.0
  %v1241 = vsel %vm1239, %v1230, 0.0
  %v1242 = vsel %vm1239, %v1231, 0.0
  %v1243 = vsel %vm1239, %v1232, 0.0
  %v1244 = vsel %vm1239, %v1233, 0.0
  %v1245 = vsel %vm1239, %v1234, 0.0
  %v1246 = vsel %vm1239, %v1235, 0.0
  %v1247 = vsel %vm1239, %v1236, 0.0
  %v1248 = vpack.c.bf16 %v1241, %v1240
  %v1249 = vpack.c.bf16 %v1243, %v1242
  %v1250 = vpack.c.bf16 %v1245, %v1244
  %v1251 = vpack.c.bf16 %v1247, %v1246
  %v1256 = vunpack.c.l.b16 %v1248
  %v1257 = vunpack.c.h.b16 %v1248
  %v1258 = vunpack.c.l.b16 %v1249
  %v1259 = vunpack.c.h.b16 %v1249
  %v1260 = vunpack.c.l.b16 %v1250
  %v1261 = vunpack.c.h.b16 %v1250
  %v1262 = vunpack.c.l.b16 %v1251
  %v1263 = vunpack.c.h.b16 %v1251
  %v1264 = vpack.c.b16 %v1256, %v1256
  %v1265 = vpack.c.b16 %v1257, %v1257
  %v1266 = vpack.c.b16 %v1258, %v1258
  %v1267 = vpack.c.b16 %v1259, %v1259
  %v1268 = vpack.c.b16 %v1260, %v1260
  %v1269 = vpack.c.b16 %v1261, %v1261
  %v1270 = vpack.c.b16 %v1262, %v1262
  %v1271 = vpack.c.b16 %v1263, %v1263
  %1280 = vst [vmem:[%s4] sm:$0xf] %v1264
  %1281 = vst [vmem:[%s4 + $0x4] sm:$0xf] %v1265
  %1282 = vst [vmem:[%s4 + $0x8] sm:$0xf] %v1266
  %1283 = vst [vmem:[%s4 + $0xc] sm:$0xf] %v1267
  %1284 = vst [vmem:[%s4 + $0x10] sm:$0xf] %v1268
  %1285 = vst [vmem:[%s4 + $0x14] sm:$0xf] %v1269
  %1286 = vst [vmem:[%s4 + $0x18] sm:$0xf] %v1270
  %1287 = vst [vmem:[%s4 + $0x1c] sm:$0xf] %v1271
  // Predicated region
  $region18: #{_lambda_.22} parent=0 // pred_check
    _
  $region19: #{_lambda_.22} parent=0 // pred_check_branch
    %1289 = sbr.rel (0) target = $region21
  $region20: #{_lambda_.22} parent=0 // pred_region
    _
  $region21: #{_lambda_.22} parent=0 // pred_fallthru
    _
  // Predicated region
  $region22: #{_lambda_.22} parent=0 // pred_check
    _
  $region23: #{_lambda_.22} parent=0 // pred_check_branch
    %1291 = sbr.rel (0) target = $region25
  $region24: #{_lambda_.22} parent=0 // pred_region
    _
  $region25: #{_lambda_.22} parent=0 // pred_fallthru
    _

// kernel: _lambda_.23
$region0: #{_lambda_.23}
  #allocation0 [shape = 'u32[]', space=smem, size = 0x4, offset = 0x4, fixed_abs, tag = 'smem constant byte address 0x4 - core index']
  #allocation1 [shape = 'u32[144,128]{1,0:T(1,128)}', space=vmem, size = 0x12000, scoped, tag = 'internal scratch']
  #allocation2 [shape = 'bf16[64,384]{1,0:T(16,128)(2,1)}', space=vmem, size = 0xc000, scoped, tag = 'scratch operand']
  %s0 = inlined_call_operand.vmem [shape: bf16[64,384], index: 0, kind: input, shape index: {}]
  %s1 = inlined_call_operand.vmem [shape: bf16[64,576], index: 1, kind: input, shape index: {}]
  %s2 = inlined_call_operand.vmem [shape: f32[64,1], index: 2, kind: input, shape index: {}]
  %s3 = inlined_call_operand.vmem [shape: bf16[64,576], index: 3, kind: input, shape index: {}]
  %s4 = inlined_call_operand.vmem [shape: f32[64,1], index: 4, kind: input, shape index: {}]
  %s5 = inlined_call_operand.vmem [shape: bf16[64,128], index: 5, kind: output, shape index: {}]
  %s6 = sld [smem:[#allocation0]]
  $region30: #{_lambda_.23} parent=0
    _
  %s8 = ssub.s32 1, %s6
  %s9 = scalar_select 0, %s8, %s6
  // Predicated region
  $region2: #{_lambda_.23} parent=0 // pred_check
    _
  $region3: #{_lambda_.23} parent=0 // pred_check_branch
    %11 = sbr.rel (0) target = $region5
  $region4: #{_lambda_.23} parent=0 // pred_region
    _
  $region5: #{_lambda_.23} parent=0 // pred_fallthru
    _
  // Predicated region
  $region6: #{_lambda_.23} parent=0 // pred_check
    _
  $region7: #{_lambda_.23} parent=0 // pred_check_branch
    %13 = sbr.rel (0) target = $region9
  $region8: #{_lambda_.23} parent=0 // pred_region
    _
  $region9: #{_lambda_.23} parent=0 // pred_fallthru
    _
  // Predicated region
  $region10: #{_lambda_.23} parent=0 // pred_check
    _
  $region11: #{_lambda_.23} parent=0 // pred_check_branch
    %15 = sbr.rel (0) target = $region13
  $region12: #{_lambda_.23} parent=0 // pred_region
    _
  $region13: #{_lambda_.23} parent=0 // pred_fallthru
    _
  // Predicated region
  $region14: #{_lambda_.23} parent=0 // pred_check
    _
  $region15: #{_lambda_.23} parent=0 // pred_check_branch
    %17 = sbr.rel (0) target = $region17
  $region16: #{_lambda_.23} parent=0 // pred_region
    _
  $region17: #{_lambda_.23} parent=0 // pred_fallthru
    _
  // Predicated region
  $region18: #{_lambda_.23} parent=0 // pred_check
    _
  $region19: #{_lambda_.23} parent=0 // pred_check_branch
    %19 = sbr.rel (0) target = $region21
  $region20: #{_lambda_.23} parent=0 // pred_region
    _
  $region21: #{_lambda_.23} parent=0 // pred_fallthru
    _
  %23 = vst [vmem:[#allocation2] sm:$0xff] 0
  %24 = vst [vmem:[#allocation2 + $0x8] sm:$0xff] 0
  %25 = vst [vmem:[#allocation2 + $0x10] sm:$0xff] 0
  %26 = vst [vmem:[#allocation2 + $0x18] sm:$0xff] 0
  %27 = vst [vmem:[#allocation2 + $0x20] sm:$0xff] 0
  %28 = vst [vmem:[#allocation2 + $0x28] sm:$0xff] 0
  %29 = vst [vmem:[#allocation2 + $0x30] sm:$0xff] 0
  %30 = vst [vmem:[#allocation2 + $0x38] sm:$0xff] 0
  %31 = vst [vmem:[#allocation2 + $0x40] sm:$0xff] 0
  %32 = vst [vmem:[#allocation2 + $0x48] sm:$0xff] 0
  %33 = vst [vmem:[#allocation2 + $0x50] sm:$0xff] 0
  %34 = vst [vmem:[#allocation2 + $0x58] sm:$0xff] 0
  %v35 = vlaneseq
  %v36 = vand.u32 %v35, 127
  %v37 = vand.u32 %v36, 3
  %v38 = vand.u32 %v36, 15
  %v39 = vld [vmem:[%s0] sm:$0xff]
  %v40 = vld [vmem:[%s0 + $0xc] sm:$0xff]
  %v41 = vld [vmem:[%s0 + $0x18] sm:$0xff]
  %v42 = vld [vmem:[%s0 + $0x24] sm:$0xff]
  %v43 = vld [vmem:[%s0 + $0x30] sm:$0xff]
  %v44 = vld [vmem:[%s0 + $0x3c] sm:$0xff]
  %v45 = vld [vmem:[%s0 + $0x48] sm:$0xff]
  %v46 = vld [vmem:[%s0 + $0x54] sm:$0xff]
  %vm47 = vcmp.ge.s32.totalorder %v37, 1
  %vm48 = vcmp.ge.s32.totalorder %v38, 4
  %vm49 = vmand %vm47, %vm48
  %v50 = vsel %vm49, 1, 0
  %vm51 = vcmp.eq.s32.totalorder %v50, 1
  %vm52 = vmpackc.low %vm51, %vm51
  %v53 = vsel %vm52, 65537, 0
  %54 = vrot.lane.b32.xlu0 %v53, 123
  %v55 = vpop.permute.xlu0 %54
  %v56 = vrot.slane %v55, 4
  %vm57 = vcmask 1006592
  %v58 = vsel %vm57, %v56, %v55
  %vm59 = vcmp.ne.s16.totalorder %v58, 0
  %v60 = vsel %vm59, %v39, 0
  %v61 = vsel %vm59, %v40, 0
  %v62 = vsel %vm59, %v41, 0
  %v63 = vsel %vm59, %v42, 0
  %v64 = vsel %vm59, %v43, 0
  %v65 = vsel %vm59, %v44, 0
  %v66 = vsel %vm59, %v45, 0
  %v67 = vsel %vm59, %v46, 0
  %v68 = vsel %vm48, 1, 0
  %vm69 = vcmp.eq.s32.totalorder %v68, 1
  %vm70 = vmpackc.low %vm69, %vm69
  %v71 = vsel %vm70, 65537, 0
  %72 = vrot.lane.b32.xlu0 %v71, 124
  %v73 = vpop.permute.xlu0 %72
  %v74 = vrot.slane %v73, 4
  %vm75 = vcmask 1014784
  %v76 = vsel %vm75, %v74, %v73
  %vm77 = vcmp.ne.s16.totalorder %v76, 0
  %v78 = vsel %vm77, %v39, 0
  %v79 = vsel %vm77, %v40, 0
  %v80 = vsel %vm77, %v41, 0
  %v81 = vsel %vm77, %v42, 0
  %v82 = vsel %vm77, %v43, 0
  %v83 = vsel %vm77, %v44, 0
  %v84 = vsel %vm77, %v45, 0
  %v85 = vsel %vm77, %v46, 0
  %vm86 = vcmp.le.s32.totalorder %v37, 2
  %vm87 = vmand %vm86, %vm48
  %v88 = vsel %vm87, 1, 0
  %vm89 = vcmp.eq.s32.totalorder %v88, 1
  %vm90 = vmpackc.low %vm89, %vm89
  %v91 = vsel %vm90, 65537, 0
  %92 = vrot.lane.b32.xlu0 %v91, 125
  %v93 = vpop.permute.xlu0 %92
  %v94 = vrot.slane %v93, 4
  %vm95 = vcmask 1022976
  %v96 = vsel %vm95, %v94, %v93
  %vm97 = vcmp.ne.s16.totalorder %v96, 0
  %v98 = vsel %vm97, %v39, 0
  %v99 = vsel %vm97, %v40, 0
  %v100 = vsel %vm97, %v41, 0
  %v101 = vsel %vm97, %v42, 0
  %v102 = vsel %vm97, %v43, 0
  %v103 = vsel %vm97, %v44, 0
  %v104 = vsel %vm97, %v45, 0
  %v105 = vsel %vm97, %v46, 0
  %v106 = vsel %vm47, 1, 0
  %vm107 = vcmp.eq.s32.totalorder %v106, 1
  %vm108 = vmpackc.low %vm107, %vm107
  %v109 = vsel %vm108, 65537, 0
  %110 = vrot.lane.b32.xlu0 %v109, 127
  %v111 = vpop.permute.xlu0 %110
  %v112 = vrot.slane %v111, 4
  %vm113 = vcmask 1039360
  %v114 = vsel %vm113, %v112, %v111
  %vm115 = vcmp.ne.s16.totalorder %v114, 0
  %v116 = vsel %vm115, %v39, 0
  %v117 = vsel %vm115, %v40, 0
  %v118 = vsel %vm115, %v41, 0
  %v119 = vsel %vm115, %v42, 0
  %v120 = vsel %vm115, %v43, 0
  %v121 = vsel %vm115, %v44, 0
  %v122 = vsel %vm115, %v45, 0
  %v123 = vsel %vm115, %v46, 0
  %v124 = vld [vmem:[%s0 + $0x4] sm:$0xf]
  %v125 = vld [vmem:[%s0 + $0x10] sm:$0xf]
  %v126 = vld [vmem:[%s0 + $0x1c] sm:$0xf]
  %v127 = vld [vmem:[%s0 + $0x28] sm:$0xf]
  %v128 = vld [vmem:[%s0 + $0x34] sm:$0xf]
  %v129 = vld [vmem:[%s0 + $0x40] sm:$0xf]
  %v130 = vld [vmem:[%s0 + $0x4c] sm:$0xf]
  %v131 = vld [vmem:[%s0 + $0x58] sm:$0xf]
  %v132 = vld [vmem:[%s0 + $0x4] sm:$0xff]
  %v133 = vld [vmem:[%s0 + $0x10] sm:$0xff]
  %v134 = vld [vmem:[%s0 + $0x1c] sm:$0xff]
  %v135 = vld [vmem:[%s0 + $0x28] sm:$0xff]
  %v136 = vld [vmem:[%s0 + $0x34] sm:$0xff]
  %v137 = vld [vmem:[%s0 + $0x40] sm:$0xff]
  %v138 = vld [vmem:[%s0 + $0x4c] sm:$0xff]
  %v139 = vld [vmem:[%s0 + $0x58] sm:$0xff]
  %v140 = vsel %vm86, 1, 0
  %vm141 = vcmp.eq.s32.totalorder %v140, 1
  %vm142 = vmpackc.low %vm141, %vm141
  %v143 = vsel %vm142, 65537, 0
  %144 = vrot.lane.b32.xlu0 %v143, 1
  %v145 = vpop.permute.xlu0 %144
  %v146 = vrot.slane %v145, 4
  %vm147 = vcmask 7168
  %v148 = vsel %vm147, %v146, %v145
  %vm149 = vcmp.ne.s16.totalorder %v148, 0
  %v150 = vsel %vm149, %v132, 0
  %v151 = vsel %vm149, %v133, 0
  %v152 = vsel %vm149, %v134, 0
  %v153 = vsel %vm149, %v135, 0
  %v154 = vsel %vm149, %v136, 0
  %v155 = vsel %vm149, %v137, 0
  %v156 = vsel %vm149, %v138, 0
  %v157 = vsel %vm149, %v139, 0
  %vm158 = vcmp.lt.s32.totalorder %v38, 12
  %vm159 = vmand %vm47, %vm158
  %v160 = vsel %vm159, 1, 0
  %vm161 = vcmp.eq.s32.totalorder %v160, 1
  %vm162 = vmpackc.low %vm161, %vm161
  %v163 = vsel %vm162, 65537, 0
  %164 = vrot.lane.b32.xlu0 %v163, 3
  %v165 = vpop.permute.xlu0 %164
  %v166 = vrot.slane %v165, 4
  %vm167 = vcmask 23552
  %v168 = vsel %vm167, %v166, %v165
  %vm169 = vcmp.ne.s16.totalorder %v168, 0
  %v170 = vsel %vm169, %v132, 0
  %v171 = vsel %vm169, %v133, 0
  %v172 = vsel %vm169, %v134, 0
  %v173 = vsel %vm169, %v135, 0
  %v174 = vsel %vm169, %v136, 0
  %v175 = vsel %vm169, %v137, 0
  %v176 = vsel %vm169, %v138, 0
  %v177 = vsel %vm169, %v139, 0
  %v178 = vsel %vm158, 1, 0
  %vm179 = vcmp.eq.s32.totalorder %v178, 1
  %vm180 = vmpackc.low %vm179, %vm179
  %v181 = vsel %vm180, 65537, 0
  %182 = vrot.lane.b32.xlu0 %v181, 4
  %v183 = vpop.permute.xlu0 %182
  %v184 = vrot.slane %v183, 4
  %vm185 = vcmask 31744
  %v186 = vsel %vm185, %v184, %v183
  %vm187 = vcmp.ne.s16.totalorder %v186, 0
  %v188 = vsel %vm187, %v132, 0
  %v189 = vsel %vm187, %v133, 0
  %v190 = vsel %vm187, %v134, 0
  %v191 = vsel %vm187, %v135, 0
  %v192 = vsel %vm187, %v136, 0
  %v193 = vsel %vm187, %v137, 0
  %v194 = vsel %vm187, %v138, 0
  %v195 = vsel %vm187, %v139, 0
  %vm196 = vmand %vm86, %vm158
  %v197 = vsel %vm196, 1, 0
  %vm198 = vcmp.eq.s32.totalorder %v197, 1
  %vm199 = vmpackc.low %vm198, %vm198
  %v200 = vsel %vm199, 65537, 0
  %201 = vrot.lane.b32.xlu0 %v200, 5
  %v202 = vpop.permute.xlu0 %201
  %v203 = vrot.slane %v202, 4
  %vm204 = vcmask 39936
  %v205 = vsel %vm204, %v203, %v202
  %vm206 = vcmp.ne.s16.totalorder %v205, 0
  %v207 = vsel %vm206, %v132, 0
  %v208 = vsel %vm206, %v133, 0
  %v209 = vsel %vm206, %v134, 0
  %v210 = vsel %vm206, %v135, 0
  %v211 = vsel %vm206, %v136, 0
  %v212 = vsel %vm206, %v137, 0
  %v213 = vsel %vm206, %v138, 0
  %v214 = vsel %vm206, %v139, 0
  %v223 = vunpack.c.l.b16 %v60
  %v224 = vunpack.c.h.b16 %v60
  %v225 = vunpack.c.l.b16 %v61
  %v226 = vunpack.c.h.b16 %v61
  %v227 = vunpack.c.l.b16 %v62
  %v228 = vunpack.c.h.b16 %v62
  %v229 = vunpack.c.l.b16 %v63
  %v230 = vunpack.c.h.b16 %v63
  %v231 = vunpack.c.l.b16 %v64
  %v232 = vunpack.c.h.b16 %v64
  %v233 = vunpack.c.l.b16 %v65
  %v234 = vunpack.c.h.b16 %v65
  %v235 = vunpack.c.l.b16 %v66
  %v236 = vunpack.c.h.b16 %v66
  %v237 = vunpack.c.l.b16 %v67
  %v238 = vunpack.c.h.b16 %v67
  %v239 = vpack.c.b16 %v225, %v223
  %v240 = vpack.c.b16 %v226, %v224
  %v241 = vpack.c.b16 %v229, %v227
  %v242 = vpack.c.b16 %v230, %v228
  %v243 = vpack.c.b16 %v233, %v231
  %v244 = vpack.c.b16 %v234, %v232
  %v245 = vpack.c.b16 %v237, %v235
  %v246 = vpack.c.b16 %v238, %v236
  %v255 = vunpack.c.l.b16 %v78
  %v256 = vunpack.c.h.b16 %v78
  %v257 = vunpack.c.l.b16 %v79
  %v258 = vunpack.c.h.b16 %v79
  %v259 = vunpack.c.l.b16 %v80
  %v260 = vunpack.c.h.b16 %v80
  %v261 = vunpack.c.l.b16 %v81
  %v262 = vunpack.c.h.b16 %v81
  %v263 = vunpack.c.l.b16 %v82
  %v264 = vunpack.c.h.b16 %v82
  %v265 = vunpack.c.l.b16 %v83
  %v266 = vunpack.c.h.b16 %v83
  %v267 = vunpack.c.l.b16 %v84
  %v268 = vunpack.c.h.b16 %v84
  %v269 = vunpack.c.l.b16 %v85
  %v270 = vunpack.c.h.b16 %v85
  %v271 = vpack.c.b16 %v257, %v255
  %v272 = vpack.c.b16 %v258, %v256
  %v273 = vpack.c.b16 %v261, %v259
  %v274 = vpack.c.b16 %v262, %v260
  %v275 = vpack.c.b16 %v265, %v263
  %v276 = vpack.c.b16 %v266, %v264
  %v277 = vpack.c.b16 %v269, %v267
  %v278 = vpack.c.b16 %v270, %v268
  %279 = vrot.lane.b32.xlu0 %v271, 127
  %v280 = vpop.permute.xlu0 %279
  %281 = vrot.lane.b32.xlu0 %v272, 127
  %v282 = vpop.permute.xlu0 %281
  %283 = vrot.lane.b32.xlu0 %v273, 127
  %v284 = vpop.permute.xlu0 %283
  %285 = vrot.lane.b32.xlu0 %v274, 127
  %v286 = vpop.permute.xlu0 %285
  %287 = vrot.lane.b32.xlu0 %v275, 127
  %v288 = vpop.permute.xlu0 %287
  %289 = vrot.lane.b32.xlu0 %v276, 127
  %v290 = vpop.permute.xlu0 %289
  %291 = vrot.lane.b32.xlu0 %v277, 127
  %v292 = vpop.permute.xlu0 %291
  %293 = vrot.lane.b32.xlu0 %v278, 127
  %v294 = vpop.permute.xlu0 %293
  %v295 = vsel %vm113, %v280, %v282
  %v296 = vsel %vm113, %v284, %v286
  %v297 = vsel %vm113, %v288, %v290
  %v298 = vsel %vm113, %v292, %v294
  %v307 = vunpack.c.l.b16 %v98
  %v308 = vunpack.c.h.b16 %v98
  %v309 = vunpack.c.l.b16 %v99
  %v310 = vunpack.c.h.b16 %v99
  %v311 = vunpack.c.l.b16 %v100
  %v312 = vunpack.c.h.b16 %v100
  %v313 = vunpack.c.l.b16 %v101
  %v314 = vunpack.c.h.b16 %v101
  %v315 = vunpack.c.l.b16 %v102
  %v316 = vunpack.c.h.b16 %v102
  %v317 = vunpack.c.l.b16 %v103
  %v318 = vunpack.c.h.b16 %v103
  %v319 = vunpack.c.l.b16 %v104
  %v320 = vunpack.c.h.b16 %v104
  %v321 = vunpack.c.l.b16 %v105
  %v322 = vunpack.c.h.b16 %v105
  %v323 = vpack.c.b16 %v309, %v307
  %v324 = vpack.c.b16 %v310, %v308
  %v325 = vpack.c.b16 %v313, %v311
  %v326 = vpack.c.b16 %v314, %v312
  %v327 = vpack.c.b16 %v317, %v315
  %v328 = vpack.c.b16 %v318, %v316
  %v329 = vpack.c.b16 %v321, %v319
  %v330 = vpack.c.b16 %v322, %v320
  %331 = vrot.lane.b32.xlu0 %v323, 126
  %v332 = vpop.permute.xlu0 %331
  %333 = vrot.lane.b32.xlu0 %v324, 126
  %v334 = vpop.permute.xlu0 %333
  %335 = vrot.lane.b32.xlu0 %v325, 126
  %v336 = vpop.permute.xlu0 %335
  %337 = vrot.lane.b32.xlu0 %v326, 126
  %v338 = vpop.permute.xlu0 %337
  %339 = vrot.lane.b32.xlu0 %v327, 126
  %v340 = vpop.permute.xlu0 %339
  %341 = vrot.lane.b32.xlu0 %v328, 126
  %v342 = vpop.permute.xlu0 %341
  %343 = vrot.lane.b32.xlu0 %v329, 126
  %v344 = vpop.permute.xlu0 %343
  %345 = vrot.lane.b32.xlu0 %v330, 126
  %v346 = vpop.permute.xlu0 %345
  %vm347 = vcmask 1031168
  %v348 = vsel %vm347, %v332, %v334
  %v349 = vsel %vm347, %v336, %v338
  %v350 = vsel %vm347, %v340, %v342
  %v351 = vsel %vm347, %v344, %v346
  %v360 = vunpack.c.l.b16 %v116
  %v361 = vunpack.c.h.b16 %v116
  %v362 = vunpack.c.l.b16 %v117
  %v363 = vunpack.c.h.b16 %v117
  %v364 = vunpack.c.l.b16 %v118
  %v365 = vunpack.c.h.b16 %v118
  %v366 = vunpack.c.l.b16 %v119
  %v367 = vunpack.c.h.b16 %v119
  %v368 = vunpack.c.l.b16 %v120
  %v369 = vunpack.c.h.b16 %v120
  %v370 = vunpack.c.l.b16 %v121
  %v371 = vunpack.c.h.b16 %v121
  %v372 = vunpack.c.l.b16 %v122
  %v373 = vunpack.c.h.b16 %v122
  %v374 = vunpack.c.l.b16 %v123
  %v375 = vunpack.c.h.b16 %v123
  %v376 = vpack.c.b16 %v362, %v360
  %v377 = vpack.c.b16 %v363, %v361
  %v378 = vpack.c.b16 %v366, %v364
  %v379 = vpack.c.b16 %v367, %v365
  %v380 = vpack.c.b16 %v370, %v368
  %v381 = vpack.c.b16 %v371, %v369
  %v382 = vpack.c.b16 %v374, %v372
  %v383 = vpack.c.b16 %v375, %v373
  %384 = vrot.lane.b32.xlu0 %v376, 124
  %v385 = vpop.permute.xlu0 %384
  %386 = vrot.lane.b32.xlu0 %v377, 124
  %v387 = vpop.permute.xlu0 %386
  %388 = vrot.lane.b32.xlu0 %v378, 124
  %v389 = vpop.permute.xlu0 %388
  %390 = vrot.lane.b32.xlu0 %v379, 124
  %v391 = vpop.permute.xlu0 %390
  %392 = vrot.lane.b32.xlu0 %v380, 124
  %v393 = vpop.permute.xlu0 %392
  %394 = vrot.lane.b32.xlu0 %v381, 124
  %v395 = vpop.permute.xlu0 %394
  %396 = vrot.lane.b32.xlu0 %v382, 124
  %v397 = vpop.permute.xlu0 %396
  %398 = vrot.lane.b32.xlu0 %v383, 124
  %v399 = vpop.permute.xlu0 %398
  %v400 = vsel %vm75, %v385, %v387
  %v401 = vsel %vm75, %v389, %v391
  %v402 = vsel %vm75, %v393, %v395
  %v403 = vsel %vm75, %v397, %v399
  %v412 = vunpack.c.l.b16 %v124
  %v413 = vunpack.c.l.b16 %v125
  %v414 = vunpack.c.l.b16 %v126
  %v415 = vunpack.c.l.b16 %v127
  %v416 = vunpack.c.l.b16 %v128
  %v417 = vunpack.c.l.b16 %v129
  %v418 = vunpack.c.l.b16 %v130
  %v419 = vunpack.c.l.b16 %v131
  %v420 = vpack.c.b16 %v413, %v412
  %v421 = vpack.c.b16 %v415, %v414
  %v422 = vpack.c.b16 %v417, %v416
  %v423 = vpack.c.b16 %v419, %v418
  %424 = vrot.lane.b32.xlu0 %v420, 123
  %v425 = vpop.permute.xlu0 %424
  %426 = vrot.lane.b32.xlu0 %v421, 123
  %v427 = vpop.permute.xlu0 %426
  %428 = vrot.lane.b32.xlu0 %v422, 123
  %v429 = vpop.permute.xlu0 %428
  %430 = vrot.lane.b32.xlu0 %v423, 123
  %v431 = vpop.permute.xlu0 %430
  %v440 = vunpack.c.l.b16 %v150
  %v441 = vunpack.c.h.b16 %v150
  %v442 = vunpack.c.l.b16 %v151
  %v443 = vunpack.c.h.b16 %v151
  %v444 = vunpack.c.l.b16 %v152
  %v445 = vunpack.c.h.b16 %v152
  %v446 = vunpack.c.l.b16 %v153
  %v447 = vunpack.c.h.b16 %v153
  %v448 = vunpack.c.l.b16 %v154
  %v449 = vunpack.c.h.b16 %v154
  %v450 = vunpack.c.l.b16 %v155
  %v451 = vunpack.c.h.b16 %v155
  %v452 = vunpack.c.l.b16 %v156
  %v453 = vunpack.c.h.b16 %v156
  %v454 = vunpack.c.l.b16 %v157
  %v455 = vunpack.c.h.b16 %v157
  %v456 = vpack.c.b16 %v442, %v440
  %v457 = vpack.c.b16 %v443, %v441
  %v458 = vpack.c.b16 %v446, %v444
  %v459 = vpack.c.b16 %v447, %v445
  %v460 = vpack.c.b16 %v450, %v448
  %v461 = vpack.c.b16 %v451, %v449
  %v462 = vpack.c.b16 %v454, %v452
  %v463 = vpack.c.b16 %v455, %v453
  %464 = vrot.lane.b32.xlu0 %v456, 122
  %v465 = vpop.permute.xlu0 %464
  %466 = vrot.lane.b32.xlu0 %v457, 122
  %v467 = vpop.permute.xlu0 %466
  %468 = vrot.lane.b32.xlu0 %v458, 122
  %v469 = vpop.permute.xlu0 %468
  %470 = vrot.lane.b32.xlu0 %v459, 122
  %v471 = vpop.permute.xlu0 %470
  %472 = vrot.lane.b32.xlu0 %v460, 122
  %v473 = vpop.permute.xlu0 %472
  %474 = vrot.lane.b32.xlu0 %v461, 122
  %v475 = vpop.permute.xlu0 %474
  %476 = vrot.lane.b32.xlu0 %v462, 122
  %v477 = vpop.permute.xlu0 %476
  %478 = vrot.lane.b32.xlu0 %v463, 122
  %v479 = vpop.permute.xlu0 %478
  %vm480 = vcmask 998400
  %v481 = vsel %vm480, %v465, %v467
  %v482 = vsel %vm480, %v469, %v471
  %v483 = vsel %vm480, %v473, %v475
  %v484 = vsel %vm480, %v477, %v479
  %v493 = vunpack.c.l.b16 %v170
  %v494 = vunpack.c.h.b16 %v170
  %v495 = vunpack.c.l.b16 %v171
  %v496 = vunpack.c.h.b16 %v171
  %v497 = vunpack.c.l.b16 %v172
  %v498 = vunpack.c.h.b16 %v172
  %v499 = vunpack.c.l.b16 %v173
  %v500 = vunpack.c.h.b16 %v173
  %v501 = vunpack.c.l.b16 %v174
  %v502 = vunpack.c.h.b16 %v174
  %v503 = vunpack.c.l.b16 %v175
  %v504 = vunpack.c.h.b16 %v175
  %v505 = vunpack.c.l.b16 %v176
  %v506 = vunpack.c.h.b16 %v176
  %v507 = vunpack.c.l.b16 %v177
  %v508 = vunpack.c.h.b16 %v177
  %v509 = vpack.c.b16 %v495, %v493
  %v510 = vpack.c.b16 %v496, %v494
  %v511 = vpack.c.b16 %v499, %v497
  %v512 = vpack.c.b16 %v500, %v498
  %v513 = vpack.c.b16 %v503, %v501
  %v514 = vpack.c.b16 %v504, %v502
  %v515 = vpack.c.b16 %v507, %v505
  %v516 = vpack.c.b16 %v508, %v506
  %517 = vrot.lane.b32.xlu0 %v509, 120
  %v518 = vpop.permute.xlu0 %517
  %519 = vrot.lane.b32.xlu0 %v510, 120
  %v520 = vpop.permute.xlu0 %519
  %521 = vrot.lane.b32.xlu0 %v511, 120
  %v522 = vpop.permute.xlu0 %521
  %523 = vrot.lane.b32.xlu0 %v512, 120
  %v524 = vpop.permute.xlu0 %523
  %525 = vrot.lane.b32.xlu0 %v513, 120
  %v526 = vpop.permute.xlu0 %525
  %527 = vrot.lane.b32.xlu0 %v514, 120
  %v528 = vpop.permute.xlu0 %527
  %529 = vrot.lane.b32.xlu0 %v515, 120
  %v530 = vpop.permute.xlu0 %529
  %531 = vrot.lane.b32.xlu0 %v516, 120
  %v532 = vpop.permute.xlu0 %531
  %vm533 = vcmask 982016
  %v534 = vsel %vm533, %v518, %v520
  %v535 = vsel %vm533, %v522, %v524
  %v536 = vsel %vm533, %v526, %v528
  %v537 = vsel %vm533, %v530, %v532
  %v546 = vunpack.c.l.b16 %v188
  %v547 = vunpack.c.h.b16 %v188
  %v548 = vunpack.c.l.b16 %v189
  %v549 = vunpack.c.h.b16 %v189
  %v550 = vunpack.c.l.b16 %v190
  %v551 = vunpack.c.h.b16 %v190
  %v552 = vunpack.c.l.b16 %v191
  %v553 = vunpack.c.h.b16 %v191
  %v554 = vunpack.c.l.b16 %v192
  %v555 = vunpack.c.h.b16 %v192
  %v556 = vunpack.c.l.b16 %v193
  %v557 = vunpack.c.h.b16 %v193
  %v558 = vunpack.c.l.b16 %v194
  %v559 = vunpack.c.h.b16 %v194
  %v560 = vunpack.c.l.b16 %v195
  %v561 = vunpack.c.h.b16 %v195
  %v562 = vpack.c.b16 %v548, %v546
  %v563 = vpack.c.b16 %v549, %v547
  %v564 = vpack.c.b16 %v552, %v550
  %v565 = vpack.c.b16 %v553, %v551
  %v566 = vpack.c.b16 %v556, %v554
  %v567 = vpack.c.b16 %v557, %v555
  %v568 = vpack.c.b16 %v560, %v558
  %v569 = vpack.c.b16 %v561, %v559
  %570 = vrot.lane.b32.xlu0 %v562, 119
  %v571 = vpop.permute.xlu0 %570
  %572 = vrot.lane.b32.xlu0 %v563, 119
  %v573 = vpop.permute.xlu0 %572
  %574 = vrot.lane.b32.xlu0 %v564, 119
  %v575 = vpop.permute.xlu0 %574
  %576 = vrot.lane.b32.xlu0 %v565, 119
  %v577 = vpop.permute.xlu0 %576
  %578 = vrot.lane.b32.xlu0 %v566, 119
  %v579 = vpop.permute.xlu0 %578
  %580 = vrot.lane.b32.xlu0 %v567, 119
  %v581 = vpop.permute.xlu0 %580
  %582 = vrot.lane.b32.xlu0 %v568, 119
  %v583 = vpop.permute.xlu0 %582
  %584 = vrot.lane.b32.xlu0 %v569, 119
  %v585 = vpop.permute.xlu0 %584
  %vm586 = vcmask 973824
  %v587 = vsel %vm586, %v571, %v573
  %v588 = vsel %vm586, %v575, %v577
  %v589 = vsel %vm586, %v579, %v581
  %v590 = vsel %vm586, %v583, %v585
  %v599 = vunpack.c.l.b16 %v207
  %v600 = vunpack.c.h.b16 %v207
  %v601 = vunpack.c.l.b16 %v208
  %v602 = vunpack.c.h.b16 %v208
  %v603 = vunpack.c.l.b16 %v209
  %v604 = vunpack.c.h.b16 %v209
  %v605 = vunpack.c.l.b16 %v210
  %v606 = vunpack.c.h.b16 %v210
  %v607 = vunpack.c.l.b16 %v211
  %v608 = vunpack.c.h.b16 %v211
  %v609 = vunpack.c.l.b16 %v212
  %v610 = vunpack.c.h.b16 %v212
  %v611 = vunpack.c.l.b16 %v213
  %v612 = vunpack.c.h.b16 %v213
  %v613 = vunpack.c.l.b16 %v214
  %v614 = vunpack.c.h.b16 %v214
  %v615 = vpack.c.b16 %v601, %v599
  %v616 = vpack.c.b16 %v602, %v600
  %v617 = vpack.c.b16 %v605, %v603
  %v618 = vpack.c.b16 %v606, %v604
  %v619 = vpack.c.b16 %v609, %v607
  %v620 = vpack.c.b16 %v610, %v608
  %v621 = vpack.c.b16 %v613, %v611
  %v622 = vpack.c.b16 %v614, %v612
  %623 = vrot.lane.b32.xlu0 %v615, 118
  %v624 = vpop.permute.xlu0 %623
  %625 = vrot.lane.b32.xlu0 %v616, 118
  %v626 = vpop.permute.xlu0 %625
  %627 = vrot.lane.b32.xlu0 %v617, 118
  %v628 = vpop.permute.xlu0 %627
  %629 = vrot.lane.b32.xlu0 %v618, 118
  %v630 = vpop.permute.xlu0 %629
  %631 = vrot.lane.b32.xlu0 %v619, 118
  %v632 = vpop.permute.xlu0 %631
  %633 = vrot.lane.b32.xlu0 %v620, 118
  %v634 = vpop.permute.xlu0 %633
  %635 = vrot.lane.b32.xlu0 %v621, 118
  %v636 = vpop.permute.xlu0 %635
  %637 = vrot.lane.b32.xlu0 %v622, 118
  %v638 = vpop.permute.xlu0 %637
  %vm639 = vcmask 965632
  %v640 = vsel %vm639, %v624, %v626
  %v641 = vsel %vm639, %v628, %v630
  %v642 = vsel %vm639, %v632, %v634
  %v643 = vsel %vm639, %v636, %v638
  %v644 = vld [vmem:[%s1] sm:$0xff]
  %v645 = vld [vmem:[%s1 + $0x8] sm:$0xff]
  %v646 = vld [vmem:[%s1 + $0x10] sm:$0xf]
  %v647 = vld [vmem:[%s1 + $0x14] sm:$0xff]
  %v648 = vld [vmem:[%s1 + $0x1c] sm:$0xff]
  %v649 = vld [vmem:[%s1 + $0x24] sm:$0xf]
  %v650 = vld [vmem:[%s1 + $0x28] sm:$0xff]
  %v651 = vld [vmem:[%s1 + $0x30] sm:$0xff]
  %v652 = vld [vmem:[%s1 + $0x38] sm:$0xf]
  %v653 = vld [vmem:[%s1 + $0x3c] sm:$0xff]
  %v654 = vld [vmem:[%s1 + $0x44] sm:$0xff]
  %v655 = vld [vmem:[%s1 + $0x4c] sm:$0xf]
  %v656 = vld [vmem:[%s1 + $0x50] sm:$0xff]
  %v657 = vld [vmem:[%s1 + $0x58] sm:$0xff]
  %v658 = vld [vmem:[%s1 + $0x60] sm:$0xf]
  %v659 = vld [vmem:[%s1 + $0x64] sm:$0xff]
  %v660 = vld [vmem:[%s1 + $0x6c] sm:$0xff]
  %v661 = vld [vmem:[%s1 + $0x74] sm:$0xf]
  %v662 = vld [vmem:[%s1 + $0x78] sm:$0xff]
  %v663 = vld [vmem:[%s1 + $0x80] sm:$0xff]
  %v664 = vld [vmem:[%s1 + $0x88] sm:$0xf]
  %v665 = vld [vmem:[%s1 + $0x8c] sm:$0xff]
  %v666 = vld [vmem:[%s1 + $0x94] sm:$0xff]
  %v667 = vld [vmem:[%s1 + $0x9c] sm:$0xf]
  %v668 = vld [vmem:[%s2] sm:$0xff]
  %v669 = vld [vmem:[%s2 + $0x8] sm:$0xff]
  %v670 = vld [vmem:[%s2 + $0x10] sm:$0xff]
  %v671 = vld [vmem:[%s2 + $0x18] sm:$0xff]
  %v672 = vld [vmem:[%s2 + $0x20] sm:$0xff]
  %v673 = vld [vmem:[%s2 + $0x28] sm:$0xff]
  %v674 = vld [vmem:[%s2 + $0x30] sm:$0xff]
  %v675 = vld [vmem:[%s2 + $0x38] sm:$0xff]
  %677 = vset.pattern.permute.xlu0 0
  %678 = vperm.xlu0 %677, %v668
  %v679 = vpop.permute.xlu0 %678
  %682 = vset.pattern.permute.xlu0 0
  %683 = vperm.xlu0 %682, %v669
  %v684 = vpop.permute.xlu0 %683
  %687 = vset.pattern.permute.xlu0 0
  %688 = vperm.xlu0 %687, %v670
  %v689 = vpop.permute.xlu0 %688
  %692 = vset.pattern.permute.xlu0 0
  %693 = vperm.xlu0 %692, %v671
  %v694 = vpop.permute.xlu0 %693
  %697 = vset.pattern.permute.xlu0 0
  %698 = vperm.xlu0 %697, %v672
  %v699 = vpop.permute.xlu0 %698
  %702 = vset.pattern.permute.xlu0 0
  %703 = vperm.xlu0 %702, %v673
  %v704 = vpop.permute.xlu0 %703
  %707 = vset.pattern.permute.xlu0 0
  %708 = vperm.xlu0 %707, %v674
  %v709 = vpop.permute.xlu0 %708
  %712 = vset.pattern.permute.xlu0 0
  %713 = vperm.xlu0 %712, %v675
  %v714 = vpop.permute.xlu0 %713
  %v740 = vunpack.c.l.b16 %v644
  %v741 = vunpack.c.h.b16 %v644
  %v742 = vunpack.c.l.b16 %v645
  %v743 = vunpack.c.h.b16 %v645
  %v744 = vunpack.c.l.b16 %v646
  %v745 = vunpack.c.l.b16 %v647
  %v746 = vunpack.c.h.b16 %v647
  %v747 = vunpack.c.l.b16 %v648
  %v748 = vunpack.c.h.b16 %v648
  %v749 = vunpack.c.l.b16 %v649
  %v750 = vunpack.c.l.b16 %v650
  %v751 = vunpack.c.h.b16 %v650
  %v752 = vunpack.c.l.b16 %v651
  %v753 = vunpack.c.h.b16 %v651
  %v754 = vunpack.c.l.b16 %v652
  %v755 = vunpack.c.l.b16 %v653
  %v756 = vunpack.c.h.b16 %v653
  %v757 = vunpack.c.l.b16 %v654
  %v758 = vunpack.c.h.b16 %v654
  %v759 = vunpack.c.l.b16 %v655
  %v760 = vunpack.c.l.b16 %v656
  %v761 = vunpack.c.h.b16 %v656
  %v762 = vunpack.c.l.b16 %v657
  %v763 = vunpack.c.h.b16 %v657
  %v764 = vunpack.c.l.b16 %v658
  %v765 = vunpack.c.l.b16 %v659
  %v766 = vunpack.c.h.b16 %v659
  %v767 = vunpack.c.l.b16 %v660
  %v768 = vunpack.c.h.b16 %v660
  %v769 = vunpack.c.l.b16 %v661
  %v770 = vunpack.c.l.b16 %v662
  %v771 = vunpack.c.h.b16 %v662
  %v772 = vunpack.c.l.b16 %v663
  %v773 = vunpack.c.h.b16 %v663
  %v774 = vunpack.c.l.b16 %v664
  %v775 = vunpack.c.l.b16 %v665
  %v776 = vunpack.c.h.b16 %v665
  %v777 = vunpack.c.l.b16 %v666
  %v778 = vunpack.c.h.b16 %v666
  %v779 = vunpack.c.l.b16 %v667
  %v780 = vpack.c.b16 %v745, %v740
  %v781 = vpack.c.b16 %v746, %v741
  %v782 = vpack.c.b16 %v747, %v742
  %v783 = vpack.c.b16 %v748, %v743
  %v784 = vpack.c.b16 %v749, %v744
  %v785 = vpack.c.b16 %v755, %v750
  %v786 = vpack.c.b16 %v756, %v751
  %v787 = vpack.c.b16 %v757, %v752
  %v788 = vpack.c.b16 %v758, %v753
  %v789 = vpack.c.b16 %v759, %v754
  %v790 = vpack.c.b16 %v765, %v760
  %v791 = vpack.c.b16 %v766, %v761
  %v792 = vpack.c.b16 %v767, %v762
  %v793 = vpack.c.b16 %v768, %v763
  %v794 = vpack.c.b16 %v769, %v764
  %v795 = vpack.c.b16 %v775, %v770
  %v796 = vpack.c.b16 %v776, %v771
  %v797 = vpack.c.b16 %v777, %v772
  %v798 = vpack.c.b16 %v778, %v773
  %v799 = vpack.c.b16 %v779, %v774
  %816 = vrot.lane.b32.xlu0 %v239, 5
  %v817 = vpop.permute.xlu0 %816
  %818 = vrot.lane.b32.xlu0 %v240, 5
  %v819 = vpop.permute.xlu0 %818
  %820 = vrot.lane.b32.xlu0 %v241, 5
  %v821 = vpop.permute.xlu0 %820
  %822 = vrot.lane.b32.xlu0 %v242, 5
  %v823 = vpop.permute.xlu0 %822
  %824 = vrot.lane.b32.xlu0 %v243, 5
  %v825 = vpop.permute.xlu0 %824
  %826 = vrot.lane.b32.xlu0 %v244, 5
  %v827 = vpop.permute.xlu0 %826
  %828 = vrot.lane.b32.xlu0 %v245, 5
  %v829 = vpop.permute.xlu0 %828
  %830 = vrot.lane.b32.xlu0 %v246, 5
  %v831 = vpop.permute.xlu0 %830
  %832 = vrot.lane.b32.xlu0 %v295, 5
  %v833 = vpop.permute.xlu0 %832
  %834 = vrot.lane.b32.xlu0 %v282, 5
  %v835 = vpop.permute.xlu0 %834
  %836 = vrot.lane.b32.xlu0 %v296, 5
  %v837 = vpop.permute.xlu0 %836
  %838 = vrot.lane.b32.xlu0 %v286, 5
  %v839 = vpop.permute.xlu0 %838
  %840 = vrot.lane.b32.xlu0 %v297, 5
  %v841 = vpop.permute.xlu0 %840
  %842 = vrot.lane.b32.xlu0 %v290, 5
  %v843 = vpop.permute.xlu0 %842
  %844 = vrot.lane.b32.xlu0 %v298, 5
  %v845 = vpop.permute.xlu0 %844
  %846 = vrot.lane.b32.xlu0 %v294, 5
  %v847 = vpop.permute.xlu0 %846
  %848 = vrot.lane.b32.xlu0 %v348, 5
  %v849 = vpop.permute.xlu0 %848
  %850 = vrot.lane.b32.xlu0 %v334, 5
  %v851 = vpop.permute.xlu0 %850
  %852 = vrot.lane.b32.xlu0 %v349, 5
  %v853 = vpop.permute.xlu0 %852
  %854 = vrot.lane.b32.xlu0 %v338, 5
  %v855 = vpop.permute.xlu0 %854
  %856 = vrot.lane.b32.xlu0 %v350, 5
  %v857 = vpop.permute.xlu0 %856
  %858 = vrot.lane.b32.xlu0 %v342, 5
  %v859 = vpop.permute.xlu0 %858
  %860 = vrot.lane.b32.xlu0 %v351, 5
  %v861 = vpop.permute.xlu0 %860
  %862 = vrot.lane.b32.xlu0 %v346, 5
  %v863 = vpop.permute.xlu0 %862
  %864 = vrot.lane.b32.xlu0 %v400, 5
  %v865 = vpop.permute.xlu0 %864
  %866 = vrot.lane.b32.xlu0 %v387, 5
  %v867 = vpop.permute.xlu0 %866
  %868 = vrot.lane.b32.xlu0 %v401, 5
  %v869 = vpop.permute.xlu0 %868
  %870 = vrot.lane.b32.xlu0 %v391, 5
  %v871 = vpop.permute.xlu0 %870
  %872 = vrot.lane.b32.xlu0 %v402, 5
  %v873 = vpop.permute.xlu0 %872
  %874 = vrot.lane.b32.xlu0 %v395, 5
  %v875 = vpop.permute.xlu0 %874
  %876 = vrot.lane.b32.xlu0 %v403, 5
  %v877 = vpop.permute.xlu0 %876
  %878 = vrot.lane.b32.xlu0 %v399, 5
  %v879 = vpop.permute.xlu0 %878
  %880 = vrot.lane.b32.xlu0 %v425, 5
  %v881 = vpop.permute.xlu0 %880
  %882 = vrot.lane.b32.xlu0 %v427, 5
  %v883 = vpop.permute.xlu0 %882
  %884 = vrot.lane.b32.xlu0 %v429, 5
  %v885 = vpop.permute.xlu0 %884
  %886 = vrot.lane.b32.xlu0 %v431, 5
  %v887 = vpop.permute.xlu0 %886
  %888 = vrot.lane.b32.xlu0 %v465, 5
  %v889 = vpop.permute.xlu0 %888
  %890 = vrot.lane.b32.xlu0 %v481, 5
  %v891 = vpop.permute.xlu0 %890
  %892 = vrot.lane.b32.xlu0 %v469, 5
  %v893 = vpop.permute.xlu0 %892
  %894 = vrot.lane.b32.xlu0 %v482, 5
  %v895 = vpop.permute.xlu0 %894
  %896 = vrot.lane.b32.xlu0 %v473, 5
  %v897 = vpop.permute.xlu0 %896
  %898 = vrot.lane.b32.xlu0 %v483, 5
  %v899 = vpop.permute.xlu0 %898
  %900 = vrot.lane.b32.xlu0 %v477, 5
  %v901 = vpop.permute.xlu0 %900
  %902 = vrot.lane.b32.xlu0 %v484, 5
  %v903 = vpop.permute.xlu0 %902
  %904 = vrot.lane.b32.xlu0 %v518, 5
  %v905 = vpop.permute.xlu0 %904
  %906 = vrot.lane.b32.xlu0 %v534, 5
  %v907 = vpop.permute.xlu0 %906
  %908 = vrot.lane.b32.xlu0 %v522, 5
  %v909 = vpop.permute.xlu0 %908
  %910 = vrot.lane.b32.xlu0 %v535, 5
  %v911 = vpop.permute.xlu0 %910
  %912 = vrot.lane.b32.xlu0 %v526, 5
  %v913 = vpop.permute.xlu0 %912
  %914 = vrot.lane.b32.xlu0 %v536, 5
  %v915 = vpop.permute.xlu0 %914
  %916 = vrot.lane.b32.xlu0 %v530, 5
  %v917 = vpop.permute.xlu0 %916
  %918 = vrot.lane.b32.xlu0 %v537, 5
  %v919 = vpop.permute.xlu0 %918
  %920 = vrot.lane.b32.xlu0 %v571, 5
  %v921 = vpop.permute.xlu0 %920
  %922 = vrot.lane.b32.xlu0 %v587, 5
  %v923 = vpop.permute.xlu0 %922
  %924 = vrot.lane.b32.xlu0 %v575, 5
  %v925 = vpop.permute.xlu0 %924
  %926 = vrot.lane.b32.xlu0 %v588, 5
  %v927 = vpop.permute.xlu0 %926
  %928 = vrot.lane.b32.xlu0 %v579, 5
  %v929 = vpop.permute.xlu0 %928
  %930 = vrot.lane.b32.xlu0 %v589, 5
  %v931 = vpop.permute.xlu0 %930
  %932 = vrot.lane.b32.xlu0 %v583, 5
  %v933 = vpop.permute.xlu0 %932
  %934 = vrot.lane.b32.xlu0 %v590, 5
  %v935 = vpop.permute.xlu0 %934
  %936 = vrot.lane.b32.xlu0 %v624, 5
  %v937 = vpop.permute.xlu0 %936
  %938 = vrot.lane.b32.xlu0 %v640, 5
  %v939 = vpop.permute.xlu0 %938
  %940 = vrot.lane.b32.xlu0 %v628, 5
  %v941 = vpop.permute.xlu0 %940
  %942 = vrot.lane.b32.xlu0 %v641, 5
  %v943 = vpop.permute.xlu0 %942
  %944 = vrot.lane.b32.xlu0 %v632, 5
  %v945 = vpop.permute.xlu0 %944
  %946 = vrot.lane.b32.xlu0 %v642, 5
  %v947 = vpop.permute.xlu0 %946
  %948 = vrot.lane.b32.xlu0 %v636, 5
  %v949 = vpop.permute.xlu0 %948
  %950 = vrot.lane.b32.xlu0 %v643, 5
  %v951 = vpop.permute.xlu0 %950
  %v952 = vsel %vm204, %v817, %v819
  %v953 = vsel %vm204, %v821, %v823
  %v954 = vsel %vm204, %v825, %v827
  %v955 = vsel %vm204, %v829, %v831
  %v956 = vsel %vm204, %v833, %v835
  %v957 = vsel %vm204, %v837, %v839
  %v958 = vsel %vm204, %v841, %v843
  %v959 = vsel %vm204, %v845, %v847
  %v960 = vsel %vm204, %v849, %v851
  %v961 = vsel %vm204, %v853, %v855
  %v962 = vsel %vm204, %v857, %v859
  %v963 = vsel %vm204, %v861, %v863
  %v964 = vsel %vm204, %v865, %v867
  %v965 = vsel %vm204, %v869, %v871
  %v966 = vsel %vm204, %v873, %v875
  %v967 = vsel %vm204, %v877, %v879
  %v968 = vsel %vm204, %v889, %v891
  %v969 = vsel %vm204, %v893, %v895
  %v970 = vsel %vm204, %v897, %v899
  %v971 = vsel %vm204, %v901, %v903
  %v972 = vsel %vm204, %v905, %v907
  %v973 = vsel %vm204, %v909, %v911
  %v974 = vsel %vm204, %v913, %v915
  %v975 = vsel %vm204, %v917, %v919
  %v976 = vsel %vm204, %v921, %v923
  %v977 = vsel %vm204, %v925, %v927
  %v978 = vsel %vm204, %v929, %v931
  %v979 = vsel %vm204, %v933, %v935
  %v980 = vsel %vm204, %v937, %v939
  %v981 = vsel %vm204, %v941, %v943
  %v982 = vsel %vm204, %v945, %v947
  %v983 = vsel %vm204, %v949, %v951
  %vm1020 = vcmask 523264
  %v1022 = vsel %vm1020, %v784, 0
  %v1025 = vsel %vm1020, %v789, 0
  %v1028 = vsel %vm1020, %v794, 0
  %v1031 = vsel %vm1020, %v799, 0
  %1033 = vmatprep.subr.bf16.mxu0 0
  %1034 = vmatpush1.bf16.msra.mxu0 %v952
  %1035 = vmatprep.subr.bf16.mxu0 0
  %1036 = vmatpush1.bf16.msra.mxu0 %v953
  %1037 = vmatprep.subr.bf16.mxu0 0
  %1038 = vmatpush1.bf16.msra.mxu0 %v954
  %1039 = vmatprep.subr.bf16.mxu0 0
  %1040 = vmatpush1.bf16.msra.mxu0 %v955
  %1041 = vmatprep.subr.bf16.mxu0 0
  %1042 = vmatpush1.bf16.msra.mxu0 %v956
  %1043 = vmatprep.subr.bf16.mxu0 0
  %1044 = vmatpush1.bf16.msra.mxu0 %v957
  %1045 = vmatprep.subr.bf16.mxu0 0
  %1046 = vmatpush1.bf16.msra.mxu0 %v958
  %1047 = vmatprep.subr.bf16.mxu0 0
  %1048 = vmatpush1.bf16.msra.mxu0 %v959
  %1049 = vmatprep.subr.bf16.mxu0 0
  %1050 = vmatpush1.bf16.msra.mxu0 %v960
  %1051 = vmatprep.subr.bf16.mxu0 0
  %1052 = vmatpush1.bf16.msra.mxu0 %v961
  %1053 = vmatprep.subr.bf16.mxu0 0
  %1054 = vmatpush1.bf16.msra.mxu0 %v962
  %1055 = vmatprep.subr.bf16.mxu0 0
  %1056 = vmatpush1.bf16.msra.mxu0 %v963
  %1057 = vmatprep.subr.bf16.mxu0 0
  %1058 = vmatpush1.bf16.msra.mxu0 %v964
  %1059 = vmatprep.subr.bf16.mxu0 0
  %1060 = vmatpush1.bf16.msra.mxu0 %v965
  %1061 = vmatprep.subr.bf16.mxu0 0
  %1062 = vmatpush1.bf16.msra.mxu0 %v966
  %1063 = vmatprep.subr.bf16.mxu0 0
  %1064 = vmatpush1.bf16.msra.mxu0 %v967
  %1065 = vmatprep.mubr.bf16.mxu0 %v781
  %1066 = vmatmul.mubr.bf16.gmra.mrb[0].mxu0 %v780
  %v1067 = vpop.f32.mrb[0].mxu0
  %v1068 = vadd.f32 %v679, %v1067
  %v1069 = vpop.f32.mrb[0].mxu0
  %v1070 = vpop.f32.mrb[0].mxu0
  %v1071 = vadd.f32 %v684, %v1070
  %v1072 = vpop.f32.mrb[0].mxu0
  %1073 = vmatprep.mubr.bf16.mxu0 %v786
  %1074 = vmatmul.mubr.bf16.gmra.mrb[0].mxu0 %v785
  %v1075 = vpop.f32.mrb[0].mxu0
  %v1076 = vadd.f32 %v689, %v1075
  %v1077 = vpop.f32.mrb[0].mxu0
  %v1078 = vpop.f32.mrb[0].mxu0
  %v1079 = vadd.f32 %v694, %v1078
  %v1080 = vpop.f32.mrb[0].mxu0
  %1081 = vmatprep.mubr.bf16.mxu0 %v791
  %1082 = vmatmul.mubr.bf16.gmra.mrb[0].mxu0 %v790
  %v1083 = vpop.f32.mrb[0].mxu0
  %v1084 = vadd.f32 %v699, %v1083
  %v1085 = vpop.f32.mrb[0].mxu0
  %v1086 = vpop.f32.mrb[0].mxu0
  %v1087 = vadd.f32 %v704, %v1086
  %v1088 = vpop.f32.mrb[0].mxu0
  %1089 = vmatprep.mubr.bf16.mxu0 %v796
  %1090 = vmatmul.mubr.bf16.gmra.mrb[0].mxu0 %v795
  %v1091 = vpop.f32.mrb[0].mxu0
  %v1092 = vadd.f32 %v709, %v1091
  %v1093 = vpop.f32.mrb[0].mxu0
  %v1094 = vpop.f32.mrb[0].mxu0
  %v1095 = vadd.f32 %v714, %v1094
  %v1096 = vpop.f32.mrb[0].mxu0
  %1097 = vdwg.mxu0
  %1098 = vmatprep.subr.bf16.mxu0 0
  %1099 = vmatpush1.bf16.msra.mxu0 %v881
  %1100 = vmatprep.subr.bf16.mxu0 0
  %1101 = vmatpush1.bf16.msra.mxu0 %v883
  %1102 = vmatprep.subr.bf16.mxu0 0
  %1103 = vmatpush1.bf16.msra.mxu0 %v885
  %1104 = vmatprep.subr.bf16.mxu0 0
  %1105 = vmatpush1.bf16.msra.mxu0 %v887
  %1106 = vmatprep.subr.bf16.mxu0 0
  %1107 = vmatpush1.bf16.msra.mxu0 %v968
  %1108 = vmatprep.subr.bf16.mxu0 0
  %1109 = vmatpush1.bf16.msra.mxu0 %v969
  %1110 = vmatprep.subr.bf16.mxu0 0
  %1111 = vmatpush1.bf16.msra.mxu0 %v970
  %1112 = vmatprep.subr.bf16.mxu0 0
  %1113 = vmatpush1.bf16.msra.mxu0 %v971
  %1114 = vmatprep.subr.bf16.mxu0 0
  %1115 = vmatpush1.bf16.msra.mxu0 %v972
  %1116 = vmatprep.subr.bf16.mxu0 0
  %1117 = vmatpush1.bf16.msra.mxu0 %v973
  %1118 = vmatprep.subr.bf16.mxu0 0
  %1119 = vmatpush1.bf16.msra.mxu0 %v974
  %1120 = vmatprep.subr.bf16.mxu0 0
  %1121 = vmatpush1.bf16.msra.mxu0 %v975
  %1122 = vmatprep.subr.bf16.mxu0 0
  %1123 = vmatpush1.bf16.msra.mxu0 %v976
  %1124 = vmatprep.subr.bf16.mxu0 0
  %1125 = vmatpush1.bf16.msra.mxu0 %v977
  %1126 = vmatprep.subr.bf16.mxu0 0
  %1127 = vmatpush1.bf16.msra.mxu0 %v978
  %1128 = vmatprep.subr.bf16.mxu0 0
  %1129 = vmatpush1.bf16.msra.mxu0 %v979
  %1130 = vmatprep.mubr.bf16.mxu0 %v783
  %1131 = vmatmul.mubr.bf16.gmra.mrb[0].mxu0 %v782
  %v1132 = vpop.f32.mrb[0].mxu0
  %v1133 = vadd.f32 %v1068, %v1132
  %v1134 = vpop.f32.mrb[0].mxu0
  %v1135 = vpop.f32.mrb[0].mxu0
  %v1136 = vadd.f32 %v1071, %v1135
  %v1137 = vpop.f32.mrb[0].mxu0
  %1138 = vmatprep.mubr.bf16.mxu0 %v788
  %1139 = vmatmul.mubr.bf16.gmra.mrb[0].mxu0 %v787
  %v1140 = vpop.f32.mrb[0].mxu0
  %v1141 = vadd.f32 %v1076, %v1140
  %v1142 = vpop.f32.mrb[0].mxu0
  %v1143 = vpop.f32.mrb[0].mxu0
  %v1144 = vadd.f32 %v1079, %v1143
  %v1145 = vpop.f32.mrb[0].mxu0
  %1146 = vmatprep.mubr.bf16.mxu0 %v793
  %1147 = vmatmul.mubr.bf16.gmra.mrb[0].mxu0 %v792
  %v1148 = vpop.f32.mrb[0].mxu0
  %v1149 = vadd.f32 %v1084, %v1148
  %v1150 = vpop.f32.mrb[0].mxu0
  %v1151 = vpop.f32.mrb[0].mxu0
  %v1152 = vadd.f32 %v1087, %v1151
  %v1153 = vpop.f32.mrb[0].mxu0
  %1154 = vmatprep.mubr.bf16.mxu0 %v798
  %1155 = vmatmul.mubr.bf16.gmra.mrb[0].mxu0 %v797
  %v1156 = vpop.f32.mrb[0].mxu0
  %v1157 = vadd.f32 %v1092, %v1156
  %v1158 = vpop.f32.mrb[0].mxu0
  %v1159 = vpop.f32.mrb[0].mxu0
  %v1160 = vadd.f32 %v1095, %v1159
  %v1161 = vpop.f32.mrb[0].mxu0
  %1162 = vdwg.mxu0
  %1163 = vmatprep.subr.bf16.mxu0 0
  %1164 = vmatpush1.bf16.msra.mxu0 %v980
  %1165 = vmatprep.subr.bf16.mxu0 0
  %1166 = vmatpush1.bf16.msra.mxu0 %v981
  %1167 = vmatprep.subr.bf16.mxu0 0
  %1168 = vmatpush1.bf16.msra.mxu0 %v982
  %1169 = vmatprep.subr.bf16.mxu0 0
  %1170 = vmatpush1.bf16.msra.mxu0 %v983
  %1171 = vmatprep.subr.bf16.mxu0 0
  %1172 = vmatpush1.bf16.msra.mxu0 0
  %1173 = vmatprep.subr.bf16.mxu0 0
  %1174 = vmatpush1.bf16.msra.mxu0 0
  %1175 = vmatprep.subr.bf16.mxu0 0
  %1176 = vmatpush1.bf16.msra.mxu0 0
  %1177 = vmatprep.subr.bf16.mxu0 0
  %1178 = vmatpush1.bf16.msra.mxu0 0
  %1179 = vmatprep.subr.bf16.mxu0 0
  %1180 = vmatpush1.bf16.msra.mxu0 0
  %1181 = vmatprep.subr.bf16.mxu0 0
  %1182 = vmatpush1.bf16.msra.mxu0 0
  %1183 = vmatprep.subr.bf16.mxu0 0
  %1184 = vmatpush1.bf16.msra.mxu0 0
  %1185 = vmatprep.subr.bf16.mxu0 0
  %1186 = vmatpush1.bf16.msra.mxu0 0
  %1187 = vmatprep.subr.bf16.mxu0 0
  %1188 = vmatpush1.bf16.msra.mxu0 0
  %1189 = vmatprep.subr.bf16.mxu0 0
  %1190 = vmatpush1.bf16.msra.mxu0 0
  %1191 = vmatprep.subr.bf16.mxu0 0
  %1192 = vmatpush1.bf16.msra.mxu0 0
  %1193 = vmatprep.subr.bf16.mxu0 0
  %1194 = vmatpush1.bf16.msra.mxu0 0
  %1195 = vmatprep.mubr.bf16.mxu0 0
  %1196 = vmatmul.mubr.bf16.gmra.mrb[0].mxu0 %v1022
  %v1197 = vpop.f32.mrb[0].mxu0
  %v1198 = vadd.f32 %v1133, %v1197
  %v1199 = vpop.f32.mrb[0].mxu0
  %v1200 = vpop.f32.mrb[0].mxu0
  %v1201 = vadd.f32 %v1136, %v1200
  %v1202 = vpop.f32.mrb[0].mxu0
  %1203 = vmatprep.mubr.bf16.mxu0 0
  %1204 = vmatmul.mubr.bf16.gmra.mrb[0].mxu0 %v1025
  %v1205 = vpop.f32.mrb[0].mxu0
  %v1206 = vadd.f32 %v1141, %v1205
  %v1207 = vpop.f32.mrb[0].mxu0
  %v1208 = vpop.f32.mrb[0].mxu0
  %v1209 = vadd.f32 %v1144, %v1208
  %v1210 = vpop.f32.mrb[0].mxu0
  %1211 = vmatprep.mubr.bf16.mxu0 0
  %1212 = vmatmul.mubr.bf16.gmra.mrb[0].mxu0 %v1028
  %v1213 = vpop.f32.mrb[0].mxu0
  %v1214 = vadd.f32 %v1149, %v1213
  %v1215 = vpop.f32.mrb[0].mxu0
  %v1216 = vpop.f32.mrb[0].mxu0
  %v1217 = vadd.f32 %v1152, %v1216
  %v1218 = vpop.f32.mrb[0].mxu0
  %1219 = vmatprep.mubr.bf16.mxu0 0
  %1220 = vmatmul.mubr.bf16.gmra.mrb[0].mxu0 %v1031
  %v1221 = vpop.f32.mrb[0].mxu0
  %v1222 = vadd.f32 %v1157, %v1221
  %v1223 = vpop.f32.mrb[0].mxu0
  %v1224 = vpop.f32.mrb[0].mxu0
  %v1225 = vadd.f32 %v1160, %v1224
  %v1226 = vpop.f32.mrb[0].mxu0
  %1227 = vdwg.mxu0
  %v1228 = vmax.f32 %v1198, 0.0
  %v1229 = vmax.f32 %v1201, 0.0
  %v1230 = vmax.f32 %v1206, 0.0
  %v1231 = vmax.f32 %v1209, 0.0
  %v1232 = vmax.f32 %v1214, 0.0
  %v1233 = vmax.f32 %v1217, 0.0
  %v1234 = vmax.f32 %v1222, 0.0
  %v1235 = vmax.f32 %v1225, 0.0
  %vm1236 = vcmp.lt.s32.totalorder %v36, 32
  %v1237 = vsel %vm1236, 1, 0
  %vm1238 = vcmp.eq.s32.totalorder %v1237, 1
  %v1239 = vsel %vm1238, %v1228, 0.0
  %v1240 = vsel %vm1238, %v1229, 0.0
  %v1241 = vsel %vm1238, %v1230, 0.0
  %v1242 = vsel %vm1238, %v1231, 0.0
  %v1243 = vsel %vm1238, %v1232, 0.0
  %v1244 = vsel %vm1238, %v1233, 0.0
  %v1245 = vsel %vm1238, %v1234, 0.0
  %v1246 = vsel %vm1238, %v1235, 0.0
  %v1247 = vpack.c.bf16 %v1240, %v1239
  %v1248 = vpack.c.bf16 %v1242, %v1241
  %v1249 = vpack.c.bf16 %v1244, %v1243
  %v1250 = vpack.c.bf16 %v1246, %v1245
  %1251 = vst [vmem:[#allocation2 + $0x8] sm:$0xff] %v1247
  %1252 = vst [vmem:[#allocation2 + $0x20] sm:$0xff] %v1248
  %1253 = vst [vmem:[#allocation2 + $0x38] sm:$0xff] %v1249
  %1254 = vst [vmem:[#allocation2 + $0x50] sm:$0xff] %v1250
  %v1255 = vld [vmem:[#allocation2] sm:$0xff]
  %v1256 = vld [vmem:[#allocation2 + $0x8] sm:$0xff]
  %v1257 = vld [vmem:[#allocation2 + $0x18] sm:$0xff]
  %v1258 = vld [vmem:[#allocation2 + $0x20] sm:$0xff]
  %v1259 = vld [vmem:[#allocation2 + $0x30] sm:$0xff]
  %v1260 = vld [vmem:[#allocation2 + $0x38] sm:$0xff]
  %v1261 = vld [vmem:[#allocation2 + $0x48] sm:$0xff]
  %v1262 = vld [vmem:[#allocation2 + $0x50] sm:$0xff]
  %v1263 = vlaneseq
  %v1264 = vshrl.u32 %v1263, 7
  %v1265 = vsub.s32 0, %v1264
  %v1266 = vrot.slane %v53, %v1265
  %1267 = vrot.lane.b32.xlu0 %v1266, 123
  %v1268 = vpop.permute.xlu0 %1267
  %vm1269 = vcmp.ne.s16.totalorder %v1268, 0
  %v1270 = vsel %vm1269, %v1255, 0
  %v1271 = vsel %vm1269, %v1256, 0
  %v1272 = vsel %vm1269, %v1257, 0
  %v1273 = vsel %vm1269, %v1258, 0
  %v1274 = vsel %vm1269, %v1259, 0
  %v1275 = vsel %vm1269, %v1260, 0
  %v1276 = vsel %vm1269, %v1261, 0
  %v1277 = vsel %vm1269, %v1262, 0
  %v1278 = vlaneseq
  %v1279 = vshrl.u32 %v1278, 7
  %v1280 = vsub.s32 0, %v1279
  %v1281 = vrot.slane %v71, %v1280
  %1282 = vrot.lane.b32.xlu0 %v1281, 124
  %v1283 = vpop.permute.xlu0 %1282
  %vm1284 = vcmp.ne.s16.totalorder %v1283, 0
  %v1285 = vsel %vm1284, %v1255, 0
  %v1286 = vsel %vm1284, %v1256, 0
  %v1287 = vsel %vm1284, %v1257, 0
  %v1288 = vsel %vm1284, %v1258, 0
  %v1289 = vsel %vm1284, %v1259, 0
  %v1290 = vsel %vm1284, %v1260, 0
  %v1291 = vsel %vm1284, %v1261, 0
  %v1292 = vsel %vm1284, %v1262, 0
  %v1293 = vlaneseq
  %v1294 = vshrl.u32 %v1293, 7
  %v1295 = vsub.s32 0, %v1294
  %v1296 = vrot.slane %v91, %v1295
  %1297 = vrot.lane.b32.xlu0 %v1296, 125
  %v1298 = vpop.permute.xlu0 %1297
  %vm1299 = vcmp.ne.s16.totalorder %v1298, 0
  %v1300 = vsel %vm1299, %v1255, 0
  %v1301 = vsel %vm1299, %v1256, 0
  %v1302 = vsel %vm1299, %v1257, 0
  %v1303 = vsel %vm1299, %v1258, 0
  %v1304 = vsel %vm1299, %v1259, 0
  %v1305 = vsel %vm1299, %v1260, 0
  %v1306 = vsel %vm1299, %v1261, 0
  %v1307 = vsel %vm1299, %v1262, 0
  %v1308 = vlaneseq
  %v1309 = vshrl.u32 %v1308, 7
  %v1310 = vsub.s32 0, %v1309
  %v1311 = vrot.slane %v109, %v1310
  %1312 = vrot.lane.b32.xlu0 %v1311, 127
  %v1313 = vpop.permute.xlu0 %1312
  %vm1314 = vcmp.ne.s16.totalorder %v1313, 0
  %v1315 = vsel %vm1314, %v1255, 0
  %v1316 = vsel %vm1314, %v1256, 0
  %v1317 = vsel %vm1314, %v1257, 0
  %v1318 = vsel %vm1314, %v1258, 0
  %v1319 = vsel %vm1314, %v1259, 0
  %v1320 = vsel %vm1314, %v1260, 0
  %v1321 = vsel %vm1314, %v1261, 0
  %v1322 = vsel %vm1314, %v1262, 0
  %v1323 = vld [vmem:[#allocation2 + $0x8] sm:$0xff]
  %v1324 = vld [vmem:[#allocation2 + $0x10] sm:$0xff]
  %v1325 = vld [vmem:[#allocation2 + $0x20] sm:$0xff]
  %v1326 = vld [vmem:[#allocation2 + $0x28] sm:$0xff]
  %v1327 = vld [vmem:[#allocation2 + $0x38] sm:$0xff]
  %v1328 = vld [vmem:[#allocation2 + $0x40] sm:$0xff]
  %v1329 = vld [vmem:[#allocation2 + $0x50] sm:$0xff]
  %v1330 = vld [vmem:[#allocation2 + $0x58] sm:$0xff]
  %v1331 = vlaneseq
  %v1332 = vshrl.u32 %v1331, 7
  %v1333 = vsub.s32 0, %v1332
  %v1334 = vrot.slane %v143, %v1333
  %1335 = vrot.lane.b32.xlu0 %v1334, 1
  %v1336 = vpop.permute.xlu0 %1335
  %vm1337 = vcmp.ne.s16.totalorder %v1336, 0
  %v1338 = vsel %vm1337, %v1323, 0
  %v1339 = vsel %vm1337, %v1324, 0
  %v1340 = vsel %vm1337, %v1325, 0
  %v1341 = vsel %vm1337, %v1326, 0
  %v1342 = vsel %vm1337, %v1327, 0
  %v1343 = vsel %vm1337, %v1328, 0
  %v1344 = vsel %vm1337, %v1329, 0
  %v1345 = vsel %vm1337, %v1330, 0
  %v1346 = vlaneseq
  %v1347 = vshrl.u32 %v1346, 7
  %v1348 = vsub.s32 0, %v1347
  %v1349 = vrot.slane %v163, %v1348
  %1350 = vrot.lane.b32.xlu0 %v1349, 3
  %v1351 = vpop.permute.xlu0 %1350
  %vm1352 = vcmp.ne.s16.totalorder %v1351, 0
  %v1353 = vsel %vm1352, %v1323, 0
  %v1354 = vsel %vm1352, %v1324, 0
  %v1355 = vsel %vm1352, %v1325, 0
  %v1356 = vsel %vm1352, %v1326, 0
  %v1357 = vsel %vm1352, %v1327, 0
  %v1358 = vsel %vm1352, %v1328, 0
  %v1359 = vsel %vm1352, %v1329, 0
  %v1360 = vsel %vm1352, %v1330, 0
  %v1361 = vlaneseq
  %v1362 = vshrl.u32 %v1361, 7
  %v1363 = vsub.s32 0, %v1362
  %v1364 = vrot.slane %v181, %v1363
  %1365 = vrot.lane.b32.xlu0 %v1364, 4
  %v1366 = vpop.permute.xlu0 %1365
  %vm1367 = vcmp.ne.s16.totalorder %v1366, 0
  %v1368 = vsel %vm1367, %v1323, 0
  %v1369 = vsel %vm1367, %v1324, 0
  %v1370 = vsel %vm1367, %v1325, 0
  %v1371 = vsel %vm1367, %v1326, 0
  %v1372 = vsel %vm1367, %v1327, 0
  %v1373 = vsel %vm1367, %v1328, 0
  %v1374 = vsel %vm1367, %v1329, 0
  %v1375 = vsel %vm1367, %v1330, 0
  %v1376 = vlaneseq
  %v1377 = vshrl.u32 %v1376, 7
  %v1378 = vsub.s32 0, %v1377
  %v1379 = vrot.slane %v200, %v1378
  %1380 = vrot.lane.b32.xlu0 %v1379, 5
  %v1381 = vpop.permute.xlu0 %1380
  %vm1382 = vcmp.ne.s16.totalorder %v1381, 0
  %v1383 = vsel %vm1382, %v1323, 0
  %v1384 = vsel %vm1382, %v1324, 0
  %v1385 = vsel %vm1382, %v1325, 0
  %v1386 = vsel %vm1382, %v1326, 0
  %v1387 = vsel %vm1382, %v1327, 0
  %v1388 = vsel %vm1382, %v1328, 0
  %v1389 = vsel %vm1382, %v1329, 0
  %v1390 = vsel %vm1382, %v1330, 0
  %1399 = vrot.lane.b32.xlu0 %v1285, 127
  %v1400 = vpop.permute.xlu0 %1399
  %1401 = vrot.lane.b32.xlu0 %v1286, 127
  %v1402 = vpop.permute.xlu0 %1401
  %1403 = vrot.lane.b32.xlu0 %v1287, 127
  %v1404 = vpop.permute.xlu0 %1403
  %1405 = vrot.lane.b32.xlu0 %v1288, 127
  %v1406 = vpop.permute.xlu0 %1405
  %1407 = vrot.lane.b32.xlu0 %v1289, 127
  %v1408 = vpop.permute.xlu0 %1407
  %1409 = vrot.lane.b32.xlu0 %v1290, 127
  %v1410 = vpop.permute.xlu0 %1409
  %1411 = vrot.lane.b32.xlu0 %v1291, 127
  %v1412 = vpop.permute.xlu0 %1411
  %1413 = vrot.lane.b32.xlu0 %v1292, 127
  %v1414 = vpop.permute.xlu0 %1413
  %v1415 = vsel %vm113, %v1400, %v1402
  %v1416 = vsel %vm113, %v1404, %v1406
  %v1417 = vsel %vm113, %v1408, %v1410
  %v1418 = vsel %vm113, %v1412, %v1414
  %1427 = vrot.lane.b32.xlu0 %v1300, 126
  %v1428 = vpop.permute.xlu0 %1427
  %1429 = vrot.lane.b32.xlu0 %v1301, 126
  %v1430 = vpop.permute.xlu0 %1429
  %1431 = vrot.lane.b32.xlu0 %v1302, 126
  %v1432 = vpop.permute.xlu0 %1431
  %1433 = vrot.lane.b32.xlu0 %v1303, 126
  %v1434 = vpop.permute.xlu0 %1433
  %1435 = vrot.lane.b32.xlu0 %v1304, 126
  %v1436 = vpop.permute.xlu0 %1435
  %1437 = vrot.lane.b32.xlu0 %v1305, 126
  %v1438 = vpop.permute.xlu0 %1437
  %1439 = vrot.lane.b32.xlu0 %v1306, 126
  %v1440 = vpop.permute.xlu0 %1439
  %1441 = vrot.lane.b32.xlu0 %v1307, 126
  %v1442 = vpop.permute.xlu0 %1441
  %v1443 = vsel %vm347, %v1428, %v1430
  %v1444 = vsel %vm347, %v1432, %v1434
  %v1445 = vsel %vm347, %v1436, %v1438
  %v1446 = vsel %vm347, %v1440, %v1442
  %1455 = vrot.lane.b32.xlu0 %v1315, 124
  %v1456 = vpop.permute.xlu0 %1455
  %1457 = vrot.lane.b32.xlu0 %v1316, 124
  %v1458 = vpop.permute.xlu0 %1457
  %1459 = vrot.lane.b32.xlu0 %v1317, 124
  %v1460 = vpop.permute.xlu0 %1459
  %1461 = vrot.lane.b32.xlu0 %v1318, 124
  %v1462 = vpop.permute.xlu0 %1461
  %1463 = vrot.lane.b32.xlu0 %v1319, 124
  %v1464 = vpop.permute.xlu0 %1463
  %1465 = vrot.lane.b32.xlu0 %v1320, 124
  %v1466 = vpop.permute.xlu0 %1465
  %1467 = vrot.lane.b32.xlu0 %v1321, 124
  %v1468 = vpop.permute.xlu0 %1467
  %1469 = vrot.lane.b32.xlu0 %v1322, 124
  %v1470 = vpop.permute.xlu0 %1469
  %v1471 = vsel %vm75, %v1456, %v1458
  %v1472 = vsel %vm75, %v1460, %v1462
  %v1473 = vsel %vm75, %v1464, %v1466
  %v1474 = vsel %vm75, %v1468, %v1470
  %1479 = vrot.lane.b32.xlu0 %v1256, 123
  %v1480 = vpop.permute.xlu0 %1479
  %1481 = vrot.lane.b32.xlu0 %v1258, 123
  %v1482 = vpop.permute.xlu0 %1481
  %1483 = vrot.lane.b32.xlu0 %v1260, 123
  %v1484 = vpop.permute.xlu0 %1483
  %1485 = vrot.lane.b32.xlu0 %v1262, 123
  %v1486 = vpop.permute.xlu0 %1485
  %1495 = vrot.lane.b32.xlu0 %v1338, 122
  %v1496 = vpop.permute.xlu0 %1495
  %1497 = vrot.lane.b32.xlu0 %v1339, 122
  %v1498 = vpop.permute.xlu0 %1497
  %1499 = vrot.lane.b32.xlu0 %v1340, 122
  %v1500 = vpop.permute.xlu0 %1499
  %1501 = vrot.lane.b32.xlu0 %v1341, 122
  %v1502 = vpop.permute.xlu0 %1501
  %1503 = vrot.lane.b32.xlu0 %v1342, 122
  %v1504 = vpop.permute.xlu0 %1503
  %1505 = vrot.lane.b32.xlu0 %v1343, 122
  %v1506 = vpop.permute.xlu0 %1505
  %1507 = vrot.lane.b32.xlu0 %v1344, 122
  %v1508 = vpop.permute.xlu0 %1507
  %1509 = vrot.lane.b32.xlu0 %v1345, 122
  %v1510 = vpop.permute.xlu0 %1509
  %v1511 = vsel %vm480, %v1496, %v1498
  %v1512 = vsel %vm480, %v1500, %v1502
  %v1513 = vsel %vm480, %v1504, %v1506
  %v1514 = vsel %vm480, %v1508, %v1510
  %1523 = vrot.lane.b32.xlu0 %v1353, 120
  %v1524 = vpop.permute.xlu0 %1523
  %1525 = vrot.lane.b32.xlu0 %v1354, 120
  %v1526 = vpop.permute.xlu0 %1525
  %1527 = vrot.lane.b32.xlu0 %v1355, 120
  %v1528 = vpop.permute.xlu0 %1527
  %1529 = vrot.lane.b32.xlu0 %v1356, 120
  %v1530 = vpop.permute.xlu0 %1529
  %1531 = vrot.lane.b32.xlu0 %v1357, 120
  %v1532 = vpop.permute.xlu0 %1531
  %1533 = vrot.lane.b32.xlu0 %v1358, 120
  %v1534 = vpop.permute.xlu0 %1533
  %1535 = vrot.lane.b32.xlu0 %v1359, 120
  %v1536 = vpop.permute.xlu0 %1535
  %1537 = vrot.lane.b32.xlu0 %v1360, 120
  %v1538 = vpop.permute.xlu0 %1537
  %v1539 = vsel %vm533, %v1524, %v1526
  %v1540 = vsel %vm533, %v1528, %v1530
  %v1541 = vsel %vm533, %v1532, %v1534
  %v1542 = vsel %vm533, %v1536, %v1538
  %1551 = vrot.lane.b32.xlu0 %v1368, 119
  %v1552 = vpop.permute.xlu0 %1551
  %1553 = vrot.lane.b32.xlu0 %v1369, 119
  %v1554 = vpop.permute.xlu0 %1553
  %1555 = vrot.lane.b32.xlu0 %v1370, 119
  %v1556 = vpop.permute.xlu0 %1555
  %1557 = vrot.lane.b32.xlu0 %v1371, 119
  %v1558 = vpop.permute.xlu0 %1557
  %1559 = vrot.lane.b32.xlu0 %v1372, 119
  %v1560 = vpop.permute.xlu0 %1559
  %1561 = vrot.lane.b32.xlu0 %v1373, 119
  %v1562 = vpop.permute.xlu0 %1561
  %1563 = vrot.lane.b32.xlu0 %v1374, 119
  %v1564 = vpop.permute.xlu0 %1563
  %1565 = vrot.lane.b32.xlu0 %v1375, 119
  %v1566 = vpop.permute.xlu0 %1565
  %v1567 = vsel %vm586, %v1552, %v1554
  %v1568 = vsel %vm586, %v1556, %v1558
  %v1569 = vsel %vm586, %v1560, %v1562
  %v1570 = vsel %vm586, %v1564, %v1566
  %1579 = vrot.lane.b32.xlu0 %v1383, 118
  %v1580 = vpop.permute.xlu0 %1579
  %1581 = vrot.lane.b32.xlu0 %v1384, 118
  %v1582 = vpop.permute.xlu0 %1581
  %1583 = vrot.lane.b32.xlu0 %v1385, 118
  %v1584 = vpop.permute.xlu0 %1583
  %1585 = vrot.lane.b32.xlu0 %v1386, 118
  %v1586 = vpop.permute.xlu0 %1585
  %1587 = vrot.lane.b32.xlu0 %v1387, 118
  %v1588 = vpop.permute.xlu0 %1587
  %1589 = vrot.lane.b32.xlu0 %v1388, 118
  %v1590 = vpop.permute.xlu0 %1589
  %1591 = vrot.lane.b32.xlu0 %v1389, 118
  %v1592 = vpop.permute.xlu0 %1591
  %1593 = vrot.lane.b32.xlu0 %v1390, 118
  %v1594 = vpop.permute.xlu0 %1593
  %v1595 = vsel %vm639, %v1580, %v1582
  %v1596 = vsel %vm639, %v1584, %v1586
  %v1597 = vsel %vm639, %v1588, %v1590
  %v1598 = vsel %vm639, %v1592, %v1594
  %v1599 = vld [vmem:[%s3] sm:$0xff]
  %v1600 = vld [vmem:[%s3 + $0x8] sm:$0xff]
  %v1601 = vld [vmem:[%s3 + $0x10] sm:$0xf]
  %v1602 = vld [vmem:[%s3 + $0x14] sm:$0xff]
  %v1603 = vld [vmem:[%s3 + $0x1c] sm:$0xff]
  %v1604 = vld [vmem:[%s3 + $0x24] sm:$0xf]
  %v1605 = vld [vmem:[%s3 + $0x28] sm:$0xff]
  %v1606 = vld [vmem:[%s3 + $0x30] sm:$0xff]
  %v1607 = vld [vmem:[%s3 + $0x38] sm:$0xf]
  %v1608 = vld [vmem:[%s3 + $0x3c] sm:$0xff]
  %v1609 = vld [vmem:[%s3 + $0x44] sm:$0xff]
  %v1610 = vld [vmem:[%s3 + $0x4c] sm:$0xf]
  %v1611 = vld [vmem:[%s3 + $0x50] sm:$0xff]
  %v1612 = vld [vmem:[%s3 + $0x58] sm:$0xff]
  %v1613 = vld [vmem:[%s3 + $0x60] sm:$0xf]
  %v1614 = vld [vmem:[%s3 + $0x64] sm:$0xff]
  %v1615 = vld [vmem:[%s3 + $0x6c] sm:$0xff]
  %v1616 = vld [vmem:[%s3 + $0x74] sm:$0xf]
  %v1617 = vld [vmem:[%s3 + $0x78] sm:$0xff]
  %v1618 = vld [vmem:[%s3 + $0x80] sm:$0xff]
  %v1619 = vld [vmem:[%s3 + $0x88] sm:$0xf]
  %v1620 = vld [vmem:[%s3 + $0x8c] sm:$0xff]
  %v1621 = vld [vmem:[%s3 + $0x94] sm:$0xff]
  %v1622 = vld [vmem:[%s3 + $0x9c] sm:$0xf]
  %v1623 = vld [vmem:[%s4] sm:$0xff]
  %v1624 = vld [vmem:[%s4 + $0x8] sm:$0xff]
  %v1625 = vld [vmem:[%s4 + $0x10] sm:$0xff]
  %v1626 = vld [vmem:[%s4 + $0x18] sm:$0xff]
  %v1627 = vld [vmem:[%s4 + $0x20] sm:$0xff]
  %v1628 = vld [vmem:[%s4 + $0x28] sm:$0xff]
  %v1629 = vld [vmem:[%s4 + $0x30] sm:$0xff]
  %v1630 = vld [vmem:[%s4 + $0x38] sm:$0xff]
  %1632 = vset.pattern.permute.xlu0 0
  %1633 = vperm.xlu0 %1632, %v1623
  %v1634 = vpop.permute.xlu0 %1633
  %1637 = vset.pattern.permute.xlu0 0
  %1638 = vperm.xlu0 %1637, %v1624
  %v1639 = vpop.permute.xlu0 %1638
  %1642 = vset.pattern.permute.xlu0 0
  %1643 = vperm.xlu0 %1642, %v1625
  %v1644 = vpop.permute.xlu0 %1643
  %1647 = vset.pattern.permute.xlu0 0
  %1648 = vperm.xlu0 %1647, %v1626
  %v1649 = vpop.permute.xlu0 %1648
  %1652 = vset.pattern.permute.xlu0 0
  %1653 = vperm.xlu0 %1652, %v1627
  %v1654 = vpop.permute.xlu0 %1653
  %1657 = vset.pattern.permute.xlu0 0
  %1658 = vperm.xlu0 %1657, %v1628
  %v1659 = vpop.permute.xlu0 %1658
  %1662 = vset.pattern.permute.xlu0 0
  %1663 = vperm.xlu0 %1662, %v1629
  %v1664 = vpop.permute.xlu0 %1663
  %1667 = vset.pattern.permute.xlu0 0
  %1668 = vperm.xlu0 %1667, %v1630
  %v1669 = vpop.permute.xlu0 %1668
  %v1695 = vunpack.c.l.b16 %v1599
  %v1696 = vunpack.c.h.b16 %v1599
  %v1697 = vunpack.c.l.b16 %v1600
  %v1698 = vunpack.c.h.b16 %v1600
  %v1699 = vunpack.c.l.b16 %v1601
  %v1700 = vunpack.c.l.b16 %v1602
  %v1701 = vunpack.c.h.b16 %v1602
  %v1702 = vunpack.c.l.b16 %v1603
  %v1703 = vunpack.c.h.b16 %v1603
  %v1704 = vunpack.c.l.b16 %v1604
  %v1705 = vunpack.c.l.b16 %v1605
  %v1706 = vunpack.c.h.b16 %v1605
  %v1707 = vunpack.c.l.b16 %v1606
  %v1708 = vunpack.c.h.b16 %v1606
  %v1709 = vunpack.c.l.b16 %v1607
  %v1710 = vunpack.c.l.b16 %v1608
  %v1711 = vunpack.c.h.b16 %v1608
  %v1712 = vunpack.c.l.b16 %v1609
  %v1713 = vunpack.c.h.b16 %v1609
  %v1714 = vunpack.c.l.b16 %v1610
  %v1715 = vunpack.c.l.b16 %v1611
  %v1716 = vunpack.c.h.b16 %v1611
  %v1717 = vunpack.c.l.b16 %v1612
  %v1718 = vunpack.c.h.b16 %v1612
  %v1719 = vunpack.c.l.b16 %v1613
  %v1720 = vunpack.c.l.b16 %v1614
  %v1721 = vunpack.c.h.b16 %v1614
  %v1722 = vunpack.c.l.b16 %v1615
  %v1723 = vunpack.c.h.b16 %v1615
  %v1724 = vunpack.c.l.b16 %v1616
  %v1725 = vunpack.c.l.b16 %v1617
  %v1726 = vunpack.c.h.b16 %v1617
  %v1727 = vunpack.c.l.b16 %v1618
  %v1728 = vunpack.c.h.b16 %v1618
  %v1729 = vunpack.c.l.b16 %v1619
  %v1730 = vunpack.c.l.b16 %v1620
  %v1731 = vunpack.c.h.b16 %v1620
  %v1732 = vunpack.c.l.b16 %v1621
  %v1733 = vunpack.c.h.b16 %v1621
  %v1734 = vunpack.c.l.b16 %v1622
  %v1735 = vpack.c.b16 %v1700, %v1695
  %v1736 = vpack.c.b16 %v1701, %v1696
  %v1737 = vpack.c.b16 %v1702, %v1697
  %v1738 = vpack.c.b16 %v1703, %v1698
  %v1739 = vpack.c.b16 %v1704, %v1699
  %v1740 = vpack.c.b16 %v1710, %v1705
  %v1741 = vpack.c.b16 %v1711, %v1706
  %v1742 = vpack.c.b16 %v1712, %v1707
  %v1743 = vpack.c.b16 %v1713, %v1708
  %v1744 = vpack.c.b16 %v1714, %v1709
  %v1745 = vpack.c.b16 %v1720, %v1715
  %v1746 = vpack.c.b16 %v1721, %v1716
  %v1747 = vpack.c.b16 %v1722, %v1717
  %v1748 = vpack.c.b16 %v1723, %v1718
  %v1749 = vpack.c.b16 %v1724, %v1719
  %v1750 = vpack.c.b16 %v1730, %v1725
  %v1751 = vpack.c.b16 %v1731, %v1726
  %v1752 = vpack.c.b16 %v1732, %v1727
  %v1753 = vpack.c.b16 %v1733, %v1728
  %v1754 = vpack.c.b16 %v1734, %v1729
  %1779 = vrot.lane.b32.xlu0 %v1270, 5
  %v1780 = vpop.permute.xlu0 %1779
  %1781 = vrot.lane.b32.xlu0 %v1271, 5
  %v1782 = vpop.permute.xlu0 %1781
  %1783 = vrot.lane.b32.xlu0 %v1272, 5
  %v1784 = vpop.permute.xlu0 %1783
  %1785 = vrot.lane.b32.xlu0 %v1273, 5
  %v1786 = vpop.permute.xlu0 %1785
  %1787 = vrot.lane.b32.xlu0 %v1274, 5
  %v1788 = vpop.permute.xlu0 %1787
  %1789 = vrot.lane.b32.xlu0 %v1275, 5
  %v1790 = vpop.permute.xlu0 %1789
  %1791 = vrot.lane.b32.xlu0 %v1276, 5
  %v1792 = vpop.permute.xlu0 %1791
  %1793 = vrot.lane.b32.xlu0 %v1277, 5
  %v1794 = vpop.permute.xlu0 %1793
  %1795 = vrot.lane.b32.xlu0 %v1415, 5
  %v1796 = vpop.permute.xlu0 %1795
  %1797 = vrot.lane.b32.xlu0 %v1402, 5
  %v1798 = vpop.permute.xlu0 %1797
  %1799 = vrot.lane.b32.xlu0 %v1416, 5
  %v1800 = vpop.permute.xlu0 %1799
  %1801 = vrot.lane.b32.xlu0 %v1406, 5
  %v1802 = vpop.permute.xlu0 %1801
  %1803 = vrot.lane.b32.xlu0 %v1417, 5
  %v1804 = vpop.permute.xlu0 %1803
  %1805 = vrot.lane.b32.xlu0 %v1410, 5
  %v1806 = vpop.permute.xlu0 %1805
  %1807 = vrot.lane.b32.xlu0 %v1418, 5
  %v1808 = vpop.permute.xlu0 %1807
  %1809 = vrot.lane.b32.xlu0 %v1414, 5
  %v1810 = vpop.permute.xlu0 %1809
  %1811 = vrot.lane.b32.xlu0 %v1443, 5
  %v1812 = vpop.permute.xlu0 %1811
  %1813 = vrot.lane.b32.xlu0 %v1430, 5
  %v1814 = vpop.permute.xlu0 %1813
  %1815 = vrot.lane.b32.xlu0 %v1444, 5
  %v1816 = vpop.permute.xlu0 %1815
  %1817 = vrot.lane.b32.xlu0 %v1434, 5
  %v1818 = vpop.permute.xlu0 %1817
  %1819 = vrot.lane.b32.xlu0 %v1445, 5
  %v1820 = vpop.permute.xlu0 %1819
  %1821 = vrot.lane.b32.xlu0 %v1438, 5
  %v1822 = vpop.permute.xlu0 %1821
  %1823 = vrot.lane.b32.xlu0 %v1446, 5
  %v1824 = vpop.permute.xlu0 %1823
  %1825 = vrot.lane.b32.xlu0 %v1442, 5
  %v1826 = vpop.permute.xlu0 %1825
  %1827 = vrot.lane.b32.xlu0 %v1471, 5
  %v1828 = vpop.permute.xlu0 %1827
  %1829 = vrot.lane.b32.xlu0 %v1458, 5
  %v1830 = vpop.permute.xlu0 %1829
  %1831 = vrot.lane.b32.xlu0 %v1472, 5
  %v1832 = vpop.permute.xlu0 %1831
  %1833 = vrot.lane.b32.xlu0 %v1462, 5
  %v1834 = vpop.permute.xlu0 %1833
  %1835 = vrot.lane.b32.xlu0 %v1473, 5
  %v1836 = vpop.permute.xlu0 %1835
  %1837 = vrot.lane.b32.xlu0 %v1466, 5
  %v1838 = vpop.permute.xlu0 %1837
  %1839 = vrot.lane.b32.xlu0 %v1474, 5
  %v1840 = vpop.permute.xlu0 %1839
  %1841 = vrot.lane.b32.xlu0 %v1470, 5
  %v1842 = vpop.permute.xlu0 %1841
  %1843 = vrot.lane.b32.xlu0 %v1480, 5
  %v1844 = vpop.permute.xlu0 %1843
  %1845 = vrot.lane.b32.xlu0 %v1482, 5
  %v1846 = vpop.permute.xlu0 %1845
  %1847 = vrot.lane.b32.xlu0 %v1484, 5
  %v1848 = vpop.permute.xlu0 %1847
  %1849 = vrot.lane.b32.xlu0 %v1486, 5
  %v1850 = vpop.permute.xlu0 %1849
  %1851 = vrot.lane.b32.xlu0 %v1496, 5
  %v1852 = vpop.permute.xlu0 %1851
  %1853 = vrot.lane.b32.xlu0 %v1511, 5
  %v1854 = vpop.permute.xlu0 %1853
  %1855 = vrot.lane.b32.xlu0 %v1500, 5
  %v1856 = vpop.permute.xlu0 %1855
  %1857 = vrot.lane.b32.xlu0 %v1512, 5
  %v1858 = vpop.permute.xlu0 %1857
  %1859 = vrot.lane.b32.xlu0 %v1504, 5
  %v1860 = vpop.permute.xlu0 %1859
  %1861 = vrot.lane.b32.xlu0 %v1513, 5
  %v1862 = vpop.permute.xlu0 %1861
  %1863 = vrot.lane.b32.xlu0 %v1508, 5
  %v1864 = vpop.permute.xlu0 %1863
  %1865 = vrot.lane.b32.xlu0 %v1514, 5
  %v1866 = vpop.permute.xlu0 %1865
  %1867 = vrot.lane.b32.xlu0 %v1524, 5
  %v1868 = vpop.permute.xlu0 %1867
  %1869 = vrot.lane.b32.xlu0 %v1539, 5
  %v1870 = vpop.permute.xlu0 %1869
  %1871 = vrot.lane.b32.xlu0 %v1528, 5
  %v1872 = vpop.permute.xlu0 %1871
  %1873 = vrot.lane.b32.xlu0 %v1540, 5
  %v1874 = vpop.permute.xlu0 %1873
  %1875 = vrot.lane.b32.xlu0 %v1532, 5
  %v1876 = vpop.permute.xlu0 %1875
  %1877 = vrot.lane.b32.xlu0 %v1541, 5
  %v1878 = vpop.permute.xlu0 %1877
  %1879 = vrot.lane.b32.xlu0 %v1536, 5
  %v1880 = vpop.permute.xlu0 %1879
  %1881 = vrot.lane.b32.xlu0 %v1542, 5
  %v1882 = vpop.permute.xlu0 %1881
  %1883 = vrot.lane.b32.xlu0 %v1552, 5
  %v1884 = vpop.permute.xlu0 %1883
  %1885 = vrot.lane.b32.xlu0 %v1567, 5
  %v1886 = vpop.permute.xlu0 %1885
  %1887 = vrot.lane.b32.xlu0 %v1556, 5
  %v1888 = vpop.permute.xlu0 %1887
  %1889 = vrot.lane.b32.xlu0 %v1568, 5
  %v1890 = vpop.permute.xlu0 %1889
  %1891 = vrot.lane.b32.xlu0 %v1560, 5
  %v1892 = vpop.permute.xlu0 %1891
  %1893 = vrot.lane.b32.xlu0 %v1569, 5
  %v1894 = vpop.permute.xlu0 %1893
  %1895 = vrot.lane.b32.xlu0 %v1564, 5
  %v1896 = vpop.permute.xlu0 %1895
  %1897 = vrot.lane.b32.xlu0 %v1570, 5
  %v1898 = vpop.permute.xlu0 %1897
  %1899 = vrot.lane.b32.xlu0 %v1580, 5
  %v1900 = vpop.permute.xlu0 %1899
  %1901 = vrot.lane.b32.xlu0 %v1595, 5
  %v1902 = vpop.permute.xlu0 %1901
  %1903 = vrot.lane.b32.xlu0 %v1584, 5
  %v1904 = vpop.permute.xlu0 %1903
  %1905 = vrot.lane.b32.xlu0 %v1596, 5
  %v1906 = vpop.permute.xlu0 %1905
  %1907 = vrot.lane.b32.xlu0 %v1588, 5
  %v1908 = vpop.permute.xlu0 %1907
  %1909 = vrot.lane.b32.xlu0 %v1597, 5
  %v1910 = vpop.permute.xlu0 %1909
  %1911 = vrot.lane.b32.xlu0 %v1592, 5
  %v1912 = vpop.permute.xlu0 %1911
  %1913 = vrot.lane.b32.xlu0 %v1598, 5
  %v1914 = vpop.permute.xlu0 %1913
  %v1915 = vsel %vm204, %v1780, %v1782
  %v1916 = vsel %vm204, %v1784, %v1786
  %v1917 = vsel %vm204, %v1788, %v1790
  %v1918 = vsel %vm204, %v1792, %v1794
  %v1919 = vsel %vm204, %v1796, %v1798
  %v1920 = vsel %vm204, %v1800, %v1802
  %v1921 = vsel %vm204, %v1804, %v1806
  %v1922 = vsel %vm204, %v1808, %v1810
  %v1923 = vsel %vm204, %v1812, %v1814
  %v1924 = vsel %vm204, %v1816, %v1818
  %v1925 = vsel %vm204, %v1820, %v1822
  %v1926 = vsel %vm204, %v1824, %v1826
  %v1927 = vsel %vm204, %v1828, %v1830
  %v1928 = vsel %vm204, %v1832, %v1834
  %v1929 = vsel %vm204, %v1836, %v1838
  %v1930 = vsel %vm204, %v1840, %v1842
  %v1931 = vsel %vm204, %v1852, %v1854
  %v1932 = vsel %vm204, %v1856, %v1858
  %v1933 = vsel %vm204, %v1860, %v1862
  %v1934 = vsel %vm204, %v1864, %v1866
  %v1935 = vsel %vm204, %v1868, %v1870
  %v1936 = vsel %vm204, %v1872, %v1874
  %v1937 = vsel %vm204, %v1876, %v1878
  %v1938 = vsel %vm204, %v1880, %v1882
  %v1939 = vsel %vm204, %v1884, %v1886
  %v1940 = vsel %vm204, %v1888, %v1890
  %v1941 = vsel %vm204, %v1892, %v1894
  %v1942 = vsel %vm204, %v1896, %v1898
  %v1943 = vsel %vm204, %v1900, %v1902
  %v1944 = vsel %vm204, %v1904, %v1906
  %v1945 = vsel %vm204, %v1908, %v1910
  %v1946 = vsel %vm204, %v1912, %v1914
  %v1984 = vsel %vm1020, %v1739, 0
  %v1987 = vsel %vm1020, %v1744, 0
  %v1990 = vsel %vm1020, %v1749, 0
  %v1993 = vsel %vm1020, %v1754, 0
  %1995 = vmatprep.subr.bf16.mxu0 0
  %1996 = vmatpush1.bf16.msra.mxu0 %v1915
  %1997 = vmatprep.subr.bf16.mxu0 0
  %1998 = vmatpush1.bf16.msra.mxu0 %v1916
  %1999 = vmatprep.subr.bf16.mxu0 0
  %2000 = vmatpush1.bf16.msra.mxu0 %v1917
  %2001 = vmatprep.subr.bf16.mxu0 0
  %2002 = vmatpush1.bf16.msra.mxu0 %v1918
  %2003 = vmatprep.subr.bf16.mxu0 0
  %2004 = vmatpush1.bf16.msra.mxu0 %v1919
  %2005 = vmatprep.subr.bf16.mxu0 0
  %2006 = vmatpush1.bf16.msra.mxu0 %v1920
  %2007 = vmatprep.subr.bf16.mxu0 0
  %2008 = vmatpush1.bf16.msra.mxu0 %v1921
  %2009 = vmatprep.subr.bf16.mxu0 0
  %2010 = vmatpush1.bf16.msra.mxu0 %v1922
  %2011 = vmatprep.subr.bf16.mxu0 0
  %2012 = vmatpush1.bf16.msra.mxu0 %v1923
  %2013 = vmatprep.subr.bf16.mxu0 0
  %2014 = vmatpush1.bf16.msra.mxu0 %v1924
  %2015 = vmatprep.subr.bf16.mxu0 0
  %2016 = vmatpush1.bf16.msra.mxu0 %v1925
  %2017 = vmatprep.subr.bf16.mxu0 0
  %2018 = vmatpush1.bf16.msra.mxu0 %v1926
  %2019 = vmatprep.subr.bf16.mxu0 0
  %2020 = vmatpush1.bf16.msra.mxu0 %v1927
  %2021 = vmatprep.subr.bf16.mxu0 0
  %2022 = vmatpush1.bf16.msra.mxu0 %v1928
  %2023 = vmatprep.subr.bf16.mxu0 0
  %2024 = vmatpush1.bf16.msra.mxu0 %v1929
  %2025 = vmatprep.subr.bf16.mxu0 0
  %2026 = vmatpush1.bf16.msra.mxu0 %v1930
  %2027 = vmatprep.mubr.bf16.mxu0 %v1736
  %2028 = vmatmul.mubr.bf16.gmra.mrb[0].mxu0 %v1735
  %v2029 = vpop.f32.mrb[0].mxu0
  %v2030 = vadd.f32 %v1634, %v2029
  %v2031 = vpop.f32.mrb[0].mxu0
  %v2032 = vpop.f32.mrb[0].mxu0
  %v2033 = vadd.f32 %v1639, %v2032
  %v2034 = vpop.f32.mrb[0].mxu0
  %2035 = vmatprep.mubr.bf16.mxu0 %v1741
  %2036 = vmatmul.mubr.bf16.gmra.mrb[0].mxu0 %v1740
  %v2037 = vpop.f32.mrb[0].mxu0
  %v2038 = vadd.f32 %v1644, %v2037
  %v2039 = vpop.f32.mrb[0].mxu0
  %v2040 = vpop.f32.mrb[0].mxu0
  %v2041 = vadd.f32 %v1649, %v2040
  %v2042 = vpop.f32.mrb[0].mxu0
  %2043 = vmatprep.mubr.bf16.mxu0 %v1746
  %2044 = vmatmul.mubr.bf16.gmra.mrb[0].mxu0 %v1745
  %v2045 = vpop.f32.mrb[0].mxu0
  %v2046 = vadd.f32 %v1654, %v2045
  %v2047 = vpop.f32.mrb[0].mxu0
  %v2048 = vpop.f32.mrb[0].mxu0
  %v2049 = vadd.f32 %v1659, %v2048
  %v2050 = vpop.f32.mrb[0].mxu0
  %2051 = vmatprep.mubr.bf16.mxu0 %v1751
  %2052 = vmatmul.mubr.bf16.gmra.mrb[0].mxu0 %v1750
  %v2053 = vpop.f32.mrb[0].mxu0
  %v2054 = vadd.f32 %v1664, %v2053
  %v2055 = vpop.f32.mrb[0].mxu0
  %v2056 = vpop.f32.mrb[0].mxu0
  %v2057 = vadd.f32 %v1669, %v2056
  %v2058 = vpop.f32.mrb[0].mxu0
  %2059 = vdwg.mxu0
  %2060 = vmatprep.subr.bf16.mxu0 0
  %2061 = vmatpush1.bf16.msra.mxu0 %v1844
  %2062 = vmatprep.subr.bf16.mxu0 0
  %2063 = vmatpush1.bf16.msra.mxu0 %v1846
  %2064 = vmatprep.subr.bf16.mxu0 0
  %2065 = vmatpush1.bf16.msra.mxu0 %v1848
  %2066 = vmatprep.subr.bf16.mxu0 0
  %2067 = vmatpush1.bf16.msra.mxu0 %v1850
  %2068 = vmatprep.subr.bf16.mxu0 0
  %2069 = vmatpush1.bf16.msra.mxu0 %v1931
  %2070 = vmatprep.subr.bf16.mxu0 0
  %2071 = vmatpush1.bf16.msra.mxu0 %v1932
  %2072 = vmatprep.subr.bf16.mxu0 0
  %2073 = vmatpush1.bf16.msra.mxu0 %v1933
  %2074 = vmatprep.subr.bf16.mxu0 0
  %2075 = vmatpush1.bf16.msra.mxu0 %v1934
  %2076 = vmatprep.subr.bf16.mxu0 0
  %2077 = vmatpush1.bf16.msra.mxu0 %v1935
  %2078 = vmatprep.subr.bf16.mxu0 0
  %2079 = vmatpush1.bf16.msra.mxu0 %v1936
  %2080 = vmatprep.subr.bf16.mxu0 0
  %2081 = vmatpush1.bf16.msra.mxu0 %v1937
  %2082 = vmatprep.subr.bf16.mxu0 0
  %2083 = vmatpush1.bf16.msra.mxu0 %v1938
  %2084 = vmatprep.subr.bf16.mxu0 0
  %2085 = vmatpush1.bf16.msra.mxu0 %v1939
  %2086 = vmatprep.subr.bf16.mxu0 0
  %2087 = vmatpush1.bf16.msra.mxu0 %v1940
  %2088 = vmatprep.subr.bf16.mxu0 0
  %2089 = vmatpush1.bf16.msra.mxu0 %v1941
  %2090 = vmatprep.subr.bf16.mxu0 0
  %2091 = vmatpush1.bf16.msra.mxu0 %v1942
  %2092 = vmatprep.mubr.bf16.mxu0 %v1738
  %2093 = vmatmul.mubr.bf16.gmra.mrb[0].mxu0 %v1737
  %v2094 = vpop.f32.mrb[0].mxu0
  %v2095 = vadd.f32 %v2030, %v2094
  %v2096 = vpop.f32.mrb[0].mxu0
  %v2097 = vpop.f32.mrb[0].mxu0
  %v2098 = vadd.f32 %v2033, %v2097
  %v2099 = vpop.f32.mrb[0].mxu0
  %2100 = vmatprep.mubr.bf16.mxu0 %v1743
  %2101 = vmatmul.mubr.bf16.gmra.mrb[0].mxu0 %v1742
  %v2102 = vpop.f32.mrb[0].mxu0
  %v2103 = vadd.f32 %v2038, %v2102
  %v2104 = vpop.f32.mrb[0].mxu0
  %v2105 = vpop.f32.mrb[0].mxu0
  %v2106 = vadd.f32 %v2041, %v2105
  %v2107 = vpop.f32.mrb[0].mxu0
  %2108 = vmatprep.mubr.bf16.mxu0 %v1748
  %2109 = vmatmul.mubr.bf16.gmra.mrb[0].mxu0 %v1747
  %v2110 = vpop.f32.mrb[0].mxu0
  %v2111 = vadd.f32 %v2046, %v2110
  %v2112 = vpop.f32.mrb[0].mxu0
  %v2113 = vpop.f32.mrb[0].mxu0
  %v2114 = vadd.f32 %v2049, %v2113
  %v2115 = vpop.f32.mrb[0].mxu0
  %2116 = vmatprep.mubr.bf16.mxu0 %v1753
  %2117 = vmatmul.mubr.bf16.gmra.mrb[0].mxu0 %v1752
  %v2118 = vpop.f32.mrb[0].mxu0
  %v2119 = vadd.f32 %v2054, %v2118
  %v2120 = vpop.f32.mrb[0].mxu0
  %v2121 = vpop.f32.mrb[0].mxu0
  %v2122 = vadd.f32 %v2057, %v2121
  %v2123 = vpop.f32.mrb[0].mxu0
  %2124 = vdwg.mxu0
  %2125 = vmatprep.subr.bf16.mxu0 0
  %2126 = vmatpush1.bf16.msra.mxu0 %v1943
  %2127 = vmatprep.subr.bf16.mxu0 0
  %2128 = vmatpush1.bf16.msra.mxu0 %v1944
  %2129 = vmatprep.subr.bf16.mxu0 0
  %2130 = vmatpush1.bf16.msra.mxu0 %v1945
  %2131 = vmatprep.subr.bf16.mxu0 0
  %2132 = vmatpush1.bf16.msra.mxu0 %v1946
  %2133 = vmatprep.subr.bf16.mxu0 0
  %2134 = vmatpush1.bf16.msra.mxu0 0
  %2135 = vmatprep.subr.bf16.mxu0 0
  %2136 = vmatpush1.bf16.msra.mxu0 0
  %2137 = vmatprep.subr.bf16.mxu0 0
  %2138 = vmatpush1.bf16.msra.mxu0 0
  %2139 = vmatprep.subr.bf16.mxu0 0
  %2140 = vmatpush1.bf16.msra.mxu0 0
  %2141 = vmatprep.subr.bf16.mxu0 0
  %2142 = vmatpush1.bf16.msra.mxu0 0
  %2143 = vmatprep.subr.bf16.mxu0 0
  %2144 = vmatpush1.bf16.msra.mxu0 0
  %2145 = vmatprep.subr.bf16.mxu0 0
  %2146 = vmatpush1.bf16.msra.mxu0 0
  %2147 = vmatprep.subr.bf16.mxu0 0
  %2148 = vmatpush1.bf16.msra.mxu0 0
  %2149 = vmatprep.subr.bf16.mxu0 0
  %2150 = vmatpush1.bf16.msra.mxu0 0
  %2151 = vmatprep.subr.bf16.mxu0 0
  %2152 = vmatpush1.bf16.msra.mxu0 0
  %2153 = vmatprep.subr.bf16.mxu0 0
  %2154 = vmatpush1.bf16.msra.mxu0 0
  %2155 = vmatprep.subr.bf16.mxu0 0
  %2156 = vmatpush1.bf16.msra.mxu0 0
  %2157 = vmatprep.mubr.bf16.mxu0 0
  %2158 = vmatmul.mubr.bf16.gmra.mrb[0].mxu0 %v1984
  %v2159 = vpop.f32.mrb[0].mxu0
  %v2160 = vadd.f32 %v2095, %v2159
  %v2161 = vpop.f32.mrb[0].mxu0
  %v2162 = vpop.f32.mrb[0].mxu0
  %v2163 = vadd.f32 %v2098, %v2162
  %v2164 = vpop.f32.mrb[0].mxu0
  %2165 = vmatprep.mubr.bf16.mxu0 0
  %2166 = vmatmul.mubr.bf16.gmra.mrb[0].mxu0 %v1987
  %v2167 = vpop.f32.mrb[0].mxu0
  %v2168 = vadd.f32 %v2103, %v2167
  %v2169 = vpop.f32.mrb[0].mxu0
  %v2170 = vpop.f32.mrb[0].mxu0
  %v2171 = vadd.f32 %v2106, %v2170
  %v2172 = vpop.f32.mrb[0].mxu0
  %2173 = vmatprep.mubr.bf16.mxu0 0
  %2174 = vmatmul.mubr.bf16.gmra.mrb[0].mxu0 %v1990
  %v2175 = vpop.f32.mrb[0].mxu0
  %v2176 = vadd.f32 %v2111, %v2175
  %v2177 = vpop.f32.mrb[0].mxu0
  %v2178 = vpop.f32.mrb[0].mxu0
  %v2179 = vadd.f32 %v2114, %v2178
  %v2180 = vpop.f32.mrb[0].mxu0
  %2181 = vmatprep.mubr.bf16.mxu0 0
  %2182 = vmatmul.mubr.bf16.gmra.mrb[0].mxu0 %v1993
  %v2183 = vpop.f32.mrb[0].mxu0
  %v2184 = vadd.f32 %v2119, %v2183
  %v2185 = vpop.f32.mrb[0].mxu0
  %v2186 = vpop.f32.mrb[0].mxu0
  %v2187 = vadd.f32 %v2122, %v2186
  %v2188 = vpop.f32.mrb[0].mxu0
  %2189 = vdwg.mxu0
  %v2190 = vld [vmem:[%s0 + $0x4] sm:$0xf]
  %v2191 = vld [vmem:[%s0 + $0x10] sm:$0xf]
  %v2192 = vld [vmem:[%s0 + $0x1c] sm:$0xf]
  %v2193 = vld [vmem:[%s0 + $0x28] sm:$0xf]
  %v2194 = vld [vmem:[%s0 + $0x34] sm:$0xf]
  %v2195 = vld [vmem:[%s0 + $0x40] sm:$0xf]
  %v2196 = vld [vmem:[%s0 + $0x4c] sm:$0xf]
  %v2197 = vld [vmem:[%s0 + $0x58] sm:$0xf]
  %v2198 = vunpack.c.l.bf16 %v2190
  %v2199 = vunpack.c.l.bf16 %v2191
  %v2200 = vunpack.c.l.bf16 %v2192
  %v2201 = vunpack.c.l.bf16 %v2193
  %v2202 = vunpack.c.l.bf16 %v2194
  %v2203 = vunpack.c.l.bf16 %v2195
  %v2204 = vunpack.c.l.bf16 %v2196
  %v2205 = vunpack.c.l.bf16 %v2197
  %v2206 = vadd.f32 %v2160, %v2198
  %v2207 = vadd.f32 %v2163, %v2199
  %v2208 = vadd.f32 %v2168, %v2200
  %v2209 = vadd.f32 %v2171, %v2201
  %v2210 = vadd.f32 %v2176, %v2202
  %v2211 = vadd.f32 %v2179, %v2203
  %v2212 = vadd.f32 %v2184, %v2204
  %v2213 = vadd.f32 %v2187, %v2205
  %v2214 = vmax.f32 %v2206, 0.0
  %v2215 = vmax.f32 %v2207, 0.0
  %v2216 = vmax.f32 %v2208, 0.0
  %v2217 = vmax.f32 %v2209, 0.0
  %v2218 = vmax.f32 %v2210, 0.0
  %v2219 = vmax.f32 %v2211, 0.0
  %v2220 = vmax.f32 %v2212, 0.0
  %v2221 = vmax.f32 %v2213, 0.0
  %v2222 = vsel %vm1238, %v2214, 0.0
  %v2223 = vsel %vm1238, %v2215, 0.0
  %v2224 = vsel %vm1238, %v2216, 0.0
  %v2225 = vsel %vm1238, %v2217, 0.0
  %v2226 = vsel %vm1238, %v2218, 0.0
  %v2227 = vsel %vm1238, %v2219, 0.0
  %v2228 = vsel %vm1238, %v2220, 0.0
  %v2229 = vsel %vm1238, %v2221, 0.0
  %v2230 = vpack.c.bf16 %v2223, %v2222
  %v2231 = vpack.c.bf16 %v2225, %v2224
  %v2232 = vpack.c.bf16 %v2227, %v2226
  %v2233 = vpack.c.bf16 %v2229, %v2228
  %v2238 = vunpack.c.l.b16 %v2230
  %v2239 = vunpack.c.h.b16 %v2230
  %v2240 = vunpack.c.l.b16 %v2231
  %v2241 = vunpack.c.h.b16 %v2231
  %v2242 = vunpack.c.l.b16 %v2232
  %v2243 = vunpack.c.h.b16 %v2232
  %v2244 = vunpack.c.l.b16 %v2233
  %v2245 = vunpack.c.h.b16 %v2233
  %v2246 = vpack.c.b16 %v2238, %v2238
  %v2247 = vpack.c.b16 %v2239, %v2239
  %v2248 = vpack.c.b16 %v2240, %v2240
  %v2249 = vpack.c.b16 %v2241, %v2241
  %v2250 = vpack.c.b16 %v2242, %v2242
  %v2251 = vpack.c.b16 %v2243, %v2243
  %v2252 = vpack.c.b16 %v2244, %v2244
  %v2253 = vpack.c.b16 %v2245, %v2245
  %2262 = vst [vmem:[%s5] sm:$0xf] %v2246
  %2263 = vst [vmem:[%s5 + $0x4] sm:$0xf] %v2247
  %2264 = vst [vmem:[%s5 + $0x8] sm:$0xf] %v2248
  %2265 = vst [vmem:[%s5 + $0xc] sm:$0xf] %v2249
  %2266 = vst [vmem:[%s5 + $0x10] sm:$0xf] %v2250
  %2267 = vst [vmem:[%s5 + $0x14] sm:$0xf] %v2251
  %2268 = vst [vmem:[%s5 + $0x18] sm:$0xf] %v2252
  %2269 = vst [vmem:[%s5 + $0x1c] sm:$0xf] %v2253
  // Predicated region
  $region22: #{_lambda_.23} parent=0 // pred_check
    _
  $region23: #{_lambda_.23} parent=0 // pred_check_branch
    %2271 = sbr.rel (0) target = $region25
  $region24: #{_lambda_.23} parent=0 // pred_region
    _
  $region25: #{_lambda_.23} parent=0 // pred_fallthru
    _
  // Predicated region
  $region26: #{_lambda_.23} parent=0 // pred_check
    _
  $region27: #{_lambda_.23} parent=0 // pred_check_branch
    %2273 = sbr.rel (0) target = $region29
  $region28: #{_lambda_.23} parent=0 // pred_region
    _
  $region29: #{_lambda_.23} parent=0 // pred_fallthru
    _

</llo_original>
